<compile_context>
chip_gen: v5e
topology: v5e:2x2
jax: 0.10.0
libtpu: 0.0.40
codegen_flags: <defaults>
</compile_context>

<pallas_src>
import jax
import jax.numpy as jnp
from jax.experimental import pallas as pl
from jax.experimental.pallas import tpu as pltpu


C_IN, C1, C2, C_OUT = 16, 64, 128, 3


# ----------------------------------------------------------------------------
# Per-generation VMEM budgeting
# ----------------------------------------------------------------------------
def _vmem_limit_bytes():
    """~75% of physical VMEM: ~48 MiB on v7x (64 MiB), ~96 MiB on v5e/v6e (128 MiB)."""
    try:
        cap = int(pltpu.get_tpu_info().vmem_capacity_bytes)
    except Exception:
        cap = 64 * 1024 * 1024  # conservative fallback: v7x physical VMEM
    return min(int(0.75 * cap), 112 * 1024 * 1024)


def _estimate_vmem_bytes(h, w):
    """Rough per-grid-step working set for the fused kernel."""
    hp, wp = h + 2, w + 2
    in_blocks = 2 * h * w * C_IN * 2                       # double-buffered input tile (bf16)
    out_blocks = 2 * h * w * C_OUT * 4                     # double-buffered output tile (f32)
    weights = 2 * ((9 * C_IN * C1 + 9 * C1 * C2 + C2 * C_OUT) * 2
                   + (C1 + C2 + C_OUT) * 4)                # resident weights + shifts
    scratch = hp * wp * (C_IN + C1) * 2                    # padded input + padded h1 (bf16)
    live = h * w * (C1 + C2) * 4 + h * w * C2 * 2          # f32 accumulators + bf16 h2
    return in_blocks + out_blocks + weights + scratch + live


# ----------------------------------------------------------------------------
# Fused Pallas kernel: implicit conv1 + BN1 + ReLU -> conv2 + BN2 + ReLU -> conv3 (1x1)
# ----------------------------------------------------------------------------
def _fused_cnn_kernel(x_ref, w1_ref, t1_ref, w2_ref, t2_ref, w3_ref, b3_ref,
                      o_ref, xpad_ref, h1pad_ref):
    h = x_ref.shape[1]
    w = x_ref.shape[2]

    # Zero the padded scratches every step (tiny cost; keeps every grid step
    # self-contained so the batch axis can be sharded "parallel" across cores).
    xpad_ref[...] = jnp.zeros_like(xpad_ref)
    h1pad_ref[...] = jnp.zeros_like(h1pad_ref)

    # ---- conv1 (3x3 "same", implicit) + folded BN1 + ReLU ----------------------
    xpad_ref[pl.ds(1, h), pl.ds(1, w), :] = x_ref[0]
    acc1 = jnp.zeros((h * w, C1), jnp.float32)
    for tap in range(9):                                   # unrolled: 9 shifted dots
        dy, dx = tap // 3, tap % 3
        xs = xpad_ref[pl.ds(dy, h), pl.ds(dx, w), :].reshape(h * w, C_IN)
        acc1 = acc1 + jnp.dot(xs, w1_ref[tap], preferred_element_type=jnp.float32)
    h1 = jnp.maximum(acc1 + t1_ref[...], 0.0)              # [h*w, 64] f32

    # h1 stays on-chip: interior of the padded VMEM scratch, never written to HBM.
    h1pad_ref[pl.ds(1, h), pl.ds(1, w), :] = h1.astype(jnp.bfloat16).reshape(h, w, C1)

    # ---- conv2 (3x3 "same", implicit) + folded BN2 + ReLU + fused conv3 (1x1) ---
    acc2 = jnp.zeros((h * w, C2), jnp.float32)
    for tap in range(9):
        dy, dx = tap // 3, tap % 3
        hs = h1pad_ref[pl.ds(dy, h), pl.ds(dx, w), :].reshape(h * w, C1)
        acc2 = acc2 + jnp.dot(hs, w2_ref[tap], preferred_element_type=jnp.float32)
    h2 = jnp.maximum(acc2 + t2_ref[...], 0.0).astype(jnp.bfloat16)   # [h*w, 128]
    out = jnp.dot(h2, w3_ref[...], preferred_element_type=jnp.float32) + b3_ref[...]
    o_ref[0] = out.reshape(h, w, C_OUT).astype(o_ref.dtype)


# ----------------------------------------------------------------------------
# pallas_call wrapper (grid over batch, resident weights)
# ----------------------------------------------------------------------------
def fused_simple_cnn(x_nhwc, p):
    n, h, w, cin = x_nhwc.shape
    assert cin == C_IN, "SimpleCNN expects 16 input channels"

    vmem_limit = _vmem_limit_bytes()
    need = _estimate_vmem_bytes(h, w)
    if need > vmem_limit:
        # TODO(synk): haloed spatial-tile grid (manual DMA) for images that exceed VMEM.
        raise ValueError(
            f"per-image working set ~{need} B exceeds VMEM budget {vmem_limit} B; "
            "spatial tiling with halos not implemented")

    gemm_terms = 9 * C_IN * C1 + 9 * C1 * C2 + C2 * C_OUT
    weight_bytes = gemm_terms * 2 + (C1 + C2 + C_OUT) * 4
    cost = pl.CostEstimate(
        flops=2 * n * h * w * gemm_terms,
        transcendentals=0,
        bytes_accessed=n * h * w * (C_IN * 2 + C_OUT * 4) + weight_bytes,
    )

    return pl.pallas_call(
        _fused_cnn_kernel,
        out_shape=jax.ShapeDtypeStruct((n, h, w, C_OUT), jnp.float32),
        grid=(n,),
        in_specs=[
            pl.BlockSpec((1, h, w, C_IN), lambda b: (b, 0, 0, 0)),   # streamed image tile
            pl.BlockSpec((9, C_IN, C1), lambda b: (0, 0, 0)),        # resident per-tap weights
            pl.BlockSpec((1, C1), lambda b: (0, 0)),                 # folded BN1 shift
            pl.BlockSpec((9, C1, C2), lambda b: (0, 0, 0)),
            pl.BlockSpec((1, C2), lambda b: (0, 0)),
            pl.BlockSpec((C2, C_OUT), lambda b: (0, 0)),             # 1x1 conv3 weight
            pl.BlockSpec((1, C_OUT), lambda b: (0, 0)),
        ],
        out_specs=pl.BlockSpec((1, h, w, C_OUT), lambda b: (b, 0, 0, 0)),
        scratch_shapes=[
            pltpu.VMEM((h + 2, w + 2, C_IN), jnp.bfloat16),   # zero-padded input tile
            pltpu.VMEM((h + 2, w + 2, C1), jnp.bfloat16),     # zero-padded h1 (VMEM-only)
        ],
        compiler_params=pltpu.CompilerParams(
            dimension_semantics=("parallel",),
            vmem_limit_bytes=vmem_limit,
        ),
        cost_estimate=cost,
    )(x_nhwc, p["w1"], p["t1"], p["w2"], p["t2"], p["w3"], p["b3"])


# ----------------------------------------------------------------------------
# Parameters
# ----------------------------------------------------------------------------
def simple_cnn_init(key):
    k1, k2, k3, k4, k5, k6 = jax.random.split(key, 6)
    return {
        "w1": 0.05 * jax.random.normal(k1, (C1, C_IN, 3, 3), jnp.float32),
        "b1": 0.01 * jax.random.normal(k4, (C1,), jnp.float32),
        "w2": 0.05 * jax.random.normal(k2, (C2, C1, 3, 3), jnp.float32),
        "b2": 0.01 * jax.random.normal(k5, (C2,), jnp.float32),
        "w3": 0.05 * jax.random.normal(k3, (C_OUT, C2, 1, 1), jnp.float32),
        "b3": 0.01 * jax.random.normal(k6, (C_OUT,), jnp.float32),
        "bn1_gamma": jnp.ones((C1,), jnp.float32),
        "bn1_beta": jnp.zeros((C1,), jnp.float32),
        "bn1_mean": jnp.zeros((C1,), jnp.float32),
        "bn1_var": jnp.ones((C1,), jnp.float32),
        "bn2_gamma": jnp.ones((C2,), jnp.float32),
        "bn2_beta": jnp.zeros((C2,), jnp.float32),
        "bn2_mean": jnp.zeros((C2,), jnp.float32),
        "bn2_var": jnp.ones((C2,), jnp.float32),
    }


def _torch_conv3x3_to_taps(w_oihw):
    """[Cout, Cin, 3, 3] -> [9, Cin, Cout], tap = dy*3 + dx (matches kernel loop)."""
    cout, cin, kh, kw = w_oihw.shape
    return jnp.transpose(w_oihw, (2, 3, 1, 0)).reshape(kh * kw, cin, cout)


def prepare_params(params, eps=1e-5):
    """One-time prep: per-tap GEMM layout, eval-mode BN folded into weights, bf16 cast."""
    s1 = params["bn1_gamma"] / jnp.sqrt(params["bn1_var"] + eps)
    t1 = s1 * (params["b1"] - params["bn1_mean"]) + params["bn1_beta"]
    w1 = _torch_conv3x3_to_taps(params["w1"]) * s1[None, None, :]    # [9, 16, 64]

    s2 = params["bn2_gamma"] / jnp.sqrt(params["bn2_var"] + eps)
    t2 = s2 * (params["b2"] - params["bn2_mean"]) + params["bn2_beta"]
    w2 = _torch_conv3x3_to_taps(params["w2"]) * s2[None, None, :]    # [9, 64, 128]

    w3 = params["w3"].reshape(C_OUT, C2).T                           # [128, 3]
    b3 = params["b3"]

    return {
        "w1": w1.astype(jnp.bfloat16), "t1": t1.reshape(1, -1).astype(jnp.float32),
        "w2": w2.astype(jnp.bfloat16), "t2": t2.reshape(1, -1).astype(jnp.float32),
        "w3": w3.astype(jnp.bfloat16), "b3": b3.reshape(1, -1).astype(jnp.float32),
    }


# ----------------------------------------------------------------------------
# Forward (dropout = identity in eval mode)
# ----------------------------------------------------------------------------
def simple_cnn_forward(prepped, x_nchw):
    n, c, h, w = x_nchw.shape
    assert c == C_IN, "SimpleCNN expects 16 input channels"
    x = jnp.transpose(x_nchw, (0, 2, 3, 1)).astype(jnp.bfloat16)     # NHWC bf16 (single pass)
    out = fused_simple_cnn(x, prepped)                               # [N, H, W, 3] f32
    return jnp.transpose(out, (0, 3, 1, 2))                          # NCHW (3-channel, tiny)


# ----------------------------------------------------------------------------
# Pure-JAX reference (f32) for a sanity check
# ----------------------------------------------------------------------------
def _reference_forward(params, x_nchw, eps=1e-5):
    def conv(x, w, b, pad):
        y = jax.lax.conv_general_dilated(
            x, w, (1, 1), ((pad, pad), (pad, pad)),
            dimension_numbers=("NCHW", "OIHW", "NCHW"))
        return y + b[None, :, None, None]

    def bn(x, g, bta, m, v):
        return (g[None, :, None, None] * (x - m[None, :, None, None])
                / jnp.sqrt(v[None, :, None, None] + eps) + bta[None, :, None, None])

    x = x_nchw.astype(jnp.float32)
    h = jax.nn.relu(bn(conv(x, params["w1"], params["b1"], 1),
                       params["bn1_gamma"], params["bn1_beta"],
                       params["bn1_mean"], params["bn1_var"]))
    h = jax.nn.relu(bn(conv(h, params["w2"], params["b2"], 1),
                       params["bn2_gamma"], params["bn2_beta"],
                       params["bn2_mean"], params["bn2_var"]))
    return conv(h, params["w3"], params["b3"], 0)


if __name__ == "__main__":
    key = jax.random.PRNGKey(0)
    pkey, xkey = jax.random.split(key)
    params = simple_cnn_init(pkey)
    prepped = prepare_params(params)

    # Small input consistent with the module: 16 input channels, 16x16 spatial, batch 2.
    x = jax.random.normal(xkey, (2, 16, 16, 16), jnp.float32)

    fwd = jax.jit(simple_cnn_forward)
    y = fwd(prepped, x)
    jax.block_until_ready(y)
    assert y.shape == (2, 3, 16, 16), y.shape

    y_ref = _reference_forward(params, x)
    max_err = float(jnp.max(jnp.abs(y.astype(jnp.float32) - y_ref)))
    assert max_err < 5e-2, f"max abs error vs reference too large: {max_err}"

    print("KERNEL_OK")
</pallas_src>

<mosaic_0001>
module attributes {stable_mosaic.version = 11 : i64} {
  func.func @_fused_cnn_kernel(%arg0: i32, %arg1: memref<1x16x16x16xbf16, #tpu.memory_space<vmem>>, %arg2: memref<9x16x64xbf16, #tpu.memory_space<vmem>>, %arg3: memref<1x64xf32, #tpu.memory_space<vmem>>, %arg4: memref<9x64x128xbf16, #tpu.memory_space<vmem>>, %arg5: memref<1x128xf32, #tpu.memory_space<vmem>>, %arg6: memref<128x3xbf16, #tpu.memory_space<vmem>>, %arg7: memref<1x3xf32, #tpu.memory_space<vmem>>, %arg8: memref<1x16x16x3xf32, #tpu.memory_space<vmem>>, %arg9: memref<18x18x16xbf16, #tpu.memory_space<vmem>>, %arg10: memref<18x18x64xbf16, #tpu.memory_space<vmem>>) attributes {dimension_semantics = [#tpu.dimension_semantics<parallel>], iteration_bounds = array<i64: 2>, scalar_prefetch = 0 : i64, scratch_operands = 2 : i64, tpu.core_type = #tpu.core_type<tc>, window_params = [{transform_indices = @transform_0, window_bounds = array<i64: 1, 16, 16, 16>}, {pipeline_mode = #tpu.pipeline_mode<synchronous>, transform_indices = @transform_1, window_bounds = array<i64: 9, 16, 64>}, {pipeline_mode = #tpu.pipeline_mode<synchronous>, transform_indices = @transform_2, window_bounds = array<i64: 1, 64>}, {pipeline_mode = #tpu.pipeline_mode<synchronous>, transform_indices = @transform_3, window_bounds = array<i64: 9, 64, 128>}, {pipeline_mode = #tpu.pipeline_mode<synchronous>, transform_indices = @transform_4, window_bounds = array<i64: 1, 128>}, {pipeline_mode = #tpu.pipeline_mode<synchronous>, transform_indices = @transform_5, window_bounds = array<i64: 128, 3>}, {pipeline_mode = #tpu.pipeline_mode<synchronous>, transform_indices = @transform_6, window_bounds = array<i64: 1, 3>}, {transform_indices = @transform_7, window_bounds = array<i64: 1, 16, 16, 3>}]} {
    %cst = arith.constant 0.000000e+00 : bf16
    %0 = vector.broadcast %cst : bf16 to vector<18x18x16xbf16>
    %c0 = arith.constant 0 : index
    %c0_0 = arith.constant 0 : index
    %c0_1 = arith.constant 0 : index
    %1 = vector.load %arg9[%c0, %c0_0, %c0_1] : memref<18x18x16xbf16, #tpu.memory_space<vmem>>, vector<18x18x16xbf16>
    tpu.vector_store %arg9[%c0, %c0_0, %c0_1], %0 {strides = array<i32>} : memref<18x18x16xbf16, #tpu.memory_space<vmem>>, vector<18x18x16xbf16>,
    %cst_2 = arith.constant 0.000000e+00 : bf16
    %2 = vector.broadcast %cst_2 : bf16 to vector<18x18x64xbf16>
    %c0_3 = arith.constant 0 : index
    %c0_4 = arith.constant 0 : index
    %c0_5 = arith.constant 0 : index
    %3 = vector.load %arg10[%c0_3, %c0_4, %c0_5] : memref<18x18x64xbf16, #tpu.memory_space<vmem>>, vector<18x18x64xbf16>
    tpu.vector_store %arg10[%c0_3, %c0_4, %c0_5], %2 {strides = array<i32>} : memref<18x18x64xbf16, #tpu.memory_space<vmem>>, vector<18x18x64xbf16>,
    %c0_6 = arith.constant 0 : index
    %c0_7 = arith.constant 0 : index
    %c0_8 = arith.constant 0 : index
    %c0_9 = arith.constant 0 : index
    %4 = vector.load %arg1[%c0_6, %c0_7, %c0_8, %c0_9] : memref<1x16x16x16xbf16, #tpu.memory_space<vmem>>, vector<1x16x16x16xbf16>
    %5 = vector.shape_cast %4 : vector<1x16x16x16xbf16> to vector<16x16x16xbf16>
    %c1 = arith.constant 1 : index
    %c1_10 = arith.constant 1 : index
    %c0_11 = arith.constant 0 : index
    %6 = vector.load %arg9[%c1, %c1_10, %c0_11] : memref<18x18x16xbf16, #tpu.memory_space<vmem>>, vector<16x16x16xbf16>
    tpu.vector_store %arg9[%c1, %c1_10, %c0_11], %5 {strides = array<i32>} : memref<18x18x16xbf16, #tpu.memory_space<vmem>>, vector<16x16x16xbf16>,
    %cst_12 = arith.constant 0.000000e+00 : f32
    %7 = vector.broadcast %cst_12 : f32 to vector<256x64xf32>
    %c0_13 = arith.constant 0 : index
    %c0_14 = arith.constant 0 : index
    %c0_15 = arith.constant 0 : index
    %8 = vector.load %arg9[%c0_13, %c0_14, %c0_15] : memref<18x18x16xbf16, #tpu.memory_space<vmem>>, vector<16x16x16xbf16>
    %9 = vector.shape_cast %8 : vector<16x16x16xbf16> to vector<256x16xbf16>
    %c0_16 = arith.constant 0 : index
    %c0_17 = arith.constant 0 : index
    %c0_18 = arith.constant 0 : index
    %10 = vector.load %arg2[%c0_16, %c0_17, %c0_18] : memref<9x16x64xbf16, #tpu.memory_space<vmem>>, vector<1x16x64xbf16>
    %11 = vector.shape_cast %10 : vector<1x16x64xbf16> to vector<16x64xbf16>
    %cst_19 = arith.constant dense<0.000000e+00> : vector<256x64xf32>
    %12 = tpu.matmul %9, %11, %cst_19 {dimension_numbers = #tpu.dot_dimension_numbers<[1], [0], [0], [1], [0, 0, 1, 1], [], []>} : vector<256x16xbf16>, vector<16x64xbf16>, vector<256x64xf32> -> vector<256x64xf32>
    %13 = arith.addf %7, %12 : vector<256x64xf32>
    %c0_20 = arith.constant 0 : index
    %c1_21 = arith.constant 1 : index
    %c0_22 = arith.constant 0 : index
    %14 = vector.load %arg9[%c0_20, %c1_21, %c0_22] : memref<18x18x16xbf16, #tpu.memory_space<vmem>>, vector<16x16x16xbf16>
    %15 = vector.shape_cast %14 : vector<16x16x16xbf16> to vector<256x16xbf16>
    %c1_23 = arith.constant 1 : index
    %c0_24 = arith.constant 0 : index
    %c0_25 = arith.constant 0 : index
    %16 = vector.load %arg2[%c1_23, %c0_24, %c0_25] : memref<9x16x64xbf16, #tpu.memory_space<vmem>>, vector<1x16x64xbf16>
    %17 = vector.shape_cast %16 : vector<1x16x64xbf16> to vector<16x64xbf16>
    %cst_26 = arith.constant dense<0.000000e+00> : vector<256x64xf32>
    %18 = tpu.matmul %15, %17, %cst_26 {dimension_numbers = #tpu.dot_dimension_numbers<[1], [0], [0], [1], [0, 0, 1, 1], [], []>} : vector<256x16xbf16>, vector<16x64xbf16>, vector<256x64xf32> -> vector<256x64xf32>
    %19 = arith.addf %13, %18 : vector<256x64xf32>
    %c0_27 = arith.constant 0 : index
    %c2 = arith.constant 2 : index
    %c0_28 = arith.constant 0 : index
    %20 = vector.load %arg9[%c0_27, %c2, %c0_28] : memref<18x18x16xbf16, #tpu.memory_space<vmem>>, vector<16x16x16xbf16>
    %21 = vector.shape_cast %20 : vector<16x16x16xbf16> to vector<256x16xbf16>
    %c2_29 = arith.constant 2 : index
    %c0_30 = arith.constant 0 : index
    %c0_31 = arith.constant 0 : index
    %22 = vector.load %arg2[%c2_29, %c0_30, %c0_31] : memref<9x16x64xbf16, #tpu.memory_space<vmem>>, vector<1x16x64xbf16>
    %23 = vector.shape_cast %22 : vector<1x16x64xbf16> to vector<16x64xbf16>
    %cst_32 = arith.constant dense<0.000000e+00> : vector<256x64xf32>
    %24 = tpu.matmul %21, %23, %cst_32 {dimension_numbers = #tpu.dot_dimension_numbers<[1], [0], [0], [1], [0, 0, 1, 1], [], []>} : vector<256x16xbf16>, vector<16x64xbf16>, vector<256x64xf32> -> vector<256x64xf32>
    %25 = arith.addf %19, %24 : vector<256x64xf32>
    %c1_33 = arith.constant 1 : index
    %c0_34 = arith.constant 0 : index
    %c0_35 = arith.constant 0 : index
    %26 = vector.load %arg9[%c1_33, %c0_34, %c0_35] : memref<18x18x16xbf16, #tpu.memory_space<vmem>>, vector<16x16x16xbf16>
    %27 = vector.shape_cast %26 : vector<16x16x16xbf16> to vector<256x16xbf16>
    %c3 = arith.constant 3 : index
    %c0_36 = arith.constant 0 : index
    %c0_37 = arith.constant 0 : index
    %28 = vector.load %arg2[%c3, %c0_36, %c0_37] : memref<9x16x64xbf16, #tpu.memory_space<vmem>>, vector<1x16x64xbf16>
    %29 = vector.shape_cast %28 : vector<1x16x64xbf16> to vector<16x64xbf16>
    %cst_38 = arith.constant dense<0.000000e+00> : vector<256x64xf32>
    %30 = tpu.matmul %27, %29, %cst_38 {dimension_numbers = #tpu.dot_dimension_numbers<[1], [0], [0], [1], [0, 0, 1, 1], [], []>} : vector<256x16xbf16>, vector<16x64xbf16>, vector<256x64xf32> -> vector<256x64xf32>
    %31 = arith.addf %25, %30 : vector<256x64xf32>
    %c1_39 = arith.constant 1 : index
    %c1_40 = arith.constant 1 : index
    %c0_41 = arith.constant 0 : index
    %32 = vector.load %arg9[%c1_39, %c1_40, %c0_41] : memref<18x18x16xbf16, #tpu.memory_space<vmem>>, vector<16x16x16xbf16>
    %33 = vector.shape_cast %32 : vector<16x16x16xbf16> to vector<256x16xbf16>
    %c4 = arith.constant 4 : index
    %c0_42 = arith.constant 0 : index
    %c0_43 = arith.constant 0 : index
    %34 = vector.load %arg2[%c4, %c0_42, %c0_43] : memref<9x16x64xbf16, #tpu.memory_space<vmem>>, vector<1x16x64xbf16>
    %35 = vector.shape_cast %34 : vector<1x16x64xbf16> to vector<16x64xbf16>
    %cst_44 = arith.constant dense<0.000000e+00> : vector<256x64xf32>
    %36 = tpu.matmul %33, %35, %cst_44 {dimension_numbers = #tpu.dot_dimension_numbers<[1], [0], [0], [1], [0, 0, 1, 1], [], []>} : vector<256x16xbf16>, vector<16x64xbf16>, vector<256x64xf32> -> vector<256x64xf32>
    %37 = arith.addf %31, %36 : vector<256x64xf32>
    %c1_45 = arith.constant 1 : index
    %c2_46 = arith.constant 2 : index
    %c0_47 = arith.constant 0 : index
    %38 = vector.load %arg9[%c1_45, %c2_46, %c0_47] : memref<18x18x16xbf16, #tpu.memory_space<vmem>>, vector<16x16x16xbf16>
    %39 = vector.shape_cast %38 : vector<16x16x16xbf16> to vector<256x16xbf16>
    %c5 = arith.constant 5 : index
    %c0_48 = arith.constant 0 : index
    %c0_49 = arith.constant 0 : index
    %40 = vector.load %arg2[%c5, %c0_48, %c0_49] : memref<9x16x64xbf16, #tpu.memory_space<vmem>>, vector<1x16x64xbf16>
    %41 = vector.shape_cast %40 : vector<1x16x64xbf16> to vector<16x64xbf16>
    %cst_50 = arith.constant dense<0.000000e+00> : vector<256x64xf32>
    %42 = tpu.matmul %39, %41, %cst_50 {dimension_numbers = #tpu.dot_dimension_numbers<[1], [0], [0], [1], [0, 0, 1, 1], [], []>} : vector<256x16xbf16>, vector<16x64xbf16>, vector<256x64xf32> -> vector<256x64xf32>
    %43 = arith.addf %37, %42 : vector<256x64xf32>
    %c2_51 = arith.constant 2 : index
    %c0_52 = arith.constant 0 : index
    %c0_53 = arith.constant 0 : index
    %44 = vector.load %arg9[%c2_51, %c0_52, %c0_53] : memref<18x18x16xbf16, #tpu.memory_space<vmem>>, vector<16x16x16xbf16>
    %45 = vector.shape_cast %44 : vector<16x16x16xbf16> to vector<256x16xbf16>
    %c6 = arith.constant 6 : index
    %c0_54 = arith.constant 0 : index
    %c0_55 = arith.constant 0 : index
    %46 = vector.load %arg2[%c6, %c0_54, %c0_55] : memref<9x16x64xbf16, #tpu.memory_space<vmem>>, vector<1x16x64xbf16>
    %47 = vector.shape_cast %46 : vector<1x16x64xbf16> to vector<16x64xbf16>
    %cst_56 = arith.constant dense<0.000000e+00> : vector<256x64xf32>
    %48 = tpu.matmul %45, %47, %cst_56 {dimension_numbers = #tpu.dot_dimension_numbers<[1], [0], [0], [1], [0, 0, 1, 1], [], []>} : vector<256x16xbf16>, vector<16x64xbf16>, vector<256x64xf32> -> vector<256x64xf32>
    %49 = arith.addf %43, %48 : vector<256x64xf32>
    %c2_57 = arith.constant 2 : index
    %c1_58 = arith.constant 1 : index
    %c0_59 = arith.constant 0 : index
    %50 = vector.load %arg9[%c2_57, %c1_58, %c0_59] : memref<18x18x16xbf16, #tpu.memory_space<vmem>>, vector<16x16x16xbf16>
    %51 = vector.shape_cast %50 : vector<16x16x16xbf16> to vector<256x16xbf16>
    %c7 = arith.constant 7 : index
    %c0_60 = arith.constant 0 : index
    %c0_61 = arith.constant 0 : index
    %52 = vector.load %arg2[%c7, %c0_60, %c0_61] : memref<9x16x64xbf16, #tpu.memory_space<vmem>>, vector<1x16x64xbf16>
    %53 = vector.shape_cast %52 : vector<1x16x64xbf16> to vector<16x64xbf16>
    %cst_62 = arith.constant dense<0.000000e+00> : vector<256x64xf32>
    %54 = tpu.matmul %51, %53, %cst_62 {dimension_numbers = #tpu.dot_dimension_numbers<[1], [0], [0], [1], [0, 0, 1, 1], [], []>} : vector<256x16xbf16>, vector<16x64xbf16>, vector<256x64xf32> -> vector<256x64xf32>
    %55 = arith.addf %49, %54 : vector<256x64xf32>
    %c2_63 = arith.constant 2 : index
    %c2_64 = arith.constant 2 : index
    %c0_65 = arith.constant 0 : index
    %56 = vector.load %arg9[%c2_63, %c2_64, %c0_65] : memref<18x18x16xbf16, #tpu.memory_space<vmem>>, vector<16x16x16xbf16>
    %57 = vector.shape_cast %56 : vector<16x16x16xbf16> to vector<256x16xbf16>
    %c8 = arith.constant 8 : index
    %c0_66 = arith.constant 0 : index
    %c0_67 = arith.constant 0 : index
    %58 = vector.load %arg2[%c8, %c0_66, %c0_67] : memref<9x16x64xbf16, #tpu.memory_space<vmem>>, vector<1x16x64xbf16>
    %59 = vector.shape_cast %58 : vector<1x16x64xbf16> to vector<16x64xbf16>
    %cst_68 = arith.constant dense<0.000000e+00> : vector<256x64xf32>
    %60 = tpu.matmul %57, %59, %cst_68 {dimension_numbers = #tpu.dot_dimension_numbers<[1], [0], [0], [1], [0, 0, 1, 1], [], []>} : vector<256x16xbf16>, vector<16x64xbf16>, vector<256x64xf32> -> vector<256x64xf32>
    %61 = arith.addf %55, %60 : vector<256x64xf32>
    %c0_69 = arith.constant 0 : index
    %c0_70 = arith.constant 0 : index
    %62 = vector.load %arg3[%c0_69, %c0_70] : memref<1x64xf32, #tpu.memory_space<vmem>>, vector<1x64xf32>
    %63 = vector.broadcast %62 : vector<1x64xf32> to vector<256x64xf32>
    %64 = arith.addf %61, %63 : vector<256x64xf32>
    %cst_71 = arith.constant 0.000000e+00 : f32
    %65 = vector.broadcast %cst_71 : f32 to vector<256x64xf32>
    %66 = arith.maximumf %64, %65 : vector<256x64xf32>
    %67 = arith.truncf %66 : vector<256x64xf32> to vector<256x64xbf16>
    %68 = vector.shape_cast %67 : vector<256x64xbf16> to vector<16x16x64xbf16>
    %c1_72 = arith.constant 1 : index
    %c1_73 = arith.constant 1 : index
    %c0_74 = arith.constant 0 : index
    %69 = vector.load %arg10[%c1_72, %c1_73, %c0_74] : memref<18x18x64xbf16, #tpu.memory_space<vmem>>, vector<16x16x64xbf16>
    tpu.vector_store %arg10[%c1_72, %c1_73, %c0_74], %68 {strides = array<i32>} : memref<18x18x64xbf16, #tpu.memory_space<vmem>>, vector<16x16x64xbf16>,
    %cst_75 = arith.constant 0.000000e+00 : f32
    %70 = vector.broadcast %cst_75 : f32 to vector<256x128xf32>
    %c0_76 = arith.constant 0 : index
    %c0_77 = arith.constant 0 : index
    %c0_78 = arith.constant 0 : index
    %71 = vector.load %arg10[%c0_76, %c0_77, %c0_78] : memref<18x18x64xbf16, #tpu.memory_space<vmem>>, vector<16x16x64xbf16>
    %72 = vector.shape_cast %71 : vector<16x16x64xbf16> to vector<256x64xbf16>
    %c0_79 = arith.constant 0 : index
    %c0_80 = arith.constant 0 : index
    %c0_81 = arith.constant 0 : index
    %73 = vector.load %arg4[%c0_79, %c0_80, %c0_81] : memref<9x64x128xbf16, #tpu.memory_space<vmem>>, vector<1x64x128xbf16>
    %74 = vector.shape_cast %73 : vector<1x64x128xbf16> to vector<64x128xbf16>
    %cst_82 = arith.constant dense<0.000000e+00> : vector<256x128xf32>
    %75 = tpu.matmul %72, %74, %cst_82 {dimension_numbers = #tpu.dot_dimension_numbers<[1], [0], [0], [1], [0, 0, 1, 1], [], []>} : vector<256x64xbf16>, vector<64x128xbf16>, vector<256x128xf32> -> vector<256x128xf32>
    %76 = arith.addf %70, %75 : vector<256x128xf32>
    %c0_83 = arith.constant 0 : index
    %c1_84 = arith.constant 1 : index
    %c0_85 = arith.constant 0 : index
    %77 = vector.load %arg10[%c0_83, %c1_84, %c0_85] : memref<18x18x64xbf16, #tpu.memory_space<vmem>>, vector<16x16x64xbf16>
    %78 = vector.shape_cast %77 : vector<16x16x64xbf16> to vector<256x64xbf16>
    %c1_86 = arith.constant 1 : index
    %c0_87 = arith.constant 0 : index
    %c0_88 = arith.constant 0 : index
    %79 = vector.load %arg4[%c1_86, %c0_87, %c0_88] : memref<9x64x128xbf16, #tpu.memory_space<vmem>>, vector<1x64x128xbf16>
    %80 = vector.shape_cast %79 : vector<1x64x128xbf16> to vector<64x128xbf16>
    %cst_89 = arith.constant dense<0.000000e+00> : vector<256x128xf32>
    %81 = tpu.matmul %78, %80, %cst_89 {dimension_numbers = #tpu.dot_dimension_numbers<[1], [0], [0], [1], [0, 0, 1, 1], [], []>} : vector<256x64xbf16>, vector<64x128xbf16>, vector<256x128xf32> -> vector<256x128xf32>
    %82 = arith.addf %76, %81 : vector<256x128xf32>
    %c0_90 = arith.constant 0 : index
    %c2_91 = arith.constant 2 : index
    %c0_92 = arith.constant 0 : index
    %83 = vector.load %arg10[%c0_90, %c2_91, %c0_92] : memref<18x18x64xbf16, #tpu.memory_space<vmem>>, vector<16x16x64xbf16>
    %84 = vector.shape_cast %83 : vector<16x16x64xbf16> to vector<256x64xbf16>
    %c2_93 = arith.constant 2 : index
    %c0_94 = arith.constant 0 : index
    %c0_95 = arith.constant 0 : index
    %85 = vector.load %arg4[%c2_93, %c0_94, %c0_95] : memref<9x64x128xbf16, #tpu.memory_space<vmem>>, vector<1x64x128xbf16>
    %86 = vector.shape_cast %85 : vector<1x64x128xbf16> to vector<64x128xbf16>
    %cst_96 = arith.constant dense<0.000000e+00> : vector<256x128xf32>
    %87 = tpu.matmul %84, %86, %cst_96 {dimension_numbers = #tpu.dot_dimension_numbers<[1], [0], [0], [1], [0, 0, 1, 1], [], []>} : vector<256x64xbf16>, vector<64x128xbf16>, vector<256x128xf32> -> vector<256x128xf32>
    %88 = arith.addf %82, %87 : vector<256x128xf32>
    %c1_97 = arith.constant 1 : index
    %c0_98 = arith.constant 0 : index
    %c0_99 = arith.constant 0 : index
    %89 = vector.load %arg10[%c1_97, %c0_98, %c0_99] : memref<18x18x64xbf16, #tpu.memory_space<vmem>>, vector<16x16x64xbf16>
    %90 = vector.shape_cast %89 : vector<16x16x64xbf16> to vector<256x64xbf16>
    %c3_100 = arith.constant 3 : index
    %c0_101 = arith.constant 0 : index
    %c0_102 = arith.constant 0 : index
    %91 = vector.load %arg4[%c3_100, %c0_101, %c0_102] : memref<9x64x128xbf16, #tpu.memory_space<vmem>>, vector<1x64x128xbf16>
    %92 = vector.shape_cast %91 : vector<1x64x128xbf16> to vector<64x128xbf16>
    %cst_103 = arith.constant dense<0.000000e+00> : vector<256x128xf32>
    %93 = tpu.matmul %90, %92, %cst_103 {dimension_numbers = #tpu.dot_dimension_numbers<[1], [0], [0], [1], [0, 0, 1, 1], [], []>} : vector<256x64xbf16>, vector<64x128xbf16>, vector<256x128xf32> -> vector<256x128xf32>
    %94 = arith.addf %88, %93 : vector<256x128xf32>
    %c1_104 = arith.constant 1 : index
    %c1_105 = arith.constant 1 : index
    %c0_106 = arith.constant 0 : index
    %95 = vector.load %arg10[%c1_104, %c1_105, %c0_106] : memref<18x18x64xbf16, #tpu.memory_space<vmem>>, vector<16x16x64xbf16>
    %96 = vector.shape_cast %95 : vector<16x16x64xbf16> to vector<256x64xbf16>
    %c4_107 = arith.constant 4 : index
    %c0_108 = arith.constant 0 : index
    %c0_109 = arith.constant 0 : index
    %97 = vector.load %arg4[%c4_107, %c0_108, %c0_109] : memref<9x64x128xbf16, #tpu.memory_space<vmem>>, vector<1x64x128xbf16>
    %98 = vector.shape_cast %97 : vector<1x64x128xbf16> to vector<64x128xbf16>
    %cst_110 = arith.constant dense<0.000000e+00> : vector<256x128xf32>
    %99 = tpu.matmul %96, %98, %cst_110 {dimension_numbers = #tpu.dot_dimension_numbers<[1], [0], [0], [1], [0, 0, 1, 1], [], []>} : vector<256x64xbf16>, vector<64x128xbf16>, vector<256x128xf32> -> vector<256x128xf32>
    %100 = arith.addf %94, %99 : vector<256x128xf32>
    %c1_111 = arith.constant 1 : index
    %c2_112 = arith.constant 2 : index
    %c0_113 = arith.constant 0 : index
    %101 = vector.load %arg10[%c1_111, %c2_112, %c0_113] : memref<18x18x64xbf16, #tpu.memory_space<vmem>>, vector<16x16x64xbf16>
    %102 = vector.shape_cast %101 : vector<16x16x64xbf16> to vector<256x64xbf16>
    %c5_114 = arith.constant 5 : index
    %c0_115 = arith.constant 0 : index
    %c0_116 = arith.constant 0 : index
    %103 = vector.load %arg4[%c5_114, %c0_115, %c0_116] : memref<9x64x128xbf16, #tpu.memory_space<vmem>>, vector<1x64x128xbf16>
    %104 = vector.shape_cast %103 : vector<1x64x128xbf16> to vector<64x128xbf16>
    %cst_117 = arith.constant dense<0.000000e+00> : vector<256x128xf32>
    %105 = tpu.matmul %102, %104, %cst_117 {dimension_numbers = #tpu.dot_dimension_numbers<[1], [0], [0], [1], [0, 0, 1, 1], [], []>} : vector<256x64xbf16>, vector<64x128xbf16>, vector<256x128xf32> -> vector<256x128xf32>
    %106 = arith.addf %100, %105 : vector<256x128xf32>
    %c2_118 = arith.constant 2 : index
    %c0_119 = arith.constant 0 : index
    %c0_120 = arith.constant 0 : index
    %107 = vector.load %arg10[%c2_118, %c0_119, %c0_120] : memref<18x18x64xbf16, #tpu.memory_space<vmem>>, vector<16x16x64xbf16>
    %108 = vector.shape_cast %107 : vector<16x16x64xbf16> to vector<256x64xbf16>
    %c6_121 = arith.constant 6 : index
    %c0_122 = arith.constant 0 : index
    %c0_123 = arith.constant 0 : index
    %109 = vector.load %arg4[%c6_121, %c0_122, %c0_123] : memref<9x64x128xbf16, #tpu.memory_space<vmem>>, vector<1x64x128xbf16>
    %110 = vector.shape_cast %109 : vector<1x64x128xbf16> to vector<64x128xbf16>
    %cst_124 = arith.constant dense<0.000000e+00> : vector<256x128xf32>
    %111 = tpu.matmul %108, %110, %cst_124 {dimension_numbers = #tpu.dot_dimension_numbers<[1], [0], [0], [1], [0, 0, 1, 1], [], []>} : vector<256x64xbf16>, vector<64x128xbf16>, vector<256x128xf32> -> vector<256x128xf32>
    %112 = arith.addf %106, %111 : vector<256x128xf32>
    %c2_125 = arith.constant 2 : index
    %c1_126 = arith.constant 1 : index
    %c0_127 = arith.constant 0 : index
    %113 = vector.load %arg10[%c2_125, %c1_126, %c0_127] : memref<18x18x64xbf16, #tpu.memory_space<vmem>>, vector<16x16x64xbf16>
    %114 = vector.shape_cast %113 : vector<16x16x64xbf16> to vector<256x64xbf16>
    %c7_128 = arith.constant 7 : index
    %c0_129 = arith.constant 0 : index
    %c0_130 = arith.constant 0 : index
    %115 = vector.load %arg4[%c7_128, %c0_129, %c0_130] : memref<9x64x128xbf16, #tpu.memory_space<vmem>>, vector<1x64x128xbf16>
    %116 = vector.shape_cast %115 : vector<1x64x128xbf16> to vector<64x128xbf16>
    %cst_131 = arith.constant dense<0.000000e+00> : vector<256x128xf32>
    %117 = tpu.matmul %114, %116, %cst_131 {dimension_numbers = #tpu.dot_dimension_numbers<[1], [0], [0], [1], [0, 0, 1, 1], [], []>} : vector<256x64xbf16>, vector<64x128xbf16>, vector<256x128xf32> -> vector<256x128xf32>
    %118 = arith.addf %112, %117 : vector<256x128xf32>
    %c2_132 = arith.constant 2 : index
    %c2_133 = arith.constant 2 : index
    %c0_134 = arith.constant 0 : index
    %119 = vector.load %arg10[%c2_132, %c2_133, %c0_134] : memref<18x18x64xbf16, #tpu.memory_space<vmem>>, vector<16x16x64xbf16>
    %120 = vector.shape_cast %119 : vector<16x16x64xbf16> to vector<256x64xbf16>
    %c8_135 = arith.constant 8 : index
    %c0_136 = arith.constant 0 : index
    %c0_137 = arith.constant 0 : index
    %121 = vector.load %arg4[%c8_135, %c0_136, %c0_137] : memref<9x64x128xbf16, #tpu.memory_space<vmem>>, vector<1x64x128xbf16>
    %122 = vector.shape_cast %121 : vector<1x64x128xbf16> to vector<64x128xbf16>
    %cst_138 = arith.constant dense<0.000000e+00> : vector<256x128xf32>
    %123 = tpu.matmul %120, %122, %cst_138 {dimension_numbers = #tpu.dot_dimension_numbers<[1], [0], [0], [1], [0, 0, 1, 1], [], []>} : vector<256x64xbf16>, vector<64x128xbf16>, vector<256x128xf32> -> vector<256x128xf32>
    %124 = arith.addf %118, %123 : vector<256x128xf32>
    %c0_139 = arith.constant 0 : index
    %c0_140 = arith.constant 0 : index
    %125 = vector.load %arg5[%c0_139, %c0_140] : memref<1x128xf32, #tpu.memory_space<vmem>>, vector<1x128xf32>
    %126 = vector.broadcast %125 : vector<1x128xf32> to vector<256x128xf32>
    %127 = arith.addf %124, %126 : vector<256x128xf32>
    %cst_141 = arith.constant 0.000000e+00 : f32
    %128 = vector.broadcast %cst_141 : f32 to vector<256x128xf32>
    %129 = arith.maximumf %127, %128 : vector<256x128xf32>
    %130 = arith.truncf %129 : vector<256x128xf32> to vector<256x128xbf16>
    %c0_142 = arith.constant 0 : index
    %c0_143 = arith.constant 0 : index
    %131 = vector.load %arg6[%c0_142, %c0_143] : memref<128x3xbf16, #tpu.memory_space<vmem>>, vector<128x3xbf16>
    %cst_144 = arith.constant dense<0.000000e+00> : vector<256x3xf32>
    %132 = tpu.matmul %130, %131, %cst_144 {dimension_numbers = #tpu.dot_dimension_numbers<[1], [0], [0], [1], [0, 0, 1, 1], [], []>} : vector<256x128xbf16>, vector<128x3xbf16>, vector<256x3xf32> -> vector<256x3xf32>
    %c0_145 = arith.constant 0 : index
    %c0_146 = arith.constant 0 : index
    %133 = vector.load %arg7[%c0_145, %c0_146] : memref<1x3xf32, #tpu.memory_space<vmem>>, vector<1x3xf32>
    %134 = vector.broadcast %133 : vector<1x3xf32> to vector<256x3xf32>
    %135 = arith.addf %132, %134 : vector<256x3xf32>
    %136 = vector.shape_cast %135 : vector<256x3xf32> to vector<16x16x3xf32>
    %c0_147 = arith.constant 0 : index
    %c0_148 = arith.constant 0 : index
    %c0_149 = arith.constant 0 : index
    %c0_150 = arith.constant 0 : index
    %137 = vector.load %arg8[%c0_147, %c0_148, %c0_149, %c0_150] : memref<1x16x16x3xf32, #tpu.memory_space<vmem>>, vector<1x16x16x3xf32>
    %138 = vector.shape_cast %137 : vector<1x16x16x3xf32> to vector<16x16x3xf32>
    %139 = vector.shape_cast %136 : vector<16x16x3xf32> to vector<1x16x16x3xf32>
    tpu.vector_store %arg8[%c0_147, %c0_148, %c0_149, %c0_150], %139 {strides = array<i32>} : memref<1x16x16x3xf32, #tpu.memory_space<vmem>>, vector<1x16x16x3xf32>,
    return
  }
  func.func @transform_0(%arg0: i32) -> (i32, i32, i32, i32) {
    %c0_i32 = arith.constant 0 : i32
    %c0_i32_0 = arith.constant 0 : i32
    %c0_i32_1 = arith.constant 0 : i32
    %c0_i32_2 = arith.constant 0 : i32
    return %arg0, %c0_i32, %c0_i32_0, %c0_i32_1 : i32, i32, i32, i32
  }
  func.func @transform_1(%arg0: i32) -> (i32, i32, i32) {
    %c0_i32 = arith.constant 0 : i32
    %c0_i32_0 = arith.constant 0 : i32
    %c0_i32_1 = arith.constant 0 : i32
    %c0_i32_2 = arith.constant 0 : i32
    return %c0_i32, %c0_i32_0, %c0_i32_1 : i32, i32, i32
  }
  func.func @transform_2(%arg0: i32) -> (i32, i32) {
    %c0_i32 = arith.constant 0 : i32
    %c0_i32_0 = arith.constant 0 : i32
    %c0_i32_1 = arith.constant 0 : i32
    return %c0_i32, %c0_i32_0 : i32, i32
  }
  func.func @transform_3(%arg0: i32) -> (i32, i32, i32) {
    %c0_i32 = arith.constant 0 : i32
    %c0_i32_0 = arith.constant 0 : i32
    %c0_i32_1 = arith.constant 0 : i32
    %c0_i32_2 = arith.constant 0 : i32
    return %c0_i32, %c0_i32_0, %c0_i32_1 : i32, i32, i32
  }
  func.func @transform_4(%arg0: i32) -> (i32, i32) {
    %c0_i32 = arith.constant 0 : i32
    %c0_i32_0 = arith.constant 0 : i32
    %c0_i32_1 = arith.constant 0 : i32
    return %c0_i32, %c0_i32_0 : i32, i32
  }
  func.func @transform_5(%arg0: i32) -> (i32, i32) {
    %c0_i32 = arith.constant 0 : i32
    %c0_i32_0 = arith.constant 0 : i32
    %c0_i32_1 = arith.constant 0 : i32
    return %c0_i32, %c0_i32_0 : i32, i32
  }
  func.func @transform_6(%arg0: i32) -> (i32, i32) {
    %c0_i32 = arith.constant 0 : i32
    %c0_i32_0 = arith.constant 0 : i32
    %c0_i32_1 = arith.constant 0 : i32
    return %c0_i32, %c0_i32_0 : i32, i32
  }
  func.func @transform_7(%arg0: i32) -> (i32, i32, i32, i32) {
    %c0_i32 = arith.constant 0 : i32
    %c0_i32_0 = arith.constant 0 : i32
    %c0_i32_1 = arith.constant 0 : i32
    %c0_i32_2 = arith.constant 0 : i32
    return %arg0, %c0_i32, %c0_i32_0, %c0_i32_1 : i32, i32, i32, i32
  }
}

</mosaic_0001>

<llo_original>
// kernel: simple_cnn_forward.1
$region0: #{simple_cnn_forward.1}
  #allocation0 [shape = 'u32[]', space=smem, size = 0x4, offset = 0x4, fixed_abs, tag = 'smem constant byte address 0x4 - core index']
  #allocation1 [shape = 'u32[72,128]{1,0:T(1,128)}', space=vmem, size = 0x9000, scoped, tag = 'internal scratch']
  #allocation2 [shape = 'bf16[18,18,16]{2,1,0:T(8,128)(2,1)}', space=vmem, size = 0x1b000, scoped, tag = 'scratch operand']
  #allocation3 [shape = 'bf16[18,18,64]{2,1,0:T(8,128)(2,1)}', space=vmem, size = 0x1b000, scoped, tag = 'scratch operand']
  %s0 = inlined_call_operand.vmem [shape: bf16[2,16,16,16], index: 0, kind: input, shape index: {}]
  %s1 = inlined_call_operand.vmem [shape: bf16[9,16,64], index: 1, kind: input, shape index: {}]
  %s2 = inlined_call_operand.vmem [shape: f32[1,64], index: 2, kind: input, shape index: {}]
  %s3 = inlined_call_operand.vmem [shape: bf16[9,64,128], index: 3, kind: input, shape index: {}]
  %s4 = inlined_call_operand.vmem [shape: f32[1,128], index: 4, kind: input, shape index: {}]
  %s5 = inlined_call_operand.vmem [shape: bf16[128,3], index: 5, kind: input, shape index: {}]
  %s6 = inlined_call_operand.vmem [shape: f32[1,3], index: 6, kind: input, shape index: {}]
  %s7 = inlined_call_operand.vmem [shape: f32[2,16,16,3], index: 7, kind: output, shape index: {}]
  %s8 = sld [smem:[#allocation0]]
  $region61: #{simple_cnn_forward.1} parent=0
    _
  %s10 = ssub.s32 1, %s8
  %s11 = scalar_select 0, %s10, %s8
  loop: start=0, step=1, limit=4
  $region2: #{simple_cnn_forward.1} parent=0 // loop_pre_header
    _
  $region3: #{simple_cnn_forward.1} parent=0 // loop_header
    %s13 = sphi 0, %s17
    %p14 = scmp.ge.s32.totalorder %s13, 4
    %s23 = sphi 0, %s25
    %s26 = sphi 0, %s23
    %s27 = sphi 0, %s26
    %s43 = sphi 0, %s27
    %s47 = sphi 0, %s47
    %s49 = sphi 0, %s47
    %s50 = sphi 0, %s49
    %s64 = sphi 0, %s50
    %s68 = sphi 0, %s68
    %s70 = sphi 0, %s68
    %s71 = sphi 0, %s70
    %s85 = sphi 0, %s71
    %s89 = sphi 0, %s89
    %s91 = sphi 0, %s89
    %s92 = sphi 0, %s91
    %s106 = sphi 0, %s92
    %s110 = sphi 0, %s110
    %s112 = sphi 0, %s110
    %s113 = sphi 0, %s112
    %s127 = sphi 0, %s113
    %s131 = sphi 0, %s131
    %s133 = sphi 0, %s131
    %s134 = sphi 0, %s133
    %s148 = sphi 0, %s134
    %s152 = sphi 0, %s152
    %s154 = sphi 0, %s152
    %s155 = sphi 0, %s154
    %s169 = sphi 0, %s155
    %s175 = sphi 0, %s177
    %s178 = sphi 0, %s175
    %s179 = sphi 0, %s178
    %s195 = sphi 0, %s179
  $region4: #{simple_cnn_forward.1} parent=0 // loop_header_branch
    %16 = sbr.rel (%p14) target = $region8
  $region5: #{simple_cnn_forward.1} parent=0 // loop_body
    %s18 = ssub.s32 %s13, 1
    %s19 = ssub.s32 %s13, 2
    %s20 = sadd.s32 %s13, 1
    %s21 = ssub.s32 %s13, %s20
    %p22 = scmp.eq.s32.totalorder %s21, 0
    %s24 = sadd.s32 %s23, 1
    %s25 = scalar_select %p22, %s23, %s24
    %p28 = pneg %p22
    %p29 = scmp.eq.s32.totalorder %s13, 1
    %p30 = por %p28, %p29
    %p31 = scmp.ne.s32.totalorder %s23, %s26
    %p32 = scmp.eq.s32.totalorder %s13, 0
    %p33 = por %p31, %p32
    %p34 = scmp.ne.s32.totalorder %s23, %s26
    %p35 = scmp.eq.s32.totalorder %s18, 1
    %p36 = por %p34, %p35
    %p37 = scmp.ne.s32.totalorder %s26, %s27
    %p38 = scmp.eq.s32.totalorder %s18, 0
    %p39 = por %p37, %p38
    %p40 = scmp.ne.s32.totalorder %s26, %s27
    %p41 = scmp.eq.s32.totalorder %s19, 1
    %p42 = por %p40, %p41
    %p44 = scmp.ne.s32.totalorder %s27, %s43
    %p45 = scmp.eq.s32.totalorder %s19, 0
    %p46 = por %p44, %p45
    %s48 = sadd.s32 %s47, 1
    %p51 = scmp.eq.s32.totalorder %s13, 1
    %p52 = scmp.ne.s32.totalorder %s47, %s49
    %p53 = scmp.eq.s32.totalorder %s13, 0
    %p54 = por %p52, %p53
    %p55 = scmp.ne.s32.totalorder %s47, %s49
    %p56 = scmp.eq.s32.totalorder %s18, 1
    %p57 = por %p55, %p56
    %p58 = scmp.ne.s32.totalorder %s49, %s50
    %p59 = scmp.eq.s32.totalorder %s18, 0
    %p60 = por %p58, %p59
    %p61 = scmp.ne.s32.totalorder %s49, %s50
    %p62 = scmp.eq.s32.totalorder %s19, 1
    %p63 = por %p61, %p62
    %p65 = scmp.ne.s32.totalorder %s50, %s64
    %p66 = scmp.eq.s32.totalorder %s19, 0
    %p67 = por %p65, %p66
    %s69 = sadd.s32 %s68, 1
    %p72 = scmp.eq.s32.totalorder %s13, 1
    %p73 = scmp.ne.s32.totalorder %s68, %s70
    %p74 = scmp.eq.s32.totalorder %s13, 0
    %p75 = por %p73, %p74
    %p76 = scmp.ne.s32.totalorder %s68, %s70
    %p77 = scmp.eq.s32.totalorder %s18, 1
    %p78 = por %p76, %p77
    %p79 = scmp.ne.s32.totalorder %s70, %s71
    %p80 = scmp.eq.s32.totalorder %s18, 0
    %p81 = por %p79, %p80
    %p82 = scmp.ne.s32.totalorder %s70, %s71
    %p83 = scmp.eq.s32.totalorder %s19, 1
    %p84 = por %p82, %p83
    %p86 = scmp.ne.s32.totalorder %s71, %s85
    %p87 = scmp.eq.s32.totalorder %s19, 0
    %p88 = por %p86, %p87
    %s90 = sadd.s32 %s89, 1
    %p93 = scmp.eq.s32.totalorder %s13, 1
    %p94 = scmp.ne.s32.totalorder %s89, %s91
    %p95 = scmp.eq.s32.totalorder %s13, 0
    %p96 = por %p94, %p95
    %p97 = scmp.ne.s32.totalorder %s89, %s91
    %p98 = scmp.eq.s32.totalorder %s18, 1
    %p99 = por %p97, %p98
    %p100 = scmp.ne.s32.totalorder %s91, %s92
    %p101 = scmp.eq.s32.totalorder %s18, 0
    %p102 = por %p100, %p101
    %p103 = scmp.ne.s32.totalorder %s91, %s92
    %p104 = scmp.eq.s32.totalorder %s19, 1
    %p105 = por %p103, %p104
    %p107 = scmp.ne.s32.totalorder %s92, %s106
    %p108 = scmp.eq.s32.totalorder %s19, 0
    %p109 = por %p107, %p108
    %s111 = sadd.s32 %s110, 1
    %p114 = scmp.eq.s32.totalorder %s13, 1
    %p115 = scmp.ne.s32.totalorder %s110, %s112
    %p116 = scmp.eq.s32.totalorder %s13, 0
    %p117 = por %p115, %p116
    %p118 = scmp.ne.s32.totalorder %s110, %s112
    %p119 = scmp.eq.s32.totalorder %s18, 1
    %p120 = por %p118, %p119
    %p121 = scmp.ne.s32.totalorder %s112, %s113
    %p122 = scmp.eq.s32.totalorder %s18, 0
    %p123 = por %p121, %p122
    %p124 = scmp.ne.s32.totalorder %s112, %s113
    %p125 = scmp.eq.s32.totalorder %s19, 1
    %p126 = por %p124, %p125
    %p128 = scmp.ne.s32.totalorder %s113, %s127
    %p129 = scmp.eq.s32.totalorder %s19, 0
    %p130 = por %p128, %p129
    %s132 = sadd.s32 %s131, 1
    %p135 = scmp.eq.s32.totalorder %s13, 1
    %p136 = scmp.ne.s32.totalorder %s131, %s133
    %p137 = scmp.eq.s32.totalorder %s13, 0
    %p138 = por %p136, %p137
    %p139 = scmp.ne.s32.totalorder %s131, %s133
    %p140 = scmp.eq.s32.totalorder %s18, 1
    %p141 = por %p139, %p140
    %p142 = scmp.ne.s32.totalorder %s133, %s134
    %p143 = scmp.eq.s32.totalorder %s18, 0
    %p144 = por %p142, %p143
    %p145 = scmp.ne.s32.totalorder %s133, %s134
    %p146 = scmp.eq.s32.totalorder %s19, 1
    %p147 = por %p145, %p146
    %p149 = scmp.ne.s32.totalorder %s134, %s148
    %p150 = scmp.eq.s32.totalorder %s19, 0
    %p151 = por %p149, %p150
    %s153 = sadd.s32 %s152, 1
    %p156 = scmp.eq.s32.totalorder %s13, 1
    %p157 = scmp.ne.s32.totalorder %s152, %s154
    %p158 = scmp.eq.s32.totalorder %s13, 0
    %p159 = por %p157, %p158
    %p160 = scmp.ne.s32.totalorder %s152, %s154
    %p161 = scmp.eq.s32.totalorder %s18, 1
    %p162 = por %p160, %p161
    %p163 = scmp.ne.s32.totalorder %s154, %s155
    %p164 = scmp.eq.s32.totalorder %s18, 0
    %p165 = por %p163, %p164
    %p166 = scmp.ne.s32.totalorder %s154, %s155
    %p167 = scmp.eq.s32.totalorder %s19, 1
    %p168 = por %p166, %p167
    %p170 = scmp.ne.s32.totalorder %s155, %s169
    %p171 = scmp.eq.s32.totalorder %s19, 0
    %p172 = por %p170, %p171
    %s173 = ssub.s32 %s13, %s20
    %p174 = scmp.eq.s32.totalorder %s173, 0
    %s176 = sadd.s32 %s175, 1
    %s177 = scalar_select %p174, %s175, %s176
    %p180 = pneg %p174
    %p181 = scmp.eq.s32.totalorder %s13, 1
    %p182 = por %p180, %p181
    %p183 = scmp.ne.s32.totalorder %s175, %s178
    %p184 = scmp.eq.s32.totalorder %s13, 0
    %p185 = por %p183, %p184
    %p186 = scmp.ne.s32.totalorder %s175, %s178
    %p187 = scmp.eq.s32.totalorder %s18, 1
    %p188 = por %p186, %p187
    %p189 = scmp.ne.s32.totalorder %s178, %s179
    %p190 = scmp.eq.s32.totalorder %s18, 0
    %p191 = por %p189, %p190
    %p192 = scmp.ne.s32.totalorder %s178, %s179
    %p193 = scmp.eq.s32.totalorder %s19, 1
    %p194 = por %p192, %p193
    %p196 = scmp.ne.s32.totalorder %s179, %s195
    %p197 = scmp.eq.s32.totalorder %s19, 0
    %p198 = por %p196, %p197
    %p199 = scmp.le.s32.totalorder 1, %s13
    %p200 = scmp.lt.s32.totalorder %s13, 3
    %p201 = pnand %p199, %p200
    %p202 = pneg %p201
    // Predicated region
    $region9: #{simple_cnn_forward.1} parent=5 // pred_check
      _
    $region10: #{simple_cnn_forward.1} parent=5 // pred_check_branch
      %204 = sbr.rel (%p201) target = $region12
    $region11: #{simple_cnn_forward.1} parent=5 // pred_region
      %s205 = ssub.s32 %s13, 1
      // Predicated region
      $region13: #{simple_cnn_forward.1} parent=11 // pred_check
        %p206 = pneg %p60
      $region14: #{simple_cnn_forward.1} parent=11 // pred_check_branch
        %208 = sbr.rel (%p206) target = $region16
      $region15: #{simple_cnn_forward.1} parent=11 // pred_region
        _
      $region16: #{simple_cnn_forward.1} parent=11 // pred_fallthru
        _
      // Predicated region
      $region17: #{simple_cnn_forward.1} parent=11 // pred_check
        %p209 = pneg %p81
      $region18: #{simple_cnn_forward.1} parent=11 // pred_check_branch
        %211 = sbr.rel (%p209) target = $region20
      $region19: #{simple_cnn_forward.1} parent=11 // pred_region
        _
      $region20: #{simple_cnn_forward.1} parent=11 // pred_fallthru
        _
      // Predicated region
      $region21: #{simple_cnn_forward.1} parent=11 // pred_check
        %p212 = pneg %p102
      $region22: #{simple_cnn_forward.1} parent=11 // pred_check_branch
        %214 = sbr.rel (%p212) target = $region24
      $region23: #{simple_cnn_forward.1} parent=11 // pred_region
        _
      $region24: #{simple_cnn_forward.1} parent=11 // pred_fallthru
        _
      // Predicated region
      $region25: #{simple_cnn_forward.1} parent=11 // pred_check
        %p215 = pneg %p123
      $region26: #{simple_cnn_forward.1} parent=11 // pred_check_branch
        %217 = sbr.rel (%p215) target = $region28
      $region27: #{simple_cnn_forward.1} parent=11 // pred_region
        _
      $region28: #{simple_cnn_forward.1} parent=11 // pred_fallthru
        _
      // Predicated region
      $region29: #{simple_cnn_forward.1} parent=11 // pred_check
        %p218 = pneg %p144
      $region30: #{simple_cnn_forward.1} parent=11 // pred_check_branch
        %220 = sbr.rel (%p218) target = $region32
      $region31: #{simple_cnn_forward.1} parent=11 // pred_region
        _
      $region32: #{simple_cnn_forward.1} parent=11 // pred_fallthru
        _
      // Predicated region
      $region33: #{simple_cnn_forward.1} parent=11 // pred_check
        %p221 = pneg %p165
      $region34: #{simple_cnn_forward.1} parent=11 // pred_check_branch
        %223 = sbr.rel (%p221) target = $region36
      $region35: #{simple_cnn_forward.1} parent=11 // pred_region
        _
      $region36: #{simple_cnn_forward.1} parent=11 // pred_fallthru
        _
    $region12: #{simple_cnn_forward.1} parent=5 // pred_fallthru
      _
    %p224 = scmp.lt.s32.totalorder %s13, 2
    // Predicated region
    $region37: #{simple_cnn_forward.1} parent=5 // pred_check
      %p225 = pneg %p224
    $region38: #{simple_cnn_forward.1} parent=5 // pred_check_branch
      %227 = sbr.rel (%p225) target = $region40
    $region39: #{simple_cnn_forward.1} parent=5 // pred_region
      // Predicated region
      $region41: #{simple_cnn_forward.1} parent=39 // pred_check
        %p228 = pneg %p33
      $region42: #{simple_cnn_forward.1} parent=39 // pred_check_branch
        %230 = sbr.rel (%p228) target = $region44
      $region43: #{simple_cnn_forward.1} parent=39 // pred_region
        %p231 = scmp.lt.s32.totalorder %s13, 1
        %s232 = scalar_select %p231, %s13, 1
        %s233 = smul.addr %s232, 32
        %s234 = smul.addr %s233, 4
        %s235 = scalar_lea.vmem %s0, %s234
      $region44: #{simple_cnn_forward.1} parent=39 // pred_fallthru
        _
    $region40: #{simple_cnn_forward.1} parent=5 // pred_fallthru
      _
    %p236 = scmp.le.s32.totalorder 1, %s13
    %p237 = scmp.lt.s32.totalorder %s13, 3
    %p238 = pnand %p236, %p237
    %p239 = pneg %p238
    // Predicated region
    $region45: #{simple_cnn_forward.1} parent=5 // pred_check
      _
    $region46: #{simple_cnn_forward.1} parent=5 // pred_check_branch
      %241 = sbr.rel (%p238) target = $region48
    $region47: #{simple_cnn_forward.1} parent=5 // pred_region
      %s242 = ssub.s32 %s13, 1
      %p243 = scmp.lt.s32.totalorder %s18, 1
      %s244 = scalar_select %p243, %s18, 1
      %s245 = smul.addr %s244, 32
      %s246 = smul.addr %s245, 4
      %s247 = scalar_lea.vmem %s0, %s246
      %p248 = pneg %p39
      %p249 = pneg %p36
      %p250 = pneg %p60
      %p251 = pneg %p57
      %p252 = pneg %p81
      %p253 = pneg %p78
      %p254 = pneg %p102
      %p255 = pneg %p99
      %p256 = pneg %p123
      %p257 = pneg %p120
      %p258 = pneg %p144
      %p259 = pneg %p141
      %p260 = pneg %p165
      %p261 = pneg %p162
      %p262 = pneg %p191
      %p263 = pneg %p188
      %p264 = scmp.lt.s32.totalorder %s18, 1
      %s265 = scalar_select %p264, %s18, 1
      %s266 = smul.addr %s265, 32
      %s267 = smul.addr %s266, 8
      %s268 = scalar_lea.vmem %s7, %s267
      %p269 = scmp.lt.s32.totalorder %s18, 1
      %s270 = scalar_select %p269, %s18, 1
      %s271 = smul.addr %s270, 32
      %s272 = smul.addr %s271, 4
      %s273 = scalar_lea.vmem %s0, %s272
      %p274 = scmp.lt.s32.totalorder %s18, 1
      %s275 = scalar_select %p274, %s18, 1
      %s276 = smul.addr %s275, 32
      %s277 = smul.addr %s276, 8
      %s278 = scalar_lea.vmem %s7, %s277
      %vm280 = vcmask 125952
      %281 = vst.msk [vmem:[#allocation2] sm:$0xf] %vm280, 0
      %282 = vst.msk [vmem:[#allocation2 + $0x4] sm:$0xf] %vm280, 0
      %vm283 = vcmask 122880
      %284 = vst.msk [vmem:[#allocation2 + $0x8] sm:$0x1] %vm283, 0
      %285 = vst.msk [vmem:[#allocation2 + $0xc] sm:$0xf] %vm280, 0
      %286 = vst.msk [vmem:[#allocation2 + $0x10] sm:$0xf] %vm280, 0
      %287 = vst.msk [vmem:[#allocation2 + $0x14] sm:$0x1] %vm283, 0
      %288 = vst.msk [vmem:[#allocation2 + $0x18] sm:$0xf] %vm280, 0
      %289 = vst.msk [vmem:[#allocation2 + $0x1c] sm:$0xf] %vm280, 0
      %290 = vst.msk [vmem:[#allocation2 + $0x20] sm:$0x1] %vm283, 0
      %291 = vst.msk [vmem:[#allocation2 + $0x24] sm:$0xf] %vm280, 0
      %292 = vst.msk [vmem:[#allocation2 + $0x28] sm:$0xf] %vm280, 0
      %293 = vst.msk [vmem:[#allocation2 + $0x2c] sm:$0x1] %vm283, 0
      %294 = vst.msk [vmem:[#allocation2 + $0x30] sm:$0xf] %vm280, 0
      %295 = vst.msk [vmem:[#allocation2 + $0x34] sm:$0xf] %vm280, 0
      %296 = vst.msk [vmem:[#allocation2 + $0x38] sm:$0x1] %vm283, 0
      %297 = vst.msk [vmem:[#allocation2 + $0x3c] sm:$0xf] %vm280, 0
      %298 = vst.msk [vmem:[#allocation2 + $0x40] sm:$0xf] %vm280, 0
      %299 = vst.msk [vmem:[#allocation2 + $0x44] sm:$0x1] %vm283, 0
      %300 = vst.msk [vmem:[#allocation2 + $0x48] sm:$0xf] %vm280, 0
      %301 = vst.msk [vmem:[#allocation2 + $0x4c] sm:$0xf] %vm280, 0
      %302 = vst.msk [vmem:[#allocation2 + $0x50] sm:$0x1] %vm283, 0
      %303 = vst.msk [vmem:[#allocation2 + $0x54] sm:$0xf] %vm280, 0
      %304 = vst.msk [vmem:[#allocation2 + $0x58] sm:$0xf] %vm280, 0
      %305 = vst.msk [vmem:[#allocation2 + $0x5c] sm:$0x1] %vm283, 0
      %306 = vst.msk [vmem:[#allocation2 + $0x60] sm:$0xf] %vm280, 0
      %307 = vst.msk [vmem:[#allocation2 + $0x64] sm:$0xf] %vm280, 0
      %308 = vst.msk [vmem:[#allocation2 + $0x68] sm:$0x1] %vm283, 0
      %309 = vst.msk [vmem:[#allocation2 + $0x6c] sm:$0xf] %vm280, 0
      %310 = vst.msk [vmem:[#allocation2 + $0x70] sm:$0xf] %vm280, 0
      %311 = vst.msk [vmem:[#allocation2 + $0x74] sm:$0x1] %vm283, 0
      %312 = vst.msk [vmem:[#allocation2 + $0x78] sm:$0xf] %vm280, 0
      %313 = vst.msk [vmem:[#allocation2 + $0x7c] sm:$0xf] %vm280, 0
      %314 = vst.msk [vmem:[#allocation2 + $0x80] sm:$0x1] %vm283, 0
      %315 = vst.msk [vmem:[#allocation2 + $0x84] sm:$0xf] %vm280, 0
      %316 = vst.msk [vmem:[#allocation2 + $0x88] sm:$0xf] %vm280, 0
      %317 = vst.msk [vmem:[#allocation2 + $0x8c] sm:$0x1] %vm283, 0
      %318 = vst.msk [vmem:[#allocation2 + $0x90] sm:$0xf] %vm280, 0
      %319 = vst.msk [vmem:[#allocation2 + $0x94] sm:$0xf] %vm280, 0
      %320 = vst.msk [vmem:[#allocation2 + $0x98] sm:$0x1] %vm283, 0
      %321 = vst.msk [vmem:[#allocation2 + $0x9c] sm:$0xf] %vm280, 0
      %322 = vst.msk [vmem:[#allocation2 + $0xa0] sm:$0xf] %vm280, 0
      %323 = vst.msk [vmem:[#allocation2 + $0xa4] sm:$0x1] %vm283, 0
      %324 = vst.msk [vmem:[#allocation2 + $0xa8] sm:$0xf] %vm280, 0
      %325 = vst.msk [vmem:[#allocation2 + $0xac] sm:$0xf] %vm280, 0
      %326 = vst.msk [vmem:[#allocation2 + $0xb0] sm:$0x1] %vm283, 0
      %327 = vst.msk [vmem:[#allocation2 + $0xb4] sm:$0xf] %vm280, 0
      %328 = vst.msk [vmem:[#allocation2 + $0xb8] sm:$0xf] %vm280, 0
      %329 = vst.msk [vmem:[#allocation2 + $0xbc] sm:$0x1] %vm283, 0
      %330 = vst.msk [vmem:[#allocation2 + $0xc0] sm:$0xf] %vm280, 0
      %331 = vst.msk [vmem:[#allocation2 + $0xc4] sm:$0xf] %vm280, 0
      %332 = vst.msk [vmem:[#allocation2 + $0xc8] sm:$0x1] %vm283, 0
      %333 = vst.msk [vmem:[#allocation2 + $0xcc] sm:$0xf] %vm280, 0
      %334 = vst.msk [vmem:[#allocation2 + $0xd0] sm:$0xf] %vm280, 0
      %335 = vst.msk [vmem:[#allocation2 + $0xd4] sm:$0x1] %vm283, 0
      %vm336 = vcmask 519168
      %337 = vst.msk [vmem:[#allocation3] sm:$0xf] %vm336, 0
      %338 = vst.msk [vmem:[#allocation3 + $0x4] sm:$0xf] %vm336, 0
      %vm339 = vcmask 516096
      %340 = vst.msk [vmem:[#allocation3 + $0x8] sm:$0x1] %vm339, 0
      %341 = vst.msk [vmem:[#allocation3 + $0xc] sm:$0xf] %vm336, 0
      %342 = vst.msk [vmem:[#allocation3 + $0x10] sm:$0xf] %vm336, 0
      %343 = vst.msk [vmem:[#allocation3 + $0x14] sm:$0x1] %vm339, 0
      %344 = vst.msk [vmem:[#allocation3 + $0x18] sm:$0xf] %vm336, 0
      %345 = vst.msk [vmem:[#allocation3 + $0x1c] sm:$0xf] %vm336, 0
      %346 = vst.msk [vmem:[#allocation3 + $0x20] sm:$0x1] %vm339, 0
      %347 = vst.msk [vmem:[#allocation3 + $0x24] sm:$0xf] %vm336, 0
      %348 = vst.msk [vmem:[#allocation3 + $0x28] sm:$0xf] %vm336, 0
      %349 = vst.msk [vmem:[#allocation3 + $0x2c] sm:$0x1] %vm339, 0
      %350 = vst.msk [vmem:[#allocation3 + $0x30] sm:$0xf] %vm336, 0
      %351 = vst.msk [vmem:[#allocation3 + $0x34] sm:$0xf] %vm336, 0
      %352 = vst.msk [vmem:[#allocation3 + $0x38] sm:$0x1] %vm339, 0
      %353 = vst.msk [vmem:[#allocation3 + $0x3c] sm:$0xf] %vm336, 0
      %354 = vst.msk [vmem:[#allocation3 + $0x40] sm:$0xf] %vm336, 0
      %355 = vst.msk [vmem:[#allocation3 + $0x44] sm:$0x1] %vm339, 0
      %356 = vst.msk [vmem:[#allocation3 + $0x48] sm:$0xf] %vm336, 0
      %357 = vst.msk [vmem:[#allocation3 + $0x4c] sm:$0xf] %vm336, 0
      %358 = vst.msk [vmem:[#allocation3 + $0x50] sm:$0x1] %vm339, 0
      %359 = vst.msk [vmem:[#allocation3 + $0x54] sm:$0xf] %vm336, 0
      %360 = vst.msk [vmem:[#allocation3 + $0x58] sm:$0xf] %vm336, 0
      %361 = vst.msk [vmem:[#allocation3 + $0x5c] sm:$0x1] %vm339, 0
      %362 = vst.msk [vmem:[#allocation3 + $0x60] sm:$0xf] %vm336, 0
      %363 = vst.msk [vmem:[#allocation3 + $0x64] sm:$0xf] %vm336, 0
      %364 = vst.msk [vmem:[#allocation3 + $0x68] sm:$0x1] %vm339, 0
      %365 = vst.msk [vmem:[#allocation3 + $0x6c] sm:$0xf] %vm336, 0
      %366 = vst.msk [vmem:[#allocation3 + $0x70] sm:$0xf] %vm336, 0
      %367 = vst.msk [vmem:[#allocation3 + $0x74] sm:$0x1] %vm339, 0
      %368 = vst.msk [vmem:[#allocation3 + $0x78] sm:$0xf] %vm336, 0
      %369 = vst.msk [vmem:[#allocation3 + $0x7c] sm:$0xf] %vm336, 0
      %370 = vst.msk [vmem:[#allocation3 + $0x80] sm:$0x1] %vm339, 0
      %371 = vst.msk [vmem:[#allocation3 + $0x84] sm:$0xf] %vm336, 0
      %372 = vst.msk [vmem:[#allocation3 + $0x88] sm:$0xf] %vm336, 0
      %373 = vst.msk [vmem:[#allocation3 + $0x8c] sm:$0x1] %vm339, 0
      %374 = vst.msk [vmem:[#allocation3 + $0x90] sm:$0xf] %vm336, 0
      %375 = vst.msk [vmem:[#allocation3 + $0x94] sm:$0xf] %vm336, 0
      %376 = vst.msk [vmem:[#allocation3 + $0x98] sm:$0x1] %vm339, 0
      %377 = vst.msk [vmem:[#allocation3 + $0x9c] sm:$0xf] %vm336, 0
      %378 = vst.msk [vmem:[#allocation3 + $0xa0] sm:$0xf] %vm336, 0
      %379 = vst.msk [vmem:[#allocation3 + $0xa4] sm:$0x1] %vm339, 0
      %380 = vst.msk [vmem:[#allocation3 + $0xa8] sm:$0xf] %vm336, 0
      %381 = vst.msk [vmem:[#allocation3 + $0xac] sm:$0xf] %vm336, 0
      %382 = vst.msk [vmem:[#allocation3 + $0xb0] sm:$0x1] %vm339, 0
      %383 = vst.msk [vmem:[#allocation3 + $0xb4] sm:$0xf] %vm336, 0
      %384 = vst.msk [vmem:[#allocation3 + $0xb8] sm:$0xf] %vm336, 0
      %385 = vst.msk [vmem:[#allocation3 + $0xbc] sm:$0x1] %vm339, 0
      %386 = vst.msk [vmem:[#allocation3 + $0xc0] sm:$0xf] %vm336, 0
      %387 = vst.msk [vmem:[#allocation3 + $0xc4] sm:$0xf] %vm336, 0
      %388 = vst.msk [vmem:[#allocation3 + $0xc8] sm:$0x1] %vm339, 0
      %389 = vst.msk [vmem:[#allocation3 + $0xcc] sm:$0xf] %vm336, 0
      %390 = vst.msk [vmem:[#allocation3 + $0xd0] sm:$0xf] %vm336, 0
      %391 = vst.msk [vmem:[#allocation3 + $0xd4] sm:$0x1] %vm339, 0
      %v392 = vld [vmem:[%s273] sm:$0xf]
      %v393 = vld [vmem:[%s273 + $0x4] sm:$0xf]
      %v394 = vld [vmem:[%s273 + $0x8] sm:$0xf]
      %v395 = vld [vmem:[%s273 + $0xc] sm:$0xf]
      %v396 = vld [vmem:[%s273 + $0x10] sm:$0xf]
      %v397 = vld [vmem:[%s273 + $0x14] sm:$0xf]
      %v398 = vld [vmem:[%s273 + $0x18] sm:$0xf]
      %v399 = vld [vmem:[%s273 + $0x1c] sm:$0xf]
      %v400 = vld [vmem:[%s273 + $0x20] sm:$0xf]
      %v401 = vld [vmem:[%s273 + $0x24] sm:$0xf]
      %v402 = vld [vmem:[%s273 + $0x28] sm:$0xf]
      %v403 = vld [vmem:[%s273 + $0x2c] sm:$0xf]
      %v404 = vld [vmem:[%s273 + $0x30] sm:$0xf]
      %v405 = vld [vmem:[%s273 + $0x34] sm:$0xf]
      %v406 = vld [vmem:[%s273 + $0x38] sm:$0xf]
      %v407 = vld [vmem:[%s273 + $0x3c] sm:$0xf]
      %v408 = vld [vmem:[%s273 + $0x40] sm:$0xf]
      %v409 = vld [vmem:[%s273 + $0x44] sm:$0xf]
      %v410 = vld [vmem:[%s273 + $0x48] sm:$0xf]
      %v411 = vld [vmem:[%s273 + $0x4c] sm:$0xf]
      %v412 = vld [vmem:[%s273 + $0x50] sm:$0xf]
      %v413 = vld [vmem:[%s273 + $0x54] sm:$0xf]
      %v414 = vld [vmem:[%s273 + $0x58] sm:$0xf]
      %v415 = vld [vmem:[%s273 + $0x5c] sm:$0xf]
      %v416 = vld [vmem:[%s273 + $0x60] sm:$0xf]
      %v417 = vld [vmem:[%s273 + $0x64] sm:$0xf]
      %v418 = vld [vmem:[%s273 + $0x68] sm:$0xf]
      %v419 = vld [vmem:[%s273 + $0x6c] sm:$0xf]
      %v420 = vld [vmem:[%s273 + $0x70] sm:$0xf]
      %v421 = vld [vmem:[%s273 + $0x74] sm:$0xf]
      %v422 = vld [vmem:[%s273 + $0x78] sm:$0xf]
      %v423 = vld [vmem:[%s273 + $0x7c] sm:$0xf]
      %vm424 = vsmask.f32 256
      %vm425 = vsmask.f32 4368
      %vm426 = vmor %vm424, %vm425
      %v428 = vshrl.u32 %v392, 16
      %v430 = vrot.slane %v428, 7
      %v431 = vshll.u32 %v392, 16
      %v433 = vor.u32 %v430, %v431
      %v434 = vrot.slane %v430, 4
      %v436 = vshrl.u32 %v393, 16
      %v438 = vrot.slane %v436, 7
      %v439 = vshll.u32 %v393, 16
      %v441 = vor.u32 %v438, %v439
      %v442 = vsel %vm426, %v434, %v441
      %v443 = vrot.slane %v438, 4
      %v445 = vshrl.u32 %v394, 16
      %v447 = vrot.slane %v445, 7
      %v448 = vshll.u32 %v394, 16
      %v450 = vor.u32 %v447, %v448
      %v451 = vrot.slane %v447, 4
      %v453 = vshrl.u32 %v395, 16
      %v455 = vrot.slane %v453, 7
      %v456 = vshll.u32 %v395, 16
      %v458 = vor.u32 %v455, %v456
      %v459 = vsel %vm426, %v451, %v458
      %v460 = vrot.slane %v455, 4
      %v462 = vshrl.u32 %v396, 16
      %v464 = vrot.slane %v462, 7
      %v465 = vshll.u32 %v396, 16
      %v467 = vor.u32 %v464, %v465
      %v468 = vrot.slane %v464, 4
      %v470 = vshrl.u32 %v397, 16
      %v472 = vrot.slane %v470, 7
      %v473 = vshll.u32 %v397, 16
      %v475 = vor.u32 %v472, %v473
      %v476 = vsel %vm426, %v468, %v475
      %v477 = vrot.slane %v472, 4
      %v479 = vshrl.u32 %v398, 16
      %v481 = vrot.slane %v479, 7
      %v482 = vshll.u32 %v398, 16
      %v484 = vor.u32 %v481, %v482
      %v485 = vrot.slane %v481, 4
      %v487 = vshrl.u32 %v399, 16
      %v489 = vrot.slane %v487, 7
      %v490 = vshll.u32 %v399, 16
      %v492 = vor.u32 %v489, %v490
      %v493 = vsel %vm426, %v485, %v492
      %v494 = vrot.slane %v489, 4
      %v496 = vshrl.u32 %v400, 16
      %v498 = vrot.slane %v496, 7
      %v499 = vshll.u32 %v400, 16
      %v501 = vor.u32 %v498, %v499
      %v502 = vrot.slane %v498, 4
      %v504 = vshrl.u32 %v401, 16
      %v506 = vrot.slane %v504, 7
      %v507 = vshll.u32 %v401, 16
      %v509 = vor.u32 %v506, %v507
      %v510 = vsel %vm426, %v502, %v509
      %v511 = vrot.slane %v506, 4
      %v513 = vshrl.u32 %v402, 16
      %v515 = vrot.slane %v513, 7
      %v516 = vshll.u32 %v402, 16
      %v518 = vor.u32 %v515, %v516
      %v519 = vrot.slane %v515, 4
      %v521 = vshrl.u32 %v403, 16
      %v523 = vrot.slane %v521, 7
      %v524 = vshll.u32 %v403, 16
      %v526 = vor.u32 %v523, %v524
      %v527 = vsel %vm426, %v519, %v526
      %v528 = vrot.slane %v523, 4
      %v530 = vshrl.u32 %v404, 16
      %v532 = vrot.slane %v530, 7
      %v533 = vshll.u32 %v404, 16
      %v535 = vor.u32 %v532, %v533
      %v536 = vrot.slane %v532, 4
      %v538 = vshrl.u32 %v405, 16
      %v540 = vrot.slane %v538, 7
      %v541 = vshll.u32 %v405, 16
      %v543 = vor.u32 %v540, %v541
      %v544 = vsel %vm426, %v536, %v543
      %v545 = vrot.slane %v540, 4
      %v547 = vshrl.u32 %v406, 16
      %v549 = vrot.slane %v547, 7
      %v550 = vshll.u32 %v406, 16
      %v552 = vor.u32 %v549, %v550
      %v553 = vrot.slane %v549, 4
      %v555 = vshrl.u32 %v407, 16
      %v557 = vrot.slane %v555, 7
      %v558 = vshll.u32 %v407, 16
      %v560 = vor.u32 %v557, %v558
      %v561 = vsel %vm426, %v553, %v560
      %v562 = vrot.slane %v557, 4
      %v564 = vshrl.u32 %v408, 16
      %v566 = vrot.slane %v564, 7
      %v567 = vshll.u32 %v408, 16
      %v569 = vor.u32 %v566, %v567
      %v570 = vrot.slane %v566, 4
      %v572 = vshrl.u32 %v409, 16
      %v574 = vrot.slane %v572, 7
      %v575 = vshll.u32 %v409, 16
      %v577 = vor.u32 %v574, %v575
      %v578 = vsel %vm426, %v570, %v577
      %v579 = vrot.slane %v574, 4
      %v581 = vshrl.u32 %v410, 16
      %v583 = vrot.slane %v581, 7
      %v584 = vshll.u32 %v410, 16
      %v586 = vor.u32 %v583, %v584
      %v587 = vrot.slane %v583, 4
      %v589 = vshrl.u32 %v411, 16
      %v591 = vrot.slane %v589, 7
      %v592 = vshll.u32 %v411, 16
      %v594 = vor.u32 %v591, %v592
      %v595 = vsel %vm426, %v587, %v594
      %v596 = vrot.slane %v591, 4
      %v598 = vshrl.u32 %v412, 16
      %v600 = vrot.slane %v598, 7
      %v601 = vshll.u32 %v412, 16
      %v603 = vor.u32 %v600, %v601
      %v604 = vrot.slane %v600, 4
      %v606 = vshrl.u32 %v413, 16
      %v608 = vrot.slane %v606, 7
      %v609 = vshll.u32 %v413, 16
      %v611 = vor.u32 %v608, %v609
      %v612 = vsel %vm426, %v604, %v611
      %v613 = vrot.slane %v608, 4
      %v615 = vshrl.u32 %v414, 16
      %v617 = vrot.slane %v615, 7
      %v618 = vshll.u32 %v414, 16
      %v620 = vor.u32 %v617, %v618
      %v621 = vrot.slane %v617, 4
      %v623 = vshrl.u32 %v415, 16
      %v625 = vrot.slane %v623, 7
      %v626 = vshll.u32 %v415, 16
      %v628 = vor.u32 %v625, %v626
      %v629 = vsel %vm426, %v621, %v628
      %v630 = vrot.slane %v625, 4
      %v632 = vshrl.u32 %v416, 16
      %v634 = vrot.slane %v632, 7
      %v635 = vshll.u32 %v416, 16
      %v637 = vor.u32 %v634, %v635
      %v638 = vrot.slane %v634, 4
      %v640 = vshrl.u32 %v417, 16
      %v642 = vrot.slane %v640, 7
      %v643 = vshll.u32 %v417, 16
      %v645 = vor.u32 %v642, %v643
      %v646 = vsel %vm426, %v638, %v645
      %v647 = vrot.slane %v642, 4
      %v649 = vshrl.u32 %v418, 16
      %v651 = vrot.slane %v649, 7
      %v652 = vshll.u32 %v418, 16
      %v654 = vor.u32 %v651, %v652
      %v655 = vrot.slane %v651, 4
      %v657 = vshrl.u32 %v419, 16
      %v659 = vrot.slane %v657, 7
      %v660 = vshll.u32 %v419, 16
      %v662 = vor.u32 %v659, %v660
      %v663 = vsel %vm426, %v655, %v662
      %v664 = vrot.slane %v659, 4
      %v666 = vshrl.u32 %v420, 16
      %v668 = vrot.slane %v666, 7
      %v669 = vshll.u32 %v420, 16
      %v671 = vor.u32 %v668, %v669
      %v672 = vrot.slane %v668, 4
      %v674 = vshrl.u32 %v421, 16
      %v676 = vrot.slane %v674, 7
      %v677 = vshll.u32 %v421, 16
      %v679 = vor.u32 %v676, %v677
      %v680 = vsel %vm426, %v672, %v679
      %v681 = vrot.slane %v676, 4
      %v683 = vshrl.u32 %v422, 16
      %v685 = vrot.slane %v683, 7
      %v686 = vshll.u32 %v422, 16
      %v688 = vor.u32 %v685, %v686
      %v689 = vrot.slane %v685, 4
      %v691 = vshrl.u32 %v423, 16
      %v693 = vrot.slane %v691, 7
      %v694 = vshll.u32 %v423, 16
      %v696 = vor.u32 %v693, %v694
      %v697 = vsel %vm426, %v689, %v696
      %v698 = vrot.slane %v693, 4
      %s747 = scalar_lea.vmem [#allocation2], 12
      %vm748 = vcmask 125952
      %vm749 = vsmask.f32 7938
      %vm750 = vmand %vm748, %vm749
      %v751 = vld [vmem:[%s747] sm:$0xf]
      %v752 = vsel %vm750, %v433, %v751
      %753 = vst [vmem:[%s747] sm:$0xf] %v752
      %754 = vst.msk [vmem:[%s747 + $0x4] sm:$0xf] %vm280, %v442
      %vm755 = vcmask 122880
      %vm756 = vmand %vm755, %vm424
      %v757 = vld [vmem:[%s747 + $0x8] sm:$0x1]
      %v758 = vsel %vm756, %v443, %v757
      %759 = vst [vmem:[%s747 + $0x8] sm:$0x1] %v758
      %v760 = vld [vmem:[%s747 + $0xc] sm:$0xf]
      %v761 = vsel %vm750, %v450, %v760
      %762 = vst [vmem:[%s747 + $0xc] sm:$0xf] %v761
      %763 = vst.msk [vmem:[%s747 + $0x10] sm:$0xf] %vm280, %v459
      %v764 = vld [vmem:[%s747 + $0x14] sm:$0x1]
      %v765 = vsel %vm756, %v460, %v764
      %766 = vst [vmem:[%s747 + $0x14] sm:$0x1] %v765
      %v767 = vld [vmem:[%s747 + $0x18] sm:$0xf]
      %v768 = vsel %vm750, %v467, %v767
      %769 = vst [vmem:[%s747 + $0x18] sm:$0xf] %v768
      %770 = vst.msk [vmem:[%s747 + $0x1c] sm:$0xf] %vm280, %v476
      %v771 = vld [vmem:[%s747 + $0x20] sm:$0x1]
      %v772 = vsel %vm756, %v477, %v771
      %773 = vst [vmem:[%s747 + $0x20] sm:$0x1] %v772
      %v774 = vld [vmem:[%s747 + $0x24] sm:$0xf]
      %v775 = vsel %vm750, %v484, %v774
      %776 = vst [vmem:[%s747 + $0x24] sm:$0xf] %v775
      %777 = vst.msk [vmem:[%s747 + $0x28] sm:$0xf] %vm280, %v493
      %v778 = vld [vmem:[%s747 + $0x2c] sm:$0x1]
      %v779 = vsel %vm756, %v494, %v778
      %780 = vst [vmem:[%s747 + $0x2c] sm:$0x1] %v779
      %v781 = vld [vmem:[%s747 + $0x30] sm:$0xf]
      %v782 = vsel %vm750, %v501, %v781
      %783 = vst [vmem:[%s747 + $0x30] sm:$0xf] %v782
      %784 = vst.msk [vmem:[%s747 + $0x34] sm:$0xf] %vm280, %v510
      %v785 = vld [vmem:[%s747 + $0x38] sm:$0x1]
      %v786 = vsel %vm756, %v511, %v785
      %787 = vst [vmem:[%s747 + $0x38] sm:$0x1] %v786
      %v788 = vld [vmem:[%s747 + $0x3c] sm:$0xf]
      %v789 = vsel %vm750, %v518, %v788
      %790 = vst [vmem:[%s747 + $0x3c] sm:$0xf] %v789
      %791 = vst.msk [vmem:[%s747 + $0x40] sm:$0xf] %vm280, %v527
      %v792 = vld [vmem:[%s747 + $0x44] sm:$0x1]
      %v793 = vsel %vm756, %v528, %v792
      %794 = vst [vmem:[%s747 + $0x44] sm:$0x1] %v793
      %v795 = vld [vmem:[%s747 + $0x48] sm:$0xf]
      %v796 = vsel %vm750, %v535, %v795
      %797 = vst [vmem:[%s747 + $0x48] sm:$0xf] %v796
      %798 = vst.msk [vmem:[%s747 + $0x4c] sm:$0xf] %vm280, %v544
      %v799 = vld [vmem:[%s747 + $0x50] sm:$0x1]
      %v800 = vsel %vm756, %v545, %v799
      %801 = vst [vmem:[%s747 + $0x50] sm:$0x1] %v800
      %v802 = vld [vmem:[%s747 + $0x54] sm:$0xf]
      %v803 = vsel %vm750, %v552, %v802
      %804 = vst [vmem:[%s747 + $0x54] sm:$0xf] %v803
      %805 = vst.msk [vmem:[%s747 + $0x58] sm:$0xf] %vm280, %v561
      %v806 = vld [vmem:[%s747 + $0x5c] sm:$0x1]
      %v807 = vsel %vm756, %v562, %v806
      %808 = vst [vmem:[%s747 + $0x5c] sm:$0x1] %v807
      %v809 = vld [vmem:[%s747 + $0x60] sm:$0xf]
      %v810 = vsel %vm750, %v569, %v809
      %811 = vst [vmem:[%s747 + $0x60] sm:$0xf] %v810
      %812 = vst.msk [vmem:[%s747 + $0x64] sm:$0xf] %vm280, %v578
      %v813 = vld [vmem:[%s747 + $0x68] sm:$0x1]
      %v814 = vsel %vm756, %v579, %v813
      %815 = vst [vmem:[%s747 + $0x68] sm:$0x1] %v814
      %v816 = vld [vmem:[%s747 + $0x6c] sm:$0xf]
      %v817 = vsel %vm750, %v586, %v816
      %818 = vst [vmem:[%s747 + $0x6c] sm:$0xf] %v817
      %819 = vst.msk [vmem:[%s747 + $0x70] sm:$0xf] %vm280, %v595
      %v820 = vld [vmem:[%s747 + $0x74] sm:$0x1]
      %v821 = vsel %vm756, %v596, %v820
      %822 = vst [vmem:[%s747 + $0x74] sm:$0x1] %v821
      %v823 = vld [vmem:[%s747 + $0x78] sm:$0xf]
      %v824 = vsel %vm750, %v603, %v823
      %825 = vst [vmem:[%s747 + $0x78] sm:$0xf] %v824
      %826 = vst.msk [vmem:[%s747 + $0x7c] sm:$0xf] %vm280, %v612
      %v827 = vld [vmem:[%s747 + $0x80] sm:$0x1]
      %v828 = vsel %vm756, %v613, %v827
      %829 = vst [vmem:[%s747 + $0x80] sm:$0x1] %v828
      %v830 = vld [vmem:[%s747 + $0x84] sm:$0xf]
      %v831 = vsel %vm750, %v620, %v830
      %832 = vst [vmem:[%s747 + $0x84] sm:$0xf] %v831
      %833 = vst.msk [vmem:[%s747 + $0x88] sm:$0xf] %vm280, %v629
      %v834 = vld [vmem:[%s747 + $0x8c] sm:$0x1]
      %v835 = vsel %vm756, %v630, %v834
      %836 = vst [vmem:[%s747 + $0x8c] sm:$0x1] %v835
      %v837 = vld [vmem:[%s747 + $0x90] sm:$0xf]
      %v838 = vsel %vm750, %v637, %v837
      %839 = vst [vmem:[%s747 + $0x90] sm:$0xf] %v838
      %840 = vst.msk [vmem:[%s747 + $0x94] sm:$0xf] %vm280, %v646
      %v841 = vld [vmem:[%s747 + $0x98] sm:$0x1]
      %v842 = vsel %vm756, %v647, %v841
      %843 = vst [vmem:[%s747 + $0x98] sm:$0x1] %v842
      %v844 = vld [vmem:[%s747 + $0x9c] sm:$0xf]
      %v845 = vsel %vm750, %v654, %v844
      %846 = vst [vmem:[%s747 + $0x9c] sm:$0xf] %v845
      %847 = vst.msk [vmem:[%s747 + $0xa0] sm:$0xf] %vm280, %v663
      %v848 = vld [vmem:[%s747 + $0xa4] sm:$0x1]
      %v849 = vsel %vm756, %v664, %v848
      %850 = vst [vmem:[%s747 + $0xa4] sm:$0x1] %v849
      %v851 = vld [vmem:[%s747 + $0xa8] sm:$0xf]
      %v852 = vsel %vm750, %v671, %v851
      %853 = vst [vmem:[%s747 + $0xa8] sm:$0xf] %v852
      %854 = vst.msk [vmem:[%s747 + $0xac] sm:$0xf] %vm280, %v680
      %v855 = vld [vmem:[%s747 + $0xb0] sm:$0x1]
      %v856 = vsel %vm756, %v681, %v855
      %857 = vst [vmem:[%s747 + $0xb0] sm:$0x1] %v856
      %v858 = vld [vmem:[%s747 + $0xb4] sm:$0xf]
      %v859 = vsel %vm750, %v688, %v858
      %860 = vst [vmem:[%s747 + $0xb4] sm:$0xf] %v859
      %861 = vst.msk [vmem:[%s747 + $0xb8] sm:$0xf] %vm280, %v697
      %v862 = vld [vmem:[%s747 + $0xbc] sm:$0x1]
      %v863 = vsel %vm756, %v698, %v862
      %864 = vst [vmem:[%s747 + $0xbc] sm:$0x1] %v863
      %v865 = vld [vmem:[#allocation2] sm:$0xf]
      %v866 = vld [vmem:[#allocation2 + $0x4] sm:$0xf]
      %v867 = vld [vmem:[#allocation2 + $0xc] sm:$0xf]
      %v868 = vld [vmem:[#allocation2 + $0x10] sm:$0xf]
      %v869 = vld [vmem:[#allocation2 + $0x18] sm:$0xf]
      %v870 = vld [vmem:[#allocation2 + $0x1c] sm:$0xf]
      %v871 = vld [vmem:[#allocation2 + $0x24] sm:$0xf]
      %v872 = vld [vmem:[#allocation2 + $0x28] sm:$0xf]
      %v873 = vld [vmem:[#allocation2 + $0x30] sm:$0xf]
      %v874 = vld [vmem:[#allocation2 + $0x34] sm:$0xf]
      %v875 = vld [vmem:[#allocation2 + $0x3c] sm:$0xf]
      %v876 = vld [vmem:[#allocation2 + $0x40] sm:$0xf]
      %v877 = vld [vmem:[#allocation2 + $0x48] sm:$0xf]
      %v878 = vld [vmem:[#allocation2 + $0x4c] sm:$0xf]
      %v879 = vld [vmem:[#allocation2 + $0x54] sm:$0xf]
      %v880 = vld [vmem:[#allocation2 + $0x58] sm:$0xf]
      %v881 = vld [vmem:[#allocation2 + $0x60] sm:$0xf]
      %v882 = vld [vmem:[#allocation2 + $0x64] sm:$0xf]
      %v883 = vld [vmem:[#allocation2 + $0x6c] sm:$0xf]
      %v884 = vld [vmem:[#allocation2 + $0x70] sm:$0xf]
      %v885 = vld [vmem:[#allocation2 + $0x78] sm:$0xf]
      %v886 = vld [vmem:[#allocation2 + $0x7c] sm:$0xf]
      %v887 = vld [vmem:[#allocation2 + $0x84] sm:$0xf]
      %v888 = vld [vmem:[#allocation2 + $0x88] sm:$0xf]
      %v889 = vld [vmem:[#allocation2 + $0x90] sm:$0xf]
      %v890 = vld [vmem:[#allocation2 + $0x94] sm:$0xf]
      %v891 = vld [vmem:[#allocation2 + $0x9c] sm:$0xf]
      %v892 = vld [vmem:[#allocation2 + $0xa0] sm:$0xf]
      %v893 = vld [vmem:[#allocation2 + $0xa8] sm:$0xf]
      %v894 = vld [vmem:[#allocation2 + $0xac] sm:$0xf]
      %v895 = vld [vmem:[#allocation2 + $0xb4] sm:$0xf]
      %v896 = vld [vmem:[#allocation2 + $0xb8] sm:$0xf]
      %v897 = vld [vmem:[%s1] sm:$0xf]
      %v898 = vld [vmem:[%s1 + $0x4] sm:$0xf]
      %v899 = vld [vmem:[#allocation2 + $0x8] sm:$0x1]
      %v900 = vld [vmem:[#allocation2 + $0x14] sm:$0x1]
      %v901 = vld [vmem:[#allocation2 + $0x20] sm:$0x1]
      %v902 = vld [vmem:[#allocation2 + $0x2c] sm:$0x1]
      %v903 = vld [vmem:[#allocation2 + $0x38] sm:$0x1]
      %v904 = vld [vmem:[#allocation2 + $0x44] sm:$0x1]
      %v905 = vld [vmem:[#allocation2 + $0x50] sm:$0x1]
      %v906 = vld [vmem:[#allocation2 + $0x5c] sm:$0x1]
      %v907 = vld [vmem:[#allocation2 + $0x68] sm:$0x1]
      %v908 = vld [vmem:[#allocation2 + $0x74] sm:$0x1]
      %v909 = vld [vmem:[#allocation2 + $0x80] sm:$0x1]
      %v910 = vld [vmem:[#allocation2 + $0x8c] sm:$0x1]
      %v911 = vld [vmem:[#allocation2 + $0x98] sm:$0x1]
      %v912 = vld [vmem:[#allocation2 + $0xa4] sm:$0x1]
      %v913 = vld [vmem:[#allocation2 + $0xb0] sm:$0x1]
      %v914 = vld [vmem:[#allocation2 + $0xbc] sm:$0x1]
      %vm915 = vsmask.f32 3328
      %vm916 = vsmask.f32 7440
      %vm917 = vmor %vm915, %vm916
      %v919 = vshrl.u32 %v865, 16
      %v921 = vrot.slane %v919, 4
      %v922 = vshll.u32 %v865, 16
      %v924 = vrot.slane %v922, 5
      %v925 = vor.u32 %v921, %v924
      %v926 = vrot.slane %v925, 4
      %v928 = vshll.u32 %v866, 16
      %v930 = vrot.slane %v928, 5
      %v931 = vsel %vm917, %v926, %v930
      %v932 = vshrl.u32 %v866, 16
      %v934 = vrot.slane %v932, 4
      %v935 = vor.u32 %v934, %v930
      %v936 = vrot.slane %v935, 4
      %v938 = vshll.u32 %v899, 16
      %v940 = vrot.slane %v938, 5
      %v941 = vsel %vm917, %v936, %v940
      %v943 = vshrl.u32 %v867, 16
      %v945 = vrot.slane %v943, 4
      %v946 = vshll.u32 %v867, 16
      %v948 = vrot.slane %v946, 5
      %v949 = vor.u32 %v945, %v948
      %v950 = vrot.slane %v949, 4
      %v952 = vshll.u32 %v868, 16
      %v954 = vrot.slane %v952, 5
      %v955 = vsel %vm917, %v950, %v954
      %v956 = vshrl.u32 %v868, 16
      %v958 = vrot.slane %v956, 4
      %v959 = vor.u32 %v958, %v954
      %v960 = vrot.slane %v959, 4
      %v962 = vshll.u32 %v900, 16
      %v964 = vrot.slane %v962, 5
      %v965 = vsel %vm917, %v960, %v964
      %v967 = vshrl.u32 %v869, 16
      %v969 = vrot.slane %v967, 4
      %v970 = vshll.u32 %v869, 16
      %v972 = vrot.slane %v970, 5
      %v973 = vor.u32 %v969, %v972
      %v974 = vrot.slane %v973, 4
      %v976 = vshll.u32 %v870, 16
      %v978 = vrot.slane %v976, 5
      %v979 = vsel %vm917, %v974, %v978
      %v980 = vshrl.u32 %v870, 16
      %v982 = vrot.slane %v980, 4
      %v983 = vor.u32 %v982, %v978
      %v984 = vrot.slane %v983, 4
      %v986 = vshll.u32 %v901, 16
      %v988 = vrot.slane %v986, 5
      %v989 = vsel %vm917, %v984, %v988
      %v991 = vshrl.u32 %v871, 16
      %v993 = vrot.slane %v991, 4
      %v994 = vshll.u32 %v871, 16
      %v996 = vrot.slane %v994, 5
      %v997 = vor.u32 %v993, %v996
      %v998 = vrot.slane %v997, 4
      %v1000 = vshll.u32 %v872, 16
      %v1002 = vrot.slane %v1000, 5
      %v1003 = vsel %vm917, %v998, %v1002
      %v1004 = vshrl.u32 %v872, 16
      %v1006 = vrot.slane %v1004, 4
      %v1007 = vor.u32 %v1006, %v1002
      %v1008 = vrot.slane %v1007, 4
      %v1010 = vshll.u32 %v902, 16
      %v1012 = vrot.slane %v1010, 5
      %v1013 = vsel %vm917, %v1008, %v1012
      %v1015 = vshrl.u32 %v873, 16
      %v1017 = vrot.slane %v1015, 4
      %v1018 = vshll.u32 %v873, 16
      %v1020 = vrot.slane %v1018, 5
      %v1021 = vor.u32 %v1017, %v1020
      %v1022 = vrot.slane %v1021, 4
      %v1024 = vshll.u32 %v874, 16
      %v1026 = vrot.slane %v1024, 5
      %v1027 = vsel %vm917, %v1022, %v1026
      %v1028 = vshrl.u32 %v874, 16
      %v1030 = vrot.slane %v1028, 4
      %v1031 = vor.u32 %v1030, %v1026
      %v1032 = vrot.slane %v1031, 4
      %v1034 = vshll.u32 %v903, 16
      %v1036 = vrot.slane %v1034, 5
      %v1037 = vsel %vm917, %v1032, %v1036
      %v1039 = vshrl.u32 %v875, 16
      %v1041 = vrot.slane %v1039, 4
      %v1042 = vshll.u32 %v875, 16
      %v1044 = vrot.slane %v1042, 5
      %v1045 = vor.u32 %v1041, %v1044
      %v1046 = vrot.slane %v1045, 4
      %v1048 = vshll.u32 %v876, 16
      %v1050 = vrot.slane %v1048, 5
      %v1051 = vsel %vm917, %v1046, %v1050
      %v1052 = vshrl.u32 %v876, 16
      %v1054 = vrot.slane %v1052, 4
      %v1055 = vor.u32 %v1054, %v1050
      %v1056 = vrot.slane %v1055, 4
      %v1058 = vshll.u32 %v904, 16
      %v1060 = vrot.slane %v1058, 5
      %v1061 = vsel %vm917, %v1056, %v1060
      %v1063 = vshrl.u32 %v877, 16
      %v1065 = vrot.slane %v1063, 4
      %v1066 = vshll.u32 %v877, 16
      %v1068 = vrot.slane %v1066, 5
      %v1069 = vor.u32 %v1065, %v1068
      %v1070 = vrot.slane %v1069, 4
      %v1072 = vshll.u32 %v878, 16
      %v1074 = vrot.slane %v1072, 5
      %v1075 = vsel %vm917, %v1070, %v1074
      %v1076 = vshrl.u32 %v878, 16
      %v1078 = vrot.slane %v1076, 4
      %v1079 = vor.u32 %v1078, %v1074
      %v1080 = vrot.slane %v1079, 4
      %v1082 = vshll.u32 %v905, 16
      %v1084 = vrot.slane %v1082, 5
      %v1085 = vsel %vm917, %v1080, %v1084
      %v1087 = vshrl.u32 %v879, 16
      %v1089 = vrot.slane %v1087, 4
      %v1090 = vshll.u32 %v879, 16
      %v1092 = vrot.slane %v1090, 5
      %v1093 = vor.u32 %v1089, %v1092
      %v1094 = vrot.slane %v1093, 4
      %v1096 = vshll.u32 %v880, 16
      %v1098 = vrot.slane %v1096, 5
      %v1099 = vsel %vm917, %v1094, %v1098
      %v1100 = vshrl.u32 %v880, 16
      %v1102 = vrot.slane %v1100, 4
      %v1103 = vor.u32 %v1102, %v1098
      %v1104 = vrot.slane %v1103, 4
      %v1106 = vshll.u32 %v906, 16
      %v1108 = vrot.slane %v1106, 5
      %v1109 = vsel %vm917, %v1104, %v1108
      %v1111 = vshrl.u32 %v881, 16
      %v1113 = vrot.slane %v1111, 4
      %v1114 = vshll.u32 %v881, 16
      %v1116 = vrot.slane %v1114, 5
      %v1117 = vor.u32 %v1113, %v1116
      %v1118 = vrot.slane %v1117, 4
      %v1120 = vshll.u32 %v882, 16
      %v1122 = vrot.slane %v1120, 5
      %v1123 = vsel %vm917, %v1118, %v1122
      %v1124 = vshrl.u32 %v882, 16
      %v1126 = vrot.slane %v1124, 4
      %v1127 = vor.u32 %v1126, %v1122
      %v1128 = vrot.slane %v1127, 4
      %v1130 = vshll.u32 %v907, 16
      %v1132 = vrot.slane %v1130, 5
      %v1133 = vsel %vm917, %v1128, %v1132
      %v1135 = vshrl.u32 %v883, 16
      %v1137 = vrot.slane %v1135, 4
      %v1138 = vshll.u32 %v883, 16
      %v1140 = vrot.slane %v1138, 5
      %v1141 = vor.u32 %v1137, %v1140
      %v1142 = vrot.slane %v1141, 4
      %v1144 = vshll.u32 %v884, 16
      %v1146 = vrot.slane %v1144, 5
      %v1147 = vsel %vm917, %v1142, %v1146
      %v1148 = vshrl.u32 %v884, 16
      %v1150 = vrot.slane %v1148, 4
      %v1151 = vor.u32 %v1150, %v1146
      %v1152 = vrot.slane %v1151, 4
      %v1154 = vshll.u32 %v908, 16
      %v1156 = vrot.slane %v1154, 5
      %v1157 = vsel %vm917, %v1152, %v1156
      %v1159 = vshrl.u32 %v885, 16
      %v1161 = vrot.slane %v1159, 4
      %v1162 = vshll.u32 %v885, 16
      %v1164 = vrot.slane %v1162, 5
      %v1165 = vor.u32 %v1161, %v1164
      %v1166 = vrot.slane %v1165, 4
      %v1168 = vshll.u32 %v886, 16
      %v1170 = vrot.slane %v1168, 5
      %v1171 = vsel %vm917, %v1166, %v1170
      %v1172 = vshrl.u32 %v886, 16
      %v1174 = vrot.slane %v1172, 4
      %v1175 = vor.u32 %v1174, %v1170
      %v1176 = vrot.slane %v1175, 4
      %v1178 = vshll.u32 %v909, 16
      %v1180 = vrot.slane %v1178, 5
      %v1181 = vsel %vm917, %v1176, %v1180
      %v1183 = vshrl.u32 %v887, 16
      %v1185 = vrot.slane %v1183, 4
      %v1186 = vshll.u32 %v887, 16
      %v1188 = vrot.slane %v1186, 5
      %v1189 = vor.u32 %v1185, %v1188
      %v1190 = vrot.slane %v1189, 4
      %v1192 = vshll.u32 %v888, 16
      %v1194 = vrot.slane %v1192, 5
      %v1195 = vsel %vm917, %v1190, %v1194
      %v1196 = vshrl.u32 %v888, 16
      %v1198 = vrot.slane %v1196, 4
      %v1199 = vor.u32 %v1198, %v1194
      %v1200 = vrot.slane %v1199, 4
      %v1202 = vshll.u32 %v910, 16
      %v1204 = vrot.slane %v1202, 5
      %v1205 = vsel %vm917, %v1200, %v1204
      %v1207 = vshrl.u32 %v889, 16
      %v1209 = vrot.slane %v1207, 4
      %v1210 = vshll.u32 %v889, 16
      %v1212 = vrot.slane %v1210, 5
      %v1213 = vor.u32 %v1209, %v1212
      %v1214 = vrot.slane %v1213, 4
      %v1216 = vshll.u32 %v890, 16
      %v1218 = vrot.slane %v1216, 5
      %v1219 = vsel %vm917, %v1214, %v1218
      %v1220 = vshrl.u32 %v890, 16
      %v1222 = vrot.slane %v1220, 4
      %v1223 = vor.u32 %v1222, %v1218
      %v1224 = vrot.slane %v1223, 4
      %v1226 = vshll.u32 %v911, 16
      %v1228 = vrot.slane %v1226, 5
      %v1229 = vsel %vm917, %v1224, %v1228
      %v1231 = vshrl.u32 %v891, 16
      %v1233 = vrot.slane %v1231, 4
      %v1234 = vshll.u32 %v891, 16
      %v1236 = vrot.slane %v1234, 5
      %v1237 = vor.u32 %v1233, %v1236
      %v1238 = vrot.slane %v1237, 4
      %v1240 = vshll.u32 %v892, 16
      %v1242 = vrot.slane %v1240, 5
      %v1243 = vsel %vm917, %v1238, %v1242
      %v1244 = vshrl.u32 %v892, 16
      %v1246 = vrot.slane %v1244, 4
      %v1247 = vor.u32 %v1246, %v1242
      %v1248 = vrot.slane %v1247, 4
      %v1250 = vshll.u32 %v912, 16
      %v1252 = vrot.slane %v1250, 5
      %v1253 = vsel %vm917, %v1248, %v1252
      %v1255 = vshrl.u32 %v893, 16
      %v1257 = vrot.slane %v1255, 4
      %v1258 = vshll.u32 %v893, 16
      %v1260 = vrot.slane %v1258, 5
      %v1261 = vor.u32 %v1257, %v1260
      %v1262 = vrot.slane %v1261, 4
      %v1264 = vshll.u32 %v894, 16
      %v1266 = vrot.slane %v1264, 5
      %v1267 = vsel %vm917, %v1262, %v1266
      %v1268 = vshrl.u32 %v894, 16
      %v1270 = vrot.slane %v1268, 4
      %v1271 = vor.u32 %v1270, %v1266
      %v1272 = vrot.slane %v1271, 4
      %v1274 = vshll.u32 %v913, 16
      %v1276 = vrot.slane %v1274, 5
      %v1277 = vsel %vm917, %v1272, %v1276
      %v1279 = vshrl.u32 %v895, 16
      %v1281 = vrot.slane %v1279, 4
      %v1282 = vshll.u32 %v895, 16
      %v1284 = vrot.slane %v1282, 5
      %v1285 = vor.u32 %v1281, %v1284
      %v1286 = vrot.slane %v1285, 4
      %v1288 = vshll.u32 %v896, 16
      %v1290 = vrot.slane %v1288, 5
      %v1291 = vsel %vm917, %v1286, %v1290
      %v1292 = vshrl.u32 %v896, 16
      %v1294 = vrot.slane %v1292, 4
      %v1295 = vor.u32 %v1294, %v1290
      %v1296 = vrot.slane %v1295, 4
      %v1298 = vshll.u32 %v914, 16
      %v1300 = vrot.slane %v1298, 5
      %v1301 = vsel %vm917, %v1296, %v1300
      %s1302 = scalar_lea.vmem %s1, 8
      %v1303 = vld [vmem:[%s1302] sm:$0xf]
      %v1304 = vld [vmem:[%s1302 + $0x4] sm:$0xf]
      %v1305 = vunpack.c.l.b16 %v931
      %v1306 = vunpack.c.l.b16 %v941
      %v1307 = vunpack.c.l.b16 %v955
      %v1308 = vunpack.c.l.b16 %v965
      %v1309 = vunpack.c.l.b16 %v979
      %v1310 = vunpack.c.l.b16 %v989
      %v1311 = vunpack.c.l.b16 %v1003
      %v1312 = vunpack.c.l.b16 %v1013
      %v1313 = vunpack.c.l.b16 %v1027
      %v1314 = vunpack.c.l.b16 %v1037
      %v1315 = vunpack.c.l.b16 %v1051
      %v1316 = vunpack.c.l.b16 %v1061
      %v1317 = vunpack.c.l.b16 %v1075
      %v1318 = vunpack.c.l.b16 %v1085
      %v1319 = vunpack.c.l.b16 %v1099
      %v1320 = vunpack.c.l.b16 %v1109
      %v1321 = vunpack.c.l.b16 %v1123
      %v1322 = vunpack.c.l.b16 %v1133
      %v1323 = vunpack.c.l.b16 %v1147
      %v1324 = vunpack.c.l.b16 %v1157
      %v1325 = vunpack.c.l.b16 %v1171
      %v1326 = vunpack.c.l.b16 %v1181
      %v1327 = vunpack.c.l.b16 %v1195
      %v1328 = vunpack.c.l.b16 %v1205
      %v1329 = vunpack.c.l.b16 %v1219
      %v1330 = vunpack.c.l.b16 %v1229
      %v1331 = vunpack.c.l.b16 %v1243
      %v1332 = vunpack.c.l.b16 %v1253
      %v1333 = vunpack.c.l.b16 %v1267
      %v1334 = vunpack.c.l.b16 %v1277
      %v1335 = vunpack.c.l.b16 %v1291
      %v1336 = vunpack.c.l.b16 %v1301
      %v1337 = vpack.c.b16 %v1306, %v1305
      %v1338 = vpack.c.b16 %v1308, %v1307
      %v1339 = vpack.c.b16 %v1310, %v1309
      %v1340 = vpack.c.b16 %v1312, %v1311
      %v1341 = vpack.c.b16 %v1314, %v1313
      %v1342 = vpack.c.b16 %v1316, %v1315
      %v1343 = vpack.c.b16 %v1318, %v1317
      %v1344 = vpack.c.b16 %v1320, %v1319
      %v1345 = vpack.c.b16 %v1322, %v1321
      %v1346 = vpack.c.b16 %v1324, %v1323
      %v1347 = vpack.c.b16 %v1326, %v1325
      %v1348 = vpack.c.b16 %v1328, %v1327
      %v1349 = vpack.c.b16 %v1330, %v1329
      %v1350 = vpack.c.b16 %v1332, %v1331
      %v1351 = vpack.c.b16 %v1334, %v1333
      %v1352 = vpack.c.b16 %v1336, %v1335
      %v1355 = vunpack.c.l.b16 %v1303
      %v1356 = vunpack.c.l.b16 %v1304
      %v1357 = vpack.c.b16 %v1356, %v1355
      %vm1359 = vcmask 130048
      %v1361 = vsel %vm1359, %v1337, 0
      %v1364 = vsel %vm1359, %v1338, 0
      %v1367 = vsel %vm1359, %v1339, 0
      %v1370 = vsel %vm1359, %v1340, 0
      %v1373 = vsel %vm1359, %v1341, 0
      %v1376 = vsel %vm1359, %v1342, 0
      %v1379 = vsel %vm1359, %v1343, 0
      %v1382 = vsel %vm1359, %v1344, 0
      %v1385 = vsel %vm1359, %v1345, 0
      %v1388 = vsel %vm1359, %v1346, 0
      %v1391 = vsel %vm1359, %v1347, 0
      %v1394 = vsel %vm1359, %v1348, 0
      %v1397 = vsel %vm1359, %v1349, 0
      %v1400 = vsel %vm1359, %v1350, 0
      %v1403 = vsel %vm1359, %v1351, 0
      %v1406 = vsel %vm1359, %v1352, 0
      %1408 = vmatpush.bf16.msra.mxu0 0
      %1409 = vmatpush.bf16.msra.mxu0 0
      %1410 = vmatpush.bf16.msra.mxu0 0
      %1411 = vmatpush.bf16.msra.mxu0 0
      %1412 = vmatpush.bf16.msra.mxu0 0
      %1413 = vmatpush.bf16.msra.mxu0 0
      %1414 = vmatpush.bf16.msra.mxu0 0
      %1415 = vmatpush.bf16.msra.mxu0 %v1357
      %1416 = vmatmul.bf16.gmra.mxu0 %v1361
      %v1417 = vpop.f32.mrf.mxu0
      %v1418 = vadd.f32 0.0, %v1417
      %v1419 = vpop.f32.mrf.mxu0
      %v1420 = vadd.f32 0.0, %v1419
      %1421 = vmatmul.bf16.gmra.mxu0 %v1364
      %v1422 = vpop.f32.mrf.mxu0
      %v1423 = vadd.f32 0.0, %v1422
      %v1424 = vpop.f32.mrf.mxu0
      %v1425 = vadd.f32 0.0, %v1424
      %1426 = vmatmul.bf16.gmra.mxu0 %v1367
      %v1427 = vpop.f32.mrf.mxu0
      %v1428 = vadd.f32 0.0, %v1427
      %v1429 = vpop.f32.mrf.mxu0
      %v1430 = vadd.f32 0.0, %v1429
      %1431 = vmatmul.bf16.gmra.mxu0 %v1370
      %v1432 = vpop.f32.mrf.mxu0
      %v1433 = vadd.f32 0.0, %v1432
      %v1434 = vpop.f32.mrf.mxu0
      %v1435 = vadd.f32 0.0, %v1434
      %1436 = vmatmul.bf16.gmra.mxu0 %v1373
      %v1437 = vpop.f32.mrf.mxu0
      %v1438 = vadd.f32 0.0, %v1437
      %v1439 = vpop.f32.mrf.mxu0
      %v1440 = vadd.f32 0.0, %v1439
      %1441 = vmatmul.bf16.gmra.mxu0 %v1376
      %v1442 = vpop.f32.mrf.mxu0
      %v1443 = vadd.f32 0.0, %v1442
      %v1444 = vpop.f32.mrf.mxu0
      %v1445 = vadd.f32 0.0, %v1444
      %1446 = vmatmul.bf16.gmra.mxu0 %v1379
      %v1447 = vpop.f32.mrf.mxu0
      %v1448 = vadd.f32 0.0, %v1447
      %v1449 = vpop.f32.mrf.mxu0
      %v1450 = vadd.f32 0.0, %v1449
      %1451 = vmatmul.bf16.gmra.mxu0 %v1382
      %v1452 = vpop.f32.mrf.mxu0
      %v1453 = vadd.f32 0.0, %v1452
      %v1454 = vpop.f32.mrf.mxu0
      %v1455 = vadd.f32 0.0, %v1454
      %1456 = vmatmul.bf16.gmra.mxu0 %v1385
      %v1457 = vpop.f32.mrf.mxu0
      %v1458 = vadd.f32 0.0, %v1457
      %v1459 = vpop.f32.mrf.mxu0
      %v1460 = vadd.f32 0.0, %v1459
      %1461 = vmatmul.bf16.gmra.mxu0 %v1388
      %v1462 = vpop.f32.mrf.mxu0
      %v1463 = vadd.f32 0.0, %v1462
      %v1464 = vpop.f32.mrf.mxu0
      %v1465 = vadd.f32 0.0, %v1464
      %1466 = vmatmul.bf16.gmra.mxu0 %v1391
      %v1467 = vpop.f32.mrf.mxu0
      %v1468 = vadd.f32 0.0, %v1467
      %v1469 = vpop.f32.mrf.mxu0
      %v1470 = vadd.f32 0.0, %v1469
      %1471 = vmatmul.bf16.gmra.mxu0 %v1394
      %v1472 = vpop.f32.mrf.mxu0
      %v1473 = vadd.f32 0.0, %v1472
      %v1474 = vpop.f32.mrf.mxu0
      %v1475 = vadd.f32 0.0, %v1474
      %1476 = vmatmul.bf16.gmra.mxu0 %v1397
      %v1477 = vpop.f32.mrf.mxu0
      %v1478 = vadd.f32 0.0, %v1477
      %v1479 = vpop.f32.mrf.mxu0
      %v1480 = vadd.f32 0.0, %v1479
      %1481 = vmatmul.bf16.gmra.mxu0 %v1400
      %v1482 = vpop.f32.mrf.mxu0
      %v1483 = vadd.f32 0.0, %v1482
      %v1484 = vpop.f32.mrf.mxu0
      %v1485 = vadd.f32 0.0, %v1484
      %1486 = vmatmul.bf16.gmra.mxu0 %v1403
      %v1487 = vpop.f32.mrf.mxu0
      %v1488 = vadd.f32 0.0, %v1487
      %v1489 = vpop.f32.mrf.mxu0
      %v1490 = vadd.f32 0.0, %v1489
      %1491 = vmatmul.bf16.gmra.mxu0 %v1406
      %v1492 = vpop.f32.mrf.mxu0
      %v1493 = vadd.f32 0.0, %v1492
      %v1494 = vpop.f32.mrf.mxu0
      %v1495 = vadd.f32 0.0, %v1494
      %1496 = vdwg.mxu0
      %v1529 = vunpack.c.l.b16 %v865
      %v1530 = vunpack.c.l.b16 %v866
      %v1531 = vunpack.c.l.b16 %v867
      %v1532 = vunpack.c.l.b16 %v868
      %v1533 = vunpack.c.l.b16 %v869
      %v1534 = vunpack.c.l.b16 %v870
      %v1535 = vunpack.c.l.b16 %v871
      %v1536 = vunpack.c.l.b16 %v872
      %v1537 = vunpack.c.l.b16 %v873
      %v1538 = vunpack.c.l.b16 %v874
      %v1539 = vunpack.c.l.b16 %v875
      %v1540 = vunpack.c.l.b16 %v876
      %v1541 = vunpack.c.l.b16 %v877
      %v1542 = vunpack.c.l.b16 %v878
      %v1543 = vunpack.c.l.b16 %v879
      %v1544 = vunpack.c.l.b16 %v880
      %v1545 = vunpack.c.l.b16 %v881
      %v1546 = vunpack.c.l.b16 %v882
      %v1547 = vunpack.c.l.b16 %v883
      %v1548 = vunpack.c.l.b16 %v884
      %v1549 = vunpack.c.l.b16 %v885
      %v1550 = vunpack.c.l.b16 %v886
      %v1551 = vunpack.c.l.b16 %v887
      %v1552 = vunpack.c.l.b16 %v888
      %v1553 = vunpack.c.l.b16 %v889
      %v1554 = vunpack.c.l.b16 %v890
      %v1555 = vunpack.c.l.b16 %v891
      %v1556 = vunpack.c.l.b16 %v892
      %v1557 = vunpack.c.l.b16 %v893
      %v1558 = vunpack.c.l.b16 %v894
      %v1559 = vunpack.c.l.b16 %v895
      %v1560 = vunpack.c.l.b16 %v896
      %v1561 = vpack.c.b16 %v1530, %v1529
      %v1562 = vpack.c.b16 %v1532, %v1531
      %v1563 = vpack.c.b16 %v1534, %v1533
      %v1564 = vpack.c.b16 %v1536, %v1535
      %v1565 = vpack.c.b16 %v1538, %v1537
      %v1566 = vpack.c.b16 %v1540, %v1539
      %v1567 = vpack.c.b16 %v1542, %v1541
      %v1568 = vpack.c.b16 %v1544, %v1543
      %v1569 = vpack.c.b16 %v1546, %v1545
      %v1570 = vpack.c.b16 %v1548, %v1547
      %v1571 = vpack.c.b16 %v1550, %v1549
      %v1572 = vpack.c.b16 %v1552, %v1551
      %v1573 = vpack.c.b16 %v1554, %v1553
      %v1574 = vpack.c.b16 %v1556, %v1555
      %v1575 = vpack.c.b16 %v1558, %v1557
      %v1576 = vpack.c.b16 %v1560, %v1559
      %v1579 = vunpack.c.l.b16 %v897
      %v1580 = vunpack.c.l.b16 %v898
      %v1581 = vpack.c.b16 %v1580, %v1579
      %v1584 = vsel %vm1359, %v1561, 0
      %v1587 = vsel %vm1359, %v1562, 0
      %v1590 = vsel %vm1359, %v1563, 0
      %v1593 = vsel %vm1359, %v1564, 0
      %v1596 = vsel %vm1359, %v1565, 0
      %v1599 = vsel %vm1359, %v1566, 0
      %v1602 = vsel %vm1359, %v1567, 0
      %v1605 = vsel %vm1359, %v1568, 0
      %v1608 = vsel %vm1359, %v1569, 0
      %v1611 = vsel %vm1359, %v1570, 0
      %v1614 = vsel %vm1359, %v1571, 0
      %v1617 = vsel %vm1359, %v1572, 0
      %v1620 = vsel %vm1359, %v1573, 0
      %v1623 = vsel %vm1359, %v1574, 0
      %v1626 = vsel %vm1359, %v1575, 0
      %v1629 = vsel %vm1359, %v1576, 0
      %1631 = vmatpush.bf16.msra.mxu0 0
      %1632 = vmatpush.bf16.msra.mxu0 0
      %1633 = vmatpush.bf16.msra.mxu0 0
      %1634 = vmatpush.bf16.msra.mxu0 0
      %1635 = vmatpush.bf16.msra.mxu0 0
      %1636 = vmatpush.bf16.msra.mxu0 0
      %1637 = vmatpush.bf16.msra.mxu0 0
      %1638 = vmatpush.bf16.msra.mxu0 %v1581
      %1639 = vmatmul.bf16.gmra.mxu0 %v1584
      %v1640 = vpop.f32.mrf.mxu0
      %v1641 = vadd.f32 %v1418, %v1640
      %v1642 = vpop.f32.mrf.mxu0
      %v1643 = vadd.f32 %v1420, %v1642
      %1644 = vmatmul.bf16.gmra.mxu0 %v1587
      %v1645 = vpop.f32.mrf.mxu0
      %v1646 = vadd.f32 %v1423, %v1645
      %v1647 = vpop.f32.mrf.mxu0
      %v1648 = vadd.f32 %v1425, %v1647
      %1649 = vmatmul.bf16.gmra.mxu0 %v1590
      %v1650 = vpop.f32.mrf.mxu0
      %v1651 = vadd.f32 %v1428, %v1650
      %v1652 = vpop.f32.mrf.mxu0
      %v1653 = vadd.f32 %v1430, %v1652
      %1654 = vmatmul.bf16.gmra.mxu0 %v1593
      %v1655 = vpop.f32.mrf.mxu0
      %v1656 = vadd.f32 %v1433, %v1655
      %v1657 = vpop.f32.mrf.mxu0
      %v1658 = vadd.f32 %v1435, %v1657
      %1659 = vmatmul.bf16.gmra.mxu0 %v1596
      %v1660 = vpop.f32.mrf.mxu0
      %v1661 = vadd.f32 %v1438, %v1660
      %v1662 = vpop.f32.mrf.mxu0
      %v1663 = vadd.f32 %v1440, %v1662
      %1664 = vmatmul.bf16.gmra.mxu0 %v1599
      %v1665 = vpop.f32.mrf.mxu0
      %v1666 = vadd.f32 %v1443, %v1665
      %v1667 = vpop.f32.mrf.mxu0
      %v1668 = vadd.f32 %v1445, %v1667
      %1669 = vmatmul.bf16.gmra.mxu0 %v1602
      %v1670 = vpop.f32.mrf.mxu0
      %v1671 = vadd.f32 %v1448, %v1670
      %v1672 = vpop.f32.mrf.mxu0
      %v1673 = vadd.f32 %v1450, %v1672
      %1674 = vmatmul.bf16.gmra.mxu0 %v1605
      %v1675 = vpop.f32.mrf.mxu0
      %v1676 = vadd.f32 %v1453, %v1675
      %v1677 = vpop.f32.mrf.mxu0
      %v1678 = vadd.f32 %v1455, %v1677
      %1679 = vmatmul.bf16.gmra.mxu0 %v1608
      %v1680 = vpop.f32.mrf.mxu0
      %v1681 = vadd.f32 %v1458, %v1680
      %v1682 = vpop.f32.mrf.mxu0
      %v1683 = vadd.f32 %v1460, %v1682
      %1684 = vmatmul.bf16.gmra.mxu0 %v1611
      %v1685 = vpop.f32.mrf.mxu0
      %v1686 = vadd.f32 %v1463, %v1685
      %v1687 = vpop.f32.mrf.mxu0
      %v1688 = vadd.f32 %v1465, %v1687
      %1689 = vmatmul.bf16.gmra.mxu0 %v1614
      %v1690 = vpop.f32.mrf.mxu0
      %v1691 = vadd.f32 %v1468, %v1690
      %v1692 = vpop.f32.mrf.mxu0
      %v1693 = vadd.f32 %v1470, %v1692
      %1694 = vmatmul.bf16.gmra.mxu0 %v1617
      %v1695 = vpop.f32.mrf.mxu0
      %v1696 = vadd.f32 %v1473, %v1695
      %v1697 = vpop.f32.mrf.mxu0
      %v1698 = vadd.f32 %v1475, %v1697
      %1699 = vmatmul.bf16.gmra.mxu0 %v1620
      %v1700 = vpop.f32.mrf.mxu0
      %v1701 = vadd.f32 %v1478, %v1700
      %v1702 = vpop.f32.mrf.mxu0
      %v1703 = vadd.f32 %v1480, %v1702
      %1704 = vmatmul.bf16.gmra.mxu0 %v1623
      %v1705 = vpop.f32.mrf.mxu0
      %v1706 = vadd.f32 %v1483, %v1705
      %v1707 = vpop.f32.mrf.mxu0
      %v1708 = vadd.f32 %v1485, %v1707
      %1709 = vmatmul.bf16.gmra.mxu0 %v1626
      %v1710 = vpop.f32.mrf.mxu0
      %v1711 = vadd.f32 %v1488, %v1710
      %v1712 = vpop.f32.mrf.mxu0
      %v1713 = vadd.f32 %v1490, %v1712
      %1714 = vmatmul.bf16.gmra.mxu0 %v1629
      %v1715 = vpop.f32.mrf.mxu0
      %v1716 = vadd.f32 %v1493, %v1715
      %v1717 = vpop.f32.mrf.mxu0
      %v1718 = vadd.f32 %v1495, %v1717
      %1719 = vdwg.mxu0
      %v1720 = vld [vmem:[#allocation2] sm:$0xe]
      %v1721 = vld [vmem:[#allocation2 + $0xc] sm:$0xe]
      %v1722 = vld [vmem:[#allocation2 + $0x18] sm:$0xe]
      %v1723 = vld [vmem:[#allocation2 + $0x24] sm:$0xe]
      %v1724 = vld [vmem:[#allocation2 + $0x30] sm:$0xe]
      %v1725 = vld [vmem:[#allocation2 + $0x3c] sm:$0xe]
      %v1726 = vld [vmem:[#allocation2 + $0x48] sm:$0xe]
      %v1727 = vld [vmem:[#allocation2 + $0x54] sm:$0xe]
      %v1728 = vld [vmem:[#allocation2 + $0x60] sm:$0xe]
      %v1729 = vld [vmem:[#allocation2 + $0x6c] sm:$0xe]
      %v1730 = vld [vmem:[#allocation2 + $0x78] sm:$0xe]
      %v1731 = vld [vmem:[#allocation2 + $0x84] sm:$0xe]
      %v1732 = vld [vmem:[#allocation2 + $0x90] sm:$0xe]
      %v1733 = vld [vmem:[#allocation2 + $0x9c] sm:$0xe]
      %v1734 = vld [vmem:[#allocation2 + $0xa8] sm:$0xe]
      %v1735 = vld [vmem:[#allocation2 + $0xb4] sm:$0xe]
      %vm1768 = vcmask 1042432
      %vm1769 = vcmask 1046532
      %vm1770 = vmor %vm1768, %vm1769
      %v1771 = vrot.slane %v1720, 5
      %v1772 = vrot.slane %v1771, 4
      %v1773 = vrot.slane %v866, 5
      %v1774 = vsel %vm1770, %v1772, %v1773
      %v1775 = vrot.slane %v1773, 4
      %v1776 = vrot.slane %v899, 5
      %v1777 = vsel %vm1770, %v1775, %v1776
      %v1778 = vrot.slane %v1721, 5
      %v1779 = vrot.slane %v1778, 4
      %v1780 = vrot.slane %v868, 5
      %v1781 = vsel %vm1770, %v1779, %v1780
      %v1782 = vrot.slane %v1780, 4
      %v1783 = vrot.slane %v900, 5
      %v1784 = vsel %vm1770, %v1782, %v1783
      %v1785 = vrot.slane %v1722, 5
      %v1786 = vrot.slane %v1785, 4
      %v1787 = vrot.slane %v870, 5
      %v1788 = vsel %vm1770, %v1786, %v1787
      %v1789 = vrot.slane %v1787, 4
      %v1790 = vrot.slane %v901, 5
      %v1791 = vsel %vm1770, %v1789, %v1790
      %v1792 = vrot.slane %v1723, 5
      %v1793 = vrot.slane %v1792, 4
      %v1794 = vrot.slane %v872, 5
      %v1795 = vsel %vm1770, %v1793, %v1794
      %v1796 = vrot.slane %v1794, 4
      %v1797 = vrot.slane %v902, 5
      %v1798 = vsel %vm1770, %v1796, %v1797
      %v1799 = vrot.slane %v1724, 5
      %v1800 = vrot.slane %v1799, 4
      %v1801 = vrot.slane %v874, 5
      %v1802 = vsel %vm1770, %v1800, %v1801
      %v1803 = vrot.slane %v1801, 4
      %v1804 = vrot.slane %v903, 5
      %v1805 = vsel %vm1770, %v1803, %v1804
      %v1806 = vrot.slane %v1725, 5
      %v1807 = vrot.slane %v1806, 4
      %v1808 = vrot.slane %v876, 5
      %v1809 = vsel %vm1770, %v1807, %v1808
      %v1810 = vrot.slane %v1808, 4
      %v1811 = vrot.slane %v904, 5
      %v1812 = vsel %vm1770, %v1810, %v1811
      %v1813 = vrot.slane %v1726, 5
      %v1814 = vrot.slane %v1813, 4
      %v1815 = vrot.slane %v878, 5
      %v1816 = vsel %vm1770, %v1814, %v1815
      %v1817 = vrot.slane %v1815, 4
      %v1818 = vrot.slane %v905, 5
      %v1819 = vsel %vm1770, %v1817, %v1818
      %v1820 = vrot.slane %v1727, 5
      %v1821 = vrot.slane %v1820, 4
      %v1822 = vrot.slane %v880, 5
      %v1823 = vsel %vm1770, %v1821, %v1822
      %v1824 = vrot.slane %v1822, 4
      %v1825 = vrot.slane %v906, 5
      %v1826 = vsel %vm1770, %v1824, %v1825
      %v1827 = vrot.slane %v1728, 5
      %v1828 = vrot.slane %v1827, 4
      %v1829 = vrot.slane %v882, 5
      %v1830 = vsel %vm1770, %v1828, %v1829
      %v1831 = vrot.slane %v1829, 4
      %v1832 = vrot.slane %v907, 5
      %v1833 = vsel %vm1770, %v1831, %v1832
      %v1834 = vrot.slane %v1729, 5
      %v1835 = vrot.slane %v1834, 4
      %v1836 = vrot.slane %v884, 5
      %v1837 = vsel %vm1770, %v1835, %v1836
      %v1838 = vrot.slane %v1836, 4
      %v1839 = vrot.slane %v908, 5
      %v1840 = vsel %vm1770, %v1838, %v1839
      %v1841 = vrot.slane %v1730, 5
      %v1842 = vrot.slane %v1841, 4
      %v1843 = vrot.slane %v886, 5
      %v1844 = vsel %vm1770, %v1842, %v1843
      %v1845 = vrot.slane %v1843, 4
      %v1846 = vrot.slane %v909, 5
      %v1847 = vsel %vm1770, %v1845, %v1846
      %v1848 = vrot.slane %v1731, 5
      %v1849 = vrot.slane %v1848, 4
      %v1850 = vrot.slane %v888, 5
      %v1851 = vsel %vm1770, %v1849, %v1850
      %v1852 = vrot.slane %v1850, 4
      %v1853 = vrot.slane %v910, 5
      %v1854 = vsel %vm1770, %v1852, %v1853
      %v1855 = vrot.slane %v1732, 5
      %v1856 = vrot.slane %v1855, 4
      %v1857 = vrot.slane %v890, 5
      %v1858 = vsel %vm1770, %v1856, %v1857
      %v1859 = vrot.slane %v1857, 4
      %v1860 = vrot.slane %v911, 5
      %v1861 = vsel %vm1770, %v1859, %v1860
      %v1862 = vrot.slane %v1733, 5
      %v1863 = vrot.slane %v1862, 4
      %v1864 = vrot.slane %v892, 5
      %v1865 = vsel %vm1770, %v1863, %v1864
      %v1866 = vrot.slane %v1864, 4
      %v1867 = vrot.slane %v912, 5
      %v1868 = vsel %vm1770, %v1866, %v1867
      %v1869 = vrot.slane %v1734, 5
      %v1870 = vrot.slane %v1869, 4
      %v1871 = vrot.slane %v894, 5
      %v1872 = vsel %vm1770, %v1870, %v1871
      %v1873 = vrot.slane %v1871, 4
      %v1874 = vrot.slane %v913, 5
      %v1875 = vsel %vm1770, %v1873, %v1874
      %v1876 = vrot.slane %v1735, 5
      %v1877 = vrot.slane %v1876, 4
      %v1878 = vrot.slane %v896, 5
      %v1879 = vsel %vm1770, %v1877, %v1878
      %v1880 = vrot.slane %v1878, 4
      %v1881 = vrot.slane %v914, 5
      %v1882 = vsel %vm1770, %v1880, %v1881
      %s1883 = scalar_lea.vmem %s1, 16
      %v1884 = vld [vmem:[%s1883] sm:$0xf]
      %v1885 = vld [vmem:[%s1883 + $0x4] sm:$0xf]
      %v1886 = vunpack.c.l.b16 %v1774
      %v1887 = vunpack.c.l.b16 %v1777
      %v1888 = vunpack.c.l.b16 %v1781
      %v1889 = vunpack.c.l.b16 %v1784
      %v1890 = vunpack.c.l.b16 %v1788
      %v1891 = vunpack.c.l.b16 %v1791
      %v1892 = vunpack.c.l.b16 %v1795
      %v1893 = vunpack.c.l.b16 %v1798
      %v1894 = vunpack.c.l.b16 %v1802
      %v1895 = vunpack.c.l.b16 %v1805
      %v1896 = vunpack.c.l.b16 %v1809
      %v1897 = vunpack.c.l.b16 %v1812
      %v1898 = vunpack.c.l.b16 %v1816
      %v1899 = vunpack.c.l.b16 %v1819
      %v1900 = vunpack.c.l.b16 %v1823
      %v1901 = vunpack.c.l.b16 %v1826
      %v1902 = vunpack.c.l.b16 %v1830
      %v1903 = vunpack.c.l.b16 %v1833
      %v1904 = vunpack.c.l.b16 %v1837
      %v1905 = vunpack.c.l.b16 %v1840
      %v1906 = vunpack.c.l.b16 %v1844
      %v1907 = vunpack.c.l.b16 %v1847
      %v1908 = vunpack.c.l.b16 %v1851
      %v1909 = vunpack.c.l.b16 %v1854
      %v1910 = vunpack.c.l.b16 %v1858
      %v1911 = vunpack.c.l.b16 %v1861
      %v1912 = vunpack.c.l.b16 %v1865
      %v1913 = vunpack.c.l.b16 %v1868
      %v1914 = vunpack.c.l.b16 %v1872
      %v1915 = vunpack.c.l.b16 %v1875
      %v1916 = vunpack.c.l.b16 %v1879
      %v1917 = vunpack.c.l.b16 %v1882
      %v1918 = vpack.c.b16 %v1887, %v1886
      %v1919 = vpack.c.b16 %v1889, %v1888
      %v1920 = vpack.c.b16 %v1891, %v1890
      %v1921 = vpack.c.b16 %v1893, %v1892
      %v1922 = vpack.c.b16 %v1895, %v1894
      %v1923 = vpack.c.b16 %v1897, %v1896
      %v1924 = vpack.c.b16 %v1899, %v1898
      %v1925 = vpack.c.b16 %v1901, %v1900
      %v1926 = vpack.c.b16 %v1903, %v1902
      %v1927 = vpack.c.b16 %v1905, %v1904
      %v1928 = vpack.c.b16 %v1907, %v1906
      %v1929 = vpack.c.b16 %v1909, %v1908
      %v1930 = vpack.c.b16 %v1911, %v1910
      %v1931 = vpack.c.b16 %v1913, %v1912
      %v1932 = vpack.c.b16 %v1915, %v1914
      %v1933 = vpack.c.b16 %v1917, %v1916
      %v1936 = vunpack.c.l.b16 %v1884
      %v1937 = vunpack.c.l.b16 %v1885
      %v1938 = vpack.c.b16 %v1937, %v1936
      %v1941 = vsel %vm1359, %v1918, 0
      %v1944 = vsel %vm1359, %v1919, 0
      %v1947 = vsel %vm1359, %v1920, 0
      %v1950 = vsel %vm1359, %v1921, 0
      %v1953 = vsel %vm1359, %v1922, 0
      %v1956 = vsel %vm1359, %v1923, 0
      %v1959 = vsel %vm1359, %v1924, 0
      %v1962 = vsel %vm1359, %v1925, 0
      %v1965 = vsel %vm1359, %v1926, 0
      %v1968 = vsel %vm1359, %v1927, 0
      %v1971 = vsel %vm1359, %v1928, 0
      %v1974 = vsel %vm1359, %v1929, 0
      %v1977 = vsel %vm1359, %v1930, 0
      %v1980 = vsel %vm1359, %v1931, 0
      %v1983 = vsel %vm1359, %v1932, 0
      %v1986 = vsel %vm1359, %v1933, 0
      %1988 = vmatpush.bf16.msra.mxu0 0
      %1989 = vmatpush.bf16.msra.mxu0 0
      %1990 = vmatpush.bf16.msra.mxu0 0
      %1991 = vmatpush.bf16.msra.mxu0 0
      %1992 = vmatpush.bf16.msra.mxu0 0
      %1993 = vmatpush.bf16.msra.mxu0 0
      %1994 = vmatpush.bf16.msra.mxu0 0
      %1995 = vmatpush.bf16.msra.mxu0 %v1938
      %1996 = vmatmul.bf16.gmra.mxu0 %v1941
      %v1997 = vpop.f32.mrf.mxu0
      %v1998 = vadd.f32 0.0, %v1997
      %v1999 = vpop.f32.mrf.mxu0
      %v2000 = vadd.f32 0.0, %v1999
      %2001 = vmatmul.bf16.gmra.mxu0 %v1944
      %v2002 = vpop.f32.mrf.mxu0
      %v2003 = vadd.f32 0.0, %v2002
      %v2004 = vpop.f32.mrf.mxu0
      %v2005 = vadd.f32 0.0, %v2004
      %2006 = vmatmul.bf16.gmra.mxu0 %v1947
      %v2007 = vpop.f32.mrf.mxu0
      %v2008 = vadd.f32 0.0, %v2007
      %v2009 = vpop.f32.mrf.mxu0
      %v2010 = vadd.f32 0.0, %v2009
      %2011 = vmatmul.bf16.gmra.mxu0 %v1950
      %v2012 = vpop.f32.mrf.mxu0
      %v2013 = vadd.f32 0.0, %v2012
      %v2014 = vpop.f32.mrf.mxu0
      %v2015 = vadd.f32 0.0, %v2014
      %2016 = vmatmul.bf16.gmra.mxu0 %v1953
      %v2017 = vpop.f32.mrf.mxu0
      %v2018 = vadd.f32 0.0, %v2017
      %v2019 = vpop.f32.mrf.mxu0
      %v2020 = vadd.f32 0.0, %v2019
      %2021 = vmatmul.bf16.gmra.mxu0 %v1956
      %v2022 = vpop.f32.mrf.mxu0
      %v2023 = vadd.f32 0.0, %v2022
      %v2024 = vpop.f32.mrf.mxu0
      %v2025 = vadd.f32 0.0, %v2024
      %2026 = vmatmul.bf16.gmra.mxu0 %v1959
      %v2027 = vpop.f32.mrf.mxu0
      %v2028 = vadd.f32 0.0, %v2027
      %v2029 = vpop.f32.mrf.mxu0
      %v2030 = vadd.f32 0.0, %v2029
      %2031 = vmatmul.bf16.gmra.mxu0 %v1962
      %v2032 = vpop.f32.mrf.mxu0
      %v2033 = vadd.f32 0.0, %v2032
      %v2034 = vpop.f32.mrf.mxu0
      %v2035 = vadd.f32 0.0, %v2034
      %2036 = vmatmul.bf16.gmra.mxu0 %v1965
      %v2037 = vpop.f32.mrf.mxu0
      %v2038 = vadd.f32 0.0, %v2037
      %v2039 = vpop.f32.mrf.mxu0
      %v2040 = vadd.f32 0.0, %v2039
      %2041 = vmatmul.bf16.gmra.mxu0 %v1968
      %v2042 = vpop.f32.mrf.mxu0
      %v2043 = vadd.f32 0.0, %v2042
      %v2044 = vpop.f32.mrf.mxu0
      %v2045 = vadd.f32 0.0, %v2044
      %2046 = vmatmul.bf16.gmra.mxu0 %v1971
      %v2047 = vpop.f32.mrf.mxu0
      %v2048 = vadd.f32 0.0, %v2047
      %v2049 = vpop.f32.mrf.mxu0
      %v2050 = vadd.f32 0.0, %v2049
      %2051 = vmatmul.bf16.gmra.mxu0 %v1974
      %v2052 = vpop.f32.mrf.mxu0
      %v2053 = vadd.f32 0.0, %v2052
      %v2054 = vpop.f32.mrf.mxu0
      %v2055 = vadd.f32 0.0, %v2054
      %2056 = vmatmul.bf16.gmra.mxu0 %v1977
      %v2057 = vpop.f32.mrf.mxu0
      %v2058 = vadd.f32 0.0, %v2057
      %v2059 = vpop.f32.mrf.mxu0
      %v2060 = vadd.f32 0.0, %v2059
      %2061 = vmatmul.bf16.gmra.mxu0 %v1980
      %v2062 = vpop.f32.mrf.mxu0
      %v2063 = vadd.f32 0.0, %v2062
      %v2064 = vpop.f32.mrf.mxu0
      %v2065 = vadd.f32 0.0, %v2064
      %2066 = vmatmul.bf16.gmra.mxu0 %v1983
      %v2067 = vpop.f32.mrf.mxu0
      %v2068 = vadd.f32 0.0, %v2067
      %v2069 = vpop.f32.mrf.mxu0
      %v2070 = vadd.f32 0.0, %v2069
      %2071 = vmatmul.bf16.gmra.mxu0 %v1986
      %v2072 = vpop.f32.mrf.mxu0
      %v2073 = vadd.f32 0.0, %v2072
      %v2074 = vpop.f32.mrf.mxu0
      %v2075 = vadd.f32 0.0, %v2074
      %2076 = vdwg.mxu0
      %v2077 = vadd.f32 %v1641, %v1998
      %v2078 = vadd.f32 %v1643, %v2000
      %v2079 = vadd.f32 %v1646, %v2003
      %v2080 = vadd.f32 %v1648, %v2005
      %v2081 = vadd.f32 %v1651, %v2008
      %v2082 = vadd.f32 %v1653, %v2010
      %v2083 = vadd.f32 %v1656, %v2013
      %v2084 = vadd.f32 %v1658, %v2015
      %v2085 = vadd.f32 %v1661, %v2018
      %v2086 = vadd.f32 %v1663, %v2020
      %v2087 = vadd.f32 %v1666, %v2023
      %v2088 = vadd.f32 %v1668, %v2025
      %v2089 = vadd.f32 %v1671, %v2028
      %v2090 = vadd.f32 %v1673, %v2030
      %v2091 = vadd.f32 %v1676, %v2033
      %v2092 = vadd.f32 %v1678, %v2035
      %v2093 = vadd.f32 %v1681, %v2038
      %v2094 = vadd.f32 %v1683, %v2040
      %v2095 = vadd.f32 %v1686, %v2043
      %v2096 = vadd.f32 %v1688, %v2045
      %v2097 = vadd.f32 %v1691, %v2048
      %v2098 = vadd.f32 %v1693, %v2050
      %v2099 = vadd.f32 %v1696, %v2053
      %v2100 = vadd.f32 %v1698, %v2055
      %v2101 = vadd.f32 %v1701, %v2058
      %v2102 = vadd.f32 %v1703, %v2060
      %v2103 = vadd.f32 %v1706, %v2063
      %v2104 = vadd.f32 %v1708, %v2065
      %v2105 = vadd.f32 %v1711, %v2068
      %v2106 = vadd.f32 %v1713, %v2070
      %v2107 = vadd.f32 %v1716, %v2073
      %v2108 = vadd.f32 %v1718, %v2075
      %v2109 = vld [vmem:[%s747] sm:$0xf]
      %v2110 = vld [vmem:[%s747 + $0x4] sm:$0xf]
      %v2111 = vld [vmem:[%s747 + $0xc] sm:$0xf]
      %v2112 = vld [vmem:[%s747 + $0x10] sm:$0xf]
      %v2113 = vld [vmem:[%s747 + $0x18] sm:$0xf]
      %v2114 = vld [vmem:[%s747 + $0x1c] sm:$0xf]
      %v2115 = vld [vmem:[%s747 + $0x24] sm:$0xf]
      %v2116 = vld [vmem:[%s747 + $0x28] sm:$0xf]
      %v2117 = vld [vmem:[%s747 + $0x30] sm:$0xf]
      %v2118 = vld [vmem:[%s747 + $0x34] sm:$0xf]
      %v2119 = vld [vmem:[%s747 + $0x3c] sm:$0xf]
      %v2120 = vld [vmem:[%s747 + $0x40] sm:$0xf]
      %v2121 = vld [vmem:[%s747 + $0x48] sm:$0xf]
      %v2122 = vld [vmem:[%s747 + $0x4c] sm:$0xf]
      %v2123 = vld [vmem:[%s747 + $0x54] sm:$0xf]
      %v2124 = vld [vmem:[%s747 + $0x58] sm:$0xf]
      %v2125 = vld [vmem:[%s747 + $0x60] sm:$0xf]
      %v2126 = vld [vmem:[%s747 + $0x64] sm:$0xf]
      %v2127 = vld [vmem:[%s747 + $0x6c] sm:$0xf]
      %v2128 = vld [vmem:[%s747 + $0x70] sm:$0xf]
      %v2129 = vld [vmem:[%s747 + $0x78] sm:$0xf]
      %v2130 = vld [vmem:[%s747 + $0x7c] sm:$0xf]
      %v2131 = vld [vmem:[%s747 + $0x84] sm:$0xf]
      %v2132 = vld [vmem:[%s747 + $0x88] sm:$0xf]
      %v2133 = vld [vmem:[%s747 + $0x90] sm:$0xf]
      %v2134 = vld [vmem:[%s747 + $0x94] sm:$0xf]
      %v2135 = vld [vmem:[%s747 + $0x9c] sm:$0xf]
      %v2136 = vld [vmem:[%s747 + $0xa0] sm:$0xf]
      %v2137 = vld [vmem:[%s747 + $0xa8] sm:$0xf]
      %v2138 = vld [vmem:[%s747 + $0xac] sm:$0xf]
      %v2139 = vld [vmem:[%s747 + $0xb4] sm:$0xf]
      %v2140 = vld [vmem:[%s747 + $0xb8] sm:$0xf]
      %s2141 = scalar_lea.vmem %s1, 24
      %v2142 = vld [vmem:[%s2141] sm:$0xf]
      %v2143 = vld [vmem:[%s2141 + $0x4] sm:$0xf]
      %v2176 = vunpack.c.l.b16 %v2109
      %v2177 = vunpack.c.l.b16 %v2110
      %v2178 = vunpack.c.l.b16 %v2111
      %v2179 = vunpack.c.l.b16 %v2112
      %v2180 = vunpack.c.l.b16 %v2113
      %v2181 = vunpack.c.l.b16 %v2114
      %v2182 = vunpack.c.l.b16 %v2115
      %v2183 = vunpack.c.l.b16 %v2116
      %v2184 = vunpack.c.l.b16 %v2117
      %v2185 = vunpack.c.l.b16 %v2118
      %v2186 = vunpack.c.l.b16 %v2119
      %v2187 = vunpack.c.l.b16 %v2120
      %v2188 = vunpack.c.l.b16 %v2121
      %v2189 = vunpack.c.l.b16 %v2122
      %v2190 = vunpack.c.l.b16 %v2123
      %v2191 = vunpack.c.l.b16 %v2124
      %v2192 = vunpack.c.l.b16 %v2125
      %v2193 = vunpack.c.l.b16 %v2126
      %v2194 = vunpack.c.l.b16 %v2127
      %v2195 = vunpack.c.l.b16 %v2128
      %v2196 = vunpack.c.l.b16 %v2129
      %v2197 = vunpack.c.l.b16 %v2130
      %v2198 = vunpack.c.l.b16 %v2131
      %v2199 = vunpack.c.l.b16 %v2132
      %v2200 = vunpack.c.l.b16 %v2133
      %v2201 = vunpack.c.l.b16 %v2134
      %v2202 = vunpack.c.l.b16 %v2135
      %v2203 = vunpack.c.l.b16 %v2136
      %v2204 = vunpack.c.l.b16 %v2137
      %v2205 = vunpack.c.l.b16 %v2138
      %v2206 = vunpack.c.l.b16 %v2139
      %v2207 = vunpack.c.l.b16 %v2140
      %v2208 = vpack.c.b16 %v2177, %v2176
      %v2209 = vpack.c.b16 %v2179, %v2178
      %v2210 = vpack.c.b16 %v2181, %v2180
      %v2211 = vpack.c.b16 %v2183, %v2182
      %v2212 = vpack.c.b16 %v2185, %v2184
      %v2213 = vpack.c.b16 %v2187, %v2186
      %v2214 = vpack.c.b16 %v2189, %v2188
      %v2215 = vpack.c.b16 %v2191, %v2190
      %v2216 = vpack.c.b16 %v2193, %v2192
      %v2217 = vpack.c.b16 %v2195, %v2194
      %v2218 = vpack.c.b16 %v2197, %v2196
      %v2219 = vpack.c.b16 %v2199, %v2198
      %v2220 = vpack.c.b16 %v2201, %v2200
      %v2221 = vpack.c.b16 %v2203, %v2202
      %v2222 = vpack.c.b16 %v2205, %v2204
      %v2223 = vpack.c.b16 %v2207, %v2206
      %v2226 = vunpack.c.l.b16 %v2142
      %v2227 = vunpack.c.l.b16 %v2143
      %v2228 = vpack.c.b16 %v2227, %v2226
      %v2231 = vsel %vm1359, %v2208, 0
      %v2234 = vsel %vm1359, %v2209, 0
      %v2237 = vsel %vm1359, %v2210, 0
      %v2240 = vsel %vm1359, %v2211, 0
      %v2243 = vsel %vm1359, %v2212, 0
      %v2246 = vsel %vm1359, %v2213, 0
      %v2249 = vsel %vm1359, %v2214, 0
      %v2252 = vsel %vm1359, %v2215, 0
      %v2255 = vsel %vm1359, %v2216, 0
      %v2258 = vsel %vm1359, %v2217, 0
      %v2261 = vsel %vm1359, %v2218, 0
      %v2264 = vsel %vm1359, %v2219, 0
      %v2267 = vsel %vm1359, %v2220, 0
      %v2270 = vsel %vm1359, %v2221, 0
      %v2273 = vsel %vm1359, %v2222, 0
      %v2276 = vsel %vm1359, %v2223, 0
      %2278 = vmatpush.bf16.msra.mxu0 0
      %2279 = vmatpush.bf16.msra.mxu0 0
      %2280 = vmatpush.bf16.msra.mxu0 0
      %2281 = vmatpush.bf16.msra.mxu0 0
      %2282 = vmatpush.bf16.msra.mxu0 0
      %2283 = vmatpush.bf16.msra.mxu0 0
      %2284 = vmatpush.bf16.msra.mxu0 0
      %2285 = vmatpush.bf16.msra.mxu0 %v2228
      %2286 = vmatmul.bf16.gmra.mxu0 %v2231
      %v2287 = vpop.f32.mrf.mxu0
      %v2288 = vadd.f32 0.0, %v2287
      %v2289 = vpop.f32.mrf.mxu0
      %v2290 = vadd.f32 0.0, %v2289
      %2291 = vmatmul.bf16.gmra.mxu0 %v2234
      %v2292 = vpop.f32.mrf.mxu0
      %v2293 = vadd.f32 0.0, %v2292
      %v2294 = vpop.f32.mrf.mxu0
      %v2295 = vadd.f32 0.0, %v2294
      %2296 = vmatmul.bf16.gmra.mxu0 %v2237
      %v2297 = vpop.f32.mrf.mxu0
      %v2298 = vadd.f32 0.0, %v2297
      %v2299 = vpop.f32.mrf.mxu0
      %v2300 = vadd.f32 0.0, %v2299
      %2301 = vmatmul.bf16.gmra.mxu0 %v2240
      %v2302 = vpop.f32.mrf.mxu0
      %v2303 = vadd.f32 0.0, %v2302
      %v2304 = vpop.f32.mrf.mxu0
      %v2305 = vadd.f32 0.0, %v2304
      %2306 = vmatmul.bf16.gmra.mxu0 %v2243
      %v2307 = vpop.f32.mrf.mxu0
      %v2308 = vadd.f32 0.0, %v2307
      %v2309 = vpop.f32.mrf.mxu0
      %v2310 = vadd.f32 0.0, %v2309
      %2311 = vmatmul.bf16.gmra.mxu0 %v2246
      %v2312 = vpop.f32.mrf.mxu0
      %v2313 = vadd.f32 0.0, %v2312
      %v2314 = vpop.f32.mrf.mxu0
      %v2315 = vadd.f32 0.0, %v2314
      %2316 = vmatmul.bf16.gmra.mxu0 %v2249
      %v2317 = vpop.f32.mrf.mxu0
      %v2318 = vadd.f32 0.0, %v2317
      %v2319 = vpop.f32.mrf.mxu0
      %v2320 = vadd.f32 0.0, %v2319
      %2321 = vmatmul.bf16.gmra.mxu0 %v2252
      %v2322 = vpop.f32.mrf.mxu0
      %v2323 = vadd.f32 0.0, %v2322
      %v2324 = vpop.f32.mrf.mxu0
      %v2325 = vadd.f32 0.0, %v2324
      %2326 = vmatmul.bf16.gmra.mxu0 %v2255
      %v2327 = vpop.f32.mrf.mxu0
      %v2328 = vadd.f32 0.0, %v2327
      %v2329 = vpop.f32.mrf.mxu0
      %v2330 = vadd.f32 0.0, %v2329
      %2331 = vmatmul.bf16.gmra.mxu0 %v2258
      %v2332 = vpop.f32.mrf.mxu0
      %v2333 = vadd.f32 0.0, %v2332
      %v2334 = vpop.f32.mrf.mxu0
      %v2335 = vadd.f32 0.0, %v2334
      %2336 = vmatmul.bf16.gmra.mxu0 %v2261
      %v2337 = vpop.f32.mrf.mxu0
      %v2338 = vadd.f32 0.0, %v2337
      %v2339 = vpop.f32.mrf.mxu0
      %v2340 = vadd.f32 0.0, %v2339
      %2341 = vmatmul.bf16.gmra.mxu0 %v2264
      %v2342 = vpop.f32.mrf.mxu0
      %v2343 = vadd.f32 0.0, %v2342
      %v2344 = vpop.f32.mrf.mxu0
      %v2345 = vadd.f32 0.0, %v2344
      %2346 = vmatmul.bf16.gmra.mxu0 %v2267
      %v2347 = vpop.f32.mrf.mxu0
      %v2348 = vadd.f32 0.0, %v2347
      %v2349 = vpop.f32.mrf.mxu0
      %v2350 = vadd.f32 0.0, %v2349
      %2351 = vmatmul.bf16.gmra.mxu0 %v2270
      %v2352 = vpop.f32.mrf.mxu0
      %v2353 = vadd.f32 0.0, %v2352
      %v2354 = vpop.f32.mrf.mxu0
      %v2355 = vadd.f32 0.0, %v2354
      %2356 = vmatmul.bf16.gmra.mxu0 %v2273
      %v2357 = vpop.f32.mrf.mxu0
      %v2358 = vadd.f32 0.0, %v2357
      %v2359 = vpop.f32.mrf.mxu0
      %v2360 = vadd.f32 0.0, %v2359
      %2361 = vmatmul.bf16.gmra.mxu0 %v2276
      %v2362 = vpop.f32.mrf.mxu0
      %v2363 = vadd.f32 0.0, %v2362
      %v2364 = vpop.f32.mrf.mxu0
      %v2365 = vadd.f32 0.0, %v2364
      %2366 = vdwg.mxu0
      %v2367 = vadd.f32 %v2077, %v2288
      %v2368 = vadd.f32 %v2078, %v2290
      %v2369 = vadd.f32 %v2079, %v2293
      %v2370 = vadd.f32 %v2080, %v2295
      %v2371 = vadd.f32 %v2081, %v2298
      %v2372 = vadd.f32 %v2082, %v2300
      %v2373 = vadd.f32 %v2083, %v2303
      %v2374 = vadd.f32 %v2084, %v2305
      %v2375 = vadd.f32 %v2085, %v2308
      %v2376 = vadd.f32 %v2086, %v2310
      %v2377 = vadd.f32 %v2087, %v2313
      %v2378 = vadd.f32 %v2088, %v2315
      %v2379 = vadd.f32 %v2089, %v2318
      %v2380 = vadd.f32 %v2090, %v2320
      %v2381 = vadd.f32 %v2091, %v2323
      %v2382 = vadd.f32 %v2092, %v2325
      %v2383 = vadd.f32 %v2093, %v2328
      %v2384 = vadd.f32 %v2094, %v2330
      %v2385 = vadd.f32 %v2095, %v2333
      %v2386 = vadd.f32 %v2096, %v2335
      %v2387 = vadd.f32 %v2097, %v2338
      %v2388 = vadd.f32 %v2098, %v2340
      %v2389 = vadd.f32 %v2099, %v2343
      %v2390 = vadd.f32 %v2100, %v2345
      %v2391 = vadd.f32 %v2101, %v2348
      %v2392 = vadd.f32 %v2102, %v2350
      %v2393 = vadd.f32 %v2103, %v2353
      %v2394 = vadd.f32 %v2104, %v2355
      %v2395 = vadd.f32 %v2105, %v2358
      %v2396 = vadd.f32 %v2106, %v2360
      %v2397 = vadd.f32 %v2107, %v2363
      %v2398 = vadd.f32 %v2108, %v2365
      %v2399 = vld [vmem:[%s747] sm:$0xf]
      %v2400 = vld [vmem:[%s747 + $0x4] sm:$0xf]
      %v2401 = vld [vmem:[%s747 + $0x8] sm:$0x1]
      %v2402 = vld [vmem:[%s747 + $0xc] sm:$0xf]
      %v2403 = vld [vmem:[%s747 + $0x10] sm:$0xf]
      %v2404 = vld [vmem:[%s747 + $0x14] sm:$0x1]
      %v2405 = vld [vmem:[%s747 + $0x18] sm:$0xf]
      %v2406 = vld [vmem:[%s747 + $0x1c] sm:$0xf]
      %v2407 = vld [vmem:[%s747 + $0x20] sm:$0x1]
      %v2408 = vld [vmem:[%s747 + $0x24] sm:$0xf]
      %v2409 = vld [vmem:[%s747 + $0x28] sm:$0xf]
      %v2410 = vld [vmem:[%s747 + $0x2c] sm:$0x1]
      %v2411 = vld [vmem:[%s747 + $0x30] sm:$0xf]
      %v2412 = vld [vmem:[%s747 + $0x34] sm:$0xf]
      %v2413 = vld [vmem:[%s747 + $0x38] sm:$0x1]
      %v2414 = vld [vmem:[%s747 + $0x3c] sm:$0xf]
      %v2415 = vld [vmem:[%s747 + $0x40] sm:$0xf]
      %v2416 = vld [vmem:[%s747 + $0x44] sm:$0x1]
      %v2417 = vld [vmem:[%s747 + $0x48] sm:$0xf]
      %v2418 = vld [vmem:[%s747 + $0x4c] sm:$0xf]
      %v2419 = vld [vmem:[%s747 + $0x50] sm:$0x1]
      %v2420 = vld [vmem:[%s747 + $0x54] sm:$0xf]
      %v2421 = vld [vmem:[%s747 + $0x58] sm:$0xf]
      %v2422 = vld [vmem:[%s747 + $0x5c] sm:$0x1]
      %v2423 = vld [vmem:[%s747 + $0x60] sm:$0xf]
      %v2424 = vld [vmem:[%s747 + $0x64] sm:$0xf]
      %v2425 = vld [vmem:[%s747 + $0x68] sm:$0x1]
      %v2426 = vld [vmem:[%s747 + $0x6c] sm:$0xf]
      %v2427 = vld [vmem:[%s747 + $0x70] sm:$0xf]
      %v2428 = vld [vmem:[%s747 + $0x74] sm:$0x1]
      %v2429 = vld [vmem:[%s747 + $0x78] sm:$0xf]
      %v2430 = vld [vmem:[%s747 + $0x7c] sm:$0xf]
      %v2431 = vld [vmem:[%s747 + $0x80] sm:$0x1]
      %v2432 = vld [vmem:[%s747 + $0x84] sm:$0xf]
      %v2433 = vld [vmem:[%s747 + $0x88] sm:$0xf]
      %v2434 = vld [vmem:[%s747 + $0x8c] sm:$0x1]
      %v2435 = vld [vmem:[%s747 + $0x90] sm:$0xf]
      %v2436 = vld [vmem:[%s747 + $0x94] sm:$0xf]
      %v2437 = vld [vmem:[%s747 + $0x98] sm:$0x1]
      %v2438 = vld [vmem:[%s747 + $0x9c] sm:$0xf]
      %v2439 = vld [vmem:[%s747 + $0xa0] sm:$0xf]
      %v2440 = vld [vmem:[%s747 + $0xa4] sm:$0x1]
      %v2441 = vld [vmem:[%s747 + $0xa8] sm:$0xf]
      %v2442 = vld [vmem:[%s747 + $0xac] sm:$0xf]
      %v2443 = vld [vmem:[%s747 + $0xb0] sm:$0x1]
      %v2444 = vld [vmem:[%s747 + $0xb4] sm:$0xf]
      %v2445 = vld [vmem:[%s747 + $0xb8] sm:$0xf]
      %v2446 = vld [vmem:[%s747 + $0xbc] sm:$0x1]
      %v2448 = vshrl.u32 %v2399, 16
      %v2450 = vrot.slane %v2448, 4
      %v2451 = vshll.u32 %v2399, 16
      %v2453 = vrot.slane %v2451, 5
      %v2454 = vor.u32 %v2450, %v2453
      %v2455 = vrot.slane %v2454, 4
      %v2457 = vshll.u32 %v2400, 16
      %v2459 = vrot.slane %v2457, 5
      %v2460 = vsel %vm917, %v2455, %v2459
      %v2461 = vshrl.u32 %v2400, 16
      %v2463 = vrot.slane %v2461, 4
      %v2464 = vor.u32 %v2463, %v2459
      %v2465 = vrot.slane %v2464, 4
      %v2467 = vshll.u32 %v2401, 16
      %v2469 = vrot.slane %v2467, 5
      %v2470 = vsel %vm917, %v2465, %v2469
      %v2472 = vshrl.u32 %v2402, 16
      %v2474 = vrot.slane %v2472, 4
      %v2475 = vshll.u32 %v2402, 16
      %v2477 = vrot.slane %v2475, 5
      %v2478 = vor.u32 %v2474, %v2477
      %v2479 = vrot.slane %v2478, 4
      %v2481 = vshll.u32 %v2403, 16
      %v2483 = vrot.slane %v2481, 5
      %v2484 = vsel %vm917, %v2479, %v2483
      %v2485 = vshrl.u32 %v2403, 16
      %v2487 = vrot.slane %v2485, 4
      %v2488 = vor.u32 %v2487, %v2483
      %v2489 = vrot.slane %v2488, 4
      %v2491 = vshll.u32 %v2404, 16
      %v2493 = vrot.slane %v2491, 5
      %v2494 = vsel %vm917, %v2489, %v2493
      %v2496 = vshrl.u32 %v2405, 16
      %v2498 = vrot.slane %v2496, 4
      %v2499 = vshll.u32 %v2405, 16
      %v2501 = vrot.slane %v2499, 5
      %v2502 = vor.u32 %v2498, %v2501
      %v2503 = vrot.slane %v2502, 4
      %v2505 = vshll.u32 %v2406, 16
      %v2507 = vrot.slane %v2505, 5
      %v2508 = vsel %vm917, %v2503, %v2507
      %v2509 = vshrl.u32 %v2406, 16
      %v2511 = vrot.slane %v2509, 4
      %v2512 = vor.u32 %v2511, %v2507
      %v2513 = vrot.slane %v2512, 4
      %v2515 = vshll.u32 %v2407, 16
      %v2517 = vrot.slane %v2515, 5
      %v2518 = vsel %vm917, %v2513, %v2517
      %v2520 = vshrl.u32 %v2408, 16
      %v2522 = vrot.slane %v2520, 4
      %v2523 = vshll.u32 %v2408, 16
      %v2525 = vrot.slane %v2523, 5
      %v2526 = vor.u32 %v2522, %v2525
      %v2527 = vrot.slane %v2526, 4
      %v2529 = vshll.u32 %v2409, 16
      %v2531 = vrot.slane %v2529, 5
      %v2532 = vsel %vm917, %v2527, %v2531
      %v2533 = vshrl.u32 %v2409, 16
      %v2535 = vrot.slane %v2533, 4
      %v2536 = vor.u32 %v2535, %v2531
      %v2537 = vrot.slane %v2536, 4
      %v2539 = vshll.u32 %v2410, 16
      %v2541 = vrot.slane %v2539, 5
      %v2542 = vsel %vm917, %v2537, %v2541
      %v2544 = vshrl.u32 %v2411, 16
      %v2546 = vrot.slane %v2544, 4
      %v2547 = vshll.u32 %v2411, 16
      %v2549 = vrot.slane %v2547, 5
      %v2550 = vor.u32 %v2546, %v2549
      %v2551 = vrot.slane %v2550, 4
      %v2553 = vshll.u32 %v2412, 16
      %v2555 = vrot.slane %v2553, 5
      %v2556 = vsel %vm917, %v2551, %v2555
      %v2557 = vshrl.u32 %v2412, 16
      %v2559 = vrot.slane %v2557, 4
      %v2560 = vor.u32 %v2559, %v2555
      %v2561 = vrot.slane %v2560, 4
      %v2563 = vshll.u32 %v2413, 16
      %v2565 = vrot.slane %v2563, 5
      %v2566 = vsel %vm917, %v2561, %v2565
      %v2568 = vshrl.u32 %v2414, 16
      %v2570 = vrot.slane %v2568, 4
      %v2571 = vshll.u32 %v2414, 16
      %v2573 = vrot.slane %v2571, 5
      %v2574 = vor.u32 %v2570, %v2573
      %v2575 = vrot.slane %v2574, 4
      %v2577 = vshll.u32 %v2415, 16
      %v2579 = vrot.slane %v2577, 5
      %v2580 = vsel %vm917, %v2575, %v2579
      %v2581 = vshrl.u32 %v2415, 16
      %v2583 = vrot.slane %v2581, 4
      %v2584 = vor.u32 %v2583, %v2579
      %v2585 = vrot.slane %v2584, 4
      %v2587 = vshll.u32 %v2416, 16
      %v2589 = vrot.slane %v2587, 5
      %v2590 = vsel %vm917, %v2585, %v2589
      %v2592 = vshrl.u32 %v2417, 16
      %v2594 = vrot.slane %v2592, 4
      %v2595 = vshll.u32 %v2417, 16
      %v2597 = vrot.slane %v2595, 5
      %v2598 = vor.u32 %v2594, %v2597
      %v2599 = vrot.slane %v2598, 4
      %v2601 = vshll.u32 %v2418, 16
      %v2603 = vrot.slane %v2601, 5
      %v2604 = vsel %vm917, %v2599, %v2603
      %v2605 = vshrl.u32 %v2418, 16
      %v2607 = vrot.slane %v2605, 4
      %v2608 = vor.u32 %v2607, %v2603
      %v2609 = vrot.slane %v2608, 4
      %v2611 = vshll.u32 %v2419, 16
      %v2613 = vrot.slane %v2611, 5
      %v2614 = vsel %vm917, %v2609, %v2613
      %v2616 = vshrl.u32 %v2420, 16
      %v2618 = vrot.slane %v2616, 4
      %v2619 = vshll.u32 %v2420, 16
      %v2621 = vrot.slane %v2619, 5
      %v2622 = vor.u32 %v2618, %v2621
      %v2623 = vrot.slane %v2622, 4
      %v2625 = vshll.u32 %v2421, 16
      %v2627 = vrot.slane %v2625, 5
      %v2628 = vsel %vm917, %v2623, %v2627
      %v2629 = vshrl.u32 %v2421, 16
      %v2631 = vrot.slane %v2629, 4
      %v2632 = vor.u32 %v2631, %v2627
      %v2633 = vrot.slane %v2632, 4
      %v2635 = vshll.u32 %v2422, 16
      %v2637 = vrot.slane %v2635, 5
      %v2638 = vsel %vm917, %v2633, %v2637
      %v2640 = vshrl.u32 %v2423, 16
      %v2642 = vrot.slane %v2640, 4
      %v2643 = vshll.u32 %v2423, 16
      %v2645 = vrot.slane %v2643, 5
      %v2646 = vor.u32 %v2642, %v2645
      %v2647 = vrot.slane %v2646, 4
      %v2649 = vshll.u32 %v2424, 16
      %v2651 = vrot.slane %v2649, 5
      %v2652 = vsel %vm917, %v2647, %v2651
      %v2653 = vshrl.u32 %v2424, 16
      %v2655 = vrot.slane %v2653, 4
      %v2656 = vor.u32 %v2655, %v2651
      %v2657 = vrot.slane %v2656, 4
      %v2659 = vshll.u32 %v2425, 16
      %v2661 = vrot.slane %v2659, 5
      %v2662 = vsel %vm917, %v2657, %v2661
      %v2664 = vshrl.u32 %v2426, 16
      %v2666 = vrot.slane %v2664, 4
      %v2667 = vshll.u32 %v2426, 16
      %v2669 = vrot.slane %v2667, 5
      %v2670 = vor.u32 %v2666, %v2669
      %v2671 = vrot.slane %v2670, 4
      %v2673 = vshll.u32 %v2427, 16
      %v2675 = vrot.slane %v2673, 5
      %v2676 = vsel %vm917, %v2671, %v2675
      %v2677 = vshrl.u32 %v2427, 16
      %v2679 = vrot.slane %v2677, 4
      %v2680 = vor.u32 %v2679, %v2675
      %v2681 = vrot.slane %v2680, 4
      %v2683 = vshll.u32 %v2428, 16
      %v2685 = vrot.slane %v2683, 5
      %v2686 = vsel %vm917, %v2681, %v2685
      %v2688 = vshrl.u32 %v2429, 16
      %v2690 = vrot.slane %v2688, 4
      %v2691 = vshll.u32 %v2429, 16
      %v2693 = vrot.slane %v2691, 5
      %v2694 = vor.u32 %v2690, %v2693
      %v2695 = vrot.slane %v2694, 4
      %v2697 = vshll.u32 %v2430, 16
      %v2699 = vrot.slane %v2697, 5
      %v2700 = vsel %vm917, %v2695, %v2699
      %v2701 = vshrl.u32 %v2430, 16
      %v2703 = vrot.slane %v2701, 4
      %v2704 = vor.u32 %v2703, %v2699
      %v2705 = vrot.slane %v2704, 4
      %v2707 = vshll.u32 %v2431, 16
      %v2709 = vrot.slane %v2707, 5
      %v2710 = vsel %vm917, %v2705, %v2709
      %v2712 = vshrl.u32 %v2432, 16
      %v2714 = vrot.slane %v2712, 4
      %v2715 = vshll.u32 %v2432, 16
      %v2717 = vrot.slane %v2715, 5
      %v2718 = vor.u32 %v2714, %v2717
      %v2719 = vrot.slane %v2718, 4
      %v2721 = vshll.u32 %v2433, 16
      %v2723 = vrot.slane %v2721, 5
      %v2724 = vsel %vm917, %v2719, %v2723
      %v2725 = vshrl.u32 %v2433, 16
      %v2727 = vrot.slane %v2725, 4
      %v2728 = vor.u32 %v2727, %v2723
      %v2729 = vrot.slane %v2728, 4
      %v2731 = vshll.u32 %v2434, 16
      %v2733 = vrot.slane %v2731, 5
      %v2734 = vsel %vm917, %v2729, %v2733
      %v2736 = vshrl.u32 %v2435, 16
      %v2738 = vrot.slane %v2736, 4
      %v2739 = vshll.u32 %v2435, 16
      %v2741 = vrot.slane %v2739, 5
      %v2742 = vor.u32 %v2738, %v2741
      %v2743 = vrot.slane %v2742, 4
      %v2745 = vshll.u32 %v2436, 16
      %v2747 = vrot.slane %v2745, 5
      %v2748 = vsel %vm917, %v2743, %v2747
      %v2749 = vshrl.u32 %v2436, 16
      %v2751 = vrot.slane %v2749, 4
      %v2752 = vor.u32 %v2751, %v2747
      %v2753 = vrot.slane %v2752, 4
      %v2755 = vshll.u32 %v2437, 16
      %v2757 = vrot.slane %v2755, 5
      %v2758 = vsel %vm917, %v2753, %v2757
      %v2760 = vshrl.u32 %v2438, 16
      %v2762 = vrot.slane %v2760, 4
      %v2763 = vshll.u32 %v2438, 16
      %v2765 = vrot.slane %v2763, 5
      %v2766 = vor.u32 %v2762, %v2765
      %v2767 = vrot.slane %v2766, 4
      %v2769 = vshll.u32 %v2439, 16
      %v2771 = vrot.slane %v2769, 5
      %v2772 = vsel %vm917, %v2767, %v2771
      %v2773 = vshrl.u32 %v2439, 16
      %v2775 = vrot.slane %v2773, 4
      %v2776 = vor.u32 %v2775, %v2771
      %v2777 = vrot.slane %v2776, 4
      %v2779 = vshll.u32 %v2440, 16
      %v2781 = vrot.slane %v2779, 5
      %v2782 = vsel %vm917, %v2777, %v2781
      %v2784 = vshrl.u32 %v2441, 16
      %v2786 = vrot.slane %v2784, 4
      %v2787 = vshll.u32 %v2441, 16
      %v2789 = vrot.slane %v2787, 5
      %v2790 = vor.u32 %v2786, %v2789
      %v2791 = vrot.slane %v2790, 4
      %v2793 = vshll.u32 %v2442, 16
      %v2795 = vrot.slane %v2793, 5
      %v2796 = vsel %vm917, %v2791, %v2795
      %v2797 = vshrl.u32 %v2442, 16
      %v2799 = vrot.slane %v2797, 4
      %v2800 = vor.u32 %v2799, %v2795
      %v2801 = vrot.slane %v2800, 4
      %v2803 = vshll.u32 %v2443, 16
      %v2805 = vrot.slane %v2803, 5
      %v2806 = vsel %vm917, %v2801, %v2805
      %v2808 = vshrl.u32 %v2444, 16
      %v2810 = vrot.slane %v2808, 4
      %v2811 = vshll.u32 %v2444, 16
      %v2813 = vrot.slane %v2811, 5
      %v2814 = vor.u32 %v2810, %v2813
      %v2815 = vrot.slane %v2814, 4
      %v2817 = vshll.u32 %v2445, 16
      %v2819 = vrot.slane %v2817, 5
      %v2820 = vsel %vm917, %v2815, %v2819
      %v2821 = vshrl.u32 %v2445, 16
      %v2823 = vrot.slane %v2821, 4
      %v2824 = vor.u32 %v2823, %v2819
      %v2825 = vrot.slane %v2824, 4
      %v2827 = vshll.u32 %v2446, 16
      %v2829 = vrot.slane %v2827, 5
      %v2830 = vsel %vm917, %v2825, %v2829
      %s2831 = scalar_lea.vmem %s1, 32
      %v2832 = vld [vmem:[%s2831] sm:$0xf]
      %v2833 = vld [vmem:[%s2831 + $0x4] sm:$0xf]
      %v2834 = vunpack.c.l.b16 %v2460
      %v2835 = vunpack.c.l.b16 %v2470
      %v2836 = vunpack.c.l.b16 %v2484
      %v2837 = vunpack.c.l.b16 %v2494
      %v2838 = vunpack.c.l.b16 %v2508
      %v2839 = vunpack.c.l.b16 %v2518
      %v2840 = vunpack.c.l.b16 %v2532
      %v2841 = vunpack.c.l.b16 %v2542
      %v2842 = vunpack.c.l.b16 %v2556
      %v2843 = vunpack.c.l.b16 %v2566
      %v2844 = vunpack.c.l.b16 %v2580
      %v2845 = vunpack.c.l.b16 %v2590
      %v2846 = vunpack.c.l.b16 %v2604
      %v2847 = vunpack.c.l.b16 %v2614
      %v2848 = vunpack.c.l.b16 %v2628
      %v2849 = vunpack.c.l.b16 %v2638
      %v2850 = vunpack.c.l.b16 %v2652
      %v2851 = vunpack.c.l.b16 %v2662
      %v2852 = vunpack.c.l.b16 %v2676
      %v2853 = vunpack.c.l.b16 %v2686
      %v2854 = vunpack.c.l.b16 %v2700
      %v2855 = vunpack.c.l.b16 %v2710
      %v2856 = vunpack.c.l.b16 %v2724
      %v2857 = vunpack.c.l.b16 %v2734
      %v2858 = vunpack.c.l.b16 %v2748
      %v2859 = vunpack.c.l.b16 %v2758
      %v2860 = vunpack.c.l.b16 %v2772
      %v2861 = vunpack.c.l.b16 %v2782
      %v2862 = vunpack.c.l.b16 %v2796
      %v2863 = vunpack.c.l.b16 %v2806
      %v2864 = vunpack.c.l.b16 %v2820
      %v2865 = vunpack.c.l.b16 %v2830
      %v2866 = vpack.c.b16 %v2835, %v2834
      %v2867 = vpack.c.b16 %v2837, %v2836
      %v2868 = vpack.c.b16 %v2839, %v2838
      %v2869 = vpack.c.b16 %v2841, %v2840
      %v2870 = vpack.c.b16 %v2843, %v2842
      %v2871 = vpack.c.b16 %v2845, %v2844
      %v2872 = vpack.c.b16 %v2847, %v2846
      %v2873 = vpack.c.b16 %v2849, %v2848
      %v2874 = vpack.c.b16 %v2851, %v2850
      %v2875 = vpack.c.b16 %v2853, %v2852
      %v2876 = vpack.c.b16 %v2855, %v2854
      %v2877 = vpack.c.b16 %v2857, %v2856
      %v2878 = vpack.c.b16 %v2859, %v2858
      %v2879 = vpack.c.b16 %v2861, %v2860
      %v2880 = vpack.c.b16 %v2863, %v2862
      %v2881 = vpack.c.b16 %v2865, %v2864
      %v2884 = vunpack.c.l.b16 %v2832
      %v2885 = vunpack.c.l.b16 %v2833
      %v2886 = vpack.c.b16 %v2885, %v2884
      %v2889 = vsel %vm1359, %v2866, 0
      %v2892 = vsel %vm1359, %v2867, 0
      %v2895 = vsel %vm1359, %v2868, 0
      %v2898 = vsel %vm1359, %v2869, 0
      %v2901 = vsel %vm1359, %v2870, 0
      %v2904 = vsel %vm1359, %v2871, 0
      %v2907 = vsel %vm1359, %v2872, 0
      %v2910 = vsel %vm1359, %v2873, 0
      %v2913 = vsel %vm1359, %v2874, 0
      %v2916 = vsel %vm1359, %v2875, 0
      %v2919 = vsel %vm1359, %v2876, 0
      %v2922 = vsel %vm1359, %v2877, 0
      %v2925 = vsel %vm1359, %v2878, 0
      %v2928 = vsel %vm1359, %v2879, 0
      %v2931 = vsel %vm1359, %v2880, 0
      %v2934 = vsel %vm1359, %v2881, 0
      %2936 = vmatpush.bf16.msra.mxu0 0
      %2937 = vmatpush.bf16.msra.mxu0 0
      %2938 = vmatpush.bf16.msra.mxu0 0
      %2939 = vmatpush.bf16.msra.mxu0 0
      %2940 = vmatpush.bf16.msra.mxu0 0
      %2941 = vmatpush.bf16.msra.mxu0 0
      %2942 = vmatpush.bf16.msra.mxu0 0
      %2943 = vmatpush.bf16.msra.mxu0 %v2886
      %2944 = vmatmul.bf16.gmra.mxu0 %v2889
      %v2945 = vpop.f32.mrf.mxu0
      %v2946 = vadd.f32 0.0, %v2945
      %v2947 = vpop.f32.mrf.mxu0
      %v2948 = vadd.f32 0.0, %v2947
      %2949 = vmatmul.bf16.gmra.mxu0 %v2892
      %v2950 = vpop.f32.mrf.mxu0
      %v2951 = vadd.f32 0.0, %v2950
      %v2952 = vpop.f32.mrf.mxu0
      %v2953 = vadd.f32 0.0, %v2952
      %2954 = vmatmul.bf16.gmra.mxu0 %v2895
      %v2955 = vpop.f32.mrf.mxu0
      %v2956 = vadd.f32 0.0, %v2955
      %v2957 = vpop.f32.mrf.mxu0
      %v2958 = vadd.f32 0.0, %v2957
      %2959 = vmatmul.bf16.gmra.mxu0 %v2898
      %v2960 = vpop.f32.mrf.mxu0
      %v2961 = vadd.f32 0.0, %v2960
      %v2962 = vpop.f32.mrf.mxu0
      %v2963 = vadd.f32 0.0, %v2962
      %2964 = vmatmul.bf16.gmra.mxu0 %v2901
      %v2965 = vpop.f32.mrf.mxu0
      %v2966 = vadd.f32 0.0, %v2965
      %v2967 = vpop.f32.mrf.mxu0
      %v2968 = vadd.f32 0.0, %v2967
      %2969 = vmatmul.bf16.gmra.mxu0 %v2904
      %v2970 = vpop.f32.mrf.mxu0
      %v2971 = vadd.f32 0.0, %v2970
      %v2972 = vpop.f32.mrf.mxu0
      %v2973 = vadd.f32 0.0, %v2972
      %2974 = vmatmul.bf16.gmra.mxu0 %v2907
      %v2975 = vpop.f32.mrf.mxu0
      %v2976 = vadd.f32 0.0, %v2975
      %v2977 = vpop.f32.mrf.mxu0
      %v2978 = vadd.f32 0.0, %v2977
      %2979 = vmatmul.bf16.gmra.mxu0 %v2910
      %v2980 = vpop.f32.mrf.mxu0
      %v2981 = vadd.f32 0.0, %v2980
      %v2982 = vpop.f32.mrf.mxu0
      %v2983 = vadd.f32 0.0, %v2982
      %2984 = vmatmul.bf16.gmra.mxu0 %v2913
      %v2985 = vpop.f32.mrf.mxu0
      %v2986 = vadd.f32 0.0, %v2985
      %v2987 = vpop.f32.mrf.mxu0
      %v2988 = vadd.f32 0.0, %v2987
      %2989 = vmatmul.bf16.gmra.mxu0 %v2916
      %v2990 = vpop.f32.mrf.mxu0
      %v2991 = vadd.f32 0.0, %v2990
      %v2992 = vpop.f32.mrf.mxu0
      %v2993 = vadd.f32 0.0, %v2992
      %2994 = vmatmul.bf16.gmra.mxu0 %v2919
      %v2995 = vpop.f32.mrf.mxu0
      %v2996 = vadd.f32 0.0, %v2995
      %v2997 = vpop.f32.mrf.mxu0
      %v2998 = vadd.f32 0.0, %v2997
      %2999 = vmatmul.bf16.gmra.mxu0 %v2922
      %v3000 = vpop.f32.mrf.mxu0
      %v3001 = vadd.f32 0.0, %v3000
      %v3002 = vpop.f32.mrf.mxu0
      %v3003 = vadd.f32 0.0, %v3002
      %3004 = vmatmul.bf16.gmra.mxu0 %v2925
      %v3005 = vpop.f32.mrf.mxu0
      %v3006 = vadd.f32 0.0, %v3005
      %v3007 = vpop.f32.mrf.mxu0
      %v3008 = vadd.f32 0.0, %v3007
      %3009 = vmatmul.bf16.gmra.mxu0 %v2928
      %v3010 = vpop.f32.mrf.mxu0
      %v3011 = vadd.f32 0.0, %v3010
      %v3012 = vpop.f32.mrf.mxu0
      %v3013 = vadd.f32 0.0, %v3012
      %3014 = vmatmul.bf16.gmra.mxu0 %v2931
      %v3015 = vpop.f32.mrf.mxu0
      %v3016 = vadd.f32 0.0, %v3015
      %v3017 = vpop.f32.mrf.mxu0
      %v3018 = vadd.f32 0.0, %v3017
      %3019 = vmatmul.bf16.gmra.mxu0 %v2934
      %v3020 = vpop.f32.mrf.mxu0
      %v3021 = vadd.f32 0.0, %v3020
      %v3022 = vpop.f32.mrf.mxu0
      %v3023 = vadd.f32 0.0, %v3022
      %3024 = vdwg.mxu0
      %v3025 = vadd.f32 %v2367, %v2946
      %v3026 = vadd.f32 %v2368, %v2948
      %v3027 = vadd.f32 %v2369, %v2951
      %v3028 = vadd.f32 %v2370, %v2953
      %v3029 = vadd.f32 %v2371, %v2956
      %v3030 = vadd.f32 %v2372, %v2958
      %v3031 = vadd.f32 %v2373, %v2961
      %v3032 = vadd.f32 %v2374, %v2963
      %v3033 = vadd.f32 %v2375, %v2966
      %v3034 = vadd.f32 %v2376, %v2968
      %v3035 = vadd.f32 %v2377, %v2971
      %v3036 = vadd.f32 %v2378, %v2973
      %v3037 = vadd.f32 %v2379, %v2976
      %v3038 = vadd.f32 %v2380, %v2978
      %v3039 = vadd.f32 %v2381, %v2981
      %v3040 = vadd.f32 %v2382, %v2983
      %v3041 = vadd.f32 %v2383, %v2986
      %v3042 = vadd.f32 %v2384, %v2988
      %v3043 = vadd.f32 %v2385, %v2991
      %v3044 = vadd.f32 %v2386, %v2993
      %v3045 = vadd.f32 %v2387, %v2996
      %v3046 = vadd.f32 %v2388, %v2998
      %v3047 = vadd.f32 %v2389, %v3001
      %v3048 = vadd.f32 %v2390, %v3003
      %v3049 = vadd.f32 %v2391, %v3006
      %v3050 = vadd.f32 %v2392, %v3008
      %v3051 = vadd.f32 %v2393, %v3011
      %v3052 = vadd.f32 %v2394, %v3013
      %v3053 = vadd.f32 %v2395, %v3016
      %v3054 = vadd.f32 %v2396, %v3018
      %v3055 = vadd.f32 %v2397, %v3021
      %v3056 = vadd.f32 %v2398, %v3023
      %v3057 = vld [vmem:[%s747] sm:$0xe]
      %v3058 = vld [vmem:[%s747 + $0xc] sm:$0xe]
      %v3059 = vld [vmem:[%s747 + $0x18] sm:$0xe]
      %v3060 = vld [vmem:[%s747 + $0x24] sm:$0xe]
      %v3061 = vld [vmem:[%s747 + $0x30] sm:$0xe]
      %v3062 = vld [vmem:[%s747 + $0x3c] sm:$0xe]
      %v3063 = vld [vmem:[%s747 + $0x48] sm:$0xe]
      %v3064 = vld [vmem:[%s747 + $0x54] sm:$0xe]
      %v3065 = vld [vmem:[%s747 + $0x60] sm:$0xe]
      %v3066 = vld [vmem:[%s747 + $0x6c] sm:$0xe]
      %v3067 = vld [vmem:[%s747 + $0x78] sm:$0xe]
      %v3068 = vld [vmem:[%s747 + $0x84] sm:$0xe]
      %v3069 = vld [vmem:[%s747 + $0x90] sm:$0xe]
      %v3070 = vld [vmem:[%s747 + $0x9c] sm:$0xe]
      %v3071 = vld [vmem:[%s747 + $0xa8] sm:$0xe]
      %v3072 = vld [vmem:[%s747 + $0xb4] sm:$0xe]
      %v3121 = vrot.slane %v3057, 5
      %v3122 = vrot.slane %v3121, 4
      %v3123 = vrot.slane %v2400, 5
      %v3124 = vsel %vm1770, %v3122, %v3123
      %v3125 = vrot.slane %v3123, 4
      %v3126 = vrot.slane %v2401, 5
      %v3127 = vsel %vm1770, %v3125, %v3126
      %v3128 = vrot.slane %v3058, 5
      %v3129 = vrot.slane %v3128, 4
      %v3130 = vrot.slane %v2403, 5
      %v3131 = vsel %vm1770, %v3129, %v3130
      %v3132 = vrot.slane %v3130, 4
      %v3133 = vrot.slane %v2404, 5
      %v3134 = vsel %vm1770, %v3132, %v3133
      %v3135 = vrot.slane %v3059, 5
      %v3136 = vrot.slane %v3135, 4
      %v3137 = vrot.slane %v2406, 5
      %v3138 = vsel %vm1770, %v3136, %v3137
      %v3139 = vrot.slane %v3137, 4
      %v3140 = vrot.slane %v2407, 5
      %v3141 = vsel %vm1770, %v3139, %v3140
      %v3142 = vrot.slane %v3060, 5
      %v3143 = vrot.slane %v3142, 4
      %v3144 = vrot.slane %v2409, 5
      %v3145 = vsel %vm1770, %v3143, %v3144
      %v3146 = vrot.slane %v3144, 4
      %v3147 = vrot.slane %v2410, 5
      %v3148 = vsel %vm1770, %v3146, %v3147
      %v3149 = vrot.slane %v3061, 5
      %v3150 = vrot.slane %v3149, 4
      %v3151 = vrot.slane %v2412, 5
      %v3152 = vsel %vm1770, %v3150, %v3151
      %v3153 = vrot.slane %v3151, 4
      %v3154 = vrot.slane %v2413, 5
      %v3155 = vsel %vm1770, %v3153, %v3154
      %v3156 = vrot.slane %v3062, 5
      %v3157 = vrot.slane %v3156, 4
      %v3158 = vrot.slane %v2415, 5
      %v3159 = vsel %vm1770, %v3157, %v3158
      %v3160 = vrot.slane %v3158, 4
      %v3161 = vrot.slane %v2416, 5
      %v3162 = vsel %vm1770, %v3160, %v3161
      %v3163 = vrot.slane %v3063, 5
      %v3164 = vrot.slane %v3163, 4
      %v3165 = vrot.slane %v2418, 5
      %v3166 = vsel %vm1770, %v3164, %v3165
      %v3167 = vrot.slane %v3165, 4
      %v3168 = vrot.slane %v2419, 5
      %v3169 = vsel %vm1770, %v3167, %v3168
      %v3170 = vrot.slane %v3064, 5
      %v3171 = vrot.slane %v3170, 4
      %v3172 = vrot.slane %v2421, 5
      %v3173 = vsel %vm1770, %v3171, %v3172
      %v3174 = vrot.slane %v3172, 4
      %v3175 = vrot.slane %v2422, 5
      %v3176 = vsel %vm1770, %v3174, %v3175
      %v3177 = vrot.slane %v3065, 5
      %v3178 = vrot.slane %v3177, 4
      %v3179 = vrot.slane %v2424, 5
      %v3180 = vsel %vm1770, %v3178, %v3179
      %v3181 = vrot.slane %v3179, 4
      %v3182 = vrot.slane %v2425, 5
      %v3183 = vsel %vm1770, %v3181, %v3182
      %v3184 = vrot.slane %v3066, 5
      %v3185 = vrot.slane %v3184, 4
      %v3186 = vrot.slane %v2427, 5
      %v3187 = vsel %vm1770, %v3185, %v3186
      %v3188 = vrot.slane %v3186, 4
      %v3189 = vrot.slane %v2428, 5
      %v3190 = vsel %vm1770, %v3188, %v3189
      %v3191 = vrot.slane %v3067, 5
      %v3192 = vrot.slane %v3191, 4
      %v3193 = vrot.slane %v2430, 5
      %v3194 = vsel %vm1770, %v3192, %v3193
      %v3195 = vrot.slane %v3193, 4
      %v3196 = vrot.slane %v2431, 5
      %v3197 = vsel %vm1770, %v3195, %v3196
      %v3198 = vrot.slane %v3068, 5
      %v3199 = vrot.slane %v3198, 4
      %v3200 = vrot.slane %v2433, 5
      %v3201 = vsel %vm1770, %v3199, %v3200
      %v3202 = vrot.slane %v3200, 4
      %v3203 = vrot.slane %v2434, 5
      %v3204 = vsel %vm1770, %v3202, %v3203
      %v3205 = vrot.slane %v3069, 5
      %v3206 = vrot.slane %v3205, 4
      %v3207 = vrot.slane %v2436, 5
      %v3208 = vsel %vm1770, %v3206, %v3207
      %v3209 = vrot.slane %v3207, 4
      %v3210 = vrot.slane %v2437, 5
      %v3211 = vsel %vm1770, %v3209, %v3210
      %v3212 = vrot.slane %v3070, 5
      %v3213 = vrot.slane %v3212, 4
      %v3214 = vrot.slane %v2439, 5
      %v3215 = vsel %vm1770, %v3213, %v3214
      %v3216 = vrot.slane %v3214, 4
      %v3217 = vrot.slane %v2440, 5
      %v3218 = vsel %vm1770, %v3216, %v3217
      %v3219 = vrot.slane %v3071, 5
      %v3220 = vrot.slane %v3219, 4
      %v3221 = vrot.slane %v2442, 5
      %v3222 = vsel %vm1770, %v3220, %v3221
      %v3223 = vrot.slane %v3221, 4
      %v3224 = vrot.slane %v2443, 5
      %v3225 = vsel %vm1770, %v3223, %v3224
      %v3226 = vrot.slane %v3072, 5
      %v3227 = vrot.slane %v3226, 4
      %v3228 = vrot.slane %v2445, 5
      %v3229 = vsel %vm1770, %v3227, %v3228
      %v3230 = vrot.slane %v3228, 4
      %v3231 = vrot.slane %v2446, 5
      %v3232 = vsel %vm1770, %v3230, %v3231
      %s3233 = scalar_lea.vmem %s1, 40
      %v3234 = vld [vmem:[%s3233] sm:$0xf]
      %v3235 = vld [vmem:[%s3233 + $0x4] sm:$0xf]
      %v3236 = vunpack.c.l.b16 %v3124
      %v3237 = vunpack.c.l.b16 %v3127
      %v3238 = vunpack.c.l.b16 %v3131
      %v3239 = vunpack.c.l.b16 %v3134
      %v3240 = vunpack.c.l.b16 %v3138
      %v3241 = vunpack.c.l.b16 %v3141
      %v3242 = vunpack.c.l.b16 %v3145
      %v3243 = vunpack.c.l.b16 %v3148
      %v3244 = vunpack.c.l.b16 %v3152
      %v3245 = vunpack.c.l.b16 %v3155
      %v3246 = vunpack.c.l.b16 %v3159
      %v3247 = vunpack.c.l.b16 %v3162
      %v3248 = vunpack.c.l.b16 %v3166
      %v3249 = vunpack.c.l.b16 %v3169
      %v3250 = vunpack.c.l.b16 %v3173
      %v3251 = vunpack.c.l.b16 %v3176
      %v3252 = vunpack.c.l.b16 %v3180
      %v3253 = vunpack.c.l.b16 %v3183
      %v3254 = vunpack.c.l.b16 %v3187
      %v3255 = vunpack.c.l.b16 %v3190
      %v3256 = vunpack.c.l.b16 %v3194
      %v3257 = vunpack.c.l.b16 %v3197
      %v3258 = vunpack.c.l.b16 %v3201
      %v3259 = vunpack.c.l.b16 %v3204
      %v3260 = vunpack.c.l.b16 %v3208
      %v3261 = vunpack.c.l.b16 %v3211
      %v3262 = vunpack.c.l.b16 %v3215
      %v3263 = vunpack.c.l.b16 %v3218
      %v3264 = vunpack.c.l.b16 %v3222
      %v3265 = vunpack.c.l.b16 %v3225
      %v3266 = vunpack.c.l.b16 %v3229
      %v3267 = vunpack.c.l.b16 %v3232
      %v3268 = vpack.c.b16 %v3237, %v3236
      %v3269 = vpack.c.b16 %v3239, %v3238
      %v3270 = vpack.c.b16 %v3241, %v3240
      %v3271 = vpack.c.b16 %v3243, %v3242
      %v3272 = vpack.c.b16 %v3245, %v3244
      %v3273 = vpack.c.b16 %v3247, %v3246
      %v3274 = vpack.c.b16 %v3249, %v3248
      %v3275 = vpack.c.b16 %v3251, %v3250
      %v3276 = vpack.c.b16 %v3253, %v3252
      %v3277 = vpack.c.b16 %v3255, %v3254
      %v3278 = vpack.c.b16 %v3257, %v3256
      %v3279 = vpack.c.b16 %v3259, %v3258
      %v3280 = vpack.c.b16 %v3261, %v3260
      %v3281 = vpack.c.b16 %v3263, %v3262
      %v3282 = vpack.c.b16 %v3265, %v3264
      %v3283 = vpack.c.b16 %v3267, %v3266
      %v3286 = vunpack.c.l.b16 %v3234
      %v3287 = vunpack.c.l.b16 %v3235
      %v3288 = vpack.c.b16 %v3287, %v3286
      %v3291 = vsel %vm1359, %v3268, 0
      %v3294 = vsel %vm1359, %v3269, 0
      %v3297 = vsel %vm1359, %v3270, 0
      %v3300 = vsel %vm1359, %v3271, 0
      %v3303 = vsel %vm1359, %v3272, 0
      %v3306 = vsel %vm1359, %v3273, 0
      %v3309 = vsel %vm1359, %v3274, 0
      %v3312 = vsel %vm1359, %v3275, 0
      %v3315 = vsel %vm1359, %v3276, 0
      %v3318 = vsel %vm1359, %v3277, 0
      %v3321 = vsel %vm1359, %v3278, 0
      %v3324 = vsel %vm1359, %v3279, 0
      %v3327 = vsel %vm1359, %v3280, 0
      %v3330 = vsel %vm1359, %v3281, 0
      %v3333 = vsel %vm1359, %v3282, 0
      %v3336 = vsel %vm1359, %v3283, 0
      %3338 = vmatpush.bf16.msra.mxu0 0
      %3339 = vmatpush.bf16.msra.mxu0 0
      %3340 = vmatpush.bf16.msra.mxu0 0
      %3341 = vmatpush.bf16.msra.mxu0 0
      %3342 = vmatpush.bf16.msra.mxu0 0
      %3343 = vmatpush.bf16.msra.mxu0 0
      %3344 = vmatpush.bf16.msra.mxu0 0
      %3345 = vmatpush.bf16.msra.mxu0 %v3288
      %3346 = vmatmul.bf16.gmra.mxu0 %v3291
      %v3347 = vpop.f32.mrf.mxu0
      %v3348 = vadd.f32 0.0, %v3347
      %v3349 = vpop.f32.mrf.mxu0
      %v3350 = vadd.f32 0.0, %v3349
      %3351 = vmatmul.bf16.gmra.mxu0 %v3294
      %v3352 = vpop.f32.mrf.mxu0
      %v3353 = vadd.f32 0.0, %v3352
      %v3354 = vpop.f32.mrf.mxu0
      %v3355 = vadd.f32 0.0, %v3354
      %3356 = vmatmul.bf16.gmra.mxu0 %v3297
      %v3357 = vpop.f32.mrf.mxu0
      %v3358 = vadd.f32 0.0, %v3357
      %v3359 = vpop.f32.mrf.mxu0
      %v3360 = vadd.f32 0.0, %v3359
      %3361 = vmatmul.bf16.gmra.mxu0 %v3300
      %v3362 = vpop.f32.mrf.mxu0
      %v3363 = vadd.f32 0.0, %v3362
      %v3364 = vpop.f32.mrf.mxu0
      %v3365 = vadd.f32 0.0, %v3364
      %3366 = vmatmul.bf16.gmra.mxu0 %v3303
      %v3367 = vpop.f32.mrf.mxu0
      %v3368 = vadd.f32 0.0, %v3367
      %v3369 = vpop.f32.mrf.mxu0
      %v3370 = vadd.f32 0.0, %v3369
      %3371 = vmatmul.bf16.gmra.mxu0 %v3306
      %v3372 = vpop.f32.mrf.mxu0
      %v3373 = vadd.f32 0.0, %v3372
      %v3374 = vpop.f32.mrf.mxu0
      %v3375 = vadd.f32 0.0, %v3374
      %3376 = vmatmul.bf16.gmra.mxu0 %v3309
      %v3377 = vpop.f32.mrf.mxu0
      %v3378 = vadd.f32 0.0, %v3377
      %v3379 = vpop.f32.mrf.mxu0
      %v3380 = vadd.f32 0.0, %v3379
      %3381 = vmatmul.bf16.gmra.mxu0 %v3312
      %v3382 = vpop.f32.mrf.mxu0
      %v3383 = vadd.f32 0.0, %v3382
      %v3384 = vpop.f32.mrf.mxu0
      %v3385 = vadd.f32 0.0, %v3384
      %3386 = vmatmul.bf16.gmra.mxu0 %v3315
      %v3387 = vpop.f32.mrf.mxu0
      %v3388 = vadd.f32 0.0, %v3387
      %v3389 = vpop.f32.mrf.mxu0
      %v3390 = vadd.f32 0.0, %v3389
      %3391 = vmatmul.bf16.gmra.mxu0 %v3318
      %v3392 = vpop.f32.mrf.mxu0
      %v3393 = vadd.f32 0.0, %v3392
      %v3394 = vpop.f32.mrf.mxu0
      %v3395 = vadd.f32 0.0, %v3394
      %3396 = vmatmul.bf16.gmra.mxu0 %v3321
      %v3397 = vpop.f32.mrf.mxu0
      %v3398 = vadd.f32 0.0, %v3397
      %v3399 = vpop.f32.mrf.mxu0
      %v3400 = vadd.f32 0.0, %v3399
      %3401 = vmatmul.bf16.gmra.mxu0 %v3324
      %v3402 = vpop.f32.mrf.mxu0
      %v3403 = vadd.f32 0.0, %v3402
      %v3404 = vpop.f32.mrf.mxu0
      %v3405 = vadd.f32 0.0, %v3404
      %3406 = vmatmul.bf16.gmra.mxu0 %v3327
      %v3407 = vpop.f32.mrf.mxu0
      %v3408 = vadd.f32 0.0, %v3407
      %v3409 = vpop.f32.mrf.mxu0
      %v3410 = vadd.f32 0.0, %v3409
      %3411 = vmatmul.bf16.gmra.mxu0 %v3330
      %v3412 = vpop.f32.mrf.mxu0
      %v3413 = vadd.f32 0.0, %v3412
      %v3414 = vpop.f32.mrf.mxu0
      %v3415 = vadd.f32 0.0, %v3414
      %3416 = vmatmul.bf16.gmra.mxu0 %v3333
      %v3417 = vpop.f32.mrf.mxu0
      %v3418 = vadd.f32 0.0, %v3417
      %v3419 = vpop.f32.mrf.mxu0
      %v3420 = vadd.f32 0.0, %v3419
      %3421 = vmatmul.bf16.gmra.mxu0 %v3336
      %v3422 = vpop.f32.mrf.mxu0
      %v3423 = vadd.f32 0.0, %v3422
      %v3424 = vpop.f32.mrf.mxu0
      %v3425 = vadd.f32 0.0, %v3424
      %3426 = vdwg.mxu0
      %v3427 = vadd.f32 %v3025, %v3348
      %v3428 = vadd.f32 %v3026, %v3350
      %v3429 = vadd.f32 %v3027, %v3353
      %v3430 = vadd.f32 %v3028, %v3355
      %v3431 = vadd.f32 %v3029, %v3358
      %v3432 = vadd.f32 %v3030, %v3360
      %v3433 = vadd.f32 %v3031, %v3363
      %v3434 = vadd.f32 %v3032, %v3365
      %v3435 = vadd.f32 %v3033, %v3368
      %v3436 = vadd.f32 %v3034, %v3370
      %v3437 = vadd.f32 %v3035, %v3373
      %v3438 = vadd.f32 %v3036, %v3375
      %v3439 = vadd.f32 %v3037, %v3378
      %v3440 = vadd.f32 %v3038, %v3380
      %v3441 = vadd.f32 %v3039, %v3383
      %v3442 = vadd.f32 %v3040, %v3385
      %v3443 = vadd.f32 %v3041, %v3388
      %v3444 = vadd.f32 %v3042, %v3390
      %v3445 = vadd.f32 %v3043, %v3393
      %v3446 = vadd.f32 %v3044, %v3395
      %v3447 = vadd.f32 %v3045, %v3398
      %v3448 = vadd.f32 %v3046, %v3400
      %v3449 = vadd.f32 %v3047, %v3403
      %v3450 = vadd.f32 %v3048, %v3405
      %v3451 = vadd.f32 %v3049, %v3408
      %v3452 = vadd.f32 %v3050, %v3410
      %v3453 = vadd.f32 %v3051, %v3413
      %v3454 = vadd.f32 %v3052, %v3415
      %v3455 = vadd.f32 %v3053, %v3418
      %v3456 = vadd.f32 %v3054, %v3420
      %v3457 = vadd.f32 %v3055, %v3423
      %v3458 = vadd.f32 %v3056, %v3425
      %s3459 = scalar_lea.vmem [#allocation2], 24
      %v3460 = vld [vmem:[%s3459] sm:$0xf]
      %v3461 = vld [vmem:[%s3459 + $0x4] sm:$0xf]
      %v3462 = vld [vmem:[%s3459 + $0xc] sm:$0xf]
      %v3463 = vld [vmem:[%s3459 + $0x10] sm:$0xf]
      %v3464 = vld [vmem:[%s3459 + $0x18] sm:$0xf]
      %v3465 = vld [vmem:[%s3459 + $0x1c] sm:$0xf]
      %v3466 = vld [vmem:[%s3459 + $0x24] sm:$0xf]
      %v3467 = vld [vmem:[%s3459 + $0x28] sm:$0xf]
      %v3468 = vld [vmem:[%s3459 + $0x30] sm:$0xf]
      %v3469 = vld [vmem:[%s3459 + $0x34] sm:$0xf]
      %v3470 = vld [vmem:[%s3459 + $0x3c] sm:$0xf]
      %v3471 = vld [vmem:[%s3459 + $0x40] sm:$0xf]
      %v3472 = vld [vmem:[%s3459 + $0x48] sm:$0xf]
      %v3473 = vld [vmem:[%s3459 + $0x4c] sm:$0xf]
      %v3474 = vld [vmem:[%s3459 + $0x54] sm:$0xf]
      %v3475 = vld [vmem:[%s3459 + $0x58] sm:$0xf]
      %v3476 = vld [vmem:[%s3459 + $0x60] sm:$0xf]
      %v3477 = vld [vmem:[%s3459 + $0x64] sm:$0xf]
      %v3478 = vld [vmem:[%s3459 + $0x6c] sm:$0xf]
      %v3479 = vld [vmem:[%s3459 + $0x70] sm:$0xf]
      %v3480 = vld [vmem:[%s3459 + $0x78] sm:$0xf]
      %v3481 = vld [vmem:[%s3459 + $0x7c] sm:$0xf]
      %v3482 = vld [vmem:[%s3459 + $0x84] sm:$0xf]
      %v3483 = vld [vmem:[%s3459 + $0x88] sm:$0xf]
      %v3484 = vld [vmem:[%s3459 + $0x90] sm:$0xf]
      %v3485 = vld [vmem:[%s3459 + $0x94] sm:$0xf]
      %v3486 = vld [vmem:[%s3459 + $0x9c] sm:$0xf]
      %v3487 = vld [vmem:[%s3459 + $0xa0] sm:$0xf]
      %v3488 = vld [vmem:[%s3459 + $0xa8] sm:$0xf]
      %v3489 = vld [vmem:[%s3459 + $0xac] sm:$0xf]
      %v3490 = vld [vmem:[%s3459 + $0xb4] sm:$0xf]
      %v3491 = vld [vmem:[%s3459 + $0xb8] sm:$0xf]
      %s3492 = scalar_lea.vmem %s1, 48
      %v3493 = vld [vmem:[%s3492] sm:$0xf]
      %v3494 = vld [vmem:[%s3492 + $0x4] sm:$0xf]
      %v3527 = vunpack.c.l.b16 %v3460
      %v3528 = vunpack.c.l.b16 %v3461
      %v3529 = vunpack.c.l.b16 %v3462
      %v3530 = vunpack.c.l.b16 %v3463
      %v3531 = vunpack.c.l.b16 %v3464
      %v3532 = vunpack.c.l.b16 %v3465
      %v3533 = vunpack.c.l.b16 %v3466
      %v3534 = vunpack.c.l.b16 %v3467
      %v3535 = vunpack.c.l.b16 %v3468
      %v3536 = vunpack.c.l.b16 %v3469
      %v3537 = vunpack.c.l.b16 %v3470
      %v3538 = vunpack.c.l.b16 %v3471
      %v3539 = vunpack.c.l.b16 %v3472
      %v3540 = vunpack.c.l.b16 %v3473
      %v3541 = vunpack.c.l.b16 %v3474
      %v3542 = vunpack.c.l.b16 %v3475
      %v3543 = vunpack.c.l.b16 %v3476
      %v3544 = vunpack.c.l.b16 %v3477
      %v3545 = vunpack.c.l.b16 %v3478
      %v3546 = vunpack.c.l.b16 %v3479
      %v3547 = vunpack.c.l.b16 %v3480
      %v3548 = vunpack.c.l.b16 %v3481
      %v3549 = vunpack.c.l.b16 %v3482
      %v3550 = vunpack.c.l.b16 %v3483
      %v3551 = vunpack.c.l.b16 %v3484
      %v3552 = vunpack.c.l.b16 %v3485
      %v3553 = vunpack.c.l.b16 %v3486
      %v3554 = vunpack.c.l.b16 %v3487
      %v3555 = vunpack.c.l.b16 %v3488
      %v3556 = vunpack.c.l.b16 %v3489
      %v3557 = vunpack.c.l.b16 %v3490
      %v3558 = vunpack.c.l.b16 %v3491
      %v3559 = vpack.c.b16 %v3528, %v3527
      %v3560 = vpack.c.b16 %v3530, %v3529
      %v3561 = vpack.c.b16 %v3532, %v3531
      %v3562 = vpack.c.b16 %v3534, %v3533
      %v3563 = vpack.c.b16 %v3536, %v3535
      %v3564 = vpack.c.b16 %v3538, %v3537
      %v3565 = vpack.c.b16 %v3540, %v3539
      %v3566 = vpack.c.b16 %v3542, %v3541
      %v3567 = vpack.c.b16 %v3544, %v3543
      %v3568 = vpack.c.b16 %v3546, %v3545
      %v3569 = vpack.c.b16 %v3548, %v3547
      %v3570 = vpack.c.b16 %v3550, %v3549
      %v3571 = vpack.c.b16 %v3552, %v3551
      %v3572 = vpack.c.b16 %v3554, %v3553
      %v3573 = vpack.c.b16 %v3556, %v3555
      %v3574 = vpack.c.b16 %v3558, %v3557
      %v3577 = vunpack.c.l.b16 %v3493
      %v3578 = vunpack.c.l.b16 %v3494
      %v3579 = vpack.c.b16 %v3578, %v3577
      %v3582 = vsel %vm1359, %v3559, 0
      %v3585 = vsel %vm1359, %v3560, 0
      %v3588 = vsel %vm1359, %v3561, 0
      %v3591 = vsel %vm1359, %v3562, 0
      %v3594 = vsel %vm1359, %v3563, 0
      %v3597 = vsel %vm1359, %v3564, 0
      %v3600 = vsel %vm1359, %v3565, 0
      %v3603 = vsel %vm1359, %v3566, 0
      %v3606 = vsel %vm1359, %v3567, 0
      %v3609 = vsel %vm1359, %v3568, 0
      %v3612 = vsel %vm1359, %v3569, 0
      %v3615 = vsel %vm1359, %v3570, 0
      %v3618 = vsel %vm1359, %v3571, 0
      %v3621 = vsel %vm1359, %v3572, 0
      %v3624 = vsel %vm1359, %v3573, 0
      %v3627 = vsel %vm1359, %v3574, 0
      %3629 = vmatpush.bf16.msra.mxu0 0
      %3630 = vmatpush.bf16.msra.mxu0 0
      %3631 = vmatpush.bf16.msra.mxu0 0
      %3632 = vmatpush.bf16.msra.mxu0 0
      %3633 = vmatpush.bf16.msra.mxu0 0
      %3634 = vmatpush.bf16.msra.mxu0 0
      %3635 = vmatpush.bf16.msra.mxu0 0
      %3636 = vmatpush.bf16.msra.mxu0 %v3579
      %3637 = vmatmul.bf16.gmra.mxu0 %v3582
      %v3638 = vpop.f32.mrf.mxu0
      %v3639 = vadd.f32 0.0, %v3638
      %v3640 = vpop.f32.mrf.mxu0
      %v3641 = vadd.f32 0.0, %v3640
      %3642 = vmatmul.bf16.gmra.mxu0 %v3585
      %v3643 = vpop.f32.mrf.mxu0
      %v3644 = vadd.f32 0.0, %v3643
      %v3645 = vpop.f32.mrf.mxu0
      %v3646 = vadd.f32 0.0, %v3645
      %3647 = vmatmul.bf16.gmra.mxu0 %v3588
      %v3648 = vpop.f32.mrf.mxu0
      %v3649 = vadd.f32 0.0, %v3648
      %v3650 = vpop.f32.mrf.mxu0
      %v3651 = vadd.f32 0.0, %v3650
      %3652 = vmatmul.bf16.gmra.mxu0 %v3591
      %v3653 = vpop.f32.mrf.mxu0
      %v3654 = vadd.f32 0.0, %v3653
      %v3655 = vpop.f32.mrf.mxu0
      %v3656 = vadd.f32 0.0, %v3655
      %3657 = vmatmul.bf16.gmra.mxu0 %v3594
      %v3658 = vpop.f32.mrf.mxu0
      %v3659 = vadd.f32 0.0, %v3658
      %v3660 = vpop.f32.mrf.mxu0
      %v3661 = vadd.f32 0.0, %v3660
      %3662 = vmatmul.bf16.gmra.mxu0 %v3597
      %v3663 = vpop.f32.mrf.mxu0
      %v3664 = vadd.f32 0.0, %v3663
      %v3665 = vpop.f32.mrf.mxu0
      %v3666 = vadd.f32 0.0, %v3665
      %3667 = vmatmul.bf16.gmra.mxu0 %v3600
      %v3668 = vpop.f32.mrf.mxu0
      %v3669 = vadd.f32 0.0, %v3668
      %v3670 = vpop.f32.mrf.mxu0
      %v3671 = vadd.f32 0.0, %v3670
      %3672 = vmatmul.bf16.gmra.mxu0 %v3603
      %v3673 = vpop.f32.mrf.mxu0
      %v3674 = vadd.f32 0.0, %v3673
      %v3675 = vpop.f32.mrf.mxu0
      %v3676 = vadd.f32 0.0, %v3675
      %3677 = vmatmul.bf16.gmra.mxu0 %v3606
      %v3678 = vpop.f32.mrf.mxu0
      %v3679 = vadd.f32 0.0, %v3678
      %v3680 = vpop.f32.mrf.mxu0
      %v3681 = vadd.f32 0.0, %v3680
      %3682 = vmatmul.bf16.gmra.mxu0 %v3609
      %v3683 = vpop.f32.mrf.mxu0
      %v3684 = vadd.f32 0.0, %v3683
      %v3685 = vpop.f32.mrf.mxu0
      %v3686 = vadd.f32 0.0, %v3685
      %3687 = vmatmul.bf16.gmra.mxu0 %v3612
      %v3688 = vpop.f32.mrf.mxu0
      %v3689 = vadd.f32 0.0, %v3688
      %v3690 = vpop.f32.mrf.mxu0
      %v3691 = vadd.f32 0.0, %v3690
      %3692 = vmatmul.bf16.gmra.mxu0 %v3615
      %v3693 = vpop.f32.mrf.mxu0
      %v3694 = vadd.f32 0.0, %v3693
      %v3695 = vpop.f32.mrf.mxu0
      %v3696 = vadd.f32 0.0, %v3695
      %3697 = vmatmul.bf16.gmra.mxu0 %v3618
      %v3698 = vpop.f32.mrf.mxu0
      %v3699 = vadd.f32 0.0, %v3698
      %v3700 = vpop.f32.mrf.mxu0
      %v3701 = vadd.f32 0.0, %v3700
      %3702 = vmatmul.bf16.gmra.mxu0 %v3621
      %v3703 = vpop.f32.mrf.mxu0
      %v3704 = vadd.f32 0.0, %v3703
      %v3705 = vpop.f32.mrf.mxu0
      %v3706 = vadd.f32 0.0, %v3705
      %3707 = vmatmul.bf16.gmra.mxu0 %v3624
      %v3708 = vpop.f32.mrf.mxu0
      %v3709 = vadd.f32 0.0, %v3708
      %v3710 = vpop.f32.mrf.mxu0
      %v3711 = vadd.f32 0.0, %v3710
      %3712 = vmatmul.bf16.gmra.mxu0 %v3627
      %v3713 = vpop.f32.mrf.mxu0
      %v3714 = vadd.f32 0.0, %v3713
      %v3715 = vpop.f32.mrf.mxu0
      %v3716 = vadd.f32 0.0, %v3715
      %3717 = vdwg.mxu0
      %v3718 = vadd.f32 %v3427, %v3639
      %v3719 = vadd.f32 %v3428, %v3641
      %v3720 = vadd.f32 %v3429, %v3644
      %v3721 = vadd.f32 %v3430, %v3646
      %v3722 = vadd.f32 %v3431, %v3649
      %v3723 = vadd.f32 %v3432, %v3651
      %v3724 = vadd.f32 %v3433, %v3654
      %v3725 = vadd.f32 %v3434, %v3656
      %v3726 = vadd.f32 %v3435, %v3659
      %v3727 = vadd.f32 %v3436, %v3661
      %v3728 = vadd.f32 %v3437, %v3664
      %v3729 = vadd.f32 %v3438, %v3666
      %v3730 = vadd.f32 %v3439, %v3669
      %v3731 = vadd.f32 %v3440, %v3671
      %v3732 = vadd.f32 %v3441, %v3674
      %v3733 = vadd.f32 %v3442, %v3676
      %v3734 = vadd.f32 %v3443, %v3679
      %v3735 = vadd.f32 %v3444, %v3681
      %v3736 = vadd.f32 %v3445, %v3684
      %v3737 = vadd.f32 %v3446, %v3686
      %v3738 = vadd.f32 %v3447, %v3689
      %v3739 = vadd.f32 %v3448, %v3691
      %v3740 = vadd.f32 %v3449, %v3694
      %v3741 = vadd.f32 %v3450, %v3696
      %v3742 = vadd.f32 %v3451, %v3699
      %v3743 = vadd.f32 %v3452, %v3701
      %v3744 = vadd.f32 %v3453, %v3704
      %v3745 = vadd.f32 %v3454, %v3706
      %v3746 = vadd.f32 %v3455, %v3709
      %v3747 = vadd.f32 %v3456, %v3711
      %v3748 = vadd.f32 %v3457, %v3714
      %v3749 = vadd.f32 %v3458, %v3716
      %v3750 = vld [vmem:[%s3459] sm:$0xf]
      %v3751 = vld [vmem:[%s3459 + $0x4] sm:$0xf]
      %v3752 = vld [vmem:[%s3459 + $0x8] sm:$0x1]
      %v3753 = vld [vmem:[%s3459 + $0xc] sm:$0xf]
      %v3754 = vld [vmem:[%s3459 + $0x10] sm:$0xf]
      %v3755 = vld [vmem:[%s3459 + $0x14] sm:$0x1]
      %v3756 = vld [vmem:[%s3459 + $0x18] sm:$0xf]
      %v3757 = vld [vmem:[%s3459 + $0x1c] sm:$0xf]
      %v3758 = vld [vmem:[%s3459 + $0x20] sm:$0x1]
      %v3759 = vld [vmem:[%s3459 + $0x24] sm:$0xf]
      %v3760 = vld [vmem:[%s3459 + $0x28] sm:$0xf]
      %v3761 = vld [vmem:[%s3459 + $0x2c] sm:$0x1]
      %v3762 = vld [vmem:[%s3459 + $0x30] sm:$0xf]
      %v3763 = vld [vmem:[%s3459 + $0x34] sm:$0xf]
      %v3764 = vld [vmem:[%s3459 + $0x38] sm:$0x1]
      %v3765 = vld [vmem:[%s3459 + $0x3c] sm:$0xf]
      %v3766 = vld [vmem:[%s3459 + $0x40] sm:$0xf]
      %v3767 = vld [vmem:[%s3459 + $0x44] sm:$0x1]
      %v3768 = vld [vmem:[%s3459 + $0x48] sm:$0xf]
      %v3769 = vld [vmem:[%s3459 + $0x4c] sm:$0xf]
      %v3770 = vld [vmem:[%s3459 + $0x50] sm:$0x1]
      %v3771 = vld [vmem:[%s3459 + $0x54] sm:$0xf]
      %v3772 = vld [vmem:[%s3459 + $0x58] sm:$0xf]
      %v3773 = vld [vmem:[%s3459 + $0x5c] sm:$0x1]
      %v3774 = vld [vmem:[%s3459 + $0x60] sm:$0xf]
      %v3775 = vld [vmem:[%s3459 + $0x64] sm:$0xf]
      %v3776 = vld [vmem:[%s3459 + $0x68] sm:$0x1]
      %v3777 = vld [vmem:[%s3459 + $0x6c] sm:$0xf]
      %v3778 = vld [vmem:[%s3459 + $0x70] sm:$0xf]
      %v3779 = vld [vmem:[%s3459 + $0x74] sm:$0x1]
      %v3780 = vld [vmem:[%s3459 + $0x78] sm:$0xf]
      %v3781 = vld [vmem:[%s3459 + $0x7c] sm:$0xf]
      %v3782 = vld [vmem:[%s3459 + $0x80] sm:$0x1]
      %v3783 = vld [vmem:[%s3459 + $0x84] sm:$0xf]
      %v3784 = vld [vmem:[%s3459 + $0x88] sm:$0xf]
      %v3785 = vld [vmem:[%s3459 + $0x8c] sm:$0x1]
      %v3786 = vld [vmem:[%s3459 + $0x90] sm:$0xf]
      %v3787 = vld [vmem:[%s3459 + $0x94] sm:$0xf]
      %v3788 = vld [vmem:[%s3459 + $0x98] sm:$0x1]
      %v3789 = vld [vmem:[%s3459 + $0x9c] sm:$0xf]
      %v3790 = vld [vmem:[%s3459 + $0xa0] sm:$0xf]
      %v3791 = vld [vmem:[%s3459 + $0xa4] sm:$0x1]
      %v3792 = vld [vmem:[%s3459 + $0xa8] sm:$0xf]
      %v3793 = vld [vmem:[%s3459 + $0xac] sm:$0xf]
      %v3794 = vld [vmem:[%s3459 + $0xb0] sm:$0x1]
      %v3795 = vld [vmem:[%s3459 + $0xb4] sm:$0xf]
      %v3796 = vld [vmem:[%s3459 + $0xb8] sm:$0xf]
      %v3797 = vld [vmem:[%s3459 + $0xbc] sm:$0x1]
      %v3799 = vshrl.u32 %v3750, 16
      %v3801 = vrot.slane %v3799, 4
      %v3802 = vshll.u32 %v3750, 16
      %v3804 = vrot.slane %v3802, 5
      %v3805 = vor.u32 %v3801, %v3804
      %v3806 = vrot.slane %v3805, 4
      %v3808 = vshll.u32 %v3751, 16
      %v3810 = vrot.slane %v3808, 5
      %v3811 = vsel %vm917, %v3806, %v3810
      %v3812 = vshrl.u32 %v3751, 16
      %v3814 = vrot.slane %v3812, 4
      %v3815 = vor.u32 %v3814, %v3810
      %v3816 = vrot.slane %v3815, 4
      %v3818 = vshll.u32 %v3752, 16
      %v3820 = vrot.slane %v3818, 5
      %v3821 = vsel %vm917, %v3816, %v3820
      %v3823 = vshrl.u32 %v3753, 16
      %v3825 = vrot.slane %v3823, 4
      %v3826 = vshll.u32 %v3753, 16
      %v3828 = vrot.slane %v3826, 5
      %v3829 = vor.u32 %v3825, %v3828
      %v3830 = vrot.slane %v3829, 4
      %v3832 = vshll.u32 %v3754, 16
      %v3834 = vrot.slane %v3832, 5
      %v3835 = vsel %vm917, %v3830, %v3834
      %v3836 = vshrl.u32 %v3754, 16
      %v3838 = vrot.slane %v3836, 4
      %v3839 = vor.u32 %v3838, %v3834
      %v3840 = vrot.slane %v3839, 4
      %v3842 = vshll.u32 %v3755, 16
      %v3844 = vrot.slane %v3842, 5
      %v3845 = vsel %vm917, %v3840, %v3844
      %v3847 = vshrl.u32 %v3756, 16
      %v3849 = vrot.slane %v3847, 4
      %v3850 = vshll.u32 %v3756, 16
      %v3852 = vrot.slane %v3850, 5
      %v3853 = vor.u32 %v3849, %v3852
      %v3854 = vrot.slane %v3853, 4
      %v3856 = vshll.u32 %v3757, 16
      %v3858 = vrot.slane %v3856, 5
      %v3859 = vsel %vm917, %v3854, %v3858
      %v3860 = vshrl.u32 %v3757, 16
      %v3862 = vrot.slane %v3860, 4
      %v3863 = vor.u32 %v3862, %v3858
      %v3864 = vrot.slane %v3863, 4
      %v3866 = vshll.u32 %v3758, 16
      %v3868 = vrot.slane %v3866, 5
      %v3869 = vsel %vm917, %v3864, %v3868
      %v3871 = vshrl.u32 %v3759, 16
      %v3873 = vrot.slane %v3871, 4
      %v3874 = vshll.u32 %v3759, 16
      %v3876 = vrot.slane %v3874, 5
      %v3877 = vor.u32 %v3873, %v3876
      %v3878 = vrot.slane %v3877, 4
      %v3880 = vshll.u32 %v3760, 16
      %v3882 = vrot.slane %v3880, 5
      %v3883 = vsel %vm917, %v3878, %v3882
      %v3884 = vshrl.u32 %v3760, 16
      %v3886 = vrot.slane %v3884, 4
      %v3887 = vor.u32 %v3886, %v3882
      %v3888 = vrot.slane %v3887, 4
      %v3890 = vshll.u32 %v3761, 16
      %v3892 = vrot.slane %v3890, 5
      %v3893 = vsel %vm917, %v3888, %v3892
      %v3895 = vshrl.u32 %v3762, 16
      %v3897 = vrot.slane %v3895, 4
      %v3898 = vshll.u32 %v3762, 16
      %v3900 = vrot.slane %v3898, 5
      %v3901 = vor.u32 %v3897, %v3900
      %v3902 = vrot.slane %v3901, 4
      %v3904 = vshll.u32 %v3763, 16
      %v3906 = vrot.slane %v3904, 5
      %v3907 = vsel %vm917, %v3902, %v3906
      %v3908 = vshrl.u32 %v3763, 16
      %v3910 = vrot.slane %v3908, 4
      %v3911 = vor.u32 %v3910, %v3906
      %v3912 = vrot.slane %v3911, 4
      %v3914 = vshll.u32 %v3764, 16
      %v3916 = vrot.slane %v3914, 5
      %v3917 = vsel %vm917, %v3912, %v3916
      %v3919 = vshrl.u32 %v3765, 16
      %v3921 = vrot.slane %v3919, 4
      %v3922 = vshll.u32 %v3765, 16
      %v3924 = vrot.slane %v3922, 5
      %v3925 = vor.u32 %v3921, %v3924
      %v3926 = vrot.slane %v3925, 4
      %v3928 = vshll.u32 %v3766, 16
      %v3930 = vrot.slane %v3928, 5
      %v3931 = vsel %vm917, %v3926, %v3930
      %v3932 = vshrl.u32 %v3766, 16
      %v3934 = vrot.slane %v3932, 4
      %v3935 = vor.u32 %v3934, %v3930
      %v3936 = vrot.slane %v3935, 4
      %v3938 = vshll.u32 %v3767, 16
      %v3940 = vrot.slane %v3938, 5
      %v3941 = vsel %vm917, %v3936, %v3940
      %v3943 = vshrl.u32 %v3768, 16
      %v3945 = vrot.slane %v3943, 4
      %v3946 = vshll.u32 %v3768, 16
      %v3948 = vrot.slane %v3946, 5
      %v3949 = vor.u32 %v3945, %v3948
      %v3950 = vrot.slane %v3949, 4
      %v3952 = vshll.u32 %v3769, 16
      %v3954 = vrot.slane %v3952, 5
      %v3955 = vsel %vm917, %v3950, %v3954
      %v3956 = vshrl.u32 %v3769, 16
      %v3958 = vrot.slane %v3956, 4
      %v3959 = vor.u32 %v3958, %v3954
      %v3960 = vrot.slane %v3959, 4
      %v3962 = vshll.u32 %v3770, 16
      %v3964 = vrot.slane %v3962, 5
      %v3965 = vsel %vm917, %v3960, %v3964
      %v3967 = vshrl.u32 %v3771, 16
      %v3969 = vrot.slane %v3967, 4
      %v3970 = vshll.u32 %v3771, 16
      %v3972 = vrot.slane %v3970, 5
      %v3973 = vor.u32 %v3969, %v3972
      %v3974 = vrot.slane %v3973, 4
      %v3976 = vshll.u32 %v3772, 16
      %v3978 = vrot.slane %v3976, 5
      %v3979 = vsel %vm917, %v3974, %v3978
      %v3980 = vshrl.u32 %v3772, 16
      %v3982 = vrot.slane %v3980, 4
      %v3983 = vor.u32 %v3982, %v3978
      %v3984 = vrot.slane %v3983, 4
      %v3986 = vshll.u32 %v3773, 16
      %v3988 = vrot.slane %v3986, 5
      %v3989 = vsel %vm917, %v3984, %v3988
      %v3991 = vshrl.u32 %v3774, 16
      %v3993 = vrot.slane %v3991, 4
      %v3994 = vshll.u32 %v3774, 16
      %v3996 = vrot.slane %v3994, 5
      %v3997 = vor.u32 %v3993, %v3996
      %v3998 = vrot.slane %v3997, 4
      %v4000 = vshll.u32 %v3775, 16
      %v4002 = vrot.slane %v4000, 5
      %v4003 = vsel %vm917, %v3998, %v4002
      %v4004 = vshrl.u32 %v3775, 16
      %v4006 = vrot.slane %v4004, 4
      %v4007 = vor.u32 %v4006, %v4002
      %v4008 = vrot.slane %v4007, 4
      %v4010 = vshll.u32 %v3776, 16
      %v4012 = vrot.slane %v4010, 5
      %v4013 = vsel %vm917, %v4008, %v4012
      %v4015 = vshrl.u32 %v3777, 16
      %v4017 = vrot.slane %v4015, 4
      %v4018 = vshll.u32 %v3777, 16
      %v4020 = vrot.slane %v4018, 5
      %v4021 = vor.u32 %v4017, %v4020
      %v4022 = vrot.slane %v4021, 4
      %v4024 = vshll.u32 %v3778, 16
      %v4026 = vrot.slane %v4024, 5
      %v4027 = vsel %vm917, %v4022, %v4026
      %v4028 = vshrl.u32 %v3778, 16
      %v4030 = vrot.slane %v4028, 4
      %v4031 = vor.u32 %v4030, %v4026
      %v4032 = vrot.slane %v4031, 4
      %v4034 = vshll.u32 %v3779, 16
      %v4036 = vrot.slane %v4034, 5
      %v4037 = vsel %vm917, %v4032, %v4036
      %v4039 = vshrl.u32 %v3780, 16
      %v4041 = vrot.slane %v4039, 4
      %v4042 = vshll.u32 %v3780, 16
      %v4044 = vrot.slane %v4042, 5
      %v4045 = vor.u32 %v4041, %v4044
      %v4046 = vrot.slane %v4045, 4
      %v4048 = vshll.u32 %v3781, 16
      %v4050 = vrot.slane %v4048, 5
      %v4051 = vsel %vm917, %v4046, %v4050
      %v4052 = vshrl.u32 %v3781, 16
      %v4054 = vrot.slane %v4052, 4
      %v4055 = vor.u32 %v4054, %v4050
      %v4056 = vrot.slane %v4055, 4
      %v4058 = vshll.u32 %v3782, 16
      %v4060 = vrot.slane %v4058, 5
      %v4061 = vsel %vm917, %v4056, %v4060
      %v4063 = vshrl.u32 %v3783, 16
      %v4065 = vrot.slane %v4063, 4
      %v4066 = vshll.u32 %v3783, 16
      %v4068 = vrot.slane %v4066, 5
      %v4069 = vor.u32 %v4065, %v4068
      %v4070 = vrot.slane %v4069, 4
      %v4072 = vshll.u32 %v3784, 16
      %v4074 = vrot.slane %v4072, 5
      %v4075 = vsel %vm917, %v4070, %v4074
      %v4076 = vshrl.u32 %v3784, 16
      %v4078 = vrot.slane %v4076, 4
      %v4079 = vor.u32 %v4078, %v4074
      %v4080 = vrot.slane %v4079, 4
      %v4082 = vshll.u32 %v3785, 16
      %v4084 = vrot.slane %v4082, 5
      %v4085 = vsel %vm917, %v4080, %v4084
      %v4087 = vshrl.u32 %v3786, 16
      %v4089 = vrot.slane %v4087, 4
      %v4090 = vshll.u32 %v3786, 16
      %v4092 = vrot.slane %v4090, 5
      %v4093 = vor.u32 %v4089, %v4092
      %v4094 = vrot.slane %v4093, 4
      %v4096 = vshll.u32 %v3787, 16
      %v4098 = vrot.slane %v4096, 5
      %v4099 = vsel %vm917, %v4094, %v4098
      %v4100 = vshrl.u32 %v3787, 16
      %v4102 = vrot.slane %v4100, 4
      %v4103 = vor.u32 %v4102, %v4098
      %v4104 = vrot.slane %v4103, 4
      %v4106 = vshll.u32 %v3788, 16
      %v4108 = vrot.slane %v4106, 5
      %v4109 = vsel %vm917, %v4104, %v4108
      %v4111 = vshrl.u32 %v3789, 16
      %v4113 = vrot.slane %v4111, 4
      %v4114 = vshll.u32 %v3789, 16
      %v4116 = vrot.slane %v4114, 5
      %v4117 = vor.u32 %v4113, %v4116
      %v4118 = vrot.slane %v4117, 4
      %v4120 = vshll.u32 %v3790, 16
      %v4122 = vrot.slane %v4120, 5
      %v4123 = vsel %vm917, %v4118, %v4122
      %v4124 = vshrl.u32 %v3790, 16
      %v4126 = vrot.slane %v4124, 4
      %v4127 = vor.u32 %v4126, %v4122
      %v4128 = vrot.slane %v4127, 4
      %v4130 = vshll.u32 %v3791, 16
      %v4132 = vrot.slane %v4130, 5
      %v4133 = vsel %vm917, %v4128, %v4132
      %v4135 = vshrl.u32 %v3792, 16
      %v4137 = vrot.slane %v4135, 4
      %v4138 = vshll.u32 %v3792, 16
      %v4140 = vrot.slane %v4138, 5
      %v4141 = vor.u32 %v4137, %v4140
      %v4142 = vrot.slane %v4141, 4
      %v4144 = vshll.u32 %v3793, 16
      %v4146 = vrot.slane %v4144, 5
      %v4147 = vsel %vm917, %v4142, %v4146
      %v4148 = vshrl.u32 %v3793, 16
      %v4150 = vrot.slane %v4148, 4
      %v4151 = vor.u32 %v4150, %v4146
      %v4152 = vrot.slane %v4151, 4
      %v4154 = vshll.u32 %v3794, 16
      %v4156 = vrot.slane %v4154, 5
      %v4157 = vsel %vm917, %v4152, %v4156
      %v4159 = vshrl.u32 %v3795, 16
      %v4161 = vrot.slane %v4159, 4
      %v4162 = vshll.u32 %v3795, 16
      %v4164 = vrot.slane %v4162, 5
      %v4165 = vor.u32 %v4161, %v4164
      %v4166 = vrot.slane %v4165, 4
      %v4168 = vshll.u32 %v3796, 16
      %v4170 = vrot.slane %v4168, 5
      %v4171 = vsel %vm917, %v4166, %v4170
      %v4172 = vshrl.u32 %v3796, 16
      %v4174 = vrot.slane %v4172, 4
      %v4175 = vor.u32 %v4174, %v4170
      %v4176 = vrot.slane %v4175, 4
      %v4178 = vshll.u32 %v3797, 16
      %v4180 = vrot.slane %v4178, 5
      %v4181 = vsel %vm917, %v4176, %v4180
      %s4182 = scalar_lea.vmem %s1, 56
      %v4183 = vld [vmem:[%s4182] sm:$0xf]
      %v4184 = vld [vmem:[%s4182 + $0x4] sm:$0xf]
      %v4185 = vunpack.c.l.b16 %v3811
      %v4186 = vunpack.c.l.b16 %v3821
      %v4187 = vunpack.c.l.b16 %v3835
      %v4188 = vunpack.c.l.b16 %v3845
      %v4189 = vunpack.c.l.b16 %v3859
      %v4190 = vunpack.c.l.b16 %v3869
      %v4191 = vunpack.c.l.b16 %v3883
      %v4192 = vunpack.c.l.b16 %v3893
      %v4193 = vunpack.c.l.b16 %v3907
      %v4194 = vunpack.c.l.b16 %v3917
      %v4195 = vunpack.c.l.b16 %v3931
      %v4196 = vunpack.c.l.b16 %v3941
      %v4197 = vunpack.c.l.b16 %v3955
      %v4198 = vunpack.c.l.b16 %v3965
      %v4199 = vunpack.c.l.b16 %v3979
      %v4200 = vunpack.c.l.b16 %v3989
      %v4201 = vunpack.c.l.b16 %v4003
      %v4202 = vunpack.c.l.b16 %v4013
      %v4203 = vunpack.c.l.b16 %v4027
      %v4204 = vunpack.c.l.b16 %v4037
      %v4205 = vunpack.c.l.b16 %v4051
      %v4206 = vunpack.c.l.b16 %v4061
      %v4207 = vunpack.c.l.b16 %v4075
      %v4208 = vunpack.c.l.b16 %v4085
      %v4209 = vunpack.c.l.b16 %v4099
      %v4210 = vunpack.c.l.b16 %v4109
      %v4211 = vunpack.c.l.b16 %v4123
      %v4212 = vunpack.c.l.b16 %v4133
      %v4213 = vunpack.c.l.b16 %v4147
      %v4214 = vunpack.c.l.b16 %v4157
      %v4215 = vunpack.c.l.b16 %v4171
      %v4216 = vunpack.c.l.b16 %v4181
      %v4217 = vpack.c.b16 %v4186, %v4185
      %v4218 = vpack.c.b16 %v4188, %v4187
      %v4219 = vpack.c.b16 %v4190, %v4189
      %v4220 = vpack.c.b16 %v4192, %v4191
      %v4221 = vpack.c.b16 %v4194, %v4193
      %v4222 = vpack.c.b16 %v4196, %v4195
      %v4223 = vpack.c.b16 %v4198, %v4197
      %v4224 = vpack.c.b16 %v4200, %v4199
      %v4225 = vpack.c.b16 %v4202, %v4201
      %v4226 = vpack.c.b16 %v4204, %v4203
      %v4227 = vpack.c.b16 %v4206, %v4205
      %v4228 = vpack.c.b16 %v4208, %v4207
      %v4229 = vpack.c.b16 %v4210, %v4209
      %v4230 = vpack.c.b16 %v4212, %v4211
      %v4231 = vpack.c.b16 %v4214, %v4213
      %v4232 = vpack.c.b16 %v4216, %v4215
      %v4235 = vunpack.c.l.b16 %v4183
      %v4236 = vunpack.c.l.b16 %v4184
      %v4237 = vpack.c.b16 %v4236, %v4235
      %v4240 = vsel %vm1359, %v4217, 0
      %v4243 = vsel %vm1359, %v4218, 0
      %v4246 = vsel %vm1359, %v4219, 0
      %v4249 = vsel %vm1359, %v4220, 0
      %v4252 = vsel %vm1359, %v4221, 0
      %v4255 = vsel %vm1359, %v4222, 0
      %v4258 = vsel %vm1359, %v4223, 0
      %v4261 = vsel %vm1359, %v4224, 0
      %v4264 = vsel %vm1359, %v4225, 0
      %v4267 = vsel %vm1359, %v4226, 0
      %v4270 = vsel %vm1359, %v4227, 0
      %v4273 = vsel %vm1359, %v4228, 0
      %v4276 = vsel %vm1359, %v4229, 0
      %v4279 = vsel %vm1359, %v4230, 0
      %v4282 = vsel %vm1359, %v4231, 0
      %v4285 = vsel %vm1359, %v4232, 0
      %4287 = vmatpush.bf16.msra.mxu0 0
      %4288 = vmatpush.bf16.msra.mxu0 0
      %4289 = vmatpush.bf16.msra.mxu0 0
      %4290 = vmatpush.bf16.msra.mxu0 0
      %4291 = vmatpush.bf16.msra.mxu0 0
      %4292 = vmatpush.bf16.msra.mxu0 0
      %4293 = vmatpush.bf16.msra.mxu0 0
      %4294 = vmatpush.bf16.msra.mxu0 %v4237
      %4295 = vmatmul.bf16.gmra.mxu0 %v4240
      %v4296 = vpop.f32.mrf.mxu0
      %v4297 = vadd.f32 0.0, %v4296
      %v4298 = vpop.f32.mrf.mxu0
      %v4299 = vadd.f32 0.0, %v4298
      %4300 = vmatmul.bf16.gmra.mxu0 %v4243
      %v4301 = vpop.f32.mrf.mxu0
      %v4302 = vadd.f32 0.0, %v4301
      %v4303 = vpop.f32.mrf.mxu0
      %v4304 = vadd.f32 0.0, %v4303
      %4305 = vmatmul.bf16.gmra.mxu0 %v4246
      %v4306 = vpop.f32.mrf.mxu0
      %v4307 = vadd.f32 0.0, %v4306
      %v4308 = vpop.f32.mrf.mxu0
      %v4309 = vadd.f32 0.0, %v4308
      %4310 = vmatmul.bf16.gmra.mxu0 %v4249
      %v4311 = vpop.f32.mrf.mxu0
      %v4312 = vadd.f32 0.0, %v4311
      %v4313 = vpop.f32.mrf.mxu0
      %v4314 = vadd.f32 0.0, %v4313
      %4315 = vmatmul.bf16.gmra.mxu0 %v4252
      %v4316 = vpop.f32.mrf.mxu0
      %v4317 = vadd.f32 0.0, %v4316
      %v4318 = vpop.f32.mrf.mxu0
      %v4319 = vadd.f32 0.0, %v4318
      %4320 = vmatmul.bf16.gmra.mxu0 %v4255
      %v4321 = vpop.f32.mrf.mxu0
      %v4322 = vadd.f32 0.0, %v4321
      %v4323 = vpop.f32.mrf.mxu0
      %v4324 = vadd.f32 0.0, %v4323
      %4325 = vmatmul.bf16.gmra.mxu0 %v4258
      %v4326 = vpop.f32.mrf.mxu0
      %v4327 = vadd.f32 0.0, %v4326
      %v4328 = vpop.f32.mrf.mxu0
      %v4329 = vadd.f32 0.0, %v4328
      %4330 = vmatmul.bf16.gmra.mxu0 %v4261
      %v4331 = vpop.f32.mrf.mxu0
      %v4332 = vadd.f32 0.0, %v4331
      %v4333 = vpop.f32.mrf.mxu0
      %v4334 = vadd.f32 0.0, %v4333
      %4335 = vmatmul.bf16.gmra.mxu0 %v4264
      %v4336 = vpop.f32.mrf.mxu0
      %v4337 = vadd.f32 0.0, %v4336
      %v4338 = vpop.f32.mrf.mxu0
      %v4339 = vadd.f32 0.0, %v4338
      %4340 = vmatmul.bf16.gmra.mxu0 %v4267
      %v4341 = vpop.f32.mrf.mxu0
      %v4342 = vadd.f32 0.0, %v4341
      %v4343 = vpop.f32.mrf.mxu0
      %v4344 = vadd.f32 0.0, %v4343
      %4345 = vmatmul.bf16.gmra.mxu0 %v4270
      %v4346 = vpop.f32.mrf.mxu0
      %v4347 = vadd.f32 0.0, %v4346
      %v4348 = vpop.f32.mrf.mxu0
      %v4349 = vadd.f32 0.0, %v4348
      %4350 = vmatmul.bf16.gmra.mxu0 %v4273
      %v4351 = vpop.f32.mrf.mxu0
      %v4352 = vadd.f32 0.0, %v4351
      %v4353 = vpop.f32.mrf.mxu0
      %v4354 = vadd.f32 0.0, %v4353
      %4355 = vmatmul.bf16.gmra.mxu0 %v4276
      %v4356 = vpop.f32.mrf.mxu0
      %v4357 = vadd.f32 0.0, %v4356
      %v4358 = vpop.f32.mrf.mxu0
      %v4359 = vadd.f32 0.0, %v4358
      %4360 = vmatmul.bf16.gmra.mxu0 %v4279
      %v4361 = vpop.f32.mrf.mxu0
      %v4362 = vadd.f32 0.0, %v4361
      %v4363 = vpop.f32.mrf.mxu0
      %v4364 = vadd.f32 0.0, %v4363
      %4365 = vmatmul.bf16.gmra.mxu0 %v4282
      %v4366 = vpop.f32.mrf.mxu0
      %v4367 = vadd.f32 0.0, %v4366
      %v4368 = vpop.f32.mrf.mxu0
      %v4369 = vadd.f32 0.0, %v4368
      %4370 = vmatmul.bf16.gmra.mxu0 %v4285
      %v4371 = vpop.f32.mrf.mxu0
      %v4372 = vadd.f32 0.0, %v4371
      %v4373 = vpop.f32.mrf.mxu0
      %v4374 = vadd.f32 0.0, %v4373
      %4375 = vdwg.mxu0
      %v4376 = vadd.f32 %v3718, %v4297
      %v4377 = vadd.f32 %v3719, %v4299
      %v4378 = vadd.f32 %v3720, %v4302
      %v4379 = vadd.f32 %v3721, %v4304
      %v4380 = vadd.f32 %v3722, %v4307
      %v4381 = vadd.f32 %v3723, %v4309
      %v4382 = vadd.f32 %v3724, %v4312
      %v4383 = vadd.f32 %v3725, %v4314
      %v4384 = vadd.f32 %v3726, %v4317
      %v4385 = vadd.f32 %v3727, %v4319
      %v4386 = vadd.f32 %v3728, %v4322
      %v4387 = vadd.f32 %v3729, %v4324
      %v4388 = vadd.f32 %v3730, %v4327
      %v4389 = vadd.f32 %v3731, %v4329
      %v4390 = vadd.f32 %v3732, %v4332
      %v4391 = vadd.f32 %v3733, %v4334
      %v4392 = vadd.f32 %v3734, %v4337
      %v4393 = vadd.f32 %v3735, %v4339
      %v4394 = vadd.f32 %v3736, %v4342
      %v4395 = vadd.f32 %v3737, %v4344
      %v4396 = vadd.f32 %v3738, %v4347
      %v4397 = vadd.f32 %v3739, %v4349
      %v4398 = vadd.f32 %v3740, %v4352
      %v4399 = vadd.f32 %v3741, %v4354
      %v4400 = vadd.f32 %v3742, %v4357
      %v4401 = vadd.f32 %v3743, %v4359
      %v4402 = vadd.f32 %v3744, %v4362
      %v4403 = vadd.f32 %v3745, %v4364
      %v4404 = vadd.f32 %v3746, %v4367
      %v4405 = vadd.f32 %v3747, %v4369
      %v4406 = vadd.f32 %v3748, %v4372
      %v4407 = vadd.f32 %v3749, %v4374
      %v4408 = vld [vmem:[%s3459] sm:$0xe]
      %v4409 = vld [vmem:[%s3459 + $0xc] sm:$0xe]
      %v4410 = vld [vmem:[%s3459 + $0x18] sm:$0xe]
      %v4411 = vld [vmem:[%s3459 + $0x24] sm:$0xe]
      %v4412 = vld [vmem:[%s3459 + $0x30] sm:$0xe]
      %v4413 = vld [vmem:[%s3459 + $0x3c] sm:$0xe]
      %v4414 = vld [vmem:[%s3459 + $0x48] sm:$0xe]
      %v4415 = vld [vmem:[%s3459 + $0x54] sm:$0xe]
      %v4416 = vld [vmem:[%s3459 + $0x60] sm:$0xe]
      %v4417 = vld [vmem:[%s3459 + $0x6c] sm:$0xe]
      %v4418 = vld [vmem:[%s3459 + $0x78] sm:$0xe]
      %v4419 = vld [vmem:[%s3459 + $0x84] sm:$0xe]
      %v4420 = vld [vmem:[%s3459 + $0x90] sm:$0xe]
      %v4421 = vld [vmem:[%s3459 + $0x9c] sm:$0xe]
      %v4422 = vld [vmem:[%s3459 + $0xa8] sm:$0xe]
      %v4423 = vld [vmem:[%s3459 + $0xb4] sm:$0xe]
      %v4472 = vrot.slane %v4408, 5
      %v4473 = vrot.slane %v4472, 4
      %v4474 = vrot.slane %v3751, 5
      %v4475 = vsel %vm1770, %v4473, %v4474
      %v4476 = vrot.slane %v4474, 4
      %v4477 = vrot.slane %v3752, 5
      %v4478 = vsel %vm1770, %v4476, %v4477
      %v4479 = vrot.slane %v4409, 5
      %v4480 = vrot.slane %v4479, 4
      %v4481 = vrot.slane %v3754, 5
      %v4482 = vsel %vm1770, %v4480, %v4481
      %v4483 = vrot.slane %v4481, 4
      %v4484 = vrot.slane %v3755, 5
      %v4485 = vsel %vm1770, %v4483, %v4484
      %v4486 = vrot.slane %v4410, 5
      %v4487 = vrot.slane %v4486, 4
      %v4488 = vrot.slane %v3757, 5
      %v4489 = vsel %vm1770, %v4487, %v4488
      %v4490 = vrot.slane %v4488, 4
      %v4491 = vrot.slane %v3758, 5
      %v4492 = vsel %vm1770, %v4490, %v4491
      %v4493 = vrot.slane %v4411, 5
      %v4494 = vrot.slane %v4493, 4
      %v4495 = vrot.slane %v3760, 5
      %v4496 = vsel %vm1770, %v4494, %v4495
      %v4497 = vrot.slane %v4495, 4
      %v4498 = vrot.slane %v3761, 5
      %v4499 = vsel %vm1770, %v4497, %v4498
      %v4500 = vrot.slane %v4412, 5
      %v4501 = vrot.slane %v4500, 4
      %v4502 = vrot.slane %v3763, 5
      %v4503 = vsel %vm1770, %v4501, %v4502
      %v4504 = vrot.slane %v4502, 4
      %v4505 = vrot.slane %v3764, 5
      %v4506 = vsel %vm1770, %v4504, %v4505
      %v4507 = vrot.slane %v4413, 5
      %v4508 = vrot.slane %v4507, 4
      %v4509 = vrot.slane %v3766, 5
      %v4510 = vsel %vm1770, %v4508, %v4509
      %v4511 = vrot.slane %v4509, 4
      %v4512 = vrot.slane %v3767, 5
      %v4513 = vsel %vm1770, %v4511, %v4512
      %v4514 = vrot.slane %v4414, 5
      %v4515 = vrot.slane %v4514, 4
      %v4516 = vrot.slane %v3769, 5
      %v4517 = vsel %vm1770, %v4515, %v4516
      %v4518 = vrot.slane %v4516, 4
      %v4519 = vrot.slane %v3770, 5
      %v4520 = vsel %vm1770, %v4518, %v4519
      %v4521 = vrot.slane %v4415, 5
      %v4522 = vrot.slane %v4521, 4
      %v4523 = vrot.slane %v3772, 5
      %v4524 = vsel %vm1770, %v4522, %v4523
      %v4525 = vrot.slane %v4523, 4
      %v4526 = vrot.slane %v3773, 5
      %v4527 = vsel %vm1770, %v4525, %v4526
      %v4528 = vrot.slane %v4416, 5
      %v4529 = vrot.slane %v4528, 4
      %v4530 = vrot.slane %v3775, 5
      %v4531 = vsel %vm1770, %v4529, %v4530
      %v4532 = vrot.slane %v4530, 4
      %v4533 = vrot.slane %v3776, 5
      %v4534 = vsel %vm1770, %v4532, %v4533
      %v4535 = vrot.slane %v4417, 5
      %v4536 = vrot.slane %v4535, 4
      %v4537 = vrot.slane %v3778, 5
      %v4538 = vsel %vm1770, %v4536, %v4537
      %v4539 = vrot.slane %v4537, 4
      %v4540 = vrot.slane %v3779, 5
      %v4541 = vsel %vm1770, %v4539, %v4540
      %v4542 = vrot.slane %v4418, 5
      %v4543 = vrot.slane %v4542, 4
      %v4544 = vrot.slane %v3781, 5
      %v4545 = vsel %vm1770, %v4543, %v4544
      %v4546 = vrot.slane %v4544, 4
      %v4547 = vrot.slane %v3782, 5
      %v4548 = vsel %vm1770, %v4546, %v4547
      %v4549 = vrot.slane %v4419, 5
      %v4550 = vrot.slane %v4549, 4
      %v4551 = vrot.slane %v3784, 5
      %v4552 = vsel %vm1770, %v4550, %v4551
      %v4553 = vrot.slane %v4551, 4
      %v4554 = vrot.slane %v3785, 5
      %v4555 = vsel %vm1770, %v4553, %v4554
      %v4556 = vrot.slane %v4420, 5
      %v4557 = vrot.slane %v4556, 4
      %v4558 = vrot.slane %v3787, 5
      %v4559 = vsel %vm1770, %v4557, %v4558
      %v4560 = vrot.slane %v4558, 4
      %v4561 = vrot.slane %v3788, 5
      %v4562 = vsel %vm1770, %v4560, %v4561
      %v4563 = vrot.slane %v4421, 5
      %v4564 = vrot.slane %v4563, 4
      %v4565 = vrot.slane %v3790, 5
      %v4566 = vsel %vm1770, %v4564, %v4565
      %v4567 = vrot.slane %v4565, 4
      %v4568 = vrot.slane %v3791, 5
      %v4569 = vsel %vm1770, %v4567, %v4568
      %v4570 = vrot.slane %v4422, 5
      %v4571 = vrot.slane %v4570, 4
      %v4572 = vrot.slane %v3793, 5
      %v4573 = vsel %vm1770, %v4571, %v4572
      %v4574 = vrot.slane %v4572, 4
      %v4575 = vrot.slane %v3794, 5
      %v4576 = vsel %vm1770, %v4574, %v4575
      %v4577 = vrot.slane %v4423, 5
      %v4578 = vrot.slane %v4577, 4
      %v4579 = vrot.slane %v3796, 5
      %v4580 = vsel %vm1770, %v4578, %v4579
      %v4581 = vrot.slane %v4579, 4
      %v4582 = vrot.slane %v3797, 5
      %v4583 = vsel %vm1770, %v4581, %v4582
      %s4584 = scalar_lea.vmem %s1, 64
      %v4585 = vld [vmem:[%s4584] sm:$0xf]
      %v4586 = vld [vmem:[%s4584 + $0x4] sm:$0xf]
      %v4587 = vunpack.c.l.b16 %v4475
      %v4588 = vunpack.c.l.b16 %v4478
      %v4589 = vunpack.c.l.b16 %v4482
      %v4590 = vunpack.c.l.b16 %v4485
      %v4591 = vunpack.c.l.b16 %v4489
      %v4592 = vunpack.c.l.b16 %v4492
      %v4593 = vunpack.c.l.b16 %v4496
      %v4594 = vunpack.c.l.b16 %v4499
      %v4595 = vunpack.c.l.b16 %v4503
      %v4596 = vunpack.c.l.b16 %v4506
      %v4597 = vunpack.c.l.b16 %v4510
      %v4598 = vunpack.c.l.b16 %v4513
      %v4599 = vunpack.c.l.b16 %v4517
      %v4600 = vunpack.c.l.b16 %v4520
      %v4601 = vunpack.c.l.b16 %v4524
      %v4602 = vunpack.c.l.b16 %v4527
      %v4603 = vunpack.c.l.b16 %v4531
      %v4604 = vunpack.c.l.b16 %v4534
      %v4605 = vunpack.c.l.b16 %v4538
      %v4606 = vunpack.c.l.b16 %v4541
      %v4607 = vunpack.c.l.b16 %v4545
      %v4608 = vunpack.c.l.b16 %v4548
      %v4609 = vunpack.c.l.b16 %v4552
      %v4610 = vunpack.c.l.b16 %v4555
      %v4611 = vunpack.c.l.b16 %v4559
      %v4612 = vunpack.c.l.b16 %v4562
      %v4613 = vunpack.c.l.b16 %v4566
      %v4614 = vunpack.c.l.b16 %v4569
      %v4615 = vunpack.c.l.b16 %v4573
      %v4616 = vunpack.c.l.b16 %v4576
      %v4617 = vunpack.c.l.b16 %v4580
      %v4618 = vunpack.c.l.b16 %v4583
      %v4619 = vpack.c.b16 %v4588, %v4587
      %v4620 = vpack.c.b16 %v4590, %v4589
      %v4621 = vpack.c.b16 %v4592, %v4591
      %v4622 = vpack.c.b16 %v4594, %v4593
      %v4623 = vpack.c.b16 %v4596, %v4595
      %v4624 = vpack.c.b16 %v4598, %v4597
      %v4625 = vpack.c.b16 %v4600, %v4599
      %v4626 = vpack.c.b16 %v4602, %v4601
      %v4627 = vpack.c.b16 %v4604, %v4603
      %v4628 = vpack.c.b16 %v4606, %v4605
      %v4629 = vpack.c.b16 %v4608, %v4607
      %v4630 = vpack.c.b16 %v4610, %v4609
      %v4631 = vpack.c.b16 %v4612, %v4611
      %v4632 = vpack.c.b16 %v4614, %v4613
      %v4633 = vpack.c.b16 %v4616, %v4615
      %v4634 = vpack.c.b16 %v4618, %v4617
      %v4637 = vunpack.c.l.b16 %v4585
      %v4638 = vunpack.c.l.b16 %v4586
      %v4639 = vpack.c.b16 %v4638, %v4637
      %v4642 = vsel %vm1359, %v4619, 0
      %v4645 = vsel %vm1359, %v4620, 0
      %v4648 = vsel %vm1359, %v4621, 0
      %v4651 = vsel %vm1359, %v4622, 0
      %v4654 = vsel %vm1359, %v4623, 0
      %v4657 = vsel %vm1359, %v4624, 0
      %v4660 = vsel %vm1359, %v4625, 0
      %v4663 = vsel %vm1359, %v4626, 0
      %v4666 = vsel %vm1359, %v4627, 0
      %v4669 = vsel %vm1359, %v4628, 0
      %v4672 = vsel %vm1359, %v4629, 0
      %v4675 = vsel %vm1359, %v4630, 0
      %v4678 = vsel %vm1359, %v4631, 0
      %v4681 = vsel %vm1359, %v4632, 0
      %v4684 = vsel %vm1359, %v4633, 0
      %v4687 = vsel %vm1359, %v4634, 0
      %4689 = vmatpush.bf16.msra.mxu0 0
      %4690 = vmatpush.bf16.msra.mxu0 0
      %4691 = vmatpush.bf16.msra.mxu0 0
      %4692 = vmatpush.bf16.msra.mxu0 0
      %4693 = vmatpush.bf16.msra.mxu0 0
      %4694 = vmatpush.bf16.msra.mxu0 0
      %4695 = vmatpush.bf16.msra.mxu0 0
      %4696 = vmatpush.bf16.msra.mxu0 %v4639
      %4697 = vmatmul.bf16.gmra.mxu0 %v4642
      %v4698 = vpop.f32.mrf.mxu0
      %v4699 = vadd.f32 0.0, %v4698
      %v4700 = vpop.f32.mrf.mxu0
      %v4701 = vadd.f32 0.0, %v4700
      %4702 = vmatmul.bf16.gmra.mxu0 %v4645
      %v4703 = vpop.f32.mrf.mxu0
      %v4704 = vadd.f32 0.0, %v4703
      %v4705 = vpop.f32.mrf.mxu0
      %v4706 = vadd.f32 0.0, %v4705
      %4707 = vmatmul.bf16.gmra.mxu0 %v4648
      %v4708 = vpop.f32.mrf.mxu0
      %v4709 = vadd.f32 0.0, %v4708
      %v4710 = vpop.f32.mrf.mxu0
      %v4711 = vadd.f32 0.0, %v4710
      %4712 = vmatmul.bf16.gmra.mxu0 %v4651
      %v4713 = vpop.f32.mrf.mxu0
      %v4714 = vadd.f32 0.0, %v4713
      %v4715 = vpop.f32.mrf.mxu0
      %v4716 = vadd.f32 0.0, %v4715
      %4717 = vmatmul.bf16.gmra.mxu0 %v4654
      %v4718 = vpop.f32.mrf.mxu0
      %v4719 = vadd.f32 0.0, %v4718
      %v4720 = vpop.f32.mrf.mxu0
      %v4721 = vadd.f32 0.0, %v4720
      %4722 = vmatmul.bf16.gmra.mxu0 %v4657
      %v4723 = vpop.f32.mrf.mxu0
      %v4724 = vadd.f32 0.0, %v4723
      %v4725 = vpop.f32.mrf.mxu0
      %v4726 = vadd.f32 0.0, %v4725
      %4727 = vmatmul.bf16.gmra.mxu0 %v4660
      %v4728 = vpop.f32.mrf.mxu0
      %v4729 = vadd.f32 0.0, %v4728
      %v4730 = vpop.f32.mrf.mxu0
      %v4731 = vadd.f32 0.0, %v4730
      %4732 = vmatmul.bf16.gmra.mxu0 %v4663
      %v4733 = vpop.f32.mrf.mxu0
      %v4734 = vadd.f32 0.0, %v4733
      %v4735 = vpop.f32.mrf.mxu0
      %v4736 = vadd.f32 0.0, %v4735
      %4737 = vmatmul.bf16.gmra.mxu0 %v4666
      %v4738 = vpop.f32.mrf.mxu0
      %v4739 = vadd.f32 0.0, %v4738
      %v4740 = vpop.f32.mrf.mxu0
      %v4741 = vadd.f32 0.0, %v4740
      %4742 = vmatmul.bf16.gmra.mxu0 %v4669
      %v4743 = vpop.f32.mrf.mxu0
      %v4744 = vadd.f32 0.0, %v4743
      %v4745 = vpop.f32.mrf.mxu0
      %v4746 = vadd.f32 0.0, %v4745
      %4747 = vmatmul.bf16.gmra.mxu0 %v4672
      %v4748 = vpop.f32.mrf.mxu0
      %v4749 = vadd.f32 0.0, %v4748
      %v4750 = vpop.f32.mrf.mxu0
      %v4751 = vadd.f32 0.0, %v4750
      %4752 = vmatmul.bf16.gmra.mxu0 %v4675
      %v4753 = vpop.f32.mrf.mxu0
      %v4754 = vadd.f32 0.0, %v4753
      %v4755 = vpop.f32.mrf.mxu0
      %v4756 = vadd.f32 0.0, %v4755
      %4757 = vmatmul.bf16.gmra.mxu0 %v4678
      %v4758 = vpop.f32.mrf.mxu0
      %v4759 = vadd.f32 0.0, %v4758
      %v4760 = vpop.f32.mrf.mxu0
      %v4761 = vadd.f32 0.0, %v4760
      %4762 = vmatmul.bf16.gmra.mxu0 %v4681
      %v4763 = vpop.f32.mrf.mxu0
      %v4764 = vadd.f32 0.0, %v4763
      %v4765 = vpop.f32.mrf.mxu0
      %v4766 = vadd.f32 0.0, %v4765
      %4767 = vmatmul.bf16.gmra.mxu0 %v4684
      %v4768 = vpop.f32.mrf.mxu0
      %v4769 = vadd.f32 0.0, %v4768
      %v4770 = vpop.f32.mrf.mxu0
      %v4771 = vadd.f32 0.0, %v4770
      %4772 = vmatmul.bf16.gmra.mxu0 %v4687
      %v4773 = vpop.f32.mrf.mxu0
      %v4774 = vadd.f32 0.0, %v4773
      %v4775 = vpop.f32.mrf.mxu0
      %v4776 = vadd.f32 0.0, %v4775
      %4777 = vdwg.mxu0
      %v4778 = vadd.f32 %v4376, %v4699
      %v4779 = vadd.f32 %v4377, %v4701
      %v4780 = vadd.f32 %v4378, %v4704
      %v4781 = vadd.f32 %v4379, %v4706
      %v4782 = vadd.f32 %v4380, %v4709
      %v4783 = vadd.f32 %v4381, %v4711
      %v4784 = vadd.f32 %v4382, %v4714
      %v4785 = vadd.f32 %v4383, %v4716
      %v4786 = vadd.f32 %v4384, %v4719
      %v4787 = vadd.f32 %v4385, %v4721
      %v4788 = vadd.f32 %v4386, %v4724
      %v4789 = vadd.f32 %v4387, %v4726
      %v4790 = vadd.f32 %v4388, %v4729
      %v4791 = vadd.f32 %v4389, %v4731
      %v4792 = vadd.f32 %v4390, %v4734
      %v4793 = vadd.f32 %v4391, %v4736
      %v4794 = vadd.f32 %v4392, %v4739
      %v4795 = vadd.f32 %v4393, %v4741
      %v4796 = vadd.f32 %v4394, %v4744
      %v4797 = vadd.f32 %v4395, %v4746
      %v4798 = vadd.f32 %v4396, %v4749
      %v4799 = vadd.f32 %v4397, %v4751
      %v4800 = vadd.f32 %v4398, %v4754
      %v4801 = vadd.f32 %v4399, %v4756
      %v4802 = vadd.f32 %v4400, %v4759
      %v4803 = vadd.f32 %v4401, %v4761
      %v4804 = vadd.f32 %v4402, %v4764
      %v4805 = vadd.f32 %v4403, %v4766
      %v4806 = vadd.f32 %v4404, %v4769
      %v4807 = vadd.f32 %v4405, %v4771
      %v4808 = vadd.f32 %v4406, %v4774
      %v4809 = vadd.f32 %v4407, %v4776
      %v4810 = vld [vmem:[%s2] sm:$0x1]
      %v4812 = vperm.slane %v4810, 0
      %v4814 = vadd.f32 %v4778, %v4812
      %v4815 = vadd.f32 %v4779, %v4812
      %v4816 = vadd.f32 %v4780, %v4812
      %v4817 = vadd.f32 %v4781, %v4812
      %v4818 = vadd.f32 %v4782, %v4812
      %v4819 = vadd.f32 %v4783, %v4812
      %v4820 = vadd.f32 %v4784, %v4812
      %v4821 = vadd.f32 %v4785, %v4812
      %v4822 = vadd.f32 %v4786, %v4812
      %v4823 = vadd.f32 %v4787, %v4812
      %v4824 = vadd.f32 %v4788, %v4812
      %v4825 = vadd.f32 %v4789, %v4812
      %v4826 = vadd.f32 %v4790, %v4812
      %v4827 = vadd.f32 %v4791, %v4812
      %v4828 = vadd.f32 %v4792, %v4812
      %v4829 = vadd.f32 %v4793, %v4812
      %v4830 = vadd.f32 %v4794, %v4812
      %v4831 = vadd.f32 %v4795, %v4812
      %v4832 = vadd.f32 %v4796, %v4812
      %v4833 = vadd.f32 %v4797, %v4812
      %v4834 = vadd.f32 %v4798, %v4812
      %v4835 = vadd.f32 %v4799, %v4812
      %v4836 = vadd.f32 %v4800, %v4812
      %v4837 = vadd.f32 %v4801, %v4812
      %v4838 = vadd.f32 %v4802, %v4812
      %v4839 = vadd.f32 %v4803, %v4812
      %v4840 = vadd.f32 %v4804, %v4812
      %v4841 = vadd.f32 %v4805, %v4812
      %v4842 = vadd.f32 %v4806, %v4812
      %v4843 = vadd.f32 %v4807, %v4812
      %v4844 = vadd.f32 %v4808, %v4812
      %v4845 = vadd.f32 %v4809, %v4812
      %v4846 = vmax.f32 %v4814, 0.0
      %v4847 = vmax.f32 %v4815, 0.0
      %v4848 = vmax.f32 %v4816, 0.0
      %v4849 = vmax.f32 %v4817, 0.0
      %v4850 = vmax.f32 %v4818, 0.0
      %v4851 = vmax.f32 %v4819, 0.0
      %v4852 = vmax.f32 %v4820, 0.0
      %v4853 = vmax.f32 %v4821, 0.0
      %v4854 = vmax.f32 %v4822, 0.0
      %v4855 = vmax.f32 %v4823, 0.0
      %v4856 = vmax.f32 %v4824, 0.0
      %v4857 = vmax.f32 %v4825, 0.0
      %v4858 = vmax.f32 %v4826, 0.0
      %v4859 = vmax.f32 %v4827, 0.0
      %v4860 = vmax.f32 %v4828, 0.0
      %v4861 = vmax.f32 %v4829, 0.0
      %v4862 = vmax.f32 %v4830, 0.0
      %v4863 = vmax.f32 %v4831, 0.0
      %v4864 = vmax.f32 %v4832, 0.0
      %v4865 = vmax.f32 %v4833, 0.0
      %v4866 = vmax.f32 %v4834, 0.0
      %v4867 = vmax.f32 %v4835, 0.0
      %v4868 = vmax.f32 %v4836, 0.0
      %v4869 = vmax.f32 %v4837, 0.0
      %v4870 = vmax.f32 %v4838, 0.0
      %v4871 = vmax.f32 %v4839, 0.0
      %v4872 = vmax.f32 %v4840, 0.0
      %v4873 = vmax.f32 %v4841, 0.0
      %v4874 = vmax.f32 %v4842, 0.0
      %v4875 = vmax.f32 %v4843, 0.0
      %v4876 = vmax.f32 %v4844, 0.0
      %v4877 = vmax.f32 %v4845, 0.0
      %v4878 = vpack.c.bf16 %v4846, %v4846
      %v4879 = vpack.c.bf16 %v4847, %v4847
      %v4880 = vpack.c.bf16 %v4848, %v4848
      %v4881 = vpack.c.bf16 %v4849, %v4849
      %v4882 = vpack.c.bf16 %v4850, %v4850
      %v4883 = vpack.c.bf16 %v4851, %v4851
      %v4884 = vpack.c.bf16 %v4852, %v4852
      %v4885 = vpack.c.bf16 %v4853, %v4853
      %v4886 = vpack.c.bf16 %v4854, %v4854
      %v4887 = vpack.c.bf16 %v4855, %v4855
      %v4888 = vpack.c.bf16 %v4856, %v4856
      %v4889 = vpack.c.bf16 %v4857, %v4857
      %v4890 = vpack.c.bf16 %v4858, %v4858
      %v4891 = vpack.c.bf16 %v4859, %v4859
      %v4892 = vpack.c.bf16 %v4860, %v4860
      %v4893 = vpack.c.bf16 %v4861, %v4861
      %v4894 = vpack.c.bf16 %v4862, %v4862
      %v4895 = vpack.c.bf16 %v4863, %v4863
      %v4896 = vpack.c.bf16 %v4864, %v4864
      %v4897 = vpack.c.bf16 %v4865, %v4865
      %v4898 = vpack.c.bf16 %v4866, %v4866
      %v4899 = vpack.c.bf16 %v4867, %v4867
      %v4900 = vpack.c.bf16 %v4868, %v4868
      %v4901 = vpack.c.bf16 %v4869, %v4869
      %v4902 = vpack.c.bf16 %v4870, %v4870
      %v4903 = vpack.c.bf16 %v4871, %v4871
      %v4904 = vpack.c.bf16 %v4872, %v4872
      %v4905 = vpack.c.bf16 %v4873, %v4873
      %v4906 = vpack.c.bf16 %v4874, %v4874
      %v4907 = vpack.c.bf16 %v4875, %v4875
      %v4908 = vpack.c.bf16 %v4876, %v4876
      %v4909 = vpack.c.bf16 %v4877, %v4877
      %v4911 = vshrl.u32 %v4878, 16
      %v4913 = vrot.slane %v4911, 7
      %v4914 = vshll.u32 %v4878, 16
      %v4916 = vor.u32 %v4913, %v4914
      %v4917 = vrot.slane %v4913, 4
      %v4919 = vshrl.u32 %v4879, 16
      %v4921 = vrot.slane %v4919, 7
      %v4922 = vshll.u32 %v4879, 16
      %v4924 = vor.u32 %v4921, %v4922
      %v4925 = vsel %vm426, %v4917, %v4924
      %v4926 = vrot.slane %v4921, 4
      %v4928 = vshrl.u32 %v4880, 16
      %v4930 = vrot.slane %v4928, 7
      %v4931 = vshll.u32 %v4880, 16
      %v4933 = vor.u32 %v4930, %v4931
      %v4934 = vrot.slane %v4930, 4
      %v4936 = vshrl.u32 %v4881, 16
      %v4938 = vrot.slane %v4936, 7
      %v4939 = vshll.u32 %v4881, 16
      %v4941 = vor.u32 %v4938, %v4939
      %v4942 = vsel %vm426, %v4934, %v4941
      %v4943 = vrot.slane %v4938, 4
      %v4945 = vshrl.u32 %v4882, 16
      %v4947 = vrot.slane %v4945, 7
      %v4948 = vshll.u32 %v4882, 16
      %v4950 = vor.u32 %v4947, %v4948
      %v4951 = vrot.slane %v4947, 4
      %v4953 = vshrl.u32 %v4883, 16
      %v4955 = vrot.slane %v4953, 7
      %v4956 = vshll.u32 %v4883, 16
      %v4958 = vor.u32 %v4955, %v4956
      %v4959 = vsel %vm426, %v4951, %v4958
      %v4960 = vrot.slane %v4955, 4
      %v4962 = vshrl.u32 %v4884, 16
      %v4964 = vrot.slane %v4962, 7
      %v4965 = vshll.u32 %v4884, 16
      %v4967 = vor.u32 %v4964, %v4965
      %v4968 = vrot.slane %v4964, 4
      %v4970 = vshrl.u32 %v4885, 16
      %v4972 = vrot.slane %v4970, 7
      %v4973 = vshll.u32 %v4885, 16
      %v4975 = vor.u32 %v4972, %v4973
      %v4976 = vsel %vm426, %v4968, %v4975
      %v4977 = vrot.slane %v4972, 4
      %v4979 = vshrl.u32 %v4886, 16
      %v4981 = vrot.slane %v4979, 7
      %v4982 = vshll.u32 %v4886, 16
      %v4984 = vor.u32 %v4981, %v4982
      %v4985 = vrot.slane %v4981, 4
      %v4987 = vshrl.u32 %v4887, 16
      %v4989 = vrot.slane %v4987, 7
      %v4990 = vshll.u32 %v4887, 16
      %v4992 = vor.u32 %v4989, %v4990
      %v4993 = vsel %vm426, %v4985, %v4992
      %v4994 = vrot.slane %v4989, 4
      %v4996 = vshrl.u32 %v4888, 16
      %v4998 = vrot.slane %v4996, 7
      %v4999 = vshll.u32 %v4888, 16
      %v5001 = vor.u32 %v4998, %v4999
      %v5002 = vrot.slane %v4998, 4
      %v5004 = vshrl.u32 %v4889, 16
      %v5006 = vrot.slane %v5004, 7
      %v5007 = vshll.u32 %v4889, 16
      %v5009 = vor.u32 %v5006, %v5007
      %v5010 = vsel %vm426, %v5002, %v5009
      %v5011 = vrot.slane %v5006, 4
      %v5013 = vshrl.u32 %v4890, 16
      %v5015 = vrot.slane %v5013, 7
      %v5016 = vshll.u32 %v4890, 16
      %v5018 = vor.u32 %v5015, %v5016
      %v5019 = vrot.slane %v5015, 4
      %v5021 = vshrl.u32 %v4891, 16
      %v5023 = vrot.slane %v5021, 7
      %v5024 = vshll.u32 %v4891, 16
      %v5026 = vor.u32 %v5023, %v5024
      %v5027 = vsel %vm426, %v5019, %v5026
      %v5028 = vrot.slane %v5023, 4
      %v5030 = vshrl.u32 %v4892, 16
      %v5032 = vrot.slane %v5030, 7
      %v5033 = vshll.u32 %v4892, 16
      %v5035 = vor.u32 %v5032, %v5033
      %v5036 = vrot.slane %v5032, 4
      %v5038 = vshrl.u32 %v4893, 16
      %v5040 = vrot.slane %v5038, 7
      %v5041 = vshll.u32 %v4893, 16
      %v5043 = vor.u32 %v5040, %v5041
      %v5044 = vsel %vm426, %v5036, %v5043
      %v5045 = vrot.slane %v5040, 4
      %v5047 = vshrl.u32 %v4894, 16
      %v5049 = vrot.slane %v5047, 7
      %v5050 = vshll.u32 %v4894, 16
      %v5052 = vor.u32 %v5049, %v5050
      %v5053 = vrot.slane %v5049, 4
      %v5055 = vshrl.u32 %v4895, 16
      %v5057 = vrot.slane %v5055, 7
      %v5058 = vshll.u32 %v4895, 16
      %v5060 = vor.u32 %v5057, %v5058
      %v5061 = vsel %vm426, %v5053, %v5060
      %v5062 = vrot.slane %v5057, 4
      %v5064 = vshrl.u32 %v4896, 16
      %v5066 = vrot.slane %v5064, 7
      %v5067 = vshll.u32 %v4896, 16
      %v5069 = vor.u32 %v5066, %v5067
      %v5070 = vrot.slane %v5066, 4
      %v5072 = vshrl.u32 %v4897, 16
      %v5074 = vrot.slane %v5072, 7
      %v5075 = vshll.u32 %v4897, 16
      %v5077 = vor.u32 %v5074, %v5075
      %v5078 = vsel %vm426, %v5070, %v5077
      %v5079 = vrot.slane %v5074, 4
      %v5081 = vshrl.u32 %v4898, 16
      %v5083 = vrot.slane %v5081, 7
      %v5084 = vshll.u32 %v4898, 16
      %v5086 = vor.u32 %v5083, %v5084
      %v5087 = vrot.slane %v5083, 4
      %v5089 = vshrl.u32 %v4899, 16
      %v5091 = vrot.slane %v5089, 7
      %v5092 = vshll.u32 %v4899, 16
      %v5094 = vor.u32 %v5091, %v5092
      %v5095 = vsel %vm426, %v5087, %v5094
      %v5096 = vrot.slane %v5091, 4
      %v5098 = vshrl.u32 %v4900, 16
      %v5100 = vrot.slane %v5098, 7
      %v5101 = vshll.u32 %v4900, 16
      %v5103 = vor.u32 %v5100, %v5101
      %v5104 = vrot.slane %v5100, 4
      %v5106 = vshrl.u32 %v4901, 16
      %v5108 = vrot.slane %v5106, 7
      %v5109 = vshll.u32 %v4901, 16
      %v5111 = vor.u32 %v5108, %v5109
      %v5112 = vsel %vm426, %v5104, %v5111
      %v5113 = vrot.slane %v5108, 4
      %v5115 = vshrl.u32 %v4902, 16
      %v5117 = vrot.slane %v5115, 7
      %v5118 = vshll.u32 %v4902, 16
      %v5120 = vor.u32 %v5117, %v5118
      %v5121 = vrot.slane %v5117, 4
      %v5123 = vshrl.u32 %v4903, 16
      %v5125 = vrot.slane %v5123, 7
      %v5126 = vshll.u32 %v4903, 16
      %v5128 = vor.u32 %v5125, %v5126
      %v5129 = vsel %vm426, %v5121, %v5128
      %v5130 = vrot.slane %v5125, 4
      %v5132 = vshrl.u32 %v4904, 16
      %v5134 = vrot.slane %v5132, 7
      %v5135 = vshll.u32 %v4904, 16
      %v5137 = vor.u32 %v5134, %v5135
      %v5138 = vrot.slane %v5134, 4
      %v5140 = vshrl.u32 %v4905, 16
      %v5142 = vrot.slane %v5140, 7
      %v5143 = vshll.u32 %v4905, 16
      %v5145 = vor.u32 %v5142, %v5143
      %v5146 = vsel %vm426, %v5138, %v5145
      %v5147 = vrot.slane %v5142, 4
      %v5149 = vshrl.u32 %v4906, 16
      %v5151 = vrot.slane %v5149, 7
      %v5152 = vshll.u32 %v4906, 16
      %v5154 = vor.u32 %v5151, %v5152
      %v5155 = vrot.slane %v5151, 4
      %v5157 = vshrl.u32 %v4907, 16
      %v5159 = vrot.slane %v5157, 7
      %v5160 = vshll.u32 %v4907, 16
      %v5162 = vor.u32 %v5159, %v5160
      %v5163 = vsel %vm426, %v5155, %v5162
      %v5164 = vrot.slane %v5159, 4
      %v5166 = vshrl.u32 %v4908, 16
      %v5168 = vrot.slane %v5166, 7
      %v5169 = vshll.u32 %v4908, 16
      %v5171 = vor.u32 %v5168, %v5169
      %v5172 = vrot.slane %v5168, 4
      %v5174 = vshrl.u32 %v4909, 16
      %v5176 = vrot.slane %v5174, 7
      %v5177 = vshll.u32 %v4909, 16
      %v5179 = vor.u32 %v5176, %v5177
      %v5180 = vsel %vm426, %v5172, %v5179
      %v5181 = vrot.slane %v5176, 4
      %s5230 = scalar_lea.vmem [#allocation3], 12
      %vm5231 = vcmask 519168
      %vm5232 = vmand %vm5231, %vm749
      %v5233 = vld [vmem:[%s5230] sm:$0xf]
      %v5234 = vsel %vm5232, %v4916, %v5233
      %5235 = vst [vmem:[%s5230] sm:$0xf] %v5234
      %5236 = vst.msk [vmem:[%s5230 + $0x4] sm:$0xf] %vm336, %v4925
      %vm5237 = vcmask 516096
      %vm5238 = vmand %vm5237, %vm424
      %v5239 = vld [vmem:[%s5230 + $0x8] sm:$0x1]
      %v5240 = vsel %vm5238, %v4926, %v5239
      %5241 = vst [vmem:[%s5230 + $0x8] sm:$0x1] %v5240
      %v5242 = vld [vmem:[%s5230 + $0xc] sm:$0xf]
      %v5243 = vsel %vm5232, %v4933, %v5242
      %5244 = vst [vmem:[%s5230 + $0xc] sm:$0xf] %v5243
      %5245 = vst.msk [vmem:[%s5230 + $0x10] sm:$0xf] %vm336, %v4942
      %v5246 = vld [vmem:[%s5230 + $0x14] sm:$0x1]
      %v5247 = vsel %vm5238, %v4943, %v5246
      %5248 = vst [vmem:[%s5230 + $0x14] sm:$0x1] %v5247
      %v5249 = vld [vmem:[%s5230 + $0x18] sm:$0xf]
      %v5250 = vsel %vm5232, %v4950, %v5249
      %5251 = vst [vmem:[%s5230 + $0x18] sm:$0xf] %v5250
      %5252 = vst.msk [vmem:[%s5230 + $0x1c] sm:$0xf] %vm336, %v4959
      %v5253 = vld [vmem:[%s5230 + $0x20] sm:$0x1]
      %v5254 = vsel %vm5238, %v4960, %v5253
      %5255 = vst [vmem:[%s5230 + $0x20] sm:$0x1] %v5254
      %v5256 = vld [vmem:[%s5230 + $0x24] sm:$0xf]
      %v5257 = vsel %vm5232, %v4967, %v5256
      %5258 = vst [vmem:[%s5230 + $0x24] sm:$0xf] %v5257
      %5259 = vst.msk [vmem:[%s5230 + $0x28] sm:$0xf] %vm336, %v4976
      %v5260 = vld [vmem:[%s5230 + $0x2c] sm:$0x1]
      %v5261 = vsel %vm5238, %v4977, %v5260
      %5262 = vst [vmem:[%s5230 + $0x2c] sm:$0x1] %v5261
      %v5263 = vld [vmem:[%s5230 + $0x30] sm:$0xf]
      %v5264 = vsel %vm5232, %v4984, %v5263
      %5265 = vst [vmem:[%s5230 + $0x30] sm:$0xf] %v5264
      %5266 = vst.msk [vmem:[%s5230 + $0x34] sm:$0xf] %vm336, %v4993
      %v5267 = vld [vmem:[%s5230 + $0x38] sm:$0x1]
      %v5268 = vsel %vm5238, %v4994, %v5267
      %5269 = vst [vmem:[%s5230 + $0x38] sm:$0x1] %v5268
      %v5270 = vld [vmem:[%s5230 + $0x3c] sm:$0xf]
      %v5271 = vsel %vm5232, %v5001, %v5270
      %5272 = vst [vmem:[%s5230 + $0x3c] sm:$0xf] %v5271
      %5273 = vst.msk [vmem:[%s5230 + $0x40] sm:$0xf] %vm336, %v5010
      %v5274 = vld [vmem:[%s5230 + $0x44] sm:$0x1]
      %v5275 = vsel %vm5238, %v5011, %v5274
      %5276 = vst [vmem:[%s5230 + $0x44] sm:$0x1] %v5275
      %v5277 = vld [vmem:[%s5230 + $0x48] sm:$0xf]
      %v5278 = vsel %vm5232, %v5018, %v5277
      %5279 = vst [vmem:[%s5230 + $0x48] sm:$0xf] %v5278
      %5280 = vst.msk [vmem:[%s5230 + $0x4c] sm:$0xf] %vm336, %v5027
      %v5281 = vld [vmem:[%s5230 + $0x50] sm:$0x1]
      %v5282 = vsel %vm5238, %v5028, %v5281
      %5283 = vst [vmem:[%s5230 + $0x50] sm:$0x1] %v5282
      %v5284 = vld [vmem:[%s5230 + $0x54] sm:$0xf]
      %v5285 = vsel %vm5232, %v5035, %v5284
      %5286 = vst [vmem:[%s5230 + $0x54] sm:$0xf] %v5285
      %5287 = vst.msk [vmem:[%s5230 + $0x58] sm:$0xf] %vm336, %v5044
      %v5288 = vld [vmem:[%s5230 + $0x5c] sm:$0x1]
      %v5289 = vsel %vm5238, %v5045, %v5288
      %5290 = vst [vmem:[%s5230 + $0x5c] sm:$0x1] %v5289
      %v5291 = vld [vmem:[%s5230 + $0x60] sm:$0xf]
      %v5292 = vsel %vm5232, %v5052, %v5291
      %5293 = vst [vmem:[%s5230 + $0x60] sm:$0xf] %v5292
      %5294 = vst.msk [vmem:[%s5230 + $0x64] sm:$0xf] %vm336, %v5061
      %v5295 = vld [vmem:[%s5230 + $0x68] sm:$0x1]
      %v5296 = vsel %vm5238, %v5062, %v5295
      %5297 = vst [vmem:[%s5230 + $0x68] sm:$0x1] %v5296
      %v5298 = vld [vmem:[%s5230 + $0x6c] sm:$0xf]
      %v5299 = vsel %vm5232, %v5069, %v5298
      %5300 = vst [vmem:[%s5230 + $0x6c] sm:$0xf] %v5299
      %5301 = vst.msk [vmem:[%s5230 + $0x70] sm:$0xf] %vm336, %v5078
      %v5302 = vld [vmem:[%s5230 + $0x74] sm:$0x1]
      %v5303 = vsel %vm5238, %v5079, %v5302
      %5304 = vst [vmem:[%s5230 + $0x74] sm:$0x1] %v5303
      %v5305 = vld [vmem:[%s5230 + $0x78] sm:$0xf]
      %v5306 = vsel %vm5232, %v5086, %v5305
      %5307 = vst [vmem:[%s5230 + $0x78] sm:$0xf] %v5306
      %5308 = vst.msk [vmem:[%s5230 + $0x7c] sm:$0xf] %vm336, %v5095
      %v5309 = vld [vmem:[%s5230 + $0x80] sm:$0x1]
      %v5310 = vsel %vm5238, %v5096, %v5309
      %5311 = vst [vmem:[%s5230 + $0x80] sm:$0x1] %v5310
      %v5312 = vld [vmem:[%s5230 + $0x84] sm:$0xf]
      %v5313 = vsel %vm5232, %v5103, %v5312
      %5314 = vst [vmem:[%s5230 + $0x84] sm:$0xf] %v5313
      %5315 = vst.msk [vmem:[%s5230 + $0x88] sm:$0xf] %vm336, %v5112
      %v5316 = vld [vmem:[%s5230 + $0x8c] sm:$0x1]
      %v5317 = vsel %vm5238, %v5113, %v5316
      %5318 = vst [vmem:[%s5230 + $0x8c] sm:$0x1] %v5317
      %v5319 = vld [vmem:[%s5230 + $0x90] sm:$0xf]
      %v5320 = vsel %vm5232, %v5120, %v5319
      %5321 = vst [vmem:[%s5230 + $0x90] sm:$0xf] %v5320
      %5322 = vst.msk [vmem:[%s5230 + $0x94] sm:$0xf] %vm336, %v5129
      %v5323 = vld [vmem:[%s5230 + $0x98] sm:$0x1]
      %v5324 = vsel %vm5238, %v5130, %v5323
      %5325 = vst [vmem:[%s5230 + $0x98] sm:$0x1] %v5324
      %v5326 = vld [vmem:[%s5230 + $0x9c] sm:$0xf]
      %v5327 = vsel %vm5232, %v5137, %v5326
      %5328 = vst [vmem:[%s5230 + $0x9c] sm:$0xf] %v5327
      %5329 = vst.msk [vmem:[%s5230 + $0xa0] sm:$0xf] %vm336, %v5146
      %v5330 = vld [vmem:[%s5230 + $0xa4] sm:$0x1]
      %v5331 = vsel %vm5238, %v5147, %v5330
      %5332 = vst [vmem:[%s5230 + $0xa4] sm:$0x1] %v5331
      %v5333 = vld [vmem:[%s5230 + $0xa8] sm:$0xf]
      %v5334 = vsel %vm5232, %v5154, %v5333
      %5335 = vst [vmem:[%s5230 + $0xa8] sm:$0xf] %v5334
      %5336 = vst.msk [vmem:[%s5230 + $0xac] sm:$0xf] %vm336, %v5163
      %v5337 = vld [vmem:[%s5230 + $0xb0] sm:$0x1]
      %v5338 = vsel %vm5238, %v5164, %v5337
      %5339 = vst [vmem:[%s5230 + $0xb0] sm:$0x1] %v5338
      %v5340 = vld [vmem:[%s5230 + $0xb4] sm:$0xf]
      %v5341 = vsel %vm5232, %v5171, %v5340
      %5342 = vst [vmem:[%s5230 + $0xb4] sm:$0xf] %v5341
      %5343 = vst.msk [vmem:[%s5230 + $0xb8] sm:$0xf] %vm336, %v5180
      %v5344 = vld [vmem:[%s5230 + $0xbc] sm:$0x1]
      %v5345 = vsel %vm5238, %v5181, %v5344
      %5346 = vst [vmem:[%s5230 + $0xbc] sm:$0x1] %v5345
      %v5347 = vld [vmem:[#allocation3] sm:$0xf]
      %v5348 = vld [vmem:[#allocation3 + $0x4] sm:$0xf]
      %v5349 = vld [vmem:[#allocation3 + $0xc] sm:$0xf]
      %v5350 = vld [vmem:[#allocation3 + $0x10] sm:$0xf]
      %v5351 = vld [vmem:[#allocation3 + $0x18] sm:$0xf]
      %v5352 = vld [vmem:[#allocation3 + $0x1c] sm:$0xf]
      %v5353 = vld [vmem:[#allocation3 + $0x24] sm:$0xf]
      %v5354 = vld [vmem:[#allocation3 + $0x28] sm:$0xf]
      %v5355 = vld [vmem:[#allocation3 + $0x30] sm:$0xf]
      %v5356 = vld [vmem:[#allocation3 + $0x34] sm:$0xf]
      %v5357 = vld [vmem:[#allocation3 + $0x3c] sm:$0xf]
      %v5358 = vld [vmem:[#allocation3 + $0x40] sm:$0xf]
      %v5359 = vld [vmem:[#allocation3 + $0x48] sm:$0xf]
      %v5360 = vld [vmem:[#allocation3 + $0x4c] sm:$0xf]
      %v5361 = vld [vmem:[#allocation3 + $0x54] sm:$0xf]
      %v5362 = vld [vmem:[#allocation3 + $0x58] sm:$0xf]
      %v5363 = vld [vmem:[#allocation3 + $0x60] sm:$0xf]
      %v5364 = vld [vmem:[#allocation3 + $0x64] sm:$0xf]
      %v5365 = vld [vmem:[#allocation3 + $0x6c] sm:$0xf]
      %v5366 = vld [vmem:[#allocation3 + $0x70] sm:$0xf]
      %v5367 = vld [vmem:[#allocation3 + $0x78] sm:$0xf]
      %v5368 = vld [vmem:[#allocation3 + $0x7c] sm:$0xf]
      %v5369 = vld [vmem:[#allocation3 + $0x84] sm:$0xf]
      %v5370 = vld [vmem:[#allocation3 + $0x88] sm:$0xf]
      %v5371 = vld [vmem:[#allocation3 + $0x90] sm:$0xf]
      %v5372 = vld [vmem:[#allocation3 + $0x94] sm:$0xf]
      %v5373 = vld [vmem:[#allocation3 + $0x9c] sm:$0xf]
      %v5374 = vld [vmem:[#allocation3 + $0xa0] sm:$0xf]
      %v5375 = vld [vmem:[#allocation3 + $0xa8] sm:$0xf]
      %v5376 = vld [vmem:[#allocation3 + $0xac] sm:$0xf]
      %v5377 = vld [vmem:[#allocation3 + $0xb4] sm:$0xf]
      %v5378 = vld [vmem:[#allocation3 + $0xb8] sm:$0xf]
      %v5379 = vld [vmem:[%s3] sm:$0xf]
      %v5380 = vld [vmem:[%s3 + $0x4] sm:$0xf]
      %v5381 = vld [vmem:[%s3 + $0x8] sm:$0xf]
      %v5382 = vld [vmem:[%s3 + $0xc] sm:$0xf]
      %v5383 = vld [vmem:[%s3 + $0x10] sm:$0xf]
      %v5384 = vld [vmem:[%s3 + $0x14] sm:$0xf]
      %v5385 = vld [vmem:[%s3 + $0x18] sm:$0xf]
      %v5386 = vld [vmem:[%s3 + $0x1c] sm:$0xf]
      %v5387 = vld [vmem:[#allocation3 + $0x8] sm:$0x1]
      %v5388 = vld [vmem:[#allocation3 + $0x14] sm:$0x1]
      %v5389 = vld [vmem:[#allocation3 + $0x20] sm:$0x1]
      %v5390 = vld [vmem:[#allocation3 + $0x2c] sm:$0x1]
      %v5391 = vld [vmem:[#allocation3 + $0x38] sm:$0x1]
      %v5392 = vld [vmem:[#allocation3 + $0x44] sm:$0x1]
      %v5393 = vld [vmem:[#allocation3 + $0x50] sm:$0x1]
      %v5394 = vld [vmem:[#allocation3 + $0x5c] sm:$0x1]
      %v5395 = vld [vmem:[#allocation3 + $0x68] sm:$0x1]
      %v5396 = vld [vmem:[#allocation3 + $0x74] sm:$0x1]
      %v5397 = vld [vmem:[#allocation3 + $0x80] sm:$0x1]
      %v5398 = vld [vmem:[#allocation3 + $0x8c] sm:$0x1]
      %v5399 = vld [vmem:[#allocation3 + $0x98] sm:$0x1]
      %v5400 = vld [vmem:[#allocation3 + $0xa4] sm:$0x1]
      %v5401 = vld [vmem:[#allocation3 + $0xb0] sm:$0x1]
      %v5402 = vld [vmem:[#allocation3 + $0xbc] sm:$0x1]
      %v5404 = vshrl.u32 %v5347, 16
      %v5406 = vrot.slane %v5404, 4
      %v5407 = vshll.u32 %v5347, 16
      %v5409 = vrot.slane %v5407, 5
      %v5410 = vor.u32 %v5406, %v5409
      %v5411 = vrot.slane %v5410, 4
      %v5413 = vshll.u32 %v5348, 16
      %v5415 = vrot.slane %v5413, 5
      %v5416 = vsel %vm917, %v5411, %v5415
      %v5417 = vshrl.u32 %v5348, 16
      %v5419 = vrot.slane %v5417, 4
      %v5420 = vor.u32 %v5419, %v5415
      %v5421 = vrot.slane %v5420, 4
      %v5423 = vshll.u32 %v5387, 16
      %v5425 = vrot.slane %v5423, 5
      %v5426 = vsel %vm917, %v5421, %v5425
      %v5428 = vshrl.u32 %v5349, 16
      %v5430 = vrot.slane %v5428, 4
      %v5431 = vshll.u32 %v5349, 16
      %v5433 = vrot.slane %v5431, 5
      %v5434 = vor.u32 %v5430, %v5433
      %v5435 = vrot.slane %v5434, 4
      %v5437 = vshll.u32 %v5350, 16
      %v5439 = vrot.slane %v5437, 5
      %v5440 = vsel %vm917, %v5435, %v5439
      %v5441 = vshrl.u32 %v5350, 16
      %v5443 = vrot.slane %v5441, 4
      %v5444 = vor.u32 %v5443, %v5439
      %v5445 = vrot.slane %v5444, 4
      %v5447 = vshll.u32 %v5388, 16
      %v5449 = vrot.slane %v5447, 5
      %v5450 = vsel %vm917, %v5445, %v5449
      %v5452 = vshrl.u32 %v5351, 16
      %v5454 = vrot.slane %v5452, 4
      %v5455 = vshll.u32 %v5351, 16
      %v5457 = vrot.slane %v5455, 5
      %v5458 = vor.u32 %v5454, %v5457
      %v5459 = vrot.slane %v5458, 4
      %v5461 = vshll.u32 %v5352, 16
      %v5463 = vrot.slane %v5461, 5
      %v5464 = vsel %vm917, %v5459, %v5463
      %v5465 = vshrl.u32 %v5352, 16
      %v5467 = vrot.slane %v5465, 4
      %v5468 = vor.u32 %v5467, %v5463
      %v5469 = vrot.slane %v5468, 4
      %v5471 = vshll.u32 %v5389, 16
      %v5473 = vrot.slane %v5471, 5
      %v5474 = vsel %vm917, %v5469, %v5473
      %v5476 = vshrl.u32 %v5353, 16
      %v5478 = vrot.slane %v5476, 4
      %v5479 = vshll.u32 %v5353, 16
      %v5481 = vrot.slane %v5479, 5
      %v5482 = vor.u32 %v5478, %v5481
      %v5483 = vrot.slane %v5482, 4
      %v5485 = vshll.u32 %v5354, 16
      %v5487 = vrot.slane %v5485, 5
      %v5488 = vsel %vm917, %v5483, %v5487
      %v5489 = vshrl.u32 %v5354, 16
      %v5491 = vrot.slane %v5489, 4
      %v5492 = vor.u32 %v5491, %v5487
      %v5493 = vrot.slane %v5492, 4
      %v5495 = vshll.u32 %v5390, 16
      %v5497 = vrot.slane %v5495, 5
      %v5498 = vsel %vm917, %v5493, %v5497
      %v5500 = vshrl.u32 %v5355, 16
      %v5502 = vrot.slane %v5500, 4
      %v5503 = vshll.u32 %v5355, 16
      %v5505 = vrot.slane %v5503, 5
      %v5506 = vor.u32 %v5502, %v5505
      %v5507 = vrot.slane %v5506, 4
      %v5509 = vshll.u32 %v5356, 16
      %v5511 = vrot.slane %v5509, 5
      %v5512 = vsel %vm917, %v5507, %v5511
      %v5513 = vshrl.u32 %v5356, 16
      %v5515 = vrot.slane %v5513, 4
      %v5516 = vor.u32 %v5515, %v5511
      %v5517 = vrot.slane %v5516, 4
      %v5519 = vshll.u32 %v5391, 16
      %v5521 = vrot.slane %v5519, 5
      %v5522 = vsel %vm917, %v5517, %v5521
      %v5524 = vshrl.u32 %v5357, 16
      %v5526 = vrot.slane %v5524, 4
      %v5527 = vshll.u32 %v5357, 16
      %v5529 = vrot.slane %v5527, 5
      %v5530 = vor.u32 %v5526, %v5529
      %v5531 = vrot.slane %v5530, 4
      %v5533 = vshll.u32 %v5358, 16
      %v5535 = vrot.slane %v5533, 5
      %v5536 = vsel %vm917, %v5531, %v5535
      %v5537 = vshrl.u32 %v5358, 16
      %v5539 = vrot.slane %v5537, 4
      %v5540 = vor.u32 %v5539, %v5535
      %v5541 = vrot.slane %v5540, 4
      %v5543 = vshll.u32 %v5392, 16
      %v5545 = vrot.slane %v5543, 5
      %v5546 = vsel %vm917, %v5541, %v5545
      %v5548 = vshrl.u32 %v5359, 16
      %v5550 = vrot.slane %v5548, 4
      %v5551 = vshll.u32 %v5359, 16
      %v5553 = vrot.slane %v5551, 5
      %v5554 = vor.u32 %v5550, %v5553
      %v5555 = vrot.slane %v5554, 4
      %v5557 = vshll.u32 %v5360, 16
      %v5559 = vrot.slane %v5557, 5
      %v5560 = vsel %vm917, %v5555, %v5559
      %v5561 = vshrl.u32 %v5360, 16
      %v5563 = vrot.slane %v5561, 4
      %v5564 = vor.u32 %v5563, %v5559
      %v5565 = vrot.slane %v5564, 4
      %v5567 = vshll.u32 %v5393, 16
      %v5569 = vrot.slane %v5567, 5
      %v5570 = vsel %vm917, %v5565, %v5569
      %v5572 = vshrl.u32 %v5361, 16
      %v5574 = vrot.slane %v5572, 4
      %v5575 = vshll.u32 %v5361, 16
      %v5577 = vrot.slane %v5575, 5
      %v5578 = vor.u32 %v5574, %v5577
      %v5579 = vrot.slane %v5578, 4
      %v5581 = vshll.u32 %v5362, 16
      %v5583 = vrot.slane %v5581, 5
      %v5584 = vsel %vm917, %v5579, %v5583
      %v5585 = vshrl.u32 %v5362, 16
      %v5587 = vrot.slane %v5585, 4
      %v5588 = vor.u32 %v5587, %v5583
      %v5589 = vrot.slane %v5588, 4
      %v5591 = vshll.u32 %v5394, 16
      %v5593 = vrot.slane %v5591, 5
      %v5594 = vsel %vm917, %v5589, %v5593
      %v5596 = vshrl.u32 %v5363, 16
      %v5598 = vrot.slane %v5596, 4
      %v5599 = vshll.u32 %v5363, 16
      %v5601 = vrot.slane %v5599, 5
      %v5602 = vor.u32 %v5598, %v5601
      %v5603 = vrot.slane %v5602, 4
      %v5605 = vshll.u32 %v5364, 16
      %v5607 = vrot.slane %v5605, 5
      %v5608 = vsel %vm917, %v5603, %v5607
      %v5609 = vshrl.u32 %v5364, 16
      %v5611 = vrot.slane %v5609, 4
      %v5612 = vor.u32 %v5611, %v5607
      %v5613 = vrot.slane %v5612, 4
      %v5615 = vshll.u32 %v5395, 16
      %v5617 = vrot.slane %v5615, 5
      %v5618 = vsel %vm917, %v5613, %v5617
      %v5620 = vshrl.u32 %v5365, 16
      %v5622 = vrot.slane %v5620, 4
      %v5623 = vshll.u32 %v5365, 16
      %v5625 = vrot.slane %v5623, 5
      %v5626 = vor.u32 %v5622, %v5625
      %v5627 = vrot.slane %v5626, 4
      %v5629 = vshll.u32 %v5366, 16
      %v5631 = vrot.slane %v5629, 5
      %v5632 = vsel %vm917, %v5627, %v5631
      %v5633 = vshrl.u32 %v5366, 16
      %v5635 = vrot.slane %v5633, 4
      %v5636 = vor.u32 %v5635, %v5631
      %v5637 = vrot.slane %v5636, 4
      %v5639 = vshll.u32 %v5396, 16
      %v5641 = vrot.slane %v5639, 5
      %v5642 = vsel %vm917, %v5637, %v5641
      %v5644 = vshrl.u32 %v5367, 16
      %v5646 = vrot.slane %v5644, 4
      %v5647 = vshll.u32 %v5367, 16
      %v5649 = vrot.slane %v5647, 5
      %v5650 = vor.u32 %v5646, %v5649
      %v5651 = vrot.slane %v5650, 4
      %v5653 = vshll.u32 %v5368, 16
      %v5655 = vrot.slane %v5653, 5
      %v5656 = vsel %vm917, %v5651, %v5655
      %v5657 = vshrl.u32 %v5368, 16
      %v5659 = vrot.slane %v5657, 4
      %v5660 = vor.u32 %v5659, %v5655
      %v5661 = vrot.slane %v5660, 4
      %v5663 = vshll.u32 %v5397, 16
      %v5665 = vrot.slane %v5663, 5
      %v5666 = vsel %vm917, %v5661, %v5665
      %v5668 = vshrl.u32 %v5369, 16
      %v5670 = vrot.slane %v5668, 4
      %v5671 = vshll.u32 %v5369, 16
      %v5673 = vrot.slane %v5671, 5
      %v5674 = vor.u32 %v5670, %v5673
      %v5675 = vrot.slane %v5674, 4
      %v5677 = vshll.u32 %v5370, 16
      %v5679 = vrot.slane %v5677, 5
      %v5680 = vsel %vm917, %v5675, %v5679
      %v5681 = vshrl.u32 %v5370, 16
      %v5683 = vrot.slane %v5681, 4
      %v5684 = vor.u32 %v5683, %v5679
      %v5685 = vrot.slane %v5684, 4
      %v5687 = vshll.u32 %v5398, 16
      %v5689 = vrot.slane %v5687, 5
      %v5690 = vsel %vm917, %v5685, %v5689
      %v5692 = vshrl.u32 %v5371, 16
      %v5694 = vrot.slane %v5692, 4
      %v5695 = vshll.u32 %v5371, 16
      %v5697 = vrot.slane %v5695, 5
      %v5698 = vor.u32 %v5694, %v5697
      %v5699 = vrot.slane %v5698, 4
      %v5701 = vshll.u32 %v5372, 16
      %v5703 = vrot.slane %v5701, 5
      %v5704 = vsel %vm917, %v5699, %v5703
      %v5705 = vshrl.u32 %v5372, 16
      %v5707 = vrot.slane %v5705, 4
      %v5708 = vor.u32 %v5707, %v5703
      %v5709 = vrot.slane %v5708, 4
      %v5711 = vshll.u32 %v5399, 16
      %v5713 = vrot.slane %v5711, 5
      %v5714 = vsel %vm917, %v5709, %v5713
      %v5716 = vshrl.u32 %v5373, 16
      %v5718 = vrot.slane %v5716, 4
      %v5719 = vshll.u32 %v5373, 16
      %v5721 = vrot.slane %v5719, 5
      %v5722 = vor.u32 %v5718, %v5721
      %v5723 = vrot.slane %v5722, 4
      %v5725 = vshll.u32 %v5374, 16
      %v5727 = vrot.slane %v5725, 5
      %v5728 = vsel %vm917, %v5723, %v5727
      %v5729 = vshrl.u32 %v5374, 16
      %v5731 = vrot.slane %v5729, 4
      %v5732 = vor.u32 %v5731, %v5727
      %v5733 = vrot.slane %v5732, 4
      %v5735 = vshll.u32 %v5400, 16
      %v5737 = vrot.slane %v5735, 5
      %v5738 = vsel %vm917, %v5733, %v5737
      %v5740 = vshrl.u32 %v5375, 16
      %v5742 = vrot.slane %v5740, 4
      %v5743 = vshll.u32 %v5375, 16
      %v5745 = vrot.slane %v5743, 5
      %v5746 = vor.u32 %v5742, %v5745
      %v5747 = vrot.slane %v5746, 4
      %v5749 = vshll.u32 %v5376, 16
      %v5751 = vrot.slane %v5749, 5
      %v5752 = vsel %vm917, %v5747, %v5751
      %v5753 = vshrl.u32 %v5376, 16
      %v5755 = vrot.slane %v5753, 4
      %v5756 = vor.u32 %v5755, %v5751
      %v5757 = vrot.slane %v5756, 4
      %v5759 = vshll.u32 %v5401, 16
      %v5761 = vrot.slane %v5759, 5
      %v5762 = vsel %vm917, %v5757, %v5761
      %v5764 = vshrl.u32 %v5377, 16
      %v5766 = vrot.slane %v5764, 4
      %v5767 = vshll.u32 %v5377, 16
      %v5769 = vrot.slane %v5767, 5
      %v5770 = vor.u32 %v5766, %v5769
      %v5771 = vrot.slane %v5770, 4
      %v5773 = vshll.u32 %v5378, 16
      %v5775 = vrot.slane %v5773, 5
      %v5776 = vsel %vm917, %v5771, %v5775
      %v5777 = vshrl.u32 %v5378, 16
      %v5779 = vrot.slane %v5777, 4
      %v5780 = vor.u32 %v5779, %v5775
      %v5781 = vrot.slane %v5780, 4
      %v5783 = vshll.u32 %v5402, 16
      %v5785 = vrot.slane %v5783, 5
      %v5786 = vsel %vm917, %v5781, %v5785
      %s5787 = scalar_lea.vmem %s3, 32
      %v5788 = vld [vmem:[%s5787] sm:$0xf]
      %v5789 = vld [vmem:[%s5787 + $0x4] sm:$0xf]
      %v5790 = vld [vmem:[%s5787 + $0x8] sm:$0xf]
      %v5791 = vld [vmem:[%s5787 + $0xc] sm:$0xf]
      %v5792 = vld [vmem:[%s5787 + $0x10] sm:$0xf]
      %v5793 = vld [vmem:[%s5787 + $0x14] sm:$0xf]
      %v5794 = vld [vmem:[%s5787 + $0x18] sm:$0xf]
      %v5795 = vld [vmem:[%s5787 + $0x1c] sm:$0xf]
      %v5796 = vunpack.c.l.b16 %v5416
      %v5797 = vunpack.c.l.b16 %v5426
      %v5798 = vunpack.c.l.b16 %v5440
      %v5799 = vunpack.c.l.b16 %v5450
      %v5800 = vunpack.c.l.b16 %v5464
      %v5801 = vunpack.c.l.b16 %v5474
      %v5802 = vunpack.c.l.b16 %v5488
      %v5803 = vunpack.c.l.b16 %v5498
      %v5804 = vunpack.c.l.b16 %v5512
      %v5805 = vunpack.c.l.b16 %v5522
      %v5806 = vunpack.c.l.b16 %v5536
      %v5807 = vunpack.c.l.b16 %v5546
      %v5808 = vunpack.c.l.b16 %v5560
      %v5809 = vunpack.c.l.b16 %v5570
      %v5810 = vunpack.c.l.b16 %v5584
      %v5811 = vunpack.c.l.b16 %v5594
      %v5812 = vunpack.c.l.b16 %v5608
      %v5813 = vunpack.c.l.b16 %v5618
      %v5814 = vunpack.c.l.b16 %v5632
      %v5815 = vunpack.c.l.b16 %v5642
      %v5816 = vunpack.c.l.b16 %v5656
      %v5817 = vunpack.c.l.b16 %v5666
      %v5818 = vunpack.c.l.b16 %v5680
      %v5819 = vunpack.c.l.b16 %v5690
      %v5820 = vunpack.c.l.b16 %v5704
      %v5821 = vunpack.c.l.b16 %v5714
      %v5822 = vunpack.c.l.b16 %v5728
      %v5823 = vunpack.c.l.b16 %v5738
      %v5824 = vunpack.c.l.b16 %v5752
      %v5825 = vunpack.c.l.b16 %v5762
      %v5826 = vunpack.c.l.b16 %v5776
      %v5827 = vunpack.c.l.b16 %v5786
      %v5828 = vpack.c.b16 %v5797, %v5796
      %v5829 = vpack.c.b16 %v5799, %v5798
      %v5830 = vpack.c.b16 %v5801, %v5800
      %v5831 = vpack.c.b16 %v5803, %v5802
      %v5832 = vpack.c.b16 %v5805, %v5804
      %v5833 = vpack.c.b16 %v5807, %v5806
      %v5834 = vpack.c.b16 %v5809, %v5808
      %v5835 = vpack.c.b16 %v5811, %v5810
      %v5836 = vpack.c.b16 %v5813, %v5812
      %v5837 = vpack.c.b16 %v5815, %v5814
      %v5838 = vpack.c.b16 %v5817, %v5816
      %v5839 = vpack.c.b16 %v5819, %v5818
      %v5840 = vpack.c.b16 %v5821, %v5820
      %v5841 = vpack.c.b16 %v5823, %v5822
      %v5842 = vpack.c.b16 %v5825, %v5824
      %v5843 = vpack.c.b16 %v5827, %v5826
      %v5852 = vunpack.c.l.b16 %v5788
      %v5853 = vunpack.c.l.b16 %v5789
      %v5854 = vunpack.c.l.b16 %v5790
      %v5855 = vunpack.c.l.b16 %v5791
      %v5856 = vunpack.c.l.b16 %v5792
      %v5857 = vunpack.c.l.b16 %v5793
      %v5858 = vunpack.c.l.b16 %v5794
      %v5859 = vunpack.c.l.b16 %v5795
      %v5860 = vpack.c.b16 %v5853, %v5852
      %v5861 = vpack.c.b16 %v5855, %v5854
      %v5862 = vpack.c.b16 %v5857, %v5856
      %v5863 = vpack.c.b16 %v5859, %v5858
      %vm5868 = vcmask 523264
      %v5870 = vsel %vm5868, %v5828, 0
      %v5873 = vsel %vm5868, %v5829, 0
      %v5876 = vsel %vm5868, %v5830, 0
      %v5879 = vsel %vm5868, %v5831, 0
      %v5882 = vsel %vm5868, %v5832, 0
      %v5885 = vsel %vm5868, %v5833, 0
      %v5888 = vsel %vm5868, %v5834, 0
      %v5891 = vsel %vm5868, %v5835, 0
      %v5894 = vsel %vm5868, %v5836, 0
      %v5897 = vsel %vm5868, %v5837, 0
      %v5900 = vsel %vm5868, %v5838, 0
      %v5903 = vsel %vm5868, %v5839, 0
      %v5906 = vsel %vm5868, %v5840, 0
      %v5909 = vsel %vm5868, %v5841, 0
      %v5912 = vsel %vm5868, %v5842, 0
      %v5915 = vsel %vm5868, %v5843, 0
      %5917 = vmatpush.bf16.msra.mxu0 0
      %5918 = vmatpush.bf16.msra.mxu0 0
      %5919 = vmatpush.bf16.msra.mxu0 0
      %5920 = vmatpush.bf16.msra.mxu0 0
      %5921 = vmatpush.bf16.msra.mxu0 %v5863
      %5922 = vmatpush.bf16.msra.mxu0 %v5862
      %5923 = vmatpush.bf16.msra.mxu0 %v5861
      %5924 = vmatpush.bf16.msra.mxu0 %v5860
      %5925 = vmatmul.bf16.gmra.mxu0 %v5870
      %v5926 = vpop.f32.mrf.mxu0
      %v5927 = vadd.f32 0.0, %v5926
      %v5928 = vpop.f32.mrf.mxu0
      %v5929 = vadd.f32 0.0, %v5928
      %5930 = vmatmul.bf16.gmra.mxu0 %v5873
      %v5931 = vpop.f32.mrf.mxu0
      %v5932 = vadd.f32 0.0, %v5931
      %v5933 = vpop.f32.mrf.mxu0
      %v5934 = vadd.f32 0.0, %v5933
      %5935 = vmatmul.bf16.gmra.mxu0 %v5876
      %v5936 = vpop.f32.mrf.mxu0
      %v5937 = vadd.f32 0.0, %v5936
      %v5938 = vpop.f32.mrf.mxu0
      %v5939 = vadd.f32 0.0, %v5938
      %5940 = vmatmul.bf16.gmra.mxu0 %v5879
      %v5941 = vpop.f32.mrf.mxu0
      %v5942 = vadd.f32 0.0, %v5941
      %v5943 = vpop.f32.mrf.mxu0
      %v5944 = vadd.f32 0.0, %v5943
      %5945 = vmatmul.bf16.gmra.mxu0 %v5882
      %v5946 = vpop.f32.mrf.mxu0
      %v5947 = vadd.f32 0.0, %v5946
      %v5948 = vpop.f32.mrf.mxu0
      %v5949 = vadd.f32 0.0, %v5948
      %5950 = vmatmul.bf16.gmra.mxu0 %v5885
      %v5951 = vpop.f32.mrf.mxu0
      %v5952 = vadd.f32 0.0, %v5951
      %v5953 = vpop.f32.mrf.mxu0
      %v5954 = vadd.f32 0.0, %v5953
      %5955 = vmatmul.bf16.gmra.mxu0 %v5888
      %v5956 = vpop.f32.mrf.mxu0
      %v5957 = vadd.f32 0.0, %v5956
      %v5958 = vpop.f32.mrf.mxu0
      %v5959 = vadd.f32 0.0, %v5958
      %5960 = vmatmul.bf16.gmra.mxu0 %v5891
      %v5961 = vpop.f32.mrf.mxu0
      %v5962 = vadd.f32 0.0, %v5961
      %v5963 = vpop.f32.mrf.mxu0
      %v5964 = vadd.f32 0.0, %v5963
      %5965 = vmatmul.bf16.gmra.mxu0 %v5894
      %v5966 = vpop.f32.mrf.mxu0
      %v5967 = vadd.f32 0.0, %v5966
      %v5968 = vpop.f32.mrf.mxu0
      %v5969 = vadd.f32 0.0, %v5968
      %5970 = vmatmul.bf16.gmra.mxu0 %v5897
      %v5971 = vpop.f32.mrf.mxu0
      %v5972 = vadd.f32 0.0, %v5971
      %v5973 = vpop.f32.mrf.mxu0
      %v5974 = vadd.f32 0.0, %v5973
      %5975 = vmatmul.bf16.gmra.mxu0 %v5900
      %v5976 = vpop.f32.mrf.mxu0
      %v5977 = vadd.f32 0.0, %v5976
      %v5978 = vpop.f32.mrf.mxu0
      %v5979 = vadd.f32 0.0, %v5978
      %5980 = vmatmul.bf16.gmra.mxu0 %v5903
      %v5981 = vpop.f32.mrf.mxu0
      %v5982 = vadd.f32 0.0, %v5981
      %v5983 = vpop.f32.mrf.mxu0
      %v5984 = vadd.f32 0.0, %v5983
      %5985 = vmatmul.bf16.gmra.mxu0 %v5906
      %v5986 = vpop.f32.mrf.mxu0
      %v5987 = vadd.f32 0.0, %v5986
      %v5988 = vpop.f32.mrf.mxu0
      %v5989 = vadd.f32 0.0, %v5988
      %5990 = vmatmul.bf16.gmra.mxu0 %v5909
      %v5991 = vpop.f32.mrf.mxu0
      %v5992 = vadd.f32 0.0, %v5991
      %v5993 = vpop.f32.mrf.mxu0
      %v5994 = vadd.f32 0.0, %v5993
      %5995 = vmatmul.bf16.gmra.mxu0 %v5912
      %v5996 = vpop.f32.mrf.mxu0
      %v5997 = vadd.f32 0.0, %v5996
      %v5998 = vpop.f32.mrf.mxu0
      %v5999 = vadd.f32 0.0, %v5998
      %6000 = vmatmul.bf16.gmra.mxu0 %v5915
      %v6001 = vpop.f32.mrf.mxu0
      %v6002 = vadd.f32 0.0, %v6001
      %v6003 = vpop.f32.mrf.mxu0
      %v6004 = vadd.f32 0.0, %v6003
      %6005 = vdwg.mxu0
      %v6038 = vunpack.c.l.b16 %v5347
      %v6039 = vunpack.c.l.b16 %v5348
      %v6040 = vunpack.c.l.b16 %v5349
      %v6041 = vunpack.c.l.b16 %v5350
      %v6042 = vunpack.c.l.b16 %v5351
      %v6043 = vunpack.c.l.b16 %v5352
      %v6044 = vunpack.c.l.b16 %v5353
      %v6045 = vunpack.c.l.b16 %v5354
      %v6046 = vunpack.c.l.b16 %v5355
      %v6047 = vunpack.c.l.b16 %v5356
      %v6048 = vunpack.c.l.b16 %v5357
      %v6049 = vunpack.c.l.b16 %v5358
      %v6050 = vunpack.c.l.b16 %v5359
      %v6051 = vunpack.c.l.b16 %v5360
      %v6052 = vunpack.c.l.b16 %v5361
      %v6053 = vunpack.c.l.b16 %v5362
      %v6054 = vunpack.c.l.b16 %v5363
      %v6055 = vunpack.c.l.b16 %v5364
      %v6056 = vunpack.c.l.b16 %v5365
      %v6057 = vunpack.c.l.b16 %v5366
      %v6058 = vunpack.c.l.b16 %v5367
      %v6059 = vunpack.c.l.b16 %v5368
      %v6060 = vunpack.c.l.b16 %v5369
      %v6061 = vunpack.c.l.b16 %v5370
      %v6062 = vunpack.c.l.b16 %v5371
      %v6063 = vunpack.c.l.b16 %v5372
      %v6064 = vunpack.c.l.b16 %v5373
      %v6065 = vunpack.c.l.b16 %v5374
      %v6066 = vunpack.c.l.b16 %v5375
      %v6067 = vunpack.c.l.b16 %v5376
      %v6068 = vunpack.c.l.b16 %v5377
      %v6069 = vunpack.c.l.b16 %v5378
      %v6070 = vpack.c.b16 %v6039, %v6038
      %v6071 = vpack.c.b16 %v6041, %v6040
      %v6072 = vpack.c.b16 %v6043, %v6042
      %v6073 = vpack.c.b16 %v6045, %v6044
      %v6074 = vpack.c.b16 %v6047, %v6046
      %v6075 = vpack.c.b16 %v6049, %v6048
      %v6076 = vpack.c.b16 %v6051, %v6050
      %v6077 = vpack.c.b16 %v6053, %v6052
      %v6078 = vpack.c.b16 %v6055, %v6054
      %v6079 = vpack.c.b16 %v6057, %v6056
      %v6080 = vpack.c.b16 %v6059, %v6058
      %v6081 = vpack.c.b16 %v6061, %v6060
      %v6082 = vpack.c.b16 %v6063, %v6062
      %v6083 = vpack.c.b16 %v6065, %v6064
      %v6084 = vpack.c.b16 %v6067, %v6066
      %v6085 = vpack.c.b16 %v6069, %v6068
      %v6094 = vunpack.c.l.b16 %v5379
      %v6095 = vunpack.c.l.b16 %v5380
      %v6096 = vunpack.c.l.b16 %v5381
      %v6097 = vunpack.c.l.b16 %v5382
      %v6098 = vunpack.c.l.b16 %v5383
      %v6099 = vunpack.c.l.b16 %v5384
      %v6100 = vunpack.c.l.b16 %v5385
      %v6101 = vunpack.c.l.b16 %v5386
      %v6102 = vpack.c.b16 %v6095, %v6094
      %v6103 = vpack.c.b16 %v6097, %v6096
      %v6104 = vpack.c.b16 %v6099, %v6098
      %v6105 = vpack.c.b16 %v6101, %v6100
      %v6111 = vsel %vm5868, %v6070, 0
      %v6114 = vsel %vm5868, %v6071, 0
      %v6117 = vsel %vm5868, %v6072, 0
      %v6120 = vsel %vm5868, %v6073, 0
      %v6123 = vsel %vm5868, %v6074, 0
      %v6126 = vsel %vm5868, %v6075, 0
      %v6129 = vsel %vm5868, %v6076, 0
      %v6132 = vsel %vm5868, %v6077, 0
      %v6135 = vsel %vm5868, %v6078, 0
      %v6138 = vsel %vm5868, %v6079, 0
      %v6141 = vsel %vm5868, %v6080, 0
      %v6144 = vsel %vm5868, %v6081, 0
      %v6147 = vsel %vm5868, %v6082, 0
      %v6150 = vsel %vm5868, %v6083, 0
      %v6153 = vsel %vm5868, %v6084, 0
      %v6156 = vsel %vm5868, %v6085, 0
      %6158 = vmatpush.bf16.msra.mxu0 0
      %6159 = vmatpush.bf16.msra.mxu0 0
      %6160 = vmatpush.bf16.msra.mxu0 0
      %6161 = vmatpush.bf16.msra.mxu0 0
      %6162 = vmatpush.bf16.msra.mxu0 %v6105
      %6163 = vmatpush.bf16.msra.mxu0 %v6104
      %6164 = vmatpush.bf16.msra.mxu0 %v6103
      %6165 = vmatpush.bf16.msra.mxu0 %v6102
      %6166 = vmatmul.bf16.gmra.mxu0 %v6111
      %v6167 = vpop.f32.mrf.mxu0
      %v6168 = vadd.f32 %v5927, %v6167
      %v6169 = vpop.f32.mrf.mxu0
      %v6170 = vadd.f32 %v5929, %v6169
      %6171 = vmatmul.bf16.gmra.mxu0 %v6114
      %v6172 = vpop.f32.mrf.mxu0
      %v6173 = vadd.f32 %v5932, %v6172
      %v6174 = vpop.f32.mrf.mxu0
      %v6175 = vadd.f32 %v5934, %v6174
      %6176 = vmatmul.bf16.gmra.mxu0 %v6117
      %v6177 = vpop.f32.mrf.mxu0
      %v6178 = vadd.f32 %v5937, %v6177
      %v6179 = vpop.f32.mrf.mxu0
      %v6180 = vadd.f32 %v5939, %v6179
      %6181 = vmatmul.bf16.gmra.mxu0 %v6120
      %v6182 = vpop.f32.mrf.mxu0
      %v6183 = vadd.f32 %v5942, %v6182
      %v6184 = vpop.f32.mrf.mxu0
      %v6185 = vadd.f32 %v5944, %v6184
      %6186 = vmatmul.bf16.gmra.mxu0 %v6123
      %v6187 = vpop.f32.mrf.mxu0
      %v6188 = vadd.f32 %v5947, %v6187
      %v6189 = vpop.f32.mrf.mxu0
      %v6190 = vadd.f32 %v5949, %v6189
      %6191 = vmatmul.bf16.gmra.mxu0 %v6126
      %v6192 = vpop.f32.mrf.mxu0
      %v6193 = vadd.f32 %v5952, %v6192
      %v6194 = vpop.f32.mrf.mxu0
      %v6195 = vadd.f32 %v5954, %v6194
      %6196 = vmatmul.bf16.gmra.mxu0 %v6129
      %v6197 = vpop.f32.mrf.mxu0
      %v6198 = vadd.f32 %v5957, %v6197
      %v6199 = vpop.f32.mrf.mxu0
      %v6200 = vadd.f32 %v5959, %v6199
      %6201 = vmatmul.bf16.gmra.mxu0 %v6132
      %v6202 = vpop.f32.mrf.mxu0
      %v6203 = vadd.f32 %v5962, %v6202
      %v6204 = vpop.f32.mrf.mxu0
      %v6205 = vadd.f32 %v5964, %v6204
      %6206 = vmatmul.bf16.gmra.mxu0 %v6135
      %v6207 = vpop.f32.mrf.mxu0
      %v6208 = vadd.f32 %v5967, %v6207
      %v6209 = vpop.f32.mrf.mxu0
      %v6210 = vadd.f32 %v5969, %v6209
      %6211 = vmatmul.bf16.gmra.mxu0 %v6138
      %v6212 = vpop.f32.mrf.mxu0
      %v6213 = vadd.f32 %v5972, %v6212
      %v6214 = vpop.f32.mrf.mxu0
      %v6215 = vadd.f32 %v5974, %v6214
      %6216 = vmatmul.bf16.gmra.mxu0 %v6141
      %v6217 = vpop.f32.mrf.mxu0
      %v6218 = vadd.f32 %v5977, %v6217
      %v6219 = vpop.f32.mrf.mxu0
      %v6220 = vadd.f32 %v5979, %v6219
      %6221 = vmatmul.bf16.gmra.mxu0 %v6144
      %v6222 = vpop.f32.mrf.mxu0
      %v6223 = vadd.f32 %v5982, %v6222
      %v6224 = vpop.f32.mrf.mxu0
      %v6225 = vadd.f32 %v5984, %v6224
      %6226 = vmatmul.bf16.gmra.mxu0 %v6147
      %v6227 = vpop.f32.mrf.mxu0
      %v6228 = vadd.f32 %v5987, %v6227
      %v6229 = vpop.f32.mrf.mxu0
      %v6230 = vadd.f32 %v5989, %v6229
      %6231 = vmatmul.bf16.gmra.mxu0 %v6150
      %v6232 = vpop.f32.mrf.mxu0
      %v6233 = vadd.f32 %v5992, %v6232
      %v6234 = vpop.f32.mrf.mxu0
      %v6235 = vadd.f32 %v5994, %v6234
      %6236 = vmatmul.bf16.gmra.mxu0 %v6153
      %v6237 = vpop.f32.mrf.mxu0
      %v6238 = vadd.f32 %v5997, %v6237
      %v6239 = vpop.f32.mrf.mxu0
      %v6240 = vadd.f32 %v5999, %v6239
      %6241 = vmatmul.bf16.gmra.mxu0 %v6156
      %v6242 = vpop.f32.mrf.mxu0
      %v6243 = vadd.f32 %v6002, %v6242
      %v6244 = vpop.f32.mrf.mxu0
      %v6245 = vadd.f32 %v6004, %v6244
      %6246 = vdwg.mxu0
      %v6247 = vld [vmem:[#allocation3] sm:$0xe]
      %v6248 = vld [vmem:[#allocation3 + $0xc] sm:$0xe]
      %v6249 = vld [vmem:[#allocation3 + $0x18] sm:$0xe]
      %v6250 = vld [vmem:[#allocation3 + $0x24] sm:$0xe]
      %v6251 = vld [vmem:[#allocation3 + $0x30] sm:$0xe]
      %v6252 = vld [vmem:[#allocation3 + $0x3c] sm:$0xe]
      %v6253 = vld [vmem:[#allocation3 + $0x48] sm:$0xe]
      %v6254 = vld [vmem:[#allocation3 + $0x54] sm:$0xe]
      %v6255 = vld [vmem:[#allocation3 + $0x60] sm:$0xe]
      %v6256 = vld [vmem:[#allocation3 + $0x6c] sm:$0xe]
      %v6257 = vld [vmem:[#allocation3 + $0x78] sm:$0xe]
      %v6258 = vld [vmem:[#allocation3 + $0x84] sm:$0xe]
      %v6259 = vld [vmem:[#allocation3 + $0x90] sm:$0xe]
      %v6260 = vld [vmem:[#allocation3 + $0x9c] sm:$0xe]
      %v6261 = vld [vmem:[#allocation3 + $0xa8] sm:$0xe]
      %v6262 = vld [vmem:[#allocation3 + $0xb4] sm:$0xe]
      %v6295 = vrot.slane %v6247, 5
      %v6296 = vrot.slane %v6295, 4
      %v6297 = vrot.slane %v5348, 5
      %v6298 = vsel %vm1770, %v6296, %v6297
      %v6299 = vrot.slane %v6297, 4
      %v6300 = vrot.slane %v5387, 5
      %v6301 = vsel %vm1770, %v6299, %v6300
      %v6302 = vrot.slane %v6248, 5
      %v6303 = vrot.slane %v6302, 4
      %v6304 = vrot.slane %v5350, 5
      %v6305 = vsel %vm1770, %v6303, %v6304
      %v6306 = vrot.slane %v6304, 4
      %v6307 = vrot.slane %v5388, 5
      %v6308 = vsel %vm1770, %v6306, %v6307
      %v6309 = vrot.slane %v6249, 5
      %v6310 = vrot.slane %v6309, 4
      %v6311 = vrot.slane %v5352, 5
      %v6312 = vsel %vm1770, %v6310, %v6311
      %v6313 = vrot.slane %v6311, 4
      %v6314 = vrot.slane %v5389, 5
      %v6315 = vsel %vm1770, %v6313, %v6314
      %v6316 = vrot.slane %v6250, 5
      %v6317 = vrot.slane %v6316, 4
      %v6318 = vrot.slane %v5354, 5
      %v6319 = vsel %vm1770, %v6317, %v6318
      %v6320 = vrot.slane %v6318, 4
      %v6321 = vrot.slane %v5390, 5
      %v6322 = vsel %vm1770, %v6320, %v6321
      %v6323 = vrot.slane %v6251, 5
      %v6324 = vrot.slane %v6323, 4
      %v6325 = vrot.slane %v5356, 5
      %v6326 = vsel %vm1770, %v6324, %v6325
      %v6327 = vrot.slane %v6325, 4
      %v6328 = vrot.slane %v5391, 5
      %v6329 = vsel %vm1770, %v6327, %v6328
      %v6330 = vrot.slane %v6252, 5
      %v6331 = vrot.slane %v6330, 4
      %v6332 = vrot.slane %v5358, 5
      %v6333 = vsel %vm1770, %v6331, %v6332
      %v6334 = vrot.slane %v6332, 4
      %v6335 = vrot.slane %v5392, 5
      %v6336 = vsel %vm1770, %v6334, %v6335
      %v6337 = vrot.slane %v6253, 5
      %v6338 = vrot.slane %v6337, 4
      %v6339 = vrot.slane %v5360, 5
      %v6340 = vsel %vm1770, %v6338, %v6339
      %v6341 = vrot.slane %v6339, 4
      %v6342 = vrot.slane %v5393, 5
      %v6343 = vsel %vm1770, %v6341, %v6342
      %v6344 = vrot.slane %v6254, 5
      %v6345 = vrot.slane %v6344, 4
      %v6346 = vrot.slane %v5362, 5
      %v6347 = vsel %vm1770, %v6345, %v6346
      %v6348 = vrot.slane %v6346, 4
      %v6349 = vrot.slane %v5394, 5
      %v6350 = vsel %vm1770, %v6348, %v6349
      %v6351 = vrot.slane %v6255, 5
      %v6352 = vrot.slane %v6351, 4
      %v6353 = vrot.slane %v5364, 5
      %v6354 = vsel %vm1770, %v6352, %v6353
      %v6355 = vrot.slane %v6353, 4
      %v6356 = vrot.slane %v5395, 5
      %v6357 = vsel %vm1770, %v6355, %v6356
      %v6358 = vrot.slane %v6256, 5
      %v6359 = vrot.slane %v6358, 4
      %v6360 = vrot.slane %v5366, 5
      %v6361 = vsel %vm1770, %v6359, %v6360
      %v6362 = vrot.slane %v6360, 4
      %v6363 = vrot.slane %v5396, 5
      %v6364 = vsel %vm1770, %v6362, %v6363
      %v6365 = vrot.slane %v6257, 5
      %v6366 = vrot.slane %v6365, 4
      %v6367 = vrot.slane %v5368, 5
      %v6368 = vsel %vm1770, %v6366, %v6367
      %v6369 = vrot.slane %v6367, 4
      %v6370 = vrot.slane %v5397, 5
      %v6371 = vsel %vm1770, %v6369, %v6370
      %v6372 = vrot.slane %v6258, 5
      %v6373 = vrot.slane %v6372, 4
      %v6374 = vrot.slane %v5370, 5
      %v6375 = vsel %vm1770, %v6373, %v6374
      %v6376 = vrot.slane %v6374, 4
      %v6377 = vrot.slane %v5398, 5
      %v6378 = vsel %vm1770, %v6376, %v6377
      %v6379 = vrot.slane %v6259, 5
      %v6380 = vrot.slane %v6379, 4
      %v6381 = vrot.slane %v5372, 5
      %v6382 = vsel %vm1770, %v6380, %v6381
      %v6383 = vrot.slane %v6381, 4
      %v6384 = vrot.slane %v5399, 5
      %v6385 = vsel %vm1770, %v6383, %v6384
      %v6386 = vrot.slane %v6260, 5
      %v6387 = vrot.slane %v6386, 4
      %v6388 = vrot.slane %v5374, 5
      %v6389 = vsel %vm1770, %v6387, %v6388
      %v6390 = vrot.slane %v6388, 4
      %v6391 = vrot.slane %v5400, 5
      %v6392 = vsel %vm1770, %v6390, %v6391
      %v6393 = vrot.slane %v6261, 5
      %v6394 = vrot.slane %v6393, 4
      %v6395 = vrot.slane %v5376, 5
      %v6396 = vsel %vm1770, %v6394, %v6395
      %v6397 = vrot.slane %v6395, 4
      %v6398 = vrot.slane %v5401, 5
      %v6399 = vsel %vm1770, %v6397, %v6398
      %v6400 = vrot.slane %v6262, 5
      %v6401 = vrot.slane %v6400, 4
      %v6402 = vrot.slane %v5378, 5
      %v6403 = vsel %vm1770, %v6401, %v6402
      %v6404 = vrot.slane %v6402, 4
      %v6405 = vrot.slane %v5402, 5
      %v6406 = vsel %vm1770, %v6404, %v6405
      %s6407 = scalar_lea.vmem %s3, 64
      %v6408 = vld [vmem:[%s6407] sm:$0xf]
      %v6409 = vld [vmem:[%s6407 + $0x4] sm:$0xf]
      %v6410 = vld [vmem:[%s6407 + $0x8] sm:$0xf]
      %v6411 = vld [vmem:[%s6407 + $0xc] sm:$0xf]
      %v6412 = vld [vmem:[%s6407 + $0x10] sm:$0xf]
      %v6413 = vld [vmem:[%s6407 + $0x14] sm:$0xf]
      %v6414 = vld [vmem:[%s6407 + $0x18] sm:$0xf]
      %v6415 = vld [vmem:[%s6407 + $0x1c] sm:$0xf]
      %v6416 = vunpack.c.l.b16 %v6298
      %v6417 = vunpack.c.l.b16 %v6301
      %v6418 = vunpack.c.l.b16 %v6305
      %v6419 = vunpack.c.l.b16 %v6308
      %v6420 = vunpack.c.l.b16 %v6312
      %v6421 = vunpack.c.l.b16 %v6315
      %v6422 = vunpack.c.l.b16 %v6319
      %v6423 = vunpack.c.l.b16 %v6322
      %v6424 = vunpack.c.l.b16 %v6326
      %v6425 = vunpack.c.l.b16 %v6329
      %v6426 = vunpack.c.l.b16 %v6333
      %v6427 = vunpack.c.l.b16 %v6336
      %v6428 = vunpack.c.l.b16 %v6340
      %v6429 = vunpack.c.l.b16 %v6343
      %v6430 = vunpack.c.l.b16 %v6347
      %v6431 = vunpack.c.l.b16 %v6350
      %v6432 = vunpack.c.l.b16 %v6354
      %v6433 = vunpack.c.l.b16 %v6357
      %v6434 = vunpack.c.l.b16 %v6361
      %v6435 = vunpack.c.l.b16 %v6364
      %v6436 = vunpack.c.l.b16 %v6368
      %v6437 = vunpack.c.l.b16 %v6371
      %v6438 = vunpack.c.l.b16 %v6375
      %v6439 = vunpack.c.l.b16 %v6378
      %v6440 = vunpack.c.l.b16 %v6382
      %v6441 = vunpack.c.l.b16 %v6385
      %v6442 = vunpack.c.l.b16 %v6389
      %v6443 = vunpack.c.l.b16 %v6392
      %v6444 = vunpack.c.l.b16 %v6396
      %v6445 = vunpack.c.l.b16 %v6399
      %v6446 = vunpack.c.l.b16 %v6403
      %v6447 = vunpack.c.l.b16 %v6406
      %v6448 = vpack.c.b16 %v6417, %v6416
      %v6449 = vpack.c.b16 %v6419, %v6418
      %v6450 = vpack.c.b16 %v6421, %v6420
      %v6451 = vpack.c.b16 %v6423, %v6422
      %v6452 = vpack.c.b16 %v6425, %v6424
      %v6453 = vpack.c.b16 %v6427, %v6426
      %v6454 = vpack.c.b16 %v6429, %v6428
      %v6455 = vpack.c.b16 %v6431, %v6430
      %v6456 = vpack.c.b16 %v6433, %v6432
      %v6457 = vpack.c.b16 %v6435, %v6434
      %v6458 = vpack.c.b16 %v6437, %v6436
      %v6459 = vpack.c.b16 %v6439, %v6438
      %v6460 = vpack.c.b16 %v6441, %v6440
      %v6461 = vpack.c.b16 %v6443, %v6442
      %v6462 = vpack.c.b16 %v6445, %v6444
      %v6463 = vpack.c.b16 %v6447, %v6446
      %v6472 = vunpack.c.l.b16 %v6408
      %v6473 = vunpack.c.l.b16 %v6409
      %v6474 = vunpack.c.l.b16 %v6410
      %v6475 = vunpack.c.l.b16 %v6411
      %v6476 = vunpack.c.l.b16 %v6412
      %v6477 = vunpack.c.l.b16 %v6413
      %v6478 = vunpack.c.l.b16 %v6414
      %v6479 = vunpack.c.l.b16 %v6415
      %v6480 = vpack.c.b16 %v6473, %v6472
      %v6481 = vpack.c.b16 %v6475, %v6474
      %v6482 = vpack.c.b16 %v6477, %v6476
      %v6483 = vpack.c.b16 %v6479, %v6478
      %v6489 = vsel %vm5868, %v6448, 0
      %v6492 = vsel %vm5868, %v6449, 0
      %v6495 = vsel %vm5868, %v6450, 0
      %v6498 = vsel %vm5868, %v6451, 0
      %v6501 = vsel %vm5868, %v6452, 0
      %v6504 = vsel %vm5868, %v6453, 0
      %v6507 = vsel %vm5868, %v6454, 0
      %v6510 = vsel %vm5868, %v6455, 0
      %v6513 = vsel %vm5868, %v6456, 0
      %v6516 = vsel %vm5868, %v6457, 0
      %v6519 = vsel %vm5868, %v6458, 0
      %v6522 = vsel %vm5868, %v6459, 0
      %v6525 = vsel %vm5868, %v6460, 0
      %v6528 = vsel %vm5868, %v6461, 0
      %v6531 = vsel %vm5868, %v6462, 0
      %v6534 = vsel %vm5868, %v6463, 0
      %6536 = vmatpush.bf16.msra.mxu0 0
      %6537 = vmatpush.bf16.msra.mxu0 0
      %6538 = vmatpush.bf16.msra.mxu0 0
      %6539 = vmatpush.bf16.msra.mxu0 0
      %6540 = vmatpush.bf16.msra.mxu0 %v6483
      %6541 = vmatpush.bf16.msra.mxu0 %v6482
      %6542 = vmatpush.bf16.msra.mxu0 %v6481
      %6543 = vmatpush.bf16.msra.mxu0 %v6480
      %6544 = vmatmul.bf16.gmra.mxu0 %v6489
      %v6545 = vpop.f32.mrf.mxu0
      %v6546 = vadd.f32 0.0, %v6545
      %v6547 = vpop.f32.mrf.mxu0
      %v6548 = vadd.f32 0.0, %v6547
      %6549 = vmatmul.bf16.gmra.mxu0 %v6492
      %v6550 = vpop.f32.mrf.mxu0
      %v6551 = vadd.f32 0.0, %v6550
      %v6552 = vpop.f32.mrf.mxu0
      %v6553 = vadd.f32 0.0, %v6552
      %6554 = vmatmul.bf16.gmra.mxu0 %v6495
      %v6555 = vpop.f32.mrf.mxu0
      %v6556 = vadd.f32 0.0, %v6555
      %v6557 = vpop.f32.mrf.mxu0
      %v6558 = vadd.f32 0.0, %v6557
      %6559 = vmatmul.bf16.gmra.mxu0 %v6498
      %v6560 = vpop.f32.mrf.mxu0
      %v6561 = vadd.f32 0.0, %v6560
      %v6562 = vpop.f32.mrf.mxu0
      %v6563 = vadd.f32 0.0, %v6562
      %6564 = vmatmul.bf16.gmra.mxu0 %v6501
      %v6565 = vpop.f32.mrf.mxu0
      %v6566 = vadd.f32 0.0, %v6565
      %v6567 = vpop.f32.mrf.mxu0
      %v6568 = vadd.f32 0.0, %v6567
      %6569 = vmatmul.bf16.gmra.mxu0 %v6504
      %v6570 = vpop.f32.mrf.mxu0
      %v6571 = vadd.f32 0.0, %v6570
      %v6572 = vpop.f32.mrf.mxu0
      %v6573 = vadd.f32 0.0, %v6572
      %6574 = vmatmul.bf16.gmra.mxu0 %v6507
      %v6575 = vpop.f32.mrf.mxu0
      %v6576 = vadd.f32 0.0, %v6575
      %v6577 = vpop.f32.mrf.mxu0
      %v6578 = vadd.f32 0.0, %v6577
      %6579 = vmatmul.bf16.gmra.mxu0 %v6510
      %v6580 = vpop.f32.mrf.mxu0
      %v6581 = vadd.f32 0.0, %v6580
      %v6582 = vpop.f32.mrf.mxu0
      %v6583 = vadd.f32 0.0, %v6582
      %6584 = vmatmul.bf16.gmra.mxu0 %v6513
      %v6585 = vpop.f32.mrf.mxu0
      %v6586 = vadd.f32 0.0, %v6585
      %v6587 = vpop.f32.mrf.mxu0
      %v6588 = vadd.f32 0.0, %v6587
      %6589 = vmatmul.bf16.gmra.mxu0 %v6516
      %v6590 = vpop.f32.mrf.mxu0
      %v6591 = vadd.f32 0.0, %v6590
      %v6592 = vpop.f32.mrf.mxu0
      %v6593 = vadd.f32 0.0, %v6592
      %6594 = vmatmul.bf16.gmra.mxu0 %v6519
      %v6595 = vpop.f32.mrf.mxu0
      %v6596 = vadd.f32 0.0, %v6595
      %v6597 = vpop.f32.mrf.mxu0
      %v6598 = vadd.f32 0.0, %v6597
      %6599 = vmatmul.bf16.gmra.mxu0 %v6522
      %v6600 = vpop.f32.mrf.mxu0
      %v6601 = vadd.f32 0.0, %v6600
      %v6602 = vpop.f32.mrf.mxu0
      %v6603 = vadd.f32 0.0, %v6602
      %6604 = vmatmul.bf16.gmra.mxu0 %v6525
      %v6605 = vpop.f32.mrf.mxu0
      %v6606 = vadd.f32 0.0, %v6605
      %v6607 = vpop.f32.mrf.mxu0
      %v6608 = vadd.f32 0.0, %v6607
      %6609 = vmatmul.bf16.gmra.mxu0 %v6528
      %v6610 = vpop.f32.mrf.mxu0
      %v6611 = vadd.f32 0.0, %v6610
      %v6612 = vpop.f32.mrf.mxu0
      %v6613 = vadd.f32 0.0, %v6612
      %6614 = vmatmul.bf16.gmra.mxu0 %v6531
      %v6615 = vpop.f32.mrf.mxu0
      %v6616 = vadd.f32 0.0, %v6615
      %v6617 = vpop.f32.mrf.mxu0
      %v6618 = vadd.f32 0.0, %v6617
      %6619 = vmatmul.bf16.gmra.mxu0 %v6534
      %v6620 = vpop.f32.mrf.mxu0
      %v6621 = vadd.f32 0.0, %v6620
      %v6622 = vpop.f32.mrf.mxu0
      %v6623 = vadd.f32 0.0, %v6622
      %6624 = vdwg.mxu0
      %v6625 = vadd.f32 %v6168, %v6546
      %v6626 = vadd.f32 %v6170, %v6548
      %v6627 = vadd.f32 %v6173, %v6551
      %v6628 = vadd.f32 %v6175, %v6553
      %v6629 = vadd.f32 %v6178, %v6556
      %v6630 = vadd.f32 %v6180, %v6558
      %v6631 = vadd.f32 %v6183, %v6561
      %v6632 = vadd.f32 %v6185, %v6563
      %v6633 = vadd.f32 %v6188, %v6566
      %v6634 = vadd.f32 %v6190, %v6568
      %v6635 = vadd.f32 %v6193, %v6571
      %v6636 = vadd.f32 %v6195, %v6573
      %v6637 = vadd.f32 %v6198, %v6576
      %v6638 = vadd.f32 %v6200, %v6578
      %v6639 = vadd.f32 %v6203, %v6581
      %v6640 = vadd.f32 %v6205, %v6583
      %v6641 = vadd.f32 %v6208, %v6586
      %v6642 = vadd.f32 %v6210, %v6588
      %v6643 = vadd.f32 %v6213, %v6591
      %v6644 = vadd.f32 %v6215, %v6593
      %v6645 = vadd.f32 %v6218, %v6596
      %v6646 = vadd.f32 %v6220, %v6598
      %v6647 = vadd.f32 %v6223, %v6601
      %v6648 = vadd.f32 %v6225, %v6603
      %v6649 = vadd.f32 %v6228, %v6606
      %v6650 = vadd.f32 %v6230, %v6608
      %v6651 = vadd.f32 %v6233, %v6611
      %v6652 = vadd.f32 %v6235, %v6613
      %v6653 = vadd.f32 %v6238, %v6616
      %v6654 = vadd.f32 %v6240, %v6618
      %v6655 = vadd.f32 %v6243, %v6621
      %v6656 = vadd.f32 %v6245, %v6623
      %v6657 = vld [vmem:[%s5230] sm:$0xf]
      %v6658 = vld [vmem:[%s5230 + $0x4] sm:$0xf]
      %v6659 = vld [vmem:[%s5230 + $0xc] sm:$0xf]
      %v6660 = vld [vmem:[%s5230 + $0x10] sm:$0xf]
      %v6661 = vld [vmem:[%s5230 + $0x18] sm:$0xf]
      %v6662 = vld [vmem:[%s5230 + $0x1c] sm:$0xf]
      %v6663 = vld [vmem:[%s5230 + $0x24] sm:$0xf]
      %v6664 = vld [vmem:[%s5230 + $0x28] sm:$0xf]
      %v6665 = vld [vmem:[%s5230 + $0x30] sm:$0xf]
      %v6666 = vld [vmem:[%s5230 + $0x34] sm:$0xf]
      %v6667 = vld [vmem:[%s5230 + $0x3c] sm:$0xf]
      %v6668 = vld [vmem:[%s5230 + $0x40] sm:$0xf]
      %v6669 = vld [vmem:[%s5230 + $0x48] sm:$0xf]
      %v6670 = vld [vmem:[%s5230 + $0x4c] sm:$0xf]
      %v6671 = vld [vmem:[%s5230 + $0x54] sm:$0xf]
      %v6672 = vld [vmem:[%s5230 + $0x58] sm:$0xf]
      %v6673 = vld [vmem:[%s5230 + $0x60] sm:$0xf]
      %v6674 = vld [vmem:[%s5230 + $0x64] sm:$0xf]
      %v6675 = vld [vmem:[%s5230 + $0x6c] sm:$0xf]
      %v6676 = vld [vmem:[%s5230 + $0x70] sm:$0xf]
      %v6677 = vld [vmem:[%s5230 + $0x78] sm:$0xf]
      %v6678 = vld [vmem:[%s5230 + $0x7c] sm:$0xf]
      %v6679 = vld [vmem:[%s5230 + $0x84] sm:$0xf]
      %v6680 = vld [vmem:[%s5230 + $0x88] sm:$0xf]
      %v6681 = vld [vmem:[%s5230 + $0x90] sm:$0xf]
      %v6682 = vld [vmem:[%s5230 + $0x94] sm:$0xf]
      %v6683 = vld [vmem:[%s5230 + $0x9c] sm:$0xf]
      %v6684 = vld [vmem:[%s5230 + $0xa0] sm:$0xf]
      %v6685 = vld [vmem:[%s5230 + $0xa8] sm:$0xf]
      %v6686 = vld [vmem:[%s5230 + $0xac] sm:$0xf]
      %v6687 = vld [vmem:[%s5230 + $0xb4] sm:$0xf]
      %v6688 = vld [vmem:[%s5230 + $0xb8] sm:$0xf]
      %s6689 = scalar_lea.vmem %s3, 96
      %v6690 = vld [vmem:[%s6689] sm:$0xf]
      %v6691 = vld [vmem:[%s6689 + $0x4] sm:$0xf]
      %v6692 = vld [vmem:[%s6689 + $0x8] sm:$0xf]
      %v6693 = vld [vmem:[%s6689 + $0xc] sm:$0xf]
      %v6694 = vld [vmem:[%s6689 + $0x10] sm:$0xf]
      %v6695 = vld [vmem:[%s6689 + $0x14] sm:$0xf]
      %v6696 = vld [vmem:[%s6689 + $0x18] sm:$0xf]
      %v6697 = vld [vmem:[%s6689 + $0x1c] sm:$0xf]
      %v6730 = vunpack.c.l.b16 %v6657
      %v6731 = vunpack.c.l.b16 %v6658
      %v6732 = vunpack.c.l.b16 %v6659
      %v6733 = vunpack.c.l.b16 %v6660
      %v6734 = vunpack.c.l.b16 %v6661
      %v6735 = vunpack.c.l.b16 %v6662
      %v6736 = vunpack.c.l.b16 %v6663
      %v6737 = vunpack.c.l.b16 %v6664
      %v6738 = vunpack.c.l.b16 %v6665
      %v6739 = vunpack.c.l.b16 %v6666
      %v6740 = vunpack.c.l.b16 %v6667
      %v6741 = vunpack.c.l.b16 %v6668
      %v6742 = vunpack.c.l.b16 %v6669
      %v6743 = vunpack.c.l.b16 %v6670
      %v6744 = vunpack.c.l.b16 %v6671
      %v6745 = vunpack.c.l.b16 %v6672
      %v6746 = vunpack.c.l.b16 %v6673
      %v6747 = vunpack.c.l.b16 %v6674
      %v6748 = vunpack.c.l.b16 %v6675
      %v6749 = vunpack.c.l.b16 %v6676
      %v6750 = vunpack.c.l.b16 %v6677
      %v6751 = vunpack.c.l.b16 %v6678
      %v6752 = vunpack.c.l.b16 %v6679
      %v6753 = vunpack.c.l.b16 %v6680
      %v6754 = vunpack.c.l.b16 %v6681
      %v6755 = vunpack.c.l.b16 %v6682
      %v6756 = vunpack.c.l.b16 %v6683
      %v6757 = vunpack.c.l.b16 %v6684
      %v6758 = vunpack.c.l.b16 %v6685
      %v6759 = vunpack.c.l.b16 %v6686
      %v6760 = vunpack.c.l.b16 %v6687
      %v6761 = vunpack.c.l.b16 %v6688
      %v6762 = vpack.c.b16 %v6731, %v6730
      %v6763 = vpack.c.b16 %v6733, %v6732
      %v6764 = vpack.c.b16 %v6735, %v6734
      %v6765 = vpack.c.b16 %v6737, %v6736
      %v6766 = vpack.c.b16 %v6739, %v6738
      %v6767 = vpack.c.b16 %v6741, %v6740
      %v6768 = vpack.c.b16 %v6743, %v6742
      %v6769 = vpack.c.b16 %v6745, %v6744
      %v6770 = vpack.c.b16 %v6747, %v6746
      %v6771 = vpack.c.b16 %v6749, %v6748
      %v6772 = vpack.c.b16 %v6751, %v6750
      %v6773 = vpack.c.b16 %v6753, %v6752
      %v6774 = vpack.c.b16 %v6755, %v6754
      %v6775 = vpack.c.b16 %v6757, %v6756
      %v6776 = vpack.c.b16 %v6759, %v6758
      %v6777 = vpack.c.b16 %v6761, %v6760
      %v6786 = vunpack.c.l.b16 %v6690
      %v6787 = vunpack.c.l.b16 %v6691
      %v6788 = vunpack.c.l.b16 %v6692
      %v6789 = vunpack.c.l.b16 %v6693
      %v6790 = vunpack.c.l.b16 %v6694
      %v6791 = vunpack.c.l.b16 %v6695
      %v6792 = vunpack.c.l.b16 %v6696
      %v6793 = vunpack.c.l.b16 %v6697
      %v6794 = vpack.c.b16 %v6787, %v6786
      %v6795 = vpack.c.b16 %v6789, %v6788
      %v6796 = vpack.c.b16 %v6791, %v6790
      %v6797 = vpack.c.b16 %v6793, %v6792
      %v6803 = vsel %vm5868, %v6762, 0
      %v6806 = vsel %vm5868, %v6763, 0
      %v6809 = vsel %vm5868, %v6764, 0
      %v6812 = vsel %vm5868, %v6765, 0
      %v6815 = vsel %vm5868, %v6766, 0
      %v6818 = vsel %vm5868, %v6767, 0
      %v6821 = vsel %vm5868, %v6768, 0
      %v6824 = vsel %vm5868, %v6769, 0
      %v6827 = vsel %vm5868, %v6770, 0
      %v6830 = vsel %vm5868, %v6771, 0
      %v6833 = vsel %vm5868, %v6772, 0
      %v6836 = vsel %vm5868, %v6773, 0
      %v6839 = vsel %vm5868, %v6774, 0
      %v6842 = vsel %vm5868, %v6775, 0
      %v6845 = vsel %vm5868, %v6776, 0
      %v6848 = vsel %vm5868, %v6777, 0
      %6850 = vmatpush.bf16.msra.mxu0 0
      %6851 = vmatpush.bf16.msra.mxu0 0
      %6852 = vmatpush.bf16.msra.mxu0 0
      %6853 = vmatpush.bf16.msra.mxu0 0
      %6854 = vmatpush.bf16.msra.mxu0 %v6797
      %6855 = vmatpush.bf16.msra.mxu0 %v6796
      %6856 = vmatpush.bf16.msra.mxu0 %v6795
      %6857 = vmatpush.bf16.msra.mxu0 %v6794
      %6858 = vmatmul.bf16.gmra.mxu0 %v6803
      %v6859 = vpop.f32.mrf.mxu0
      %v6860 = vadd.f32 0.0, %v6859
      %v6861 = vpop.f32.mrf.mxu0
      %v6862 = vadd.f32 0.0, %v6861
      %6863 = vmatmul.bf16.gmra.mxu0 %v6806
      %v6864 = vpop.f32.mrf.mxu0
      %v6865 = vadd.f32 0.0, %v6864
      %v6866 = vpop.f32.mrf.mxu0
      %v6867 = vadd.f32 0.0, %v6866
      %6868 = vmatmul.bf16.gmra.mxu0 %v6809
      %v6869 = vpop.f32.mrf.mxu0
      %v6870 = vadd.f32 0.0, %v6869
      %v6871 = vpop.f32.mrf.mxu0
      %v6872 = vadd.f32 0.0, %v6871
      %6873 = vmatmul.bf16.gmra.mxu0 %v6812
      %v6874 = vpop.f32.mrf.mxu0
      %v6875 = vadd.f32 0.0, %v6874
      %v6876 = vpop.f32.mrf.mxu0
      %v6877 = vadd.f32 0.0, %v6876
      %6878 = vmatmul.bf16.gmra.mxu0 %v6815
      %v6879 = vpop.f32.mrf.mxu0
      %v6880 = vadd.f32 0.0, %v6879
      %v6881 = vpop.f32.mrf.mxu0
      %v6882 = vadd.f32 0.0, %v6881
      %6883 = vmatmul.bf16.gmra.mxu0 %v6818
      %v6884 = vpop.f32.mrf.mxu0
      %v6885 = vadd.f32 0.0, %v6884
      %v6886 = vpop.f32.mrf.mxu0
      %v6887 = vadd.f32 0.0, %v6886
      %6888 = vmatmul.bf16.gmra.mxu0 %v6821
      %v6889 = vpop.f32.mrf.mxu0
      %v6890 = vadd.f32 0.0, %v6889
      %v6891 = vpop.f32.mrf.mxu0
      %v6892 = vadd.f32 0.0, %v6891
      %6893 = vmatmul.bf16.gmra.mxu0 %v6824
      %v6894 = vpop.f32.mrf.mxu0
      %v6895 = vadd.f32 0.0, %v6894
      %v6896 = vpop.f32.mrf.mxu0
      %v6897 = vadd.f32 0.0, %v6896
      %6898 = vmatmul.bf16.gmra.mxu0 %v6827
      %v6899 = vpop.f32.mrf.mxu0
      %v6900 = vadd.f32 0.0, %v6899
      %v6901 = vpop.f32.mrf.mxu0
      %v6902 = vadd.f32 0.0, %v6901
      %6903 = vmatmul.bf16.gmra.mxu0 %v6830
      %v6904 = vpop.f32.mrf.mxu0
      %v6905 = vadd.f32 0.0, %v6904
      %v6906 = vpop.f32.mrf.mxu0
      %v6907 = vadd.f32 0.0, %v6906
      %6908 = vmatmul.bf16.gmra.mxu0 %v6833
      %v6909 = vpop.f32.mrf.mxu0
      %v6910 = vadd.f32 0.0, %v6909
      %v6911 = vpop.f32.mrf.mxu0
      %v6912 = vadd.f32 0.0, %v6911
      %6913 = vmatmul.bf16.gmra.mxu0 %v6836
      %v6914 = vpop.f32.mrf.mxu0
      %v6915 = vadd.f32 0.0, %v6914
      %v6916 = vpop.f32.mrf.mxu0
      %v6917 = vadd.f32 0.0, %v6916
      %6918 = vmatmul.bf16.gmra.mxu0 %v6839
      %v6919 = vpop.f32.mrf.mxu0
      %v6920 = vadd.f32 0.0, %v6919
      %v6921 = vpop.f32.mrf.mxu0
      %v6922 = vadd.f32 0.0, %v6921
      %6923 = vmatmul.bf16.gmra.mxu0 %v6842
      %v6924 = vpop.f32.mrf.mxu0
      %v6925 = vadd.f32 0.0, %v6924
      %v6926 = vpop.f32.mrf.mxu0
      %v6927 = vadd.f32 0.0, %v6926
      %6928 = vmatmul.bf16.gmra.mxu0 %v6845
      %v6929 = vpop.f32.mrf.mxu0
      %v6930 = vadd.f32 0.0, %v6929
      %v6931 = vpop.f32.mrf.mxu0
      %v6932 = vadd.f32 0.0, %v6931
      %6933 = vmatmul.bf16.gmra.mxu0 %v6848
      %v6934 = vpop.f32.mrf.mxu0
      %v6935 = vadd.f32 0.0, %v6934
      %v6936 = vpop.f32.mrf.mxu0
      %v6937 = vadd.f32 0.0, %v6936
      %6938 = vdwg.mxu0
      %v6939 = vadd.f32 %v6625, %v6860
      %v6940 = vadd.f32 %v6626, %v6862
      %v6941 = vadd.f32 %v6627, %v6865
      %v6942 = vadd.f32 %v6628, %v6867
      %v6943 = vadd.f32 %v6629, %v6870
      %v6944 = vadd.f32 %v6630, %v6872
      %v6945 = vadd.f32 %v6631, %v6875
      %v6946 = vadd.f32 %v6632, %v6877
      %v6947 = vadd.f32 %v6633, %v6880
      %v6948 = vadd.f32 %v6634, %v6882
      %v6949 = vadd.f32 %v6635, %v6885
      %v6950 = vadd.f32 %v6636, %v6887
      %v6951 = vadd.f32 %v6637, %v6890
      %v6952 = vadd.f32 %v6638, %v6892
      %v6953 = vadd.f32 %v6639, %v6895
      %v6954 = vadd.f32 %v6640, %v6897
      %v6955 = vadd.f32 %v6641, %v6900
      %v6956 = vadd.f32 %v6642, %v6902
      %v6957 = vadd.f32 %v6643, %v6905
      %v6958 = vadd.f32 %v6644, %v6907
      %v6959 = vadd.f32 %v6645, %v6910
      %v6960 = vadd.f32 %v6646, %v6912
      %v6961 = vadd.f32 %v6647, %v6915
      %v6962 = vadd.f32 %v6648, %v6917
      %v6963 = vadd.f32 %v6649, %v6920
      %v6964 = vadd.f32 %v6650, %v6922
      %v6965 = vadd.f32 %v6651, %v6925
      %v6966 = vadd.f32 %v6652, %v6927
      %v6967 = vadd.f32 %v6653, %v6930
      %v6968 = vadd.f32 %v6654, %v6932
      %v6969 = vadd.f32 %v6655, %v6935
      %v6970 = vadd.f32 %v6656, %v6937
      %v6971 = vld [vmem:[%s5230] sm:$0xf]
      %v6972 = vld [vmem:[%s5230 + $0x4] sm:$0xf]
      %v6973 = vld [vmem:[%s5230 + $0x8] sm:$0x1]
      %v6974 = vld [vmem:[%s5230 + $0xc] sm:$0xf]
      %v6975 = vld [vmem:[%s5230 + $0x10] sm:$0xf]
      %v6976 = vld [vmem:[%s5230 + $0x14] sm:$0x1]
      %v6977 = vld [vmem:[%s5230 + $0x18] sm:$0xf]
      %v6978 = vld [vmem:[%s5230 + $0x1c] sm:$0xf]
      %v6979 = vld [vmem:[%s5230 + $0x20] sm:$0x1]
      %v6980 = vld [vmem:[%s5230 + $0x24] sm:$0xf]
      %v6981 = vld [vmem:[%s5230 + $0x28] sm:$0xf]
      %v6982 = vld [vmem:[%s5230 + $0x2c] sm:$0x1]
      %v6983 = vld [vmem:[%s5230 + $0x30] sm:$0xf]
      %v6984 = vld [vmem:[%s5230 + $0x34] sm:$0xf]
      %v6985 = vld [vmem:[%s5230 + $0x38] sm:$0x1]
      %v6986 = vld [vmem:[%s5230 + $0x3c] sm:$0xf]
      %v6987 = vld [vmem:[%s5230 + $0x40] sm:$0xf]
      %v6988 = vld [vmem:[%s5230 + $0x44] sm:$0x1]
      %v6989 = vld [vmem:[%s5230 + $0x48] sm:$0xf]
      %v6990 = vld [vmem:[%s5230 + $0x4c] sm:$0xf]
      %v6991 = vld [vmem:[%s5230 + $0x50] sm:$0x1]
      %v6992 = vld [vmem:[%s5230 + $0x54] sm:$0xf]
      %v6993 = vld [vmem:[%s5230 + $0x58] sm:$0xf]
      %v6994 = vld [vmem:[%s5230 + $0x5c] sm:$0x1]
      %v6995 = vld [vmem:[%s5230 + $0x60] sm:$0xf]
      %v6996 = vld [vmem:[%s5230 + $0x64] sm:$0xf]
      %v6997 = vld [vmem:[%s5230 + $0x68] sm:$0x1]
      %v6998 = vld [vmem:[%s5230 + $0x6c] sm:$0xf]
      %v6999 = vld [vmem:[%s5230 + $0x70] sm:$0xf]
      %v7000 = vld [vmem:[%s5230 + $0x74] sm:$0x1]
      %v7001 = vld [vmem:[%s5230 + $0x78] sm:$0xf]
      %v7002 = vld [vmem:[%s5230 + $0x7c] sm:$0xf]
      %v7003 = vld [vmem:[%s5230 + $0x80] sm:$0x1]
      %v7004 = vld [vmem:[%s5230 + $0x84] sm:$0xf]
      %v7005 = vld [vmem:[%s5230 + $0x88] sm:$0xf]
      %v7006 = vld [vmem:[%s5230 + $0x8c] sm:$0x1]
      %v7007 = vld [vmem:[%s5230 + $0x90] sm:$0xf]
      %v7008 = vld [vmem:[%s5230 + $0x94] sm:$0xf]
      %v7009 = vld [vmem:[%s5230 + $0x98] sm:$0x1]
      %v7010 = vld [vmem:[%s5230 + $0x9c] sm:$0xf]
      %v7011 = vld [vmem:[%s5230 + $0xa0] sm:$0xf]
      %v7012 = vld [vmem:[%s5230 + $0xa4] sm:$0x1]
      %v7013 = vld [vmem:[%s5230 + $0xa8] sm:$0xf]
      %v7014 = vld [vmem:[%s5230 + $0xac] sm:$0xf]
      %v7015 = vld [vmem:[%s5230 + $0xb0] sm:$0x1]
      %v7016 = vld [vmem:[%s5230 + $0xb4] sm:$0xf]
      %v7017 = vld [vmem:[%s5230 + $0xb8] sm:$0xf]
      %v7018 = vld [vmem:[%s5230 + $0xbc] sm:$0x1]
      %v7020 = vshrl.u32 %v6971, 16
      %v7022 = vrot.slane %v7020, 4
      %v7023 = vshll.u32 %v6971, 16
      %v7025 = vrot.slane %v7023, 5
      %v7026 = vor.u32 %v7022, %v7025
      %v7027 = vrot.slane %v7026, 4
      %v7029 = vshll.u32 %v6972, 16
      %v7031 = vrot.slane %v7029, 5
      %v7032 = vsel %vm917, %v7027, %v7031
      %v7033 = vshrl.u32 %v6972, 16
      %v7035 = vrot.slane %v7033, 4
      %v7036 = vor.u32 %v7035, %v7031
      %v7037 = vrot.slane %v7036, 4
      %v7039 = vshll.u32 %v6973, 16
      %v7041 = vrot.slane %v7039, 5
      %v7042 = vsel %vm917, %v7037, %v7041
      %v7044 = vshrl.u32 %v6974, 16
      %v7046 = vrot.slane %v7044, 4
      %v7047 = vshll.u32 %v6974, 16
      %v7049 = vrot.slane %v7047, 5
      %v7050 = vor.u32 %v7046, %v7049
      %v7051 = vrot.slane %v7050, 4
      %v7053 = vshll.u32 %v6975, 16
      %v7055 = vrot.slane %v7053, 5
      %v7056 = vsel %vm917, %v7051, %v7055
      %v7057 = vshrl.u32 %v6975, 16
      %v7059 = vrot.slane %v7057, 4
      %v7060 = vor.u32 %v7059, %v7055
      %v7061 = vrot.slane %v7060, 4
      %v7063 = vshll.u32 %v6976, 16
      %v7065 = vrot.slane %v7063, 5
      %v7066 = vsel %vm917, %v7061, %v7065
      %v7068 = vshrl.u32 %v6977, 16
      %v7070 = vrot.slane %v7068, 4
      %v7071 = vshll.u32 %v6977, 16
      %v7073 = vrot.slane %v7071, 5
      %v7074 = vor.u32 %v7070, %v7073
      %v7075 = vrot.slane %v7074, 4
      %v7077 = vshll.u32 %v6978, 16
      %v7079 = vrot.slane %v7077, 5
      %v7080 = vsel %vm917, %v7075, %v7079
      %v7081 = vshrl.u32 %v6978, 16
      %v7083 = vrot.slane %v7081, 4
      %v7084 = vor.u32 %v7083, %v7079
      %v7085 = vrot.slane %v7084, 4
      %v7087 = vshll.u32 %v6979, 16
      %v7089 = vrot.slane %v7087, 5
      %v7090 = vsel %vm917, %v7085, %v7089
      %v7092 = vshrl.u32 %v6980, 16
      %v7094 = vrot.slane %v7092, 4
      %v7095 = vshll.u32 %v6980, 16
      %v7097 = vrot.slane %v7095, 5
      %v7098 = vor.u32 %v7094, %v7097
      %v7099 = vrot.slane %v7098, 4
      %v7101 = vshll.u32 %v6981, 16
      %v7103 = vrot.slane %v7101, 5
      %v7104 = vsel %vm917, %v7099, %v7103
      %v7105 = vshrl.u32 %v6981, 16
      %v7107 = vrot.slane %v7105, 4
      %v7108 = vor.u32 %v7107, %v7103
      %v7109 = vrot.slane %v7108, 4
      %v7111 = vshll.u32 %v6982, 16
      %v7113 = vrot.slane %v7111, 5
      %v7114 = vsel %vm917, %v7109, %v7113
      %v7116 = vshrl.u32 %v6983, 16
      %v7118 = vrot.slane %v7116, 4
      %v7119 = vshll.u32 %v6983, 16
      %v7121 = vrot.slane %v7119, 5
      %v7122 = vor.u32 %v7118, %v7121
      %v7123 = vrot.slane %v7122, 4
      %v7125 = vshll.u32 %v6984, 16
      %v7127 = vrot.slane %v7125, 5
      %v7128 = vsel %vm917, %v7123, %v7127
      %v7129 = vshrl.u32 %v6984, 16
      %v7131 = vrot.slane %v7129, 4
      %v7132 = vor.u32 %v7131, %v7127
      %v7133 = vrot.slane %v7132, 4
      %v7135 = vshll.u32 %v6985, 16
      %v7137 = vrot.slane %v7135, 5
      %v7138 = vsel %vm917, %v7133, %v7137
      %v7140 = vshrl.u32 %v6986, 16
      %v7142 = vrot.slane %v7140, 4
      %v7143 = vshll.u32 %v6986, 16
      %v7145 = vrot.slane %v7143, 5
      %v7146 = vor.u32 %v7142, %v7145
      %v7147 = vrot.slane %v7146, 4
      %v7149 = vshll.u32 %v6987, 16
      %v7151 = vrot.slane %v7149, 5
      %v7152 = vsel %vm917, %v7147, %v7151
      %v7153 = vshrl.u32 %v6987, 16
      %v7155 = vrot.slane %v7153, 4
      %v7156 = vor.u32 %v7155, %v7151
      %v7157 = vrot.slane %v7156, 4
      %v7159 = vshll.u32 %v6988, 16
      %v7161 = vrot.slane %v7159, 5
      %v7162 = vsel %vm917, %v7157, %v7161
      %v7164 = vshrl.u32 %v6989, 16
      %v7166 = vrot.slane %v7164, 4
      %v7167 = vshll.u32 %v6989, 16
      %v7169 = vrot.slane %v7167, 5
      %v7170 = vor.u32 %v7166, %v7169
      %v7171 = vrot.slane %v7170, 4
      %v7173 = vshll.u32 %v6990, 16
      %v7175 = vrot.slane %v7173, 5
      %v7176 = vsel %vm917, %v7171, %v7175
      %v7177 = vshrl.u32 %v6990, 16
      %v7179 = vrot.slane %v7177, 4
      %v7180 = vor.u32 %v7179, %v7175
      %v7181 = vrot.slane %v7180, 4
      %v7183 = vshll.u32 %v6991, 16
      %v7185 = vrot.slane %v7183, 5
      %v7186 = vsel %vm917, %v7181, %v7185
      %v7188 = vshrl.u32 %v6992, 16
      %v7190 = vrot.slane %v7188, 4
      %v7191 = vshll.u32 %v6992, 16
      %v7193 = vrot.slane %v7191, 5
      %v7194 = vor.u32 %v7190, %v7193
      %v7195 = vrot.slane %v7194, 4
      %v7197 = vshll.u32 %v6993, 16
      %v7199 = vrot.slane %v7197, 5
      %v7200 = vsel %vm917, %v7195, %v7199
      %v7201 = vshrl.u32 %v6993, 16
      %v7203 = vrot.slane %v7201, 4
      %v7204 = vor.u32 %v7203, %v7199
      %v7205 = vrot.slane %v7204, 4
      %v7207 = vshll.u32 %v6994, 16
      %v7209 = vrot.slane %v7207, 5
      %v7210 = vsel %vm917, %v7205, %v7209
      %v7212 = vshrl.u32 %v6995, 16
      %v7214 = vrot.slane %v7212, 4
      %v7215 = vshll.u32 %v6995, 16
      %v7217 = vrot.slane %v7215, 5
      %v7218 = vor.u32 %v7214, %v7217
      %v7219 = vrot.slane %v7218, 4
      %v7221 = vshll.u32 %v6996, 16
      %v7223 = vrot.slane %v7221, 5
      %v7224 = vsel %vm917, %v7219, %v7223
      %v7225 = vshrl.u32 %v6996, 16
      %v7227 = vrot.slane %v7225, 4
      %v7228 = vor.u32 %v7227, %v7223
      %v7229 = vrot.slane %v7228, 4
      %v7231 = vshll.u32 %v6997, 16
      %v7233 = vrot.slane %v7231, 5
      %v7234 = vsel %vm917, %v7229, %v7233
      %v7236 = vshrl.u32 %v6998, 16
      %v7238 = vrot.slane %v7236, 4
      %v7239 = vshll.u32 %v6998, 16
      %v7241 = vrot.slane %v7239, 5
      %v7242 = vor.u32 %v7238, %v7241
      %v7243 = vrot.slane %v7242, 4
      %v7245 = vshll.u32 %v6999, 16
      %v7247 = vrot.slane %v7245, 5
      %v7248 = vsel %vm917, %v7243, %v7247
      %v7249 = vshrl.u32 %v6999, 16
      %v7251 = vrot.slane %v7249, 4
      %v7252 = vor.u32 %v7251, %v7247
      %v7253 = vrot.slane %v7252, 4
      %v7255 = vshll.u32 %v7000, 16
      %v7257 = vrot.slane %v7255, 5
      %v7258 = vsel %vm917, %v7253, %v7257
      %v7260 = vshrl.u32 %v7001, 16
      %v7262 = vrot.slane %v7260, 4
      %v7263 = vshll.u32 %v7001, 16
      %v7265 = vrot.slane %v7263, 5
      %v7266 = vor.u32 %v7262, %v7265
      %v7267 = vrot.slane %v7266, 4
      %v7269 = vshll.u32 %v7002, 16
      %v7271 = vrot.slane %v7269, 5
      %v7272 = vsel %vm917, %v7267, %v7271
      %v7273 = vshrl.u32 %v7002, 16
      %v7275 = vrot.slane %v7273, 4
      %v7276 = vor.u32 %v7275, %v7271
      %v7277 = vrot.slane %v7276, 4
      %v7279 = vshll.u32 %v7003, 16
      %v7281 = vrot.slane %v7279, 5
      %v7282 = vsel %vm917, %v7277, %v7281
      %v7284 = vshrl.u32 %v7004, 16
      %v7286 = vrot.slane %v7284, 4
      %v7287 = vshll.u32 %v7004, 16
      %v7289 = vrot.slane %v7287, 5
      %v7290 = vor.u32 %v7286, %v7289
      %v7291 = vrot.slane %v7290, 4
      %v7293 = vshll.u32 %v7005, 16
      %v7295 = vrot.slane %v7293, 5
      %v7296 = vsel %vm917, %v7291, %v7295
      %v7297 = vshrl.u32 %v7005, 16
      %v7299 = vrot.slane %v7297, 4
      %v7300 = vor.u32 %v7299, %v7295
      %v7301 = vrot.slane %v7300, 4
      %v7303 = vshll.u32 %v7006, 16
      %v7305 = vrot.slane %v7303, 5
      %v7306 = vsel %vm917, %v7301, %v7305
      %v7308 = vshrl.u32 %v7007, 16
      %v7310 = vrot.slane %v7308, 4
      %v7311 = vshll.u32 %v7007, 16
      %v7313 = vrot.slane %v7311, 5
      %v7314 = vor.u32 %v7310, %v7313
      %v7315 = vrot.slane %v7314, 4
      %v7317 = vshll.u32 %v7008, 16
      %v7319 = vrot.slane %v7317, 5
      %v7320 = vsel %vm917, %v7315, %v7319
      %v7321 = vshrl.u32 %v7008, 16
      %v7323 = vrot.slane %v7321, 4
      %v7324 = vor.u32 %v7323, %v7319
      %v7325 = vrot.slane %v7324, 4
      %v7327 = vshll.u32 %v7009, 16
      %v7329 = vrot.slane %v7327, 5
      %v7330 = vsel %vm917, %v7325, %v7329
      %v7332 = vshrl.u32 %v7010, 16
      %v7334 = vrot.slane %v7332, 4
      %v7335 = vshll.u32 %v7010, 16
      %v7337 = vrot.slane %v7335, 5
      %v7338 = vor.u32 %v7334, %v7337
      %v7339 = vrot.slane %v7338, 4
      %v7341 = vshll.u32 %v7011, 16
      %v7343 = vrot.slane %v7341, 5
      %v7344 = vsel %vm917, %v7339, %v7343
      %v7345 = vshrl.u32 %v7011, 16
      %v7347 = vrot.slane %v7345, 4
      %v7348 = vor.u32 %v7347, %v7343
      %v7349 = vrot.slane %v7348, 4
      %v7351 = vshll.u32 %v7012, 16
      %v7353 = vrot.slane %v7351, 5
      %v7354 = vsel %vm917, %v7349, %v7353
      %v7356 = vshrl.u32 %v7013, 16
      %v7358 = vrot.slane %v7356, 4
      %v7359 = vshll.u32 %v7013, 16
      %v7361 = vrot.slane %v7359, 5
      %v7362 = vor.u32 %v7358, %v7361
      %v7363 = vrot.slane %v7362, 4
      %v7365 = vshll.u32 %v7014, 16
      %v7367 = vrot.slane %v7365, 5
      %v7368 = vsel %vm917, %v7363, %v7367
      %v7369 = vshrl.u32 %v7014, 16
      %v7371 = vrot.slane %v7369, 4
      %v7372 = vor.u32 %v7371, %v7367
      %v7373 = vrot.slane %v7372, 4
      %v7375 = vshll.u32 %v7015, 16
      %v7377 = vrot.slane %v7375, 5
      %v7378 = vsel %vm917, %v7373, %v7377
      %v7380 = vshrl.u32 %v7016, 16
      %v7382 = vrot.slane %v7380, 4
      %v7383 = vshll.u32 %v7016, 16
      %v7385 = vrot.slane %v7383, 5
      %v7386 = vor.u32 %v7382, %v7385
      %v7387 = vrot.slane %v7386, 4
      %v7389 = vshll.u32 %v7017, 16
      %v7391 = vrot.slane %v7389, 5
      %v7392 = vsel %vm917, %v7387, %v7391
      %v7393 = vshrl.u32 %v7017, 16
      %v7395 = vrot.slane %v7393, 4
      %v7396 = vor.u32 %v7395, %v7391
      %v7397 = vrot.slane %v7396, 4
      %v7399 = vshll.u32 %v7018, 16
      %v7401 = vrot.slane %v7399, 5
      %v7402 = vsel %vm917, %v7397, %v7401
      %s7403 = scalar_lea.vmem %s3, 128
      %v7404 = vld [vmem:[%s7403] sm:$0xf]
      %v7405 = vld [vmem:[%s7403 + $0x4] sm:$0xf]
      %v7406 = vld [vmem:[%s7403 + $0x8] sm:$0xf]
      %v7407 = vld [vmem:[%s7403 + $0xc] sm:$0xf]
      %v7408 = vld [vmem:[%s7403 + $0x10] sm:$0xf]
      %v7409 = vld [vmem:[%s7403 + $0x14] sm:$0xf]
      %v7410 = vld [vmem:[%s7403 + $0x18] sm:$0xf]
      %v7411 = vld [vmem:[%s7403 + $0x1c] sm:$0xf]
      %v7412 = vunpack.c.l.b16 %v7032
      %v7413 = vunpack.c.l.b16 %v7042
      %v7414 = vunpack.c.l.b16 %v7056
      %v7415 = vunpack.c.l.b16 %v7066
      %v7416 = vunpack.c.l.b16 %v7080
      %v7417 = vunpack.c.l.b16 %v7090
      %v7418 = vunpack.c.l.b16 %v7104
      %v7419 = vunpack.c.l.b16 %v7114
      %v7420 = vunpack.c.l.b16 %v7128
      %v7421 = vunpack.c.l.b16 %v7138
      %v7422 = vunpack.c.l.b16 %v7152
      %v7423 = vunpack.c.l.b16 %v7162
      %v7424 = vunpack.c.l.b16 %v7176
      %v7425 = vunpack.c.l.b16 %v7186
      %v7426 = vunpack.c.l.b16 %v7200
      %v7427 = vunpack.c.l.b16 %v7210
      %v7428 = vunpack.c.l.b16 %v7224
      %v7429 = vunpack.c.l.b16 %v7234
      %v7430 = vunpack.c.l.b16 %v7248
      %v7431 = vunpack.c.l.b16 %v7258
      %v7432 = vunpack.c.l.b16 %v7272
      %v7433 = vunpack.c.l.b16 %v7282
      %v7434 = vunpack.c.l.b16 %v7296
      %v7435 = vunpack.c.l.b16 %v7306
      %v7436 = vunpack.c.l.b16 %v7320
      %v7437 = vunpack.c.l.b16 %v7330
      %v7438 = vunpack.c.l.b16 %v7344
      %v7439 = vunpack.c.l.b16 %v7354
      %v7440 = vunpack.c.l.b16 %v7368
      %v7441 = vunpack.c.l.b16 %v7378
      %v7442 = vunpack.c.l.b16 %v7392
      %v7443 = vunpack.c.l.b16 %v7402
      %v7444 = vpack.c.b16 %v7413, %v7412
      %v7445 = vpack.c.b16 %v7415, %v7414
      %v7446 = vpack.c.b16 %v7417, %v7416
      %v7447 = vpack.c.b16 %v7419, %v7418
      %v7448 = vpack.c.b16 %v7421, %v7420
      %v7449 = vpack.c.b16 %v7423, %v7422
      %v7450 = vpack.c.b16 %v7425, %v7424
      %v7451 = vpack.c.b16 %v7427, %v7426
      %v7452 = vpack.c.b16 %v7429, %v7428
      %v7453 = vpack.c.b16 %v7431, %v7430
      %v7454 = vpack.c.b16 %v7433, %v7432
      %v7455 = vpack.c.b16 %v7435, %v7434
      %v7456 = vpack.c.b16 %v7437, %v7436
      %v7457 = vpack.c.b16 %v7439, %v7438
      %v7458 = vpack.c.b16 %v7441, %v7440
      %v7459 = vpack.c.b16 %v7443, %v7442
      %v7468 = vunpack.c.l.b16 %v7404
      %v7469 = vunpack.c.l.b16 %v7405
      %v7470 = vunpack.c.l.b16 %v7406
      %v7471 = vunpack.c.l.b16 %v7407
      %v7472 = vunpack.c.l.b16 %v7408
      %v7473 = vunpack.c.l.b16 %v7409
      %v7474 = vunpack.c.l.b16 %v7410
      %v7475 = vunpack.c.l.b16 %v7411
      %v7476 = vpack.c.b16 %v7469, %v7468
      %v7477 = vpack.c.b16 %v7471, %v7470
      %v7478 = vpack.c.b16 %v7473, %v7472
      %v7479 = vpack.c.b16 %v7475, %v7474
      %v7485 = vsel %vm5868, %v7444, 0
      %v7488 = vsel %vm5868, %v7445, 0
      %v7491 = vsel %vm5868, %v7446, 0
      %v7494 = vsel %vm5868, %v7447, 0
      %v7497 = vsel %vm5868, %v7448, 0
      %v7500 = vsel %vm5868, %v7449, 0
      %v7503 = vsel %vm5868, %v7450, 0
      %v7506 = vsel %vm5868, %v7451, 0
      %v7509 = vsel %vm5868, %v7452, 0
      %v7512 = vsel %vm5868, %v7453, 0
      %v7515 = vsel %vm5868, %v7454, 0
      %v7518 = vsel %vm5868, %v7455, 0
      %v7521 = vsel %vm5868, %v7456, 0
      %v7524 = vsel %vm5868, %v7457, 0
      %v7527 = vsel %vm5868, %v7458, 0
      %v7530 = vsel %vm5868, %v7459, 0
      %7532 = vmatpush.bf16.msra.mxu0 0
      %7533 = vmatpush.bf16.msra.mxu0 0
      %7534 = vmatpush.bf16.msra.mxu0 0
      %7535 = vmatpush.bf16.msra.mxu0 0
      %7536 = vmatpush.bf16.msra.mxu0 %v7479
      %7537 = vmatpush.bf16.msra.mxu0 %v7478
      %7538 = vmatpush.bf16.msra.mxu0 %v7477
      %7539 = vmatpush.bf16.msra.mxu0 %v7476
      %7540 = vmatmul.bf16.gmra.mxu0 %v7485
      %v7541 = vpop.f32.mrf.mxu0
      %v7542 = vadd.f32 0.0, %v7541
      %v7543 = vpop.f32.mrf.mxu0
      %v7544 = vadd.f32 0.0, %v7543
      %7545 = vmatmul.bf16.gmra.mxu0 %v7488
      %v7546 = vpop.f32.mrf.mxu0
      %v7547 = vadd.f32 0.0, %v7546
      %v7548 = vpop.f32.mrf.mxu0
      %v7549 = vadd.f32 0.0, %v7548
      %7550 = vmatmul.bf16.gmra.mxu0 %v7491
      %v7551 = vpop.f32.mrf.mxu0
      %v7552 = vadd.f32 0.0, %v7551
      %v7553 = vpop.f32.mrf.mxu0
      %v7554 = vadd.f32 0.0, %v7553
      %7555 = vmatmul.bf16.gmra.mxu0 %v7494
      %v7556 = vpop.f32.mrf.mxu0
      %v7557 = vadd.f32 0.0, %v7556
      %v7558 = vpop.f32.mrf.mxu0
      %v7559 = vadd.f32 0.0, %v7558
      %7560 = vmatmul.bf16.gmra.mxu0 %v7497
      %v7561 = vpop.f32.mrf.mxu0
      %v7562 = vadd.f32 0.0, %v7561
      %v7563 = vpop.f32.mrf.mxu0
      %v7564 = vadd.f32 0.0, %v7563
      %7565 = vmatmul.bf16.gmra.mxu0 %v7500
      %v7566 = vpop.f32.mrf.mxu0
      %v7567 = vadd.f32 0.0, %v7566
      %v7568 = vpop.f32.mrf.mxu0
      %v7569 = vadd.f32 0.0, %v7568
      %7570 = vmatmul.bf16.gmra.mxu0 %v7503
      %v7571 = vpop.f32.mrf.mxu0
      %v7572 = vadd.f32 0.0, %v7571
      %v7573 = vpop.f32.mrf.mxu0
      %v7574 = vadd.f32 0.0, %v7573
      %7575 = vmatmul.bf16.gmra.mxu0 %v7506
      %v7576 = vpop.f32.mrf.mxu0
      %v7577 = vadd.f32 0.0, %v7576
      %v7578 = vpop.f32.mrf.mxu0
      %v7579 = vadd.f32 0.0, %v7578
      %7580 = vmatmul.bf16.gmra.mxu0 %v7509
      %v7581 = vpop.f32.mrf.mxu0
      %v7582 = vadd.f32 0.0, %v7581
      %v7583 = vpop.f32.mrf.mxu0
      %v7584 = vadd.f32 0.0, %v7583
      %7585 = vmatmul.bf16.gmra.mxu0 %v7512
      %v7586 = vpop.f32.mrf.mxu0
      %v7587 = vadd.f32 0.0, %v7586
      %v7588 = vpop.f32.mrf.mxu0
      %v7589 = vadd.f32 0.0, %v7588
      %7590 = vmatmul.bf16.gmra.mxu0 %v7515
      %v7591 = vpop.f32.mrf.mxu0
      %v7592 = vadd.f32 0.0, %v7591
      %v7593 = vpop.f32.mrf.mxu0
      %v7594 = vadd.f32 0.0, %v7593
      %7595 = vmatmul.bf16.gmra.mxu0 %v7518
      %v7596 = vpop.f32.mrf.mxu0
      %v7597 = vadd.f32 0.0, %v7596
      %v7598 = vpop.f32.mrf.mxu0
      %v7599 = vadd.f32 0.0, %v7598
      %7600 = vmatmul.bf16.gmra.mxu0 %v7521
      %v7601 = vpop.f32.mrf.mxu0
      %v7602 = vadd.f32 0.0, %v7601
      %v7603 = vpop.f32.mrf.mxu0
      %v7604 = vadd.f32 0.0, %v7603
      %7605 = vmatmul.bf16.gmra.mxu0 %v7524
      %v7606 = vpop.f32.mrf.mxu0
      %v7607 = vadd.f32 0.0, %v7606
      %v7608 = vpop.f32.mrf.mxu0
      %v7609 = vadd.f32 0.0, %v7608
      %7610 = vmatmul.bf16.gmra.mxu0 %v7527
      %v7611 = vpop.f32.mrf.mxu0
      %v7612 = vadd.f32 0.0, %v7611
      %v7613 = vpop.f32.mrf.mxu0
      %v7614 = vadd.f32 0.0, %v7613
      %7615 = vmatmul.bf16.gmra.mxu0 %v7530
      %v7616 = vpop.f32.mrf.mxu0
      %v7617 = vadd.f32 0.0, %v7616
      %v7618 = vpop.f32.mrf.mxu0
      %v7619 = vadd.f32 0.0, %v7618
      %7620 = vdwg.mxu0
      %v7621 = vadd.f32 %v6939, %v7542
      %v7622 = vadd.f32 %v6940, %v7544
      %v7623 = vadd.f32 %v6941, %v7547
      %v7624 = vadd.f32 %v6942, %v7549
      %v7625 = vadd.f32 %v6943, %v7552
      %v7626 = vadd.f32 %v6944, %v7554
      %v7627 = vadd.f32 %v6945, %v7557
      %v7628 = vadd.f32 %v6946, %v7559
      %v7629 = vadd.f32 %v6947, %v7562
      %v7630 = vadd.f32 %v6948, %v7564
      %v7631 = vadd.f32 %v6949, %v7567
      %v7632 = vadd.f32 %v6950, %v7569
      %v7633 = vadd.f32 %v6951, %v7572
      %v7634 = vadd.f32 %v6952, %v7574
      %v7635 = vadd.f32 %v6953, %v7577
      %v7636 = vadd.f32 %v6954, %v7579
      %v7637 = vadd.f32 %v6955, %v7582
      %v7638 = vadd.f32 %v6956, %v7584
      %v7639 = vadd.f32 %v6957, %v7587
      %v7640 = vadd.f32 %v6958, %v7589
      %v7641 = vadd.f32 %v6959, %v7592
      %v7642 = vadd.f32 %v6960, %v7594
      %v7643 = vadd.f32 %v6961, %v7597
      %v7644 = vadd.f32 %v6962, %v7599
      %v7645 = vadd.f32 %v6963, %v7602
      %v7646 = vadd.f32 %v6964, %v7604
      %v7647 = vadd.f32 %v6965, %v7607
      %v7648 = vadd.f32 %v6966, %v7609
      %v7649 = vadd.f32 %v6967, %v7612
      %v7650 = vadd.f32 %v6968, %v7614
      %v7651 = vadd.f32 %v6969, %v7617
      %v7652 = vadd.f32 %v6970, %v7619
      %v7653 = vld [vmem:[%s5230] sm:$0xe]
      %v7654 = vld [vmem:[%s5230 + $0xc] sm:$0xe]
      %v7655 = vld [vmem:[%s5230 + $0x18] sm:$0xe]
      %v7656 = vld [vmem:[%s5230 + $0x24] sm:$0xe]
      %v7657 = vld [vmem:[%s5230 + $0x30] sm:$0xe]
      %v7658 = vld [vmem:[%s5230 + $0x3c] sm:$0xe]
      %v7659 = vld [vmem:[%s5230 + $0x48] sm:$0xe]
      %v7660 = vld [vmem:[%s5230 + $0x54] sm:$0xe]
      %v7661 = vld [vmem:[%s5230 + $0x60] sm:$0xe]
      %v7662 = vld [vmem:[%s5230 + $0x6c] sm:$0xe]
      %v7663 = vld [vmem:[%s5230 + $0x78] sm:$0xe]
      %v7664 = vld [vmem:[%s5230 + $0x84] sm:$0xe]
      %v7665 = vld [vmem:[%s5230 + $0x90] sm:$0xe]
      %v7666 = vld [vmem:[%s5230 + $0x9c] sm:$0xe]
      %v7667 = vld [vmem:[%s5230 + $0xa8] sm:$0xe]
      %v7668 = vld [vmem:[%s5230 + $0xb4] sm:$0xe]
      %v7717 = vrot.slane %v7653, 5
      %v7718 = vrot.slane %v7717, 4
      %v7719 = vrot.slane %v6972, 5
      %v7720 = vsel %vm1770, %v7718, %v7719
      %v7721 = vrot.slane %v7719, 4
      %v7722 = vrot.slane %v6973, 5
      %v7723 = vsel %vm1770, %v7721, %v7722
      %v7724 = vrot.slane %v7654, 5
      %v7725 = vrot.slane %v7724, 4
      %v7726 = vrot.slane %v6975, 5
      %v7727 = vsel %vm1770, %v7725, %v7726
      %v7728 = vrot.slane %v7726, 4
      %v7729 = vrot.slane %v6976, 5
      %v7730 = vsel %vm1770, %v7728, %v7729
      %v7731 = vrot.slane %v7655, 5
      %v7732 = vrot.slane %v7731, 4
      %v7733 = vrot.slane %v6978, 5
      %v7734 = vsel %vm1770, %v7732, %v7733
      %v7735 = vrot.slane %v7733, 4
      %v7736 = vrot.slane %v6979, 5
      %v7737 = vsel %vm1770, %v7735, %v7736
      %v7738 = vrot.slane %v7656, 5
      %v7739 = vrot.slane %v7738, 4
      %v7740 = vrot.slane %v6981, 5
      %v7741 = vsel %vm1770, %v7739, %v7740
      %v7742 = vrot.slane %v7740, 4
      %v7743 = vrot.slane %v6982, 5
      %v7744 = vsel %vm1770, %v7742, %v7743
      %v7745 = vrot.slane %v7657, 5
      %v7746 = vrot.slane %v7745, 4
      %v7747 = vrot.slane %v6984, 5
      %v7748 = vsel %vm1770, %v7746, %v7747
      %v7749 = vrot.slane %v7747, 4
      %v7750 = vrot.slane %v6985, 5
      %v7751 = vsel %vm1770, %v7749, %v7750
      %v7752 = vrot.slane %v7658, 5
      %v7753 = vrot.slane %v7752, 4
      %v7754 = vrot.slane %v6987, 5
      %v7755 = vsel %vm1770, %v7753, %v7754
      %v7756 = vrot.slane %v7754, 4
      %v7757 = vrot.slane %v6988, 5
      %v7758 = vsel %vm1770, %v7756, %v7757
      %v7759 = vrot.slane %v7659, 5
      %v7760 = vrot.slane %v7759, 4
      %v7761 = vrot.slane %v6990, 5
      %v7762 = vsel %vm1770, %v7760, %v7761
      %v7763 = vrot.slane %v7761, 4
      %v7764 = vrot.slane %v6991, 5
      %v7765 = vsel %vm1770, %v7763, %v7764
      %v7766 = vrot.slane %v7660, 5
      %v7767 = vrot.slane %v7766, 4
      %v7768 = vrot.slane %v6993, 5
      %v7769 = vsel %vm1770, %v7767, %v7768
      %v7770 = vrot.slane %v7768, 4
      %v7771 = vrot.slane %v6994, 5
      %v7772 = vsel %vm1770, %v7770, %v7771
      %v7773 = vrot.slane %v7661, 5
      %v7774 = vrot.slane %v7773, 4
      %v7775 = vrot.slane %v6996, 5
      %v7776 = vsel %vm1770, %v7774, %v7775
      %v7777 = vrot.slane %v7775, 4
      %v7778 = vrot.slane %v6997, 5
      %v7779 = vsel %vm1770, %v7777, %v7778
      %v7780 = vrot.slane %v7662, 5
      %v7781 = vrot.slane %v7780, 4
      %v7782 = vrot.slane %v6999, 5
      %v7783 = vsel %vm1770, %v7781, %v7782
      %v7784 = vrot.slane %v7782, 4
      %v7785 = vrot.slane %v7000, 5
      %v7786 = vsel %vm1770, %v7784, %v7785
      %v7787 = vrot.slane %v7663, 5
      %v7788 = vrot.slane %v7787, 4
      %v7789 = vrot.slane %v7002, 5
      %v7790 = vsel %vm1770, %v7788, %v7789
      %v7791 = vrot.slane %v7789, 4
      %v7792 = vrot.slane %v7003, 5
      %v7793 = vsel %vm1770, %v7791, %v7792
      %v7794 = vrot.slane %v7664, 5
      %v7795 = vrot.slane %v7794, 4
      %v7796 = vrot.slane %v7005, 5
      %v7797 = vsel %vm1770, %v7795, %v7796
      %v7798 = vrot.slane %v7796, 4
      %v7799 = vrot.slane %v7006, 5
      %v7800 = vsel %vm1770, %v7798, %v7799
      %v7801 = vrot.slane %v7665, 5
      %v7802 = vrot.slane %v7801, 4
      %v7803 = vrot.slane %v7008, 5
      %v7804 = vsel %vm1770, %v7802, %v7803
      %v7805 = vrot.slane %v7803, 4
      %v7806 = vrot.slane %v7009, 5
      %v7807 = vsel %vm1770, %v7805, %v7806
      %v7808 = vrot.slane %v7666, 5
      %v7809 = vrot.slane %v7808, 4
      %v7810 = vrot.slane %v7011, 5
      %v7811 = vsel %vm1770, %v7809, %v7810
      %v7812 = vrot.slane %v7810, 4
      %v7813 = vrot.slane %v7012, 5
      %v7814 = vsel %vm1770, %v7812, %v7813
      %v7815 = vrot.slane %v7667, 5
      %v7816 = vrot.slane %v7815, 4
      %v7817 = vrot.slane %v7014, 5
      %v7818 = vsel %vm1770, %v7816, %v7817
      %v7819 = vrot.slane %v7817, 4
      %v7820 = vrot.slane %v7015, 5
      %v7821 = vsel %vm1770, %v7819, %v7820
      %v7822 = vrot.slane %v7668, 5
      %v7823 = vrot.slane %v7822, 4
      %v7824 = vrot.slane %v7017, 5
      %v7825 = vsel %vm1770, %v7823, %v7824
      %v7826 = vrot.slane %v7824, 4
      %v7827 = vrot.slane %v7018, 5
      %v7828 = vsel %vm1770, %v7826, %v7827
      %s7829 = scalar_lea.vmem %s3, 160
      %v7830 = vld [vmem:[%s7829] sm:$0xf]
      %v7831 = vld [vmem:[%s7829 + $0x4] sm:$0xf]
      %v7832 = vld [vmem:[%s7829 + $0x8] sm:$0xf]
      %v7833 = vld [vmem:[%s7829 + $0xc] sm:$0xf]
      %v7834 = vld [vmem:[%s7829 + $0x10] sm:$0xf]
      %v7835 = vld [vmem:[%s7829 + $0x14] sm:$0xf]
      %v7836 = vld [vmem:[%s7829 + $0x18] sm:$0xf]
      %v7837 = vld [vmem:[%s7829 + $0x1c] sm:$0xf]
      %v7838 = vunpack.c.l.b16 %v7720
      %v7839 = vunpack.c.l.b16 %v7723
      %v7840 = vunpack.c.l.b16 %v7727
      %v7841 = vunpack.c.l.b16 %v7730
      %v7842 = vunpack.c.l.b16 %v7734
      %v7843 = vunpack.c.l.b16 %v7737
      %v7844 = vunpack.c.l.b16 %v7741
      %v7845 = vunpack.c.l.b16 %v7744
      %v7846 = vunpack.c.l.b16 %v7748
      %v7847 = vunpack.c.l.b16 %v7751
      %v7848 = vunpack.c.l.b16 %v7755
      %v7849 = vunpack.c.l.b16 %v7758
      %v7850 = vunpack.c.l.b16 %v7762
      %v7851 = vunpack.c.l.b16 %v7765
      %v7852 = vunpack.c.l.b16 %v7769
      %v7853 = vunpack.c.l.b16 %v7772
      %v7854 = vunpack.c.l.b16 %v7776
      %v7855 = vunpack.c.l.b16 %v7779
      %v7856 = vunpack.c.l.b16 %v7783
      %v7857 = vunpack.c.l.b16 %v7786
      %v7858 = vunpack.c.l.b16 %v7790
      %v7859 = vunpack.c.l.b16 %v7793
      %v7860 = vunpack.c.l.b16 %v7797
      %v7861 = vunpack.c.l.b16 %v7800
      %v7862 = vunpack.c.l.b16 %v7804
      %v7863 = vunpack.c.l.b16 %v7807
      %v7864 = vunpack.c.l.b16 %v7811
      %v7865 = vunpack.c.l.b16 %v7814
      %v7866 = vunpack.c.l.b16 %v7818
      %v7867 = vunpack.c.l.b16 %v7821
      %v7868 = vunpack.c.l.b16 %v7825
      %v7869 = vunpack.c.l.b16 %v7828
      %v7870 = vpack.c.b16 %v7839, %v7838
      %v7871 = vpack.c.b16 %v7841, %v7840
      %v7872 = vpack.c.b16 %v7843, %v7842
      %v7873 = vpack.c.b16 %v7845, %v7844
      %v7874 = vpack.c.b16 %v7847, %v7846
      %v7875 = vpack.c.b16 %v7849, %v7848
      %v7876 = vpack.c.b16 %v7851, %v7850
      %v7877 = vpack.c.b16 %v7853, %v7852
      %v7878 = vpack.c.b16 %v7855, %v7854
      %v7879 = vpack.c.b16 %v7857, %v7856
      %v7880 = vpack.c.b16 %v7859, %v7858
      %v7881 = vpack.c.b16 %v7861, %v7860
      %v7882 = vpack.c.b16 %v7863, %v7862
      %v7883 = vpack.c.b16 %v7865, %v7864
      %v7884 = vpack.c.b16 %v7867, %v7866
      %v7885 = vpack.c.b16 %v7869, %v7868
      %v7894 = vunpack.c.l.b16 %v7830
      %v7895 = vunpack.c.l.b16 %v7831
      %v7896 = vunpack.c.l.b16 %v7832
      %v7897 = vunpack.c.l.b16 %v7833
      %v7898 = vunpack.c.l.b16 %v7834
      %v7899 = vunpack.c.l.b16 %v7835
      %v7900 = vunpack.c.l.b16 %v7836
      %v7901 = vunpack.c.l.b16 %v7837
      %v7902 = vpack.c.b16 %v7895, %v7894
      %v7903 = vpack.c.b16 %v7897, %v7896
      %v7904 = vpack.c.b16 %v7899, %v7898
      %v7905 = vpack.c.b16 %v7901, %v7900
      %v7911 = vsel %vm5868, %v7870, 0
      %v7914 = vsel %vm5868, %v7871, 0
      %v7917 = vsel %vm5868, %v7872, 0
      %v7920 = vsel %vm5868, %v7873, 0
      %v7923 = vsel %vm5868, %v7874, 0
      %v7926 = vsel %vm5868, %v7875, 0
      %v7929 = vsel %vm5868, %v7876, 0
      %v7932 = vsel %vm5868, %v7877, 0
      %v7935 = vsel %vm5868, %v7878, 0
      %v7938 = vsel %vm5868, %v7879, 0
      %v7941 = vsel %vm5868, %v7880, 0
      %v7944 = vsel %vm5868, %v7881, 0
      %v7947 = vsel %vm5868, %v7882, 0
      %v7950 = vsel %vm5868, %v7883, 0
      %v7953 = vsel %vm5868, %v7884, 0
      %v7956 = vsel %vm5868, %v7885, 0
      %7958 = vmatpush.bf16.msra.mxu0 0
      %7959 = vmatpush.bf16.msra.mxu0 0
      %7960 = vmatpush.bf16.msra.mxu0 0
      %7961 = vmatpush.bf16.msra.mxu0 0
      %7962 = vmatpush.bf16.msra.mxu0 %v7905
      %7963 = vmatpush.bf16.msra.mxu0 %v7904
      %7964 = vmatpush.bf16.msra.mxu0 %v7903
      %7965 = vmatpush.bf16.msra.mxu0 %v7902
      %7966 = vmatmul.bf16.gmra.mxu0 %v7911
      %v7967 = vpop.f32.mrf.mxu0
      %v7968 = vadd.f32 0.0, %v7967
      %v7969 = vpop.f32.mrf.mxu0
      %v7970 = vadd.f32 0.0, %v7969
      %7971 = vmatmul.bf16.gmra.mxu0 %v7914
      %v7972 = vpop.f32.mrf.mxu0
      %v7973 = vadd.f32 0.0, %v7972
      %v7974 = vpop.f32.mrf.mxu0
      %v7975 = vadd.f32 0.0, %v7974
      %7976 = vmatmul.bf16.gmra.mxu0 %v7917
      %v7977 = vpop.f32.mrf.mxu0
      %v7978 = vadd.f32 0.0, %v7977
      %v7979 = vpop.f32.mrf.mxu0
      %v7980 = vadd.f32 0.0, %v7979
      %7981 = vmatmul.bf16.gmra.mxu0 %v7920
      %v7982 = vpop.f32.mrf.mxu0
      %v7983 = vadd.f32 0.0, %v7982
      %v7984 = vpop.f32.mrf.mxu0
      %v7985 = vadd.f32 0.0, %v7984
      %7986 = vmatmul.bf16.gmra.mxu0 %v7923
      %v7987 = vpop.f32.mrf.mxu0
      %v7988 = vadd.f32 0.0, %v7987
      %v7989 = vpop.f32.mrf.mxu0
      %v7990 = vadd.f32 0.0, %v7989
      %7991 = vmatmul.bf16.gmra.mxu0 %v7926
      %v7992 = vpop.f32.mrf.mxu0
      %v7993 = vadd.f32 0.0, %v7992
      %v7994 = vpop.f32.mrf.mxu0
      %v7995 = vadd.f32 0.0, %v7994
      %7996 = vmatmul.bf16.gmra.mxu0 %v7929
      %v7997 = vpop.f32.mrf.mxu0
      %v7998 = vadd.f32 0.0, %v7997
      %v7999 = vpop.f32.mrf.mxu0
      %v8000 = vadd.f32 0.0, %v7999
      %8001 = vmatmul.bf16.gmra.mxu0 %v7932
      %v8002 = vpop.f32.mrf.mxu0
      %v8003 = vadd.f32 0.0, %v8002
      %v8004 = vpop.f32.mrf.mxu0
      %v8005 = vadd.f32 0.0, %v8004
      %8006 = vmatmul.bf16.gmra.mxu0 %v7935
      %v8007 = vpop.f32.mrf.mxu0
      %v8008 = vadd.f32 0.0, %v8007
      %v8009 = vpop.f32.mrf.mxu0
      %v8010 = vadd.f32 0.0, %v8009
      %8011 = vmatmul.bf16.gmra.mxu0 %v7938
      %v8012 = vpop.f32.mrf.mxu0
      %v8013 = vadd.f32 0.0, %v8012
      %v8014 = vpop.f32.mrf.mxu0
      %v8015 = vadd.f32 0.0, %v8014
      %8016 = vmatmul.bf16.gmra.mxu0 %v7941
      %v8017 = vpop.f32.mrf.mxu0
      %v8018 = vadd.f32 0.0, %v8017
      %v8019 = vpop.f32.mrf.mxu0
      %v8020 = vadd.f32 0.0, %v8019
      %8021 = vmatmul.bf16.gmra.mxu0 %v7944
      %v8022 = vpop.f32.mrf.mxu0
      %v8023 = vadd.f32 0.0, %v8022
      %v8024 = vpop.f32.mrf.mxu0
      %v8025 = vadd.f32 0.0, %v8024
      %8026 = vmatmul.bf16.gmra.mxu0 %v7947
      %v8027 = vpop.f32.mrf.mxu0
      %v8028 = vadd.f32 0.0, %v8027
      %v8029 = vpop.f32.mrf.mxu0
      %v8030 = vadd.f32 0.0, %v8029
      %8031 = vmatmul.bf16.gmra.mxu0 %v7950
      %v8032 = vpop.f32.mrf.mxu0
      %v8033 = vadd.f32 0.0, %v8032
      %v8034 = vpop.f32.mrf.mxu0
      %v8035 = vadd.f32 0.0, %v8034
      %8036 = vmatmul.bf16.gmra.mxu0 %v7953
      %v8037 = vpop.f32.mrf.mxu0
      %v8038 = vadd.f32 0.0, %v8037
      %v8039 = vpop.f32.mrf.mxu0
      %v8040 = vadd.f32 0.0, %v8039
      %8041 = vmatmul.bf16.gmra.mxu0 %v7956
      %v8042 = vpop.f32.mrf.mxu0
      %v8043 = vadd.f32 0.0, %v8042
      %v8044 = vpop.f32.mrf.mxu0
      %v8045 = vadd.f32 0.0, %v8044
      %8046 = vdwg.mxu0
      %v8047 = vadd.f32 %v7621, %v7968
      %v8048 = vadd.f32 %v7622, %v7970
      %v8049 = vadd.f32 %v7623, %v7973
      %v8050 = vadd.f32 %v7624, %v7975
      %v8051 = vadd.f32 %v7625, %v7978
      %v8052 = vadd.f32 %v7626, %v7980
      %v8053 = vadd.f32 %v7627, %v7983
      %v8054 = vadd.f32 %v7628, %v7985
      %v8055 = vadd.f32 %v7629, %v7988
      %v8056 = vadd.f32 %v7630, %v7990
      %v8057 = vadd.f32 %v7631, %v7993
      %v8058 = vadd.f32 %v7632, %v7995
      %v8059 = vadd.f32 %v7633, %v7998
      %v8060 = vadd.f32 %v7634, %v8000
      %v8061 = vadd.f32 %v7635, %v8003
      %v8062 = vadd.f32 %v7636, %v8005
      %v8063 = vadd.f32 %v7637, %v8008
      %v8064 = vadd.f32 %v7638, %v8010
      %v8065 = vadd.f32 %v7639, %v8013
      %v8066 = vadd.f32 %v7640, %v8015
      %v8067 = vadd.f32 %v7641, %v8018
      %v8068 = vadd.f32 %v7642, %v8020
      %v8069 = vadd.f32 %v7643, %v8023
      %v8070 = vadd.f32 %v7644, %v8025
      %v8071 = vadd.f32 %v7645, %v8028
      %v8072 = vadd.f32 %v7646, %v8030
      %v8073 = vadd.f32 %v7647, %v8033
      %v8074 = vadd.f32 %v7648, %v8035
      %v8075 = vadd.f32 %v7649, %v8038
      %v8076 = vadd.f32 %v7650, %v8040
      %v8077 = vadd.f32 %v7651, %v8043
      %v8078 = vadd.f32 %v7652, %v8045
      %s8079 = scalar_lea.vmem [#allocation3], 24
      %v8080 = vld [vmem:[%s8079] sm:$0xf]
      %v8081 = vld [vmem:[%s8079 + $0x4] sm:$0xf]
      %v8082 = vld [vmem:[%s8079 + $0xc] sm:$0xf]
      %v8083 = vld [vmem:[%s8079 + $0x10] sm:$0xf]
      %v8084 = vld [vmem:[%s8079 + $0x18] sm:$0xf]
      %v8085 = vld [vmem:[%s8079 + $0x1c] sm:$0xf]
      %v8086 = vld [vmem:[%s8079 + $0x24] sm:$0xf]
      %v8087 = vld [vmem:[%s8079 + $0x28] sm:$0xf]
      %v8088 = vld [vmem:[%s8079 + $0x30] sm:$0xf]
      %v8089 = vld [vmem:[%s8079 + $0x34] sm:$0xf]
      %v8090 = vld [vmem:[%s8079 + $0x3c] sm:$0xf]
      %v8091 = vld [vmem:[%s8079 + $0x40] sm:$0xf]
      %v8092 = vld [vmem:[%s8079 + $0x48] sm:$0xf]
      %v8093 = vld [vmem:[%s8079 + $0x4c] sm:$0xf]
      %v8094 = vld [vmem:[%s8079 + $0x54] sm:$0xf]
      %v8095 = vld [vmem:[%s8079 + $0x58] sm:$0xf]
      %v8096 = vld [vmem:[%s8079 + $0x60] sm:$0xf]
      %v8097 = vld [vmem:[%s8079 + $0x64] sm:$0xf]
      %v8098 = vld [vmem:[%s8079 + $0x6c] sm:$0xf]
      %v8099 = vld [vmem:[%s8079 + $0x70] sm:$0xf]
      %v8100 = vld [vmem:[%s8079 + $0x78] sm:$0xf]
      %v8101 = vld [vmem:[%s8079 + $0x7c] sm:$0xf]
      %v8102 = vld [vmem:[%s8079 + $0x84] sm:$0xf]
      %v8103 = vld [vmem:[%s8079 + $0x88] sm:$0xf]
      %v8104 = vld [vmem:[%s8079 + $0x90] sm:$0xf]
      %v8105 = vld [vmem:[%s8079 + $0x94] sm:$0xf]
      %v8106 = vld [vmem:[%s8079 + $0x9c] sm:$0xf]
      %v8107 = vld [vmem:[%s8079 + $0xa0] sm:$0xf]
      %v8108 = vld [vmem:[%s8079 + $0xa8] sm:$0xf]
      %v8109 = vld [vmem:[%s8079 + $0xac] sm:$0xf]
      %v8110 = vld [vmem:[%s8079 + $0xb4] sm:$0xf]
      %v8111 = vld [vmem:[%s8079 + $0xb8] sm:$0xf]
      %s8112 = scalar_lea.vmem %s3, 192
      %v8113 = vld [vmem:[%s8112] sm:$0xf]
      %v8114 = vld [vmem:[%s8112 + $0x4] sm:$0xf]
      %v8115 = vld [vmem:[%s8112 + $0x8] sm:$0xf]
      %v8116 = vld [vmem:[%s8112 + $0xc] sm:$0xf]
      %v8117 = vld [vmem:[%s8112 + $0x10] sm:$0xf]
      %v8118 = vld [vmem:[%s8112 + $0x14] sm:$0xf]
      %v8119 = vld [vmem:[%s8112 + $0x18] sm:$0xf]
      %v8120 = vld [vmem:[%s8112 + $0x1c] sm:$0xf]
      %v8153 = vunpack.c.l.b16 %v8080
      %v8154 = vunpack.c.l.b16 %v8081
      %v8155 = vunpack.c.l.b16 %v8082
      %v8156 = vunpack.c.l.b16 %v8083
      %v8157 = vunpack.c.l.b16 %v8084
      %v8158 = vunpack.c.l.b16 %v8085
      %v8159 = vunpack.c.l.b16 %v8086
      %v8160 = vunpack.c.l.b16 %v8087
      %v8161 = vunpack.c.l.b16 %v8088
      %v8162 = vunpack.c.l.b16 %v8089
      %v8163 = vunpack.c.l.b16 %v8090
      %v8164 = vunpack.c.l.b16 %v8091
      %v8165 = vunpack.c.l.b16 %v8092
      %v8166 = vunpack.c.l.b16 %v8093
      %v8167 = vunpack.c.l.b16 %v8094
      %v8168 = vunpack.c.l.b16 %v8095
      %v8169 = vunpack.c.l.b16 %v8096
      %v8170 = vunpack.c.l.b16 %v8097
      %v8171 = vunpack.c.l.b16 %v8098
      %v8172 = vunpack.c.l.b16 %v8099
      %v8173 = vunpack.c.l.b16 %v8100
      %v8174 = vunpack.c.l.b16 %v8101
      %v8175 = vunpack.c.l.b16 %v8102
      %v8176 = vunpack.c.l.b16 %v8103
      %v8177 = vunpack.c.l.b16 %v8104
      %v8178 = vunpack.c.l.b16 %v8105
      %v8179 = vunpack.c.l.b16 %v8106
      %v8180 = vunpack.c.l.b16 %v8107
      %v8181 = vunpack.c.l.b16 %v8108
      %v8182 = vunpack.c.l.b16 %v8109
      %v8183 = vunpack.c.l.b16 %v8110
      %v8184 = vunpack.c.l.b16 %v8111
      %v8185 = vpack.c.b16 %v8154, %v8153
      %v8186 = vpack.c.b16 %v8156, %v8155
      %v8187 = vpack.c.b16 %v8158, %v8157
      %v8188 = vpack.c.b16 %v8160, %v8159
      %v8189 = vpack.c.b16 %v8162, %v8161
      %v8190 = vpack.c.b16 %v8164, %v8163
      %v8191 = vpack.c.b16 %v8166, %v8165
      %v8192 = vpack.c.b16 %v8168, %v8167
      %v8193 = vpack.c.b16 %v8170, %v8169
      %v8194 = vpack.c.b16 %v8172, %v8171
      %v8195 = vpack.c.b16 %v8174, %v8173
      %v8196 = vpack.c.b16 %v8176, %v8175
      %v8197 = vpack.c.b16 %v8178, %v8177
      %v8198 = vpack.c.b16 %v8180, %v8179
      %v8199 = vpack.c.b16 %v8182, %v8181
      %v8200 = vpack.c.b16 %v8184, %v8183
      %v8209 = vunpack.c.l.b16 %v8113
      %v8210 = vunpack.c.l.b16 %v8114
      %v8211 = vunpack.c.l.b16 %v8115
      %v8212 = vunpack.c.l.b16 %v8116
      %v8213 = vunpack.c.l.b16 %v8117
      %v8214 = vunpack.c.l.b16 %v8118
      %v8215 = vunpack.c.l.b16 %v8119
      %v8216 = vunpack.c.l.b16 %v8120
      %v8217 = vpack.c.b16 %v8210, %v8209
      %v8218 = vpack.c.b16 %v8212, %v8211
      %v8219 = vpack.c.b16 %v8214, %v8213
      %v8220 = vpack.c.b16 %v8216, %v8215
      %v8226 = vsel %vm5868, %v8185, 0
      %v8229 = vsel %vm5868, %v8186, 0
      %v8232 = vsel %vm5868, %v8187, 0
      %v8235 = vsel %vm5868, %v8188, 0
      %v8238 = vsel %vm5868, %v8189, 0
      %v8241 = vsel %vm5868, %v8190, 0
      %v8244 = vsel %vm5868, %v8191, 0
      %v8247 = vsel %vm5868, %v8192, 0
      %v8250 = vsel %vm5868, %v8193, 0
      %v8253 = vsel %vm5868, %v8194, 0
      %v8256 = vsel %vm5868, %v8195, 0
      %v8259 = vsel %vm5868, %v8196, 0
      %v8262 = vsel %vm5868, %v8197, 0
      %v8265 = vsel %vm5868, %v8198, 0
      %v8268 = vsel %vm5868, %v8199, 0
      %v8271 = vsel %vm5868, %v8200, 0
      %8273 = vmatpush.bf16.msra.mxu0 0
      %8274 = vmatpush.bf16.msra.mxu0 0
      %8275 = vmatpush.bf16.msra.mxu0 0
      %8276 = vmatpush.bf16.msra.mxu0 0
      %8277 = vmatpush.bf16.msra.mxu0 %v8220
      %8278 = vmatpush.bf16.msra.mxu0 %v8219
      %8279 = vmatpush.bf16.msra.mxu0 %v8218
      %8280 = vmatpush.bf16.msra.mxu0 %v8217
      %8281 = vmatmul.bf16.gmra.mxu0 %v8226
      %v8282 = vpop.f32.mrf.mxu0
      %v8283 = vadd.f32 0.0, %v8282
      %v8284 = vpop.f32.mrf.mxu0
      %v8285 = vadd.f32 0.0, %v8284
      %8286 = vmatmul.bf16.gmra.mxu0 %v8229
      %v8287 = vpop.f32.mrf.mxu0
      %v8288 = vadd.f32 0.0, %v8287
      %v8289 = vpop.f32.mrf.mxu0
      %v8290 = vadd.f32 0.0, %v8289
      %8291 = vmatmul.bf16.gmra.mxu0 %v8232
      %v8292 = vpop.f32.mrf.mxu0
      %v8293 = vadd.f32 0.0, %v8292
      %v8294 = vpop.f32.mrf.mxu0
      %v8295 = vadd.f32 0.0, %v8294
      %8296 = vmatmul.bf16.gmra.mxu0 %v8235
      %v8297 = vpop.f32.mrf.mxu0
      %v8298 = vadd.f32 0.0, %v8297
      %v8299 = vpop.f32.mrf.mxu0
      %v8300 = vadd.f32 0.0, %v8299
      %8301 = vmatmul.bf16.gmra.mxu0 %v8238
      %v8302 = vpop.f32.mrf.mxu0
      %v8303 = vadd.f32 0.0, %v8302
      %v8304 = vpop.f32.mrf.mxu0
      %v8305 = vadd.f32 0.0, %v8304
      %8306 = vmatmul.bf16.gmra.mxu0 %v8241
      %v8307 = vpop.f32.mrf.mxu0
      %v8308 = vadd.f32 0.0, %v8307
      %v8309 = vpop.f32.mrf.mxu0
      %v8310 = vadd.f32 0.0, %v8309
      %8311 = vmatmul.bf16.gmra.mxu0 %v8244
      %v8312 = vpop.f32.mrf.mxu0
      %v8313 = vadd.f32 0.0, %v8312
      %v8314 = vpop.f32.mrf.mxu0
      %v8315 = vadd.f32 0.0, %v8314
      %8316 = vmatmul.bf16.gmra.mxu0 %v8247
      %v8317 = vpop.f32.mrf.mxu0
      %v8318 = vadd.f32 0.0, %v8317
      %v8319 = vpop.f32.mrf.mxu0
      %v8320 = vadd.f32 0.0, %v8319
      %8321 = vmatmul.bf16.gmra.mxu0 %v8250
      %v8322 = vpop.f32.mrf.mxu0
      %v8323 = vadd.f32 0.0, %v8322
      %v8324 = vpop.f32.mrf.mxu0
      %v8325 = vadd.f32 0.0, %v8324
      %8326 = vmatmul.bf16.gmra.mxu0 %v8253
      %v8327 = vpop.f32.mrf.mxu0
      %v8328 = vadd.f32 0.0, %v8327
      %v8329 = vpop.f32.mrf.mxu0
      %v8330 = vadd.f32 0.0, %v8329
      %8331 = vmatmul.bf16.gmra.mxu0 %v8256
      %v8332 = vpop.f32.mrf.mxu0
      %v8333 = vadd.f32 0.0, %v8332
      %v8334 = vpop.f32.mrf.mxu0
      %v8335 = vadd.f32 0.0, %v8334
      %8336 = vmatmul.bf16.gmra.mxu0 %v8259
      %v8337 = vpop.f32.mrf.mxu0
      %v8338 = vadd.f32 0.0, %v8337
      %v8339 = vpop.f32.mrf.mxu0
      %v8340 = vadd.f32 0.0, %v8339
      %8341 = vmatmul.bf16.gmra.mxu0 %v8262
      %v8342 = vpop.f32.mrf.mxu0
      %v8343 = vadd.f32 0.0, %v8342
      %v8344 = vpop.f32.mrf.mxu0
      %v8345 = vadd.f32 0.0, %v8344
      %8346 = vmatmul.bf16.gmra.mxu0 %v8265
      %v8347 = vpop.f32.mrf.mxu0
      %v8348 = vadd.f32 0.0, %v8347
      %v8349 = vpop.f32.mrf.mxu0
      %v8350 = vadd.f32 0.0, %v8349
      %8351 = vmatmul.bf16.gmra.mxu0 %v8268
      %v8352 = vpop.f32.mrf.mxu0
      %v8353 = vadd.f32 0.0, %v8352
      %v8354 = vpop.f32.mrf.mxu0
      %v8355 = vadd.f32 0.0, %v8354
      %8356 = vmatmul.bf16.gmra.mxu0 %v8271
      %v8357 = vpop.f32.mrf.mxu0
      %v8358 = vadd.f32 0.0, %v8357
      %v8359 = vpop.f32.mrf.mxu0
      %v8360 = vadd.f32 0.0, %v8359
      %8361 = vdwg.mxu0
      %v8362 = vadd.f32 %v8047, %v8283
      %v8363 = vadd.f32 %v8048, %v8285
      %v8364 = vadd.f32 %v8049, %v8288
      %v8365 = vadd.f32 %v8050, %v8290
      %v8366 = vadd.f32 %v8051, %v8293
      %v8367 = vadd.f32 %v8052, %v8295
      %v8368 = vadd.f32 %v8053, %v8298
      %v8369 = vadd.f32 %v8054, %v8300
      %v8370 = vadd.f32 %v8055, %v8303
      %v8371 = vadd.f32 %v8056, %v8305
      %v8372 = vadd.f32 %v8057, %v8308
      %v8373 = vadd.f32 %v8058, %v8310
      %v8374 = vadd.f32 %v8059, %v8313
      %v8375 = vadd.f32 %v8060, %v8315
      %v8376 = vadd.f32 %v8061, %v8318
      %v8377 = vadd.f32 %v8062, %v8320
      %v8378 = vadd.f32 %v8063, %v8323
      %v8379 = vadd.f32 %v8064, %v8325
      %v8380 = vadd.f32 %v8065, %v8328
      %v8381 = vadd.f32 %v8066, %v8330
      %v8382 = vadd.f32 %v8067, %v8333
      %v8383 = vadd.f32 %v8068, %v8335
      %v8384 = vadd.f32 %v8069, %v8338
      %v8385 = vadd.f32 %v8070, %v8340
      %v8386 = vadd.f32 %v8071, %v8343
      %v8387 = vadd.f32 %v8072, %v8345
      %v8388 = vadd.f32 %v8073, %v8348
      %v8389 = vadd.f32 %v8074, %v8350
      %v8390 = vadd.f32 %v8075, %v8353
      %v8391 = vadd.f32 %v8076, %v8355
      %v8392 = vadd.f32 %v8077, %v8358
      %v8393 = vadd.f32 %v8078, %v8360
      %v8394 = vld [vmem:[%s8079] sm:$0xf]
      %v8395 = vld [vmem:[%s8079 + $0x4] sm:$0xf]
      %v8396 = vld [vmem:[%s8079 + $0x8] sm:$0x1]
      %v8397 = vld [vmem:[%s8079 + $0xc] sm:$0xf]
      %v8398 = vld [vmem:[%s8079 + $0x10] sm:$0xf]
      %v8399 = vld [vmem:[%s8079 + $0x14] sm:$0x1]
      %v8400 = vld [vmem:[%s8079 + $0x18] sm:$0xf]
      %v8401 = vld [vmem:[%s8079 + $0x1c] sm:$0xf]
      %v8402 = vld [vmem:[%s8079 + $0x20] sm:$0x1]
      %v8403 = vld [vmem:[%s8079 + $0x24] sm:$0xf]
      %v8404 = vld [vmem:[%s8079 + $0x28] sm:$0xf]
      %v8405 = vld [vmem:[%s8079 + $0x2c] sm:$0x1]
      %v8406 = vld [vmem:[%s8079 + $0x30] sm:$0xf]
      %v8407 = vld [vmem:[%s8079 + $0x34] sm:$0xf]
      %v8408 = vld [vmem:[%s8079 + $0x38] sm:$0x1]
      %v8409 = vld [vmem:[%s8079 + $0x3c] sm:$0xf]
      %v8410 = vld [vmem:[%s8079 + $0x40] sm:$0xf]
      %v8411 = vld [vmem:[%s8079 + $0x44] sm:$0x1]
      %v8412 = vld [vmem:[%s8079 + $0x48] sm:$0xf]
      %v8413 = vld [vmem:[%s8079 + $0x4c] sm:$0xf]
      %v8414 = vld [vmem:[%s8079 + $0x50] sm:$0x1]
      %v8415 = vld [vmem:[%s8079 + $0x54] sm:$0xf]
      %v8416 = vld [vmem:[%s8079 + $0x58] sm:$0xf]
      %v8417 = vld [vmem:[%s8079 + $0x5c] sm:$0x1]
      %v8418 = vld [vmem:[%s8079 + $0x60] sm:$0xf]
      %v8419 = vld [vmem:[%s8079 + $0x64] sm:$0xf]
      %v8420 = vld [vmem:[%s8079 + $0x68] sm:$0x1]
      %v8421 = vld [vmem:[%s8079 + $0x6c] sm:$0xf]
      %v8422 = vld [vmem:[%s8079 + $0x70] sm:$0xf]
      %v8423 = vld [vmem:[%s8079 + $0x74] sm:$0x1]
      %v8424 = vld [vmem:[%s8079 + $0x78] sm:$0xf]
      %v8425 = vld [vmem:[%s8079 + $0x7c] sm:$0xf]
      %v8426 = vld [vmem:[%s8079 + $0x80] sm:$0x1]
      %v8427 = vld [vmem:[%s8079 + $0x84] sm:$0xf]
      %v8428 = vld [vmem:[%s8079 + $0x88] sm:$0xf]
      %v8429 = vld [vmem:[%s8079 + $0x8c] sm:$0x1]
      %v8430 = vld [vmem:[%s8079 + $0x90] sm:$0xf]
      %v8431 = vld [vmem:[%s8079 + $0x94] sm:$0xf]
      %v8432 = vld [vmem:[%s8079 + $0x98] sm:$0x1]
      %v8433 = vld [vmem:[%s8079 + $0x9c] sm:$0xf]
      %v8434 = vld [vmem:[%s8079 + $0xa0] sm:$0xf]
      %v8435 = vld [vmem:[%s8079 + $0xa4] sm:$0x1]
      %v8436 = vld [vmem:[%s8079 + $0xa8] sm:$0xf]
      %v8437 = vld [vmem:[%s8079 + $0xac] sm:$0xf]
      %v8438 = vld [vmem:[%s8079 + $0xb0] sm:$0x1]
      %v8439 = vld [vmem:[%s8079 + $0xb4] sm:$0xf]
      %v8440 = vld [vmem:[%s8079 + $0xb8] sm:$0xf]
      %v8441 = vld [vmem:[%s8079 + $0xbc] sm:$0x1]
      %v8443 = vshrl.u32 %v8394, 16
      %v8445 = vrot.slane %v8443, 4
      %v8446 = vshll.u32 %v8394, 16
      %v8448 = vrot.slane %v8446, 5
      %v8449 = vor.u32 %v8445, %v8448
      %v8450 = vrot.slane %v8449, 4
      %v8452 = vshll.u32 %v8395, 16
      %v8454 = vrot.slane %v8452, 5
      %v8455 = vsel %vm917, %v8450, %v8454
      %v8456 = vshrl.u32 %v8395, 16
      %v8458 = vrot.slane %v8456, 4
      %v8459 = vor.u32 %v8458, %v8454
      %v8460 = vrot.slane %v8459, 4
      %v8462 = vshll.u32 %v8396, 16
      %v8464 = vrot.slane %v8462, 5
      %v8465 = vsel %vm917, %v8460, %v8464
      %v8467 = vshrl.u32 %v8397, 16
      %v8469 = vrot.slane %v8467, 4
      %v8470 = vshll.u32 %v8397, 16
      %v8472 = vrot.slane %v8470, 5
      %v8473 = vor.u32 %v8469, %v8472
      %v8474 = vrot.slane %v8473, 4
      %v8476 = vshll.u32 %v8398, 16
      %v8478 = vrot.slane %v8476, 5
      %v8479 = vsel %vm917, %v8474, %v8478
      %v8480 = vshrl.u32 %v8398, 16
      %v8482 = vrot.slane %v8480, 4
      %v8483 = vor.u32 %v8482, %v8478
      %v8484 = vrot.slane %v8483, 4
      %v8486 = vshll.u32 %v8399, 16
      %v8488 = vrot.slane %v8486, 5
      %v8489 = vsel %vm917, %v8484, %v8488
      %v8491 = vshrl.u32 %v8400, 16
      %v8493 = vrot.slane %v8491, 4
      %v8494 = vshll.u32 %v8400, 16
      %v8496 = vrot.slane %v8494, 5
      %v8497 = vor.u32 %v8493, %v8496
      %v8498 = vrot.slane %v8497, 4
      %v8500 = vshll.u32 %v8401, 16
      %v8502 = vrot.slane %v8500, 5
      %v8503 = vsel %vm917, %v8498, %v8502
      %v8504 = vshrl.u32 %v8401, 16
      %v8506 = vrot.slane %v8504, 4
      %v8507 = vor.u32 %v8506, %v8502
      %v8508 = vrot.slane %v8507, 4
      %v8510 = vshll.u32 %v8402, 16
      %v8512 = vrot.slane %v8510, 5
      %v8513 = vsel %vm917, %v8508, %v8512
      %v8515 = vshrl.u32 %v8403, 16
      %v8517 = vrot.slane %v8515, 4
      %v8518 = vshll.u32 %v8403, 16
      %v8520 = vrot.slane %v8518, 5
      %v8521 = vor.u32 %v8517, %v8520
      %v8522 = vrot.slane %v8521, 4
      %v8524 = vshll.u32 %v8404, 16
      %v8526 = vrot.slane %v8524, 5
      %v8527 = vsel %vm917, %v8522, %v8526
      %v8528 = vshrl.u32 %v8404, 16
      %v8530 = vrot.slane %v8528, 4
      %v8531 = vor.u32 %v8530, %v8526
      %v8532 = vrot.slane %v8531, 4
      %v8534 = vshll.u32 %v8405, 16
      %v8536 = vrot.slane %v8534, 5
      %v8537 = vsel %vm917, %v8532, %v8536
      %v8539 = vshrl.u32 %v8406, 16
      %v8541 = vrot.slane %v8539, 4
      %v8542 = vshll.u32 %v8406, 16
      %v8544 = vrot.slane %v8542, 5
      %v8545 = vor.u32 %v8541, %v8544
      %v8546 = vrot.slane %v8545, 4
      %v8548 = vshll.u32 %v8407, 16
      %v8550 = vrot.slane %v8548, 5
      %v8551 = vsel %vm917, %v8546, %v8550
      %v8552 = vshrl.u32 %v8407, 16
      %v8554 = vrot.slane %v8552, 4
      %v8555 = vor.u32 %v8554, %v8550
      %v8556 = vrot.slane %v8555, 4
      %v8558 = vshll.u32 %v8408, 16
      %v8560 = vrot.slane %v8558, 5
      %v8561 = vsel %vm917, %v8556, %v8560
      %v8563 = vshrl.u32 %v8409, 16
      %v8565 = vrot.slane %v8563, 4
      %v8566 = vshll.u32 %v8409, 16
      %v8568 = vrot.slane %v8566, 5
      %v8569 = vor.u32 %v8565, %v8568
      %v8570 = vrot.slane %v8569, 4
      %v8572 = vshll.u32 %v8410, 16
      %v8574 = vrot.slane %v8572, 5
      %v8575 = vsel %vm917, %v8570, %v8574
      %v8576 = vshrl.u32 %v8410, 16
      %v8578 = vrot.slane %v8576, 4
      %v8579 = vor.u32 %v8578, %v8574
      %v8580 = vrot.slane %v8579, 4
      %v8582 = vshll.u32 %v8411, 16
      %v8584 = vrot.slane %v8582, 5
      %v8585 = vsel %vm917, %v8580, %v8584
      %v8587 = vshrl.u32 %v8412, 16
      %v8589 = vrot.slane %v8587, 4
      %v8590 = vshll.u32 %v8412, 16
      %v8592 = vrot.slane %v8590, 5
      %v8593 = vor.u32 %v8589, %v8592
      %v8594 = vrot.slane %v8593, 4
      %v8596 = vshll.u32 %v8413, 16
      %v8598 = vrot.slane %v8596, 5
      %v8599 = vsel %vm917, %v8594, %v8598
      %v8600 = vshrl.u32 %v8413, 16
      %v8602 = vrot.slane %v8600, 4
      %v8603 = vor.u32 %v8602, %v8598
      %v8604 = vrot.slane %v8603, 4
      %v8606 = vshll.u32 %v8414, 16
      %v8608 = vrot.slane %v8606, 5
      %v8609 = vsel %vm917, %v8604, %v8608
      %v8611 = vshrl.u32 %v8415, 16
      %v8613 = vrot.slane %v8611, 4
      %v8614 = vshll.u32 %v8415, 16
      %v8616 = vrot.slane %v8614, 5
      %v8617 = vor.u32 %v8613, %v8616
      %v8618 = vrot.slane %v8617, 4
      %v8620 = vshll.u32 %v8416, 16
      %v8622 = vrot.slane %v8620, 5
      %v8623 = vsel %vm917, %v8618, %v8622
      %v8624 = vshrl.u32 %v8416, 16
      %v8626 = vrot.slane %v8624, 4
      %v8627 = vor.u32 %v8626, %v8622
      %v8628 = vrot.slane %v8627, 4
      %v8630 = vshll.u32 %v8417, 16
      %v8632 = vrot.slane %v8630, 5
      %v8633 = vsel %vm917, %v8628, %v8632
      %v8635 = vshrl.u32 %v8418, 16
      %v8637 = vrot.slane %v8635, 4
      %v8638 = vshll.u32 %v8418, 16
      %v8640 = vrot.slane %v8638, 5
      %v8641 = vor.u32 %v8637, %v8640
      %v8642 = vrot.slane %v8641, 4
      %v8644 = vshll.u32 %v8419, 16
      %v8646 = vrot.slane %v8644, 5
      %v8647 = vsel %vm917, %v8642, %v8646
      %v8648 = vshrl.u32 %v8419, 16
      %v8650 = vrot.slane %v8648, 4
      %v8651 = vor.u32 %v8650, %v8646
      %v8652 = vrot.slane %v8651, 4
      %v8654 = vshll.u32 %v8420, 16
      %v8656 = vrot.slane %v8654, 5
      %v8657 = vsel %vm917, %v8652, %v8656
      %v8659 = vshrl.u32 %v8421, 16
      %v8661 = vrot.slane %v8659, 4
      %v8662 = vshll.u32 %v8421, 16
      %v8664 = vrot.slane %v8662, 5
      %v8665 = vor.u32 %v8661, %v8664
      %v8666 = vrot.slane %v8665, 4
      %v8668 = vshll.u32 %v8422, 16
      %v8670 = vrot.slane %v8668, 5
      %v8671 = vsel %vm917, %v8666, %v8670
      %v8672 = vshrl.u32 %v8422, 16
      %v8674 = vrot.slane %v8672, 4
      %v8675 = vor.u32 %v8674, %v8670
      %v8676 = vrot.slane %v8675, 4
      %v8678 = vshll.u32 %v8423, 16
      %v8680 = vrot.slane %v8678, 5
      %v8681 = vsel %vm917, %v8676, %v8680
      %v8683 = vshrl.u32 %v8424, 16
      %v8685 = vrot.slane %v8683, 4
      %v8686 = vshll.u32 %v8424, 16
      %v8688 = vrot.slane %v8686, 5
      %v8689 = vor.u32 %v8685, %v8688
      %v8690 = vrot.slane %v8689, 4
      %v8692 = vshll.u32 %v8425, 16
      %v8694 = vrot.slane %v8692, 5
      %v8695 = vsel %vm917, %v8690, %v8694
      %v8696 = vshrl.u32 %v8425, 16
      %v8698 = vrot.slane %v8696, 4
      %v8699 = vor.u32 %v8698, %v8694
      %v8700 = vrot.slane %v8699, 4
      %v8702 = vshll.u32 %v8426, 16
      %v8704 = vrot.slane %v8702, 5
      %v8705 = vsel %vm917, %v8700, %v8704
      %v8707 = vshrl.u32 %v8427, 16
      %v8709 = vrot.slane %v8707, 4
      %v8710 = vshll.u32 %v8427, 16
      %v8712 = vrot.slane %v8710, 5
      %v8713 = vor.u32 %v8709, %v8712
      %v8714 = vrot.slane %v8713, 4
      %v8716 = vshll.u32 %v8428, 16
      %v8718 = vrot.slane %v8716, 5
      %v8719 = vsel %vm917, %v8714, %v8718
      %v8720 = vshrl.u32 %v8428, 16
      %v8722 = vrot.slane %v8720, 4
      %v8723 = vor.u32 %v8722, %v8718
      %v8724 = vrot.slane %v8723, 4
      %v8726 = vshll.u32 %v8429, 16
      %v8728 = vrot.slane %v8726, 5
      %v8729 = vsel %vm917, %v8724, %v8728
      %v8731 = vshrl.u32 %v8430, 16
      %v8733 = vrot.slane %v8731, 4
      %v8734 = vshll.u32 %v8430, 16
      %v8736 = vrot.slane %v8734, 5
      %v8737 = vor.u32 %v8733, %v8736
      %v8738 = vrot.slane %v8737, 4
      %v8740 = vshll.u32 %v8431, 16
      %v8742 = vrot.slane %v8740, 5
      %v8743 = vsel %vm917, %v8738, %v8742
      %v8744 = vshrl.u32 %v8431, 16
      %v8746 = vrot.slane %v8744, 4
      %v8747 = vor.u32 %v8746, %v8742
      %v8748 = vrot.slane %v8747, 4
      %v8750 = vshll.u32 %v8432, 16
      %v8752 = vrot.slane %v8750, 5
      %v8753 = vsel %vm917, %v8748, %v8752
      %v8755 = vshrl.u32 %v8433, 16
      %v8757 = vrot.slane %v8755, 4
      %v8758 = vshll.u32 %v8433, 16
      %v8760 = vrot.slane %v8758, 5
      %v8761 = vor.u32 %v8757, %v8760
      %v8762 = vrot.slane %v8761, 4
      %v8764 = vshll.u32 %v8434, 16
      %v8766 = vrot.slane %v8764, 5
      %v8767 = vsel %vm917, %v8762, %v8766
      %v8768 = vshrl.u32 %v8434, 16
      %v8770 = vrot.slane %v8768, 4
      %v8771 = vor.u32 %v8770, %v8766
      %v8772 = vrot.slane %v8771, 4
      %v8774 = vshll.u32 %v8435, 16
      %v8776 = vrot.slane %v8774, 5
      %v8777 = vsel %vm917, %v8772, %v8776
      %v8779 = vshrl.u32 %v8436, 16
      %v8781 = vrot.slane %v8779, 4
      %v8782 = vshll.u32 %v8436, 16
      %v8784 = vrot.slane %v8782, 5
      %v8785 = vor.u32 %v8781, %v8784
      %v8786 = vrot.slane %v8785, 4
      %v8788 = vshll.u32 %v8437, 16
      %v8790 = vrot.slane %v8788, 5
      %v8791 = vsel %vm917, %v8786, %v8790
      %v8792 = vshrl.u32 %v8437, 16
      %v8794 = vrot.slane %v8792, 4
      %v8795 = vor.u32 %v8794, %v8790
      %v8796 = vrot.slane %v8795, 4
      %v8798 = vshll.u32 %v8438, 16
      %v8800 = vrot.slane %v8798, 5
      %v8801 = vsel %vm917, %v8796, %v8800
      %v8803 = vshrl.u32 %v8439, 16
      %v8805 = vrot.slane %v8803, 4
      %v8806 = vshll.u32 %v8439, 16
      %v8808 = vrot.slane %v8806, 5
      %v8809 = vor.u32 %v8805, %v8808
      %v8810 = vrot.slane %v8809, 4
      %v8812 = vshll.u32 %v8440, 16
      %v8814 = vrot.slane %v8812, 5
      %v8815 = vsel %vm917, %v8810, %v8814
      %v8816 = vshrl.u32 %v8440, 16
      %v8818 = vrot.slane %v8816, 4
      %v8819 = vor.u32 %v8818, %v8814
      %v8820 = vrot.slane %v8819, 4
      %v8822 = vshll.u32 %v8441, 16
      %v8824 = vrot.slane %v8822, 5
      %v8825 = vsel %vm917, %v8820, %v8824
      %s8826 = scalar_lea.vmem %s3, 224
      %v8827 = vld [vmem:[%s8826] sm:$0xf]
      %v8828 = vld [vmem:[%s8826 + $0x4] sm:$0xf]
      %v8829 = vld [vmem:[%s8826 + $0x8] sm:$0xf]
      %v8830 = vld [vmem:[%s8826 + $0xc] sm:$0xf]
      %v8831 = vld [vmem:[%s8826 + $0x10] sm:$0xf]
      %v8832 = vld [vmem:[%s8826 + $0x14] sm:$0xf]
      %v8833 = vld [vmem:[%s8826 + $0x18] sm:$0xf]
      %v8834 = vld [vmem:[%s8826 + $0x1c] sm:$0xf]
      %v8835 = vunpack.c.l.b16 %v8455
      %v8836 = vunpack.c.l.b16 %v8465
      %v8837 = vunpack.c.l.b16 %v8479
      %v8838 = vunpack.c.l.b16 %v8489
      %v8839 = vunpack.c.l.b16 %v8503
      %v8840 = vunpack.c.l.b16 %v8513
      %v8841 = vunpack.c.l.b16 %v8527
      %v8842 = vunpack.c.l.b16 %v8537
      %v8843 = vunpack.c.l.b16 %v8551
      %v8844 = vunpack.c.l.b16 %v8561
      %v8845 = vunpack.c.l.b16 %v8575
      %v8846 = vunpack.c.l.b16 %v8585
      %v8847 = vunpack.c.l.b16 %v8599
      %v8848 = vunpack.c.l.b16 %v8609
      %v8849 = vunpack.c.l.b16 %v8623
      %v8850 = vunpack.c.l.b16 %v8633
      %v8851 = vunpack.c.l.b16 %v8647
      %v8852 = vunpack.c.l.b16 %v8657
      %v8853 = vunpack.c.l.b16 %v8671
      %v8854 = vunpack.c.l.b16 %v8681
      %v8855 = vunpack.c.l.b16 %v8695
      %v8856 = vunpack.c.l.b16 %v8705
      %v8857 = vunpack.c.l.b16 %v8719
      %v8858 = vunpack.c.l.b16 %v8729
      %v8859 = vunpack.c.l.b16 %v8743
      %v8860 = vunpack.c.l.b16 %v8753
      %v8861 = vunpack.c.l.b16 %v8767
      %v8862 = vunpack.c.l.b16 %v8777
      %v8863 = vunpack.c.l.b16 %v8791
      %v8864 = vunpack.c.l.b16 %v8801
      %v8865 = vunpack.c.l.b16 %v8815
      %v8866 = vunpack.c.l.b16 %v8825
      %v8867 = vpack.c.b16 %v8836, %v8835
      %v8868 = vpack.c.b16 %v8838, %v8837
      %v8869 = vpack.c.b16 %v8840, %v8839
      %v8870 = vpack.c.b16 %v8842, %v8841
      %v8871 = vpack.c.b16 %v8844, %v8843
      %v8872 = vpack.c.b16 %v8846, %v8845
      %v8873 = vpack.c.b16 %v8848, %v8847
      %v8874 = vpack.c.b16 %v8850, %v8849
      %v8875 = vpack.c.b16 %v8852, %v8851
      %v8876 = vpack.c.b16 %v8854, %v8853
      %v8877 = vpack.c.b16 %v8856, %v8855
      %v8878 = vpack.c.b16 %v8858, %v8857
      %v8879 = vpack.c.b16 %v8860, %v8859
      %v8880 = vpack.c.b16 %v8862, %v8861
      %v8881 = vpack.c.b16 %v8864, %v8863
      %v8882 = vpack.c.b16 %v8866, %v8865
      %v8891 = vunpack.c.l.b16 %v8827
      %v8892 = vunpack.c.l.b16 %v8828
      %v8893 = vunpack.c.l.b16 %v8829
      %v8894 = vunpack.c.l.b16 %v8830
      %v8895 = vunpack.c.l.b16 %v8831
      %v8896 = vunpack.c.l.b16 %v8832
      %v8897 = vunpack.c.l.b16 %v8833
      %v8898 = vunpack.c.l.b16 %v8834
      %v8899 = vpack.c.b16 %v8892, %v8891
      %v8900 = vpack.c.b16 %v8894, %v8893
      %v8901 = vpack.c.b16 %v8896, %v8895
      %v8902 = vpack.c.b16 %v8898, %v8897
      %v8908 = vsel %vm5868, %v8867, 0
      %v8911 = vsel %vm5868, %v8868, 0
      %v8914 = vsel %vm5868, %v8869, 0
      %v8917 = vsel %vm5868, %v8870, 0
      %v8920 = vsel %vm5868, %v8871, 0
      %v8923 = vsel %vm5868, %v8872, 0
      %v8926 = vsel %vm5868, %v8873, 0
      %v8929 = vsel %vm5868, %v8874, 0
      %v8932 = vsel %vm5868, %v8875, 0
      %v8935 = vsel %vm5868, %v8876, 0
      %v8938 = vsel %vm5868, %v8877, 0
      %v8941 = vsel %vm5868, %v8878, 0
      %v8944 = vsel %vm5868, %v8879, 0
      %v8947 = vsel %vm5868, %v8880, 0
      %v8950 = vsel %vm5868, %v8881, 0
      %v8953 = vsel %vm5868, %v8882, 0
      %8955 = vmatpush.bf16.msra.mxu0 0
      %8956 = vmatpush.bf16.msra.mxu0 0
      %8957 = vmatpush.bf16.msra.mxu0 0
      %8958 = vmatpush.bf16.msra.mxu0 0
      %8959 = vmatpush.bf16.msra.mxu0 %v8902
      %8960 = vmatpush.bf16.msra.mxu0 %v8901
      %8961 = vmatpush.bf16.msra.mxu0 %v8900
      %8962 = vmatpush.bf16.msra.mxu0 %v8899
      %8963 = vmatmul.bf16.gmra.mxu0 %v8908
      %v8964 = vpop.f32.mrf.mxu0
      %v8965 = vadd.f32 0.0, %v8964
      %v8966 = vpop.f32.mrf.mxu0
      %v8967 = vadd.f32 0.0, %v8966
      %8968 = vmatmul.bf16.gmra.mxu0 %v8911
      %v8969 = vpop.f32.mrf.mxu0
      %v8970 = vadd.f32 0.0, %v8969
      %v8971 = vpop.f32.mrf.mxu0
      %v8972 = vadd.f32 0.0, %v8971
      %8973 = vmatmul.bf16.gmra.mxu0 %v8914
      %v8974 = vpop.f32.mrf.mxu0
      %v8975 = vadd.f32 0.0, %v8974
      %v8976 = vpop.f32.mrf.mxu0
      %v8977 = vadd.f32 0.0, %v8976
      %8978 = vmatmul.bf16.gmra.mxu0 %v8917
      %v8979 = vpop.f32.mrf.mxu0
      %v8980 = vadd.f32 0.0, %v8979
      %v8981 = vpop.f32.mrf.mxu0
      %v8982 = vadd.f32 0.0, %v8981
      %8983 = vmatmul.bf16.gmra.mxu0 %v8920
      %v8984 = vpop.f32.mrf.mxu0
      %v8985 = vadd.f32 0.0, %v8984
      %v8986 = vpop.f32.mrf.mxu0
      %v8987 = vadd.f32 0.0, %v8986
      %8988 = vmatmul.bf16.gmra.mxu0 %v8923
      %v8989 = vpop.f32.mrf.mxu0
      %v8990 = vadd.f32 0.0, %v8989
      %v8991 = vpop.f32.mrf.mxu0
      %v8992 = vadd.f32 0.0, %v8991
      %8993 = vmatmul.bf16.gmra.mxu0 %v8926
      %v8994 = vpop.f32.mrf.mxu0
      %v8995 = vadd.f32 0.0, %v8994
      %v8996 = vpop.f32.mrf.mxu0
      %v8997 = vadd.f32 0.0, %v8996
      %8998 = vmatmul.bf16.gmra.mxu0 %v8929
      %v8999 = vpop.f32.mrf.mxu0
      %v9000 = vadd.f32 0.0, %v8999
      %v9001 = vpop.f32.mrf.mxu0
      %v9002 = vadd.f32 0.0, %v9001
      %9003 = vmatmul.bf16.gmra.mxu0 %v8932
      %v9004 = vpop.f32.mrf.mxu0
      %v9005 = vadd.f32 0.0, %v9004
      %v9006 = vpop.f32.mrf.mxu0
      %v9007 = vadd.f32 0.0, %v9006
      %9008 = vmatmul.bf16.gmra.mxu0 %v8935
      %v9009 = vpop.f32.mrf.mxu0
      %v9010 = vadd.f32 0.0, %v9009
      %v9011 = vpop.f32.mrf.mxu0
      %v9012 = vadd.f32 0.0, %v9011
      %9013 = vmatmul.bf16.gmra.mxu0 %v8938
      %v9014 = vpop.f32.mrf.mxu0
      %v9015 = vadd.f32 0.0, %v9014
      %v9016 = vpop.f32.mrf.mxu0
      %v9017 = vadd.f32 0.0, %v9016
      %9018 = vmatmul.bf16.gmra.mxu0 %v8941
      %v9019 = vpop.f32.mrf.mxu0
      %v9020 = vadd.f32 0.0, %v9019
      %v9021 = vpop.f32.mrf.mxu0
      %v9022 = vadd.f32 0.0, %v9021
      %9023 = vmatmul.bf16.gmra.mxu0 %v8944
      %v9024 = vpop.f32.mrf.mxu0
      %v9025 = vadd.f32 0.0, %v9024
      %v9026 = vpop.f32.mrf.mxu0
      %v9027 = vadd.f32 0.0, %v9026
      %9028 = vmatmul.bf16.gmra.mxu0 %v8947
      %v9029 = vpop.f32.mrf.mxu0
      %v9030 = vadd.f32 0.0, %v9029
      %v9031 = vpop.f32.mrf.mxu0
      %v9032 = vadd.f32 0.0, %v9031
      %9033 = vmatmul.bf16.gmra.mxu0 %v8950
      %v9034 = vpop.f32.mrf.mxu0
      %v9035 = vadd.f32 0.0, %v9034
      %v9036 = vpop.f32.mrf.mxu0
      %v9037 = vadd.f32 0.0, %v9036
      %9038 = vmatmul.bf16.gmra.mxu0 %v8953
      %v9039 = vpop.f32.mrf.mxu0
      %v9040 = vadd.f32 0.0, %v9039
      %v9041 = vpop.f32.mrf.mxu0
      %v9042 = vadd.f32 0.0, %v9041
      %9043 = vdwg.mxu0
      %v9044 = vadd.f32 %v8362, %v8965
      %v9045 = vadd.f32 %v8363, %v8967
      %v9046 = vadd.f32 %v8364, %v8970
      %v9047 = vadd.f32 %v8365, %v8972
      %v9048 = vadd.f32 %v8366, %v8975
      %v9049 = vadd.f32 %v8367, %v8977
      %v9050 = vadd.f32 %v8368, %v8980
      %v9051 = vadd.f32 %v8369, %v8982
      %v9052 = vadd.f32 %v8370, %v8985
      %v9053 = vadd.f32 %v8371, %v8987
      %v9054 = vadd.f32 %v8372, %v8990
      %v9055 = vadd.f32 %v8373, %v8992
      %v9056 = vadd.f32 %v8374, %v8995
      %v9057 = vadd.f32 %v8375, %v8997
      %v9058 = vadd.f32 %v8376, %v9000
      %v9059 = vadd.f32 %v8377, %v9002
      %v9060 = vadd.f32 %v8378, %v9005
      %v9061 = vadd.f32 %v8379, %v9007
      %v9062 = vadd.f32 %v8380, %v9010
      %v9063 = vadd.f32 %v8381, %v9012
      %v9064 = vadd.f32 %v8382, %v9015
      %v9065 = vadd.f32 %v8383, %v9017
      %v9066 = vadd.f32 %v8384, %v9020
      %v9067 = vadd.f32 %v8385, %v9022
      %v9068 = vadd.f32 %v8386, %v9025
      %v9069 = vadd.f32 %v8387, %v9027
      %v9070 = vadd.f32 %v8388, %v9030
      %v9071 = vadd.f32 %v8389, %v9032
      %v9072 = vadd.f32 %v8390, %v9035
      %v9073 = vadd.f32 %v8391, %v9037
      %v9074 = vadd.f32 %v8392, %v9040
      %v9075 = vadd.f32 %v8393, %v9042
      %v9076 = vld [vmem:[%s8079] sm:$0xe]
      %v9077 = vld [vmem:[%s8079 + $0xc] sm:$0xe]
      %v9078 = vld [vmem:[%s8079 + $0x18] sm:$0xe]
      %v9079 = vld [vmem:[%s8079 + $0x24] sm:$0xe]
      %v9080 = vld [vmem:[%s8079 + $0x30] sm:$0xe]
      %v9081 = vld [vmem:[%s8079 + $0x3c] sm:$0xe]
      %v9082 = vld [vmem:[%s8079 + $0x48] sm:$0xe]
      %v9083 = vld [vmem:[%s8079 + $0x54] sm:$0xe]
      %v9084 = vld [vmem:[%s8079 + $0x60] sm:$0xe]
      %v9085 = vld [vmem:[%s8079 + $0x6c] sm:$0xe]
      %v9086 = vld [vmem:[%s8079 + $0x78] sm:$0xe]
      %v9087 = vld [vmem:[%s8079 + $0x84] sm:$0xe]
      %v9088 = vld [vmem:[%s8079 + $0x90] sm:$0xe]
      %v9089 = vld [vmem:[%s8079 + $0x9c] sm:$0xe]
      %v9090 = vld [vmem:[%s8079 + $0xa8] sm:$0xe]
      %v9091 = vld [vmem:[%s8079 + $0xb4] sm:$0xe]
      %v9140 = vrot.slane %v9076, 5
      %v9141 = vrot.slane %v9140, 4
      %v9142 = vrot.slane %v8395, 5
      %v9143 = vsel %vm1770, %v9141, %v9142
      %v9144 = vrot.slane %v9142, 4
      %v9145 = vrot.slane %v8396, 5
      %v9146 = vsel %vm1770, %v9144, %v9145
      %v9147 = vrot.slane %v9077, 5
      %v9148 = vrot.slane %v9147, 4
      %v9149 = vrot.slane %v8398, 5
      %v9150 = vsel %vm1770, %v9148, %v9149
      %v9151 = vrot.slane %v9149, 4
      %v9152 = vrot.slane %v8399, 5
      %v9153 = vsel %vm1770, %v9151, %v9152
      %v9154 = vrot.slane %v9078, 5
      %v9155 = vrot.slane %v9154, 4
      %v9156 = vrot.slane %v8401, 5
      %v9157 = vsel %vm1770, %v9155, %v9156
      %v9158 = vrot.slane %v9156, 4
      %v9159 = vrot.slane %v8402, 5
      %v9160 = vsel %vm1770, %v9158, %v9159
      %v9161 = vrot.slane %v9079, 5
      %v9162 = vrot.slane %v9161, 4
      %v9163 = vrot.slane %v8404, 5
      %v9164 = vsel %vm1770, %v9162, %v9163
      %v9165 = vrot.slane %v9163, 4
      %v9166 = vrot.slane %v8405, 5
      %v9167 = vsel %vm1770, %v9165, %v9166
      %v9168 = vrot.slane %v9080, 5
      %v9169 = vrot.slane %v9168, 4
      %v9170 = vrot.slane %v8407, 5
      %v9171 = vsel %vm1770, %v9169, %v9170
      %v9172 = vrot.slane %v9170, 4
      %v9173 = vrot.slane %v8408, 5
      %v9174 = vsel %vm1770, %v9172, %v9173
      %v9175 = vrot.slane %v9081, 5
      %v9176 = vrot.slane %v9175, 4
      %v9177 = vrot.slane %v8410, 5
      %v9178 = vsel %vm1770, %v9176, %v9177
      %v9179 = vrot.slane %v9177, 4
      %v9180 = vrot.slane %v8411, 5
      %v9181 = vsel %vm1770, %v9179, %v9180
      %v9182 = vrot.slane %v9082, 5
      %v9183 = vrot.slane %v9182, 4
      %v9184 = vrot.slane %v8413, 5
      %v9185 = vsel %vm1770, %v9183, %v9184
      %v9186 = vrot.slane %v9184, 4
      %v9187 = vrot.slane %v8414, 5
      %v9188 = vsel %vm1770, %v9186, %v9187
      %v9189 = vrot.slane %v9083, 5
      %v9190 = vrot.slane %v9189, 4
      %v9191 = vrot.slane %v8416, 5
      %v9192 = vsel %vm1770, %v9190, %v9191
      %v9193 = vrot.slane %v9191, 4
      %v9194 = vrot.slane %v8417, 5
      %v9195 = vsel %vm1770, %v9193, %v9194
      %v9196 = vrot.slane %v9084, 5
      %v9197 = vrot.slane %v9196, 4
      %v9198 = vrot.slane %v8419, 5
      %v9199 = vsel %vm1770, %v9197, %v9198
      %v9200 = vrot.slane %v9198, 4
      %v9201 = vrot.slane %v8420, 5
      %v9202 = vsel %vm1770, %v9200, %v9201
      %v9203 = vrot.slane %v9085, 5
      %v9204 = vrot.slane %v9203, 4
      %v9205 = vrot.slane %v8422, 5
      %v9206 = vsel %vm1770, %v9204, %v9205
      %v9207 = vrot.slane %v9205, 4
      %v9208 = vrot.slane %v8423, 5
      %v9209 = vsel %vm1770, %v9207, %v9208
      %v9210 = vrot.slane %v9086, 5
      %v9211 = vrot.slane %v9210, 4
      %v9212 = vrot.slane %v8425, 5
      %v9213 = vsel %vm1770, %v9211, %v9212
      %v9214 = vrot.slane %v9212, 4
      %v9215 = vrot.slane %v8426, 5
      %v9216 = vsel %vm1770, %v9214, %v9215
      %v9217 = vrot.slane %v9087, 5
      %v9218 = vrot.slane %v9217, 4
      %v9219 = vrot.slane %v8428, 5
      %v9220 = vsel %vm1770, %v9218, %v9219
      %v9221 = vrot.slane %v9219, 4
      %v9222 = vrot.slane %v8429, 5
      %v9223 = vsel %vm1770, %v9221, %v9222
      %v9224 = vrot.slane %v9088, 5
      %v9225 = vrot.slane %v9224, 4
      %v9226 = vrot.slane %v8431, 5
      %v9227 = vsel %vm1770, %v9225, %v9226
      %v9228 = vrot.slane %v9226, 4
      %v9229 = vrot.slane %v8432, 5
      %v9230 = vsel %vm1770, %v9228, %v9229
      %v9231 = vrot.slane %v9089, 5
      %v9232 = vrot.slane %v9231, 4
      %v9233 = vrot.slane %v8434, 5
      %v9234 = vsel %vm1770, %v9232, %v9233
      %v9235 = vrot.slane %v9233, 4
      %v9236 = vrot.slane %v8435, 5
      %v9237 = vsel %vm1770, %v9235, %v9236
      %v9238 = vrot.slane %v9090, 5
      %v9239 = vrot.slane %v9238, 4
      %v9240 = vrot.slane %v8437, 5
      %v9241 = vsel %vm1770, %v9239, %v9240
      %v9242 = vrot.slane %v9240, 4
      %v9243 = vrot.slane %v8438, 5
      %v9244 = vsel %vm1770, %v9242, %v9243
      %v9245 = vrot.slane %v9091, 5
      %v9246 = vrot.slane %v9245, 4
      %v9247 = vrot.slane %v8440, 5
      %v9248 = vsel %vm1770, %v9246, %v9247
      %v9249 = vrot.slane %v9247, 4
      %v9250 = vrot.slane %v8441, 5
      %v9251 = vsel %vm1770, %v9249, %v9250
      %s9252 = scalar_lea.vmem %s3, 256
      %v9253 = vld [vmem:[%s9252] sm:$0xf]
      %v9254 = vld [vmem:[%s9252 + $0x4] sm:$0xf]
      %v9255 = vld [vmem:[%s9252 + $0x8] sm:$0xf]
      %v9256 = vld [vmem:[%s9252 + $0xc] sm:$0xf]
      %v9257 = vld [vmem:[%s9252 + $0x10] sm:$0xf]
      %v9258 = vld [vmem:[%s9252 + $0x14] sm:$0xf]
      %v9259 = vld [vmem:[%s9252 + $0x18] sm:$0xf]
      %v9260 = vld [vmem:[%s9252 + $0x1c] sm:$0xf]
      %v9261 = vunpack.c.l.b16 %v9143
      %v9262 = vunpack.c.l.b16 %v9146
      %v9263 = vunpack.c.l.b16 %v9150
      %v9264 = vunpack.c.l.b16 %v9153
      %v9265 = vunpack.c.l.b16 %v9157
      %v9266 = vunpack.c.l.b16 %v9160
      %v9267 = vunpack.c.l.b16 %v9164
      %v9268 = vunpack.c.l.b16 %v9167
      %v9269 = vunpack.c.l.b16 %v9171
      %v9270 = vunpack.c.l.b16 %v9174
      %v9271 = vunpack.c.l.b16 %v9178
      %v9272 = vunpack.c.l.b16 %v9181
      %v9273 = vunpack.c.l.b16 %v9185
      %v9274 = vunpack.c.l.b16 %v9188
      %v9275 = vunpack.c.l.b16 %v9192
      %v9276 = vunpack.c.l.b16 %v9195
      %v9277 = vunpack.c.l.b16 %v9199
      %v9278 = vunpack.c.l.b16 %v9202
      %v9279 = vunpack.c.l.b16 %v9206
      %v9280 = vunpack.c.l.b16 %v9209
      %v9281 = vunpack.c.l.b16 %v9213
      %v9282 = vunpack.c.l.b16 %v9216
      %v9283 = vunpack.c.l.b16 %v9220
      %v9284 = vunpack.c.l.b16 %v9223
      %v9285 = vunpack.c.l.b16 %v9227
      %v9286 = vunpack.c.l.b16 %v9230
      %v9287 = vunpack.c.l.b16 %v9234
      %v9288 = vunpack.c.l.b16 %v9237
      %v9289 = vunpack.c.l.b16 %v9241
      %v9290 = vunpack.c.l.b16 %v9244
      %v9291 = vunpack.c.l.b16 %v9248
      %v9292 = vunpack.c.l.b16 %v9251
      %v9293 = vpack.c.b16 %v9262, %v9261
      %v9294 = vpack.c.b16 %v9264, %v9263
      %v9295 = vpack.c.b16 %v9266, %v9265
      %v9296 = vpack.c.b16 %v9268, %v9267
      %v9297 = vpack.c.b16 %v9270, %v9269
      %v9298 = vpack.c.b16 %v9272, %v9271
      %v9299 = vpack.c.b16 %v9274, %v9273
      %v9300 = vpack.c.b16 %v9276, %v9275
      %v9301 = vpack.c.b16 %v9278, %v9277
      %v9302 = vpack.c.b16 %v9280, %v9279
      %v9303 = vpack.c.b16 %v9282, %v9281
      %v9304 = vpack.c.b16 %v9284, %v9283
      %v9305 = vpack.c.b16 %v9286, %v9285
      %v9306 = vpack.c.b16 %v9288, %v9287
      %v9307 = vpack.c.b16 %v9290, %v9289
      %v9308 = vpack.c.b16 %v9292, %v9291
      %v9317 = vunpack.c.l.b16 %v9253
      %v9318 = vunpack.c.l.b16 %v9254
      %v9319 = vunpack.c.l.b16 %v9255
      %v9320 = vunpack.c.l.b16 %v9256
      %v9321 = vunpack.c.l.b16 %v9257
      %v9322 = vunpack.c.l.b16 %v9258
      %v9323 = vunpack.c.l.b16 %v9259
      %v9324 = vunpack.c.l.b16 %v9260
      %v9325 = vpack.c.b16 %v9318, %v9317
      %v9326 = vpack.c.b16 %v9320, %v9319
      %v9327 = vpack.c.b16 %v9322, %v9321
      %v9328 = vpack.c.b16 %v9324, %v9323
      %v9334 = vsel %vm5868, %v9293, 0
      %v9337 = vsel %vm5868, %v9294, 0
      %v9340 = vsel %vm5868, %v9295, 0
      %v9343 = vsel %vm5868, %v9296, 0
      %v9346 = vsel %vm5868, %v9297, 0
      %v9349 = vsel %vm5868, %v9298, 0
      %v9352 = vsel %vm5868, %v9299, 0
      %v9355 = vsel %vm5868, %v9300, 0
      %v9358 = vsel %vm5868, %v9301, 0
      %v9361 = vsel %vm5868, %v9302, 0
      %v9364 = vsel %vm5868, %v9303, 0
      %v9367 = vsel %vm5868, %v9304, 0
      %v9370 = vsel %vm5868, %v9305, 0
      %v9373 = vsel %vm5868, %v9306, 0
      %v9376 = vsel %vm5868, %v9307, 0
      %v9379 = vsel %vm5868, %v9308, 0
      %9381 = vmatpush.bf16.msra.mxu0 0
      %9382 = vmatpush.bf16.msra.mxu0 0
      %9383 = vmatpush.bf16.msra.mxu0 0
      %9384 = vmatpush.bf16.msra.mxu0 0
      %9385 = vmatpush.bf16.msra.mxu0 %v9328
      %9386 = vmatpush.bf16.msra.mxu0 %v9327
      %9387 = vmatpush.bf16.msra.mxu0 %v9326
      %9388 = vmatpush.bf16.msra.mxu0 %v9325
      %9389 = vmatmul.bf16.gmra.mxu0 %v9334
      %v9390 = vpop.f32.mrf.mxu0
      %v9391 = vadd.f32 0.0, %v9390
      %v9392 = vpop.f32.mrf.mxu0
      %v9393 = vadd.f32 0.0, %v9392
      %9394 = vmatmul.bf16.gmra.mxu0 %v9337
      %v9395 = vpop.f32.mrf.mxu0
      %v9396 = vadd.f32 0.0, %v9395
      %v9397 = vpop.f32.mrf.mxu0
      %v9398 = vadd.f32 0.0, %v9397
      %9399 = vmatmul.bf16.gmra.mxu0 %v9340
      %v9400 = vpop.f32.mrf.mxu0
      %v9401 = vadd.f32 0.0, %v9400
      %v9402 = vpop.f32.mrf.mxu0
      %v9403 = vadd.f32 0.0, %v9402
      %9404 = vmatmul.bf16.gmra.mxu0 %v9343
      %v9405 = vpop.f32.mrf.mxu0
      %v9406 = vadd.f32 0.0, %v9405
      %v9407 = vpop.f32.mrf.mxu0
      %v9408 = vadd.f32 0.0, %v9407
      %9409 = vmatmul.bf16.gmra.mxu0 %v9346
      %v9410 = vpop.f32.mrf.mxu0
      %v9411 = vadd.f32 0.0, %v9410
      %v9412 = vpop.f32.mrf.mxu0
      %v9413 = vadd.f32 0.0, %v9412
      %9414 = vmatmul.bf16.gmra.mxu0 %v9349
      %v9415 = vpop.f32.mrf.mxu0
      %v9416 = vadd.f32 0.0, %v9415
      %v9417 = vpop.f32.mrf.mxu0
      %v9418 = vadd.f32 0.0, %v9417
      %9419 = vmatmul.bf16.gmra.mxu0 %v9352
      %v9420 = vpop.f32.mrf.mxu0
      %v9421 = vadd.f32 0.0, %v9420
      %v9422 = vpop.f32.mrf.mxu0
      %v9423 = vadd.f32 0.0, %v9422
      %9424 = vmatmul.bf16.gmra.mxu0 %v9355
      %v9425 = vpop.f32.mrf.mxu0
      %v9426 = vadd.f32 0.0, %v9425
      %v9427 = vpop.f32.mrf.mxu0
      %v9428 = vadd.f32 0.0, %v9427
      %9429 = vmatmul.bf16.gmra.mxu0 %v9358
      %v9430 = vpop.f32.mrf.mxu0
      %v9431 = vadd.f32 0.0, %v9430
      %v9432 = vpop.f32.mrf.mxu0
      %v9433 = vadd.f32 0.0, %v9432
      %9434 = vmatmul.bf16.gmra.mxu0 %v9361
      %v9435 = vpop.f32.mrf.mxu0
      %v9436 = vadd.f32 0.0, %v9435
      %v9437 = vpop.f32.mrf.mxu0
      %v9438 = vadd.f32 0.0, %v9437
      %9439 = vmatmul.bf16.gmra.mxu0 %v9364
      %v9440 = vpop.f32.mrf.mxu0
      %v9441 = vadd.f32 0.0, %v9440
      %v9442 = vpop.f32.mrf.mxu0
      %v9443 = vadd.f32 0.0, %v9442
      %9444 = vmatmul.bf16.gmra.mxu0 %v9367
      %v9445 = vpop.f32.mrf.mxu0
      %v9446 = vadd.f32 0.0, %v9445
      %v9447 = vpop.f32.mrf.mxu0
      %v9448 = vadd.f32 0.0, %v9447
      %9449 = vmatmul.bf16.gmra.mxu0 %v9370
      %v9450 = vpop.f32.mrf.mxu0
      %v9451 = vadd.f32 0.0, %v9450
      %v9452 = vpop.f32.mrf.mxu0
      %v9453 = vadd.f32 0.0, %v9452
      %9454 = vmatmul.bf16.gmra.mxu0 %v9373
      %v9455 = vpop.f32.mrf.mxu0
      %v9456 = vadd.f32 0.0, %v9455
      %v9457 = vpop.f32.mrf.mxu0
      %v9458 = vadd.f32 0.0, %v9457
      %9459 = vmatmul.bf16.gmra.mxu0 %v9376
      %v9460 = vpop.f32.mrf.mxu0
      %v9461 = vadd.f32 0.0, %v9460
      %v9462 = vpop.f32.mrf.mxu0
      %v9463 = vadd.f32 0.0, %v9462
      %9464 = vmatmul.bf16.gmra.mxu0 %v9379
      %v9465 = vpop.f32.mrf.mxu0
      %v9466 = vadd.f32 0.0, %v9465
      %v9467 = vpop.f32.mrf.mxu0
      %v9468 = vadd.f32 0.0, %v9467
      %9469 = vdwg.mxu0
      %v9470 = vadd.f32 %v9044, %v9391
      %v9471 = vadd.f32 %v9045, %v9393
      %v9472 = vadd.f32 %v9046, %v9396
      %v9473 = vadd.f32 %v9047, %v9398
      %v9474 = vadd.f32 %v9048, %v9401
      %v9475 = vadd.f32 %v9049, %v9403
      %v9476 = vadd.f32 %v9050, %v9406
      %v9477 = vadd.f32 %v9051, %v9408
      %v9478 = vadd.f32 %v9052, %v9411
      %v9479 = vadd.f32 %v9053, %v9413
      %v9480 = vadd.f32 %v9054, %v9416
      %v9481 = vadd.f32 %v9055, %v9418
      %v9482 = vadd.f32 %v9056, %v9421
      %v9483 = vadd.f32 %v9057, %v9423
      %v9484 = vadd.f32 %v9058, %v9426
      %v9485 = vadd.f32 %v9059, %v9428
      %v9486 = vadd.f32 %v9060, %v9431
      %v9487 = vadd.f32 %v9061, %v9433
      %v9488 = vadd.f32 %v9062, %v9436
      %v9489 = vadd.f32 %v9063, %v9438
      %v9490 = vadd.f32 %v9064, %v9441
      %v9491 = vadd.f32 %v9065, %v9443
      %v9492 = vadd.f32 %v9066, %v9446
      %v9493 = vadd.f32 %v9067, %v9448
      %v9494 = vadd.f32 %v9068, %v9451
      %v9495 = vadd.f32 %v9069, %v9453
      %v9496 = vadd.f32 %v9070, %v9456
      %v9497 = vadd.f32 %v9071, %v9458
      %v9498 = vadd.f32 %v9072, %v9461
      %v9499 = vadd.f32 %v9073, %v9463
      %v9500 = vadd.f32 %v9074, %v9466
      %v9501 = vadd.f32 %v9075, %v9468
      %v9502 = vld [vmem:[%s4] sm:$0x1]
      %v9504 = vperm.slane %v9502, 0
      %v9506 = vadd.f32 %v9470, %v9504
      %v9507 = vadd.f32 %v9471, %v9504
      %v9508 = vadd.f32 %v9472, %v9504
      %v9509 = vadd.f32 %v9473, %v9504
      %v9510 = vadd.f32 %v9474, %v9504
      %v9511 = vadd.f32 %v9475, %v9504
      %v9512 = vadd.f32 %v9476, %v9504
      %v9513 = vadd.f32 %v9477, %v9504
      %v9514 = vadd.f32 %v9478, %v9504
      %v9515 = vadd.f32 %v9479, %v9504
      %v9516 = vadd.f32 %v9480, %v9504
      %v9517 = vadd.f32 %v9481, %v9504
      %v9518 = vadd.f32 %v9482, %v9504
      %v9519 = vadd.f32 %v9483, %v9504
      %v9520 = vadd.f32 %v9484, %v9504
      %v9521 = vadd.f32 %v9485, %v9504
      %v9522 = vadd.f32 %v9486, %v9504
      %v9523 = vadd.f32 %v9487, %v9504
      %v9524 = vadd.f32 %v9488, %v9504
      %v9525 = vadd.f32 %v9489, %v9504
      %v9526 = vadd.f32 %v9490, %v9504
      %v9527 = vadd.f32 %v9491, %v9504
      %v9528 = vadd.f32 %v9492, %v9504
      %v9529 = vadd.f32 %v9493, %v9504
      %v9530 = vadd.f32 %v9494, %v9504
      %v9531 = vadd.f32 %v9495, %v9504
      %v9532 = vadd.f32 %v9496, %v9504
      %v9533 = vadd.f32 %v9497, %v9504
      %v9534 = vadd.f32 %v9498, %v9504
      %v9535 = vadd.f32 %v9499, %v9504
      %v9536 = vadd.f32 %v9500, %v9504
      %v9537 = vadd.f32 %v9501, %v9504
      %v9538 = vmax.f32 %v9506, 0.0
      %v9539 = vmax.f32 %v9507, 0.0
      %v9540 = vmax.f32 %v9508, 0.0
      %v9541 = vmax.f32 %v9509, 0.0
      %v9542 = vmax.f32 %v9510, 0.0
      %v9543 = vmax.f32 %v9511, 0.0
      %v9544 = vmax.f32 %v9512, 0.0
      %v9545 = vmax.f32 %v9513, 0.0
      %v9546 = vmax.f32 %v9514, 0.0
      %v9547 = vmax.f32 %v9515, 0.0
      %v9548 = vmax.f32 %v9516, 0.0
      %v9549 = vmax.f32 %v9517, 0.0
      %v9550 = vmax.f32 %v9518, 0.0
      %v9551 = vmax.f32 %v9519, 0.0
      %v9552 = vmax.f32 %v9520, 0.0
      %v9553 = vmax.f32 %v9521, 0.0
      %v9554 = vmax.f32 %v9522, 0.0
      %v9555 = vmax.f32 %v9523, 0.0
      %v9556 = vmax.f32 %v9524, 0.0
      %v9557 = vmax.f32 %v9525, 0.0
      %v9558 = vmax.f32 %v9526, 0.0
      %v9559 = vmax.f32 %v9527, 0.0
      %v9560 = vmax.f32 %v9528, 0.0
      %v9561 = vmax.f32 %v9529, 0.0
      %v9562 = vmax.f32 %v9530, 0.0
      %v9563 = vmax.f32 %v9531, 0.0
      %v9564 = vmax.f32 %v9532, 0.0
      %v9565 = vmax.f32 %v9533, 0.0
      %v9566 = vmax.f32 %v9534, 0.0
      %v9567 = vmax.f32 %v9535, 0.0
      %v9568 = vmax.f32 %v9536, 0.0
      %v9569 = vmax.f32 %v9537, 0.0
      %v9570 = vpack.c.bf16 %v9539, %v9538
      %v9571 = vpack.c.bf16 %v9541, %v9540
      %v9572 = vpack.c.bf16 %v9543, %v9542
      %v9573 = vpack.c.bf16 %v9545, %v9544
      %v9574 = vpack.c.bf16 %v9547, %v9546
      %v9575 = vpack.c.bf16 %v9549, %v9548
      %v9576 = vpack.c.bf16 %v9551, %v9550
      %v9577 = vpack.c.bf16 %v9553, %v9552
      %v9578 = vpack.c.bf16 %v9555, %v9554
      %v9579 = vpack.c.bf16 %v9557, %v9556
      %v9580 = vpack.c.bf16 %v9559, %v9558
      %v9581 = vpack.c.bf16 %v9561, %v9560
      %v9582 = vpack.c.bf16 %v9563, %v9562
      %v9583 = vpack.c.bf16 %v9565, %v9564
      %v9584 = vpack.c.bf16 %v9567, %v9566
      %v9585 = vpack.c.bf16 %v9569, %v9568
      %v9586 = vld [vmem:[%s5] sm:$0xf]
      %v9587 = vld [vmem:[%s5 + $0x4] sm:$0xf]
      %v9588 = vld [vmem:[%s5 + $0x8] sm:$0xf]
      %v9589 = vld [vmem:[%s5 + $0xc] sm:$0xf]
      %v9590 = vld [vmem:[%s5 + $0x10] sm:$0xf]
      %v9591 = vld [vmem:[%s5 + $0x14] sm:$0xf]
      %v9592 = vld [vmem:[%s5 + $0x18] sm:$0xf]
      %v9593 = vld [vmem:[%s5 + $0x1c] sm:$0xf]
      %v9594 = vld [vmem:[%s5 + $0x20] sm:$0xf]
      %v9595 = vld [vmem:[%s5 + $0x24] sm:$0xf]
      %v9596 = vld [vmem:[%s5 + $0x28] sm:$0xf]
      %v9597 = vld [vmem:[%s5 + $0x2c] sm:$0xf]
      %v9598 = vld [vmem:[%s5 + $0x30] sm:$0xf]
      %v9599 = vld [vmem:[%s5 + $0x34] sm:$0xf]
      %v9600 = vld [vmem:[%s5 + $0x38] sm:$0xf]
      %v9601 = vld [vmem:[%s5 + $0x3c] sm:$0xf]
      %v9602 = vld [vmem:[%s6] sm:$0x1]
      %v9604 = vperm.slane %v9602, 0
      %v9622 = vunpack.c.l.b16 %v9586
      %v9623 = vunpack.c.l.b16 %v9587
      %v9624 = vunpack.c.l.b16 %v9588
      %v9625 = vunpack.c.l.b16 %v9589
      %v9626 = vunpack.c.l.b16 %v9590
      %v9627 = vunpack.c.l.b16 %v9591
      %v9628 = vunpack.c.l.b16 %v9592
      %v9629 = vunpack.c.l.b16 %v9593
      %v9630 = vunpack.c.l.b16 %v9594
      %v9631 = vunpack.c.l.b16 %v9595
      %v9632 = vunpack.c.l.b16 %v9596
      %v9633 = vunpack.c.l.b16 %v9597
      %v9634 = vunpack.c.l.b16 %v9598
      %v9635 = vunpack.c.l.b16 %v9599
      %v9636 = vunpack.c.l.b16 %v9600
      %v9637 = vunpack.c.l.b16 %v9601
      %v9638 = vpack.c.b16 %v9623, %v9622
      %v9639 = vpack.c.b16 %v9625, %v9624
      %v9640 = vpack.c.b16 %v9627, %v9626
      %v9641 = vpack.c.b16 %v9629, %v9628
      %v9642 = vpack.c.b16 %v9631, %v9630
      %v9643 = vpack.c.b16 %v9633, %v9632
      %v9644 = vpack.c.b16 %v9635, %v9634
      %v9645 = vpack.c.b16 %v9637, %v9636
      %9654 = vmatpush.bf16.msra.mxu0 %v9645
      %9655 = vmatpush.bf16.msra.mxu0 %v9644
      %9656 = vmatpush.bf16.msra.mxu0 %v9643
      %9657 = vmatpush.bf16.msra.mxu0 %v9642
      %9658 = vmatpush.bf16.msra.mxu0 %v9641
      %9659 = vmatpush.bf16.msra.mxu0 %v9640
      %9660 = vmatpush.bf16.msra.mxu0 %v9639
      %9661 = vmatpush.bf16.msra.mxu0 %v9638
      %9662 = vmatmul.bf16.gmra.mxu0 %v9570
      %v9663 = vpop.f32.mrf.mxu0
      %v9664 = vadd.f32 %v9604, %v9663
      %v9665 = vpop.f32.mrf.mxu0
      %v9666 = vadd.f32 %v9604, %v9665
      %9667 = vmatmul.bf16.gmra.mxu0 %v9571
      %v9668 = vpop.f32.mrf.mxu0
      %v9669 = vadd.f32 %v9604, %v9668
      %v9670 = vpop.f32.mrf.mxu0
      %v9671 = vadd.f32 %v9604, %v9670
      %9672 = vmatmul.bf16.gmra.mxu0 %v9572
      %v9673 = vpop.f32.mrf.mxu0
      %v9674 = vadd.f32 %v9604, %v9673
      %v9675 = vpop.f32.mrf.mxu0
      %v9676 = vadd.f32 %v9604, %v9675
      %9677 = vmatmul.bf16.gmra.mxu0 %v9573
      %v9678 = vpop.f32.mrf.mxu0
      %v9679 = vadd.f32 %v9604, %v9678
      %v9680 = vpop.f32.mrf.mxu0
      %v9681 = vadd.f32 %v9604, %v9680
      %9682 = vmatmul.bf16.gmra.mxu0 %v9574
      %v9683 = vpop.f32.mrf.mxu0
      %v9684 = vadd.f32 %v9604, %v9683
      %v9685 = vpop.f32.mrf.mxu0
      %v9686 = vadd.f32 %v9604, %v9685
      %9687 = vmatmul.bf16.gmra.mxu0 %v9575
      %v9688 = vpop.f32.mrf.mxu0
      %v9689 = vadd.f32 %v9604, %v9688
      %v9690 = vpop.f32.mrf.mxu0
      %v9691 = vadd.f32 %v9604, %v9690
      %9692 = vmatmul.bf16.gmra.mxu0 %v9576
      %v9693 = vpop.f32.mrf.mxu0
      %v9694 = vadd.f32 %v9604, %v9693
      %v9695 = vpop.f32.mrf.mxu0
      %v9696 = vadd.f32 %v9604, %v9695
      %9697 = vmatmul.bf16.gmra.mxu0 %v9577
      %v9698 = vpop.f32.mrf.mxu0
      %v9699 = vadd.f32 %v9604, %v9698
      %v9700 = vpop.f32.mrf.mxu0
      %v9701 = vadd.f32 %v9604, %v9700
      %9702 = vmatmul.bf16.gmra.mxu0 %v9578
      %v9703 = vpop.f32.mrf.mxu0
      %v9704 = vadd.f32 %v9604, %v9703
      %v9705 = vpop.f32.mrf.mxu0
      %v9706 = vadd.f32 %v9604, %v9705
      %9707 = vmatmul.bf16.gmra.mxu0 %v9579
      %v9708 = vpop.f32.mrf.mxu0
      %v9709 = vadd.f32 %v9604, %v9708
      %v9710 = vpop.f32.mrf.mxu0
      %v9711 = vadd.f32 %v9604, %v9710
      %9712 = vmatmul.bf16.gmra.mxu0 %v9580
      %v9713 = vpop.f32.mrf.mxu0
      %v9714 = vadd.f32 %v9604, %v9713
      %v9715 = vpop.f32.mrf.mxu0
      %v9716 = vadd.f32 %v9604, %v9715
      %9717 = vmatmul.bf16.gmra.mxu0 %v9581
      %v9718 = vpop.f32.mrf.mxu0
      %v9719 = vadd.f32 %v9604, %v9718
      %v9720 = vpop.f32.mrf.mxu0
      %v9721 = vadd.f32 %v9604, %v9720
      %9722 = vmatmul.bf16.gmra.mxu0 %v9582
      %v9723 = vpop.f32.mrf.mxu0
      %v9724 = vadd.f32 %v9604, %v9723
      %v9725 = vpop.f32.mrf.mxu0
      %v9726 = vadd.f32 %v9604, %v9725
      %9727 = vmatmul.bf16.gmra.mxu0 %v9583
      %v9728 = vpop.f32.mrf.mxu0
      %v9729 = vadd.f32 %v9604, %v9728
      %v9730 = vpop.f32.mrf.mxu0
      %v9731 = vadd.f32 %v9604, %v9730
      %9732 = vmatmul.bf16.gmra.mxu0 %v9584
      %v9733 = vpop.f32.mrf.mxu0
      %v9734 = vadd.f32 %v9604, %v9733
      %v9735 = vpop.f32.mrf.mxu0
      %v9736 = vadd.f32 %v9604, %v9735
      %9737 = vmatmul.bf16.gmra.mxu0 %v9585
      %v9738 = vpop.f32.mrf.mxu0
      %v9739 = vadd.f32 %v9604, %v9738
      %v9740 = vpop.f32.mrf.mxu0
      %v9741 = vadd.f32 %v9604, %v9740
      %9742 = vdwg.mxu0
      %vm9743 = vcmask 23552
      %9744 = vst.msk [vmem:[%s278] sm:$0xff] %vm9743, %v9664
      %9745 = vst.msk [vmem:[%s278 + $0x8] sm:$0xff] %vm9743, %v9666
      %9746 = vst.msk [vmem:[%s278 + $0x10] sm:$0xff] %vm9743, %v9669
      %9747 = vst.msk [vmem:[%s278 + $0x18] sm:$0xff] %vm9743, %v9671
      %9748 = vst.msk [vmem:[%s278 + $0x20] sm:$0xff] %vm9743, %v9674
      %9749 = vst.msk [vmem:[%s278 + $0x28] sm:$0xff] %vm9743, %v9676
      %9750 = vst.msk [vmem:[%s278 + $0x30] sm:$0xff] %vm9743, %v9679
      %9751 = vst.msk [vmem:[%s278 + $0x38] sm:$0xff] %vm9743, %v9681
      %9752 = vst.msk [vmem:[%s278 + $0x40] sm:$0xff] %vm9743, %v9684
      %9753 = vst.msk [vmem:[%s278 + $0x48] sm:$0xff] %vm9743, %v9686
      %9754 = vst.msk [vmem:[%s278 + $0x50] sm:$0xff] %vm9743, %v9689
      %9755 = vst.msk [vmem:[%s278 + $0x58] sm:$0xff] %vm9743, %v9691
      %9756 = vst.msk [vmem:[%s278 + $0x60] sm:$0xff] %vm9743, %v9694
      %9757 = vst.msk [vmem:[%s278 + $0x68] sm:$0xff] %vm9743, %v9696
      %9758 = vst.msk [vmem:[%s278 + $0x70] sm:$0xff] %vm9743, %v9699
      %9759 = vst.msk [vmem:[%s278 + $0x78] sm:$0xff] %vm9743, %v9701
      %9760 = vst.msk [vmem:[%s278 + $0x80] sm:$0xff] %vm9743, %v9704
      %9761 = vst.msk [vmem:[%s278 + $0x88] sm:$0xff] %vm9743, %v9706
      %9762 = vst.msk [vmem:[%s278 + $0x90] sm:$0xff] %vm9743, %v9709
      %9763 = vst.msk [vmem:[%s278 + $0x98] sm:$0xff] %vm9743, %v9711
      %9764 = vst.msk [vmem:[%s278 + $0xa0] sm:$0xff] %vm9743, %v9714
      %9765 = vst.msk [vmem:[%s278 + $0xa8] sm:$0xff] %vm9743, %v9716
      %9766 = vst.msk [vmem:[%s278 + $0xb0] sm:$0xff] %vm9743, %v9719
      %9767 = vst.msk [vmem:[%s278 + $0xb8] sm:$0xff] %vm9743, %v9721
      %9768 = vst.msk [vmem:[%s278 + $0xc0] sm:$0xff] %vm9743, %v9724
      %9769 = vst.msk [vmem:[%s278 + $0xc8] sm:$0xff] %vm9743, %v9726
      %9770 = vst.msk [vmem:[%s278 + $0xd0] sm:$0xff] %vm9743, %v9729
      %9771 = vst.msk [vmem:[%s278 + $0xd8] sm:$0xff] %vm9743, %v9731
      %9772 = vst.msk [vmem:[%s278 + $0xe0] sm:$0xff] %vm9743, %v9734
      %9773 = vst.msk [vmem:[%s278 + $0xe8] sm:$0xff] %vm9743, %v9736
      %9774 = vst.msk [vmem:[%s278 + $0xf0] sm:$0xff] %vm9743, %v9739
      %9775 = vst.msk [vmem:[%s278 + $0xf8] sm:$0xff] %vm9743, %v9741
      %p9776 = scmp.lt.s32.totalorder %s18, 1
      %s9777 = scalar_select %p9776, %s18, 1
      %s9778 = smul.addr %s9777, 32
      %s9779 = smul.addr %s9778, 8
      %s9780 = scalar_lea.vmem %s7, %s9779
      // Predicated region
      $region49: #{simple_cnn_forward.1} parent=47 // pred_check
        %p9781 = pneg %p188
      $region50: #{simple_cnn_forward.1} parent=47 // pred_check_branch
        %9783 = sbr.rel (%p9781) target = $region52
      $region51: #{simple_cnn_forward.1} parent=47 // pred_region
        _
      $region52: #{simple_cnn_forward.1} parent=47 // pred_fallthru
        _
    $region48: #{simple_cnn_forward.1} parent=5 // pred_fallthru
      _
    %p9784 = scmp.le.s32.totalorder 2, %s13
    // Predicated region
    $region53: #{simple_cnn_forward.1} parent=5 // pred_check
      %p9785 = pneg %p9784
    $region54: #{simple_cnn_forward.1} parent=5 // pred_check_branch
      %9787 = sbr.rel (%p9785) target = $region56
    $region55: #{simple_cnn_forward.1} parent=5 // pred_region
      %s9788 = ssub.s32 %s13, 2
      // Predicated region
      $region57: #{simple_cnn_forward.1} parent=55 // pred_check
        %p9789 = pneg %p194
      $region58: #{simple_cnn_forward.1} parent=55 // pred_check_branch
        %9791 = sbr.rel (%p9789) target = $region60
      $region59: #{simple_cnn_forward.1} parent=55 // pred_region
        %p9792 = scmp.lt.s32.totalorder %s19, 1
        %s9793 = scalar_select %p9792, %s19, 1
        %s9794 = smul.addr %s9793, 32
        %s9795 = smul.addr %s9794, 8
        %s9796 = scalar_lea.vmem %s7, %s9795
      $region60: #{simple_cnn_forward.1} parent=55 // pred_fallthru
        _
    $region56: #{simple_cnn_forward.1} parent=5 // pred_fallthru
      _
  $region6: #{simple_cnn_forward.1} parent=0 // loop_footer
    %s17 = sadd.s32 1, %s13
  $region7: #{simple_cnn_forward.1} parent=0 // loop_footer_branch
    %12 = sbr.rel target = $region3
  $region8: #{simple_cnn_forward.1} parent=0 // loop_exit
    _

</llo_original>
